<compile_context>
chip_gen: v7x
topology: tpu7x:2x2x1
jax: 0.10.0
libtpu: 0.0.40
codegen_flags: <defaults>
</compile_context>

<pallas_src>
import math

import jax
import jax.numpy as jnp
from jax.experimental import pallas as pl
from jax.experimental.pallas import tpu as pltpu

# ------------------------- small config (consistent with the module) --------
BATCH = 2
IN_CHANS = 4          # spectral bands
SPA_IMG = 16          # spa_img_size
SPA_PATCH = 8         # spa_patch_size
SPE_IMG = 5           # spe_img_size
SPE_PATCH = 2         # spe_patch_size
HID_CHANS = 8         # hid_chans
EMBED = 32            # embed_dim
NCLASS = 10
DEPTH = 2
D_STATE = 16          # block_1D default
EXPAND = 2
D_CONV = 4
D_INNER = EXPAND * EMBED
DT_RANK = math.ceil(EMBED / 16)

GRID = SPA_IMG // SPA_PATCH
N_SPA = GRID * GRID                 # spatial patches
N_SPE = IN_CHANS // SPE_PATCH       # spectral patches
L_SPA = N_SPA + 1                   # + cls token (appended last)
L_SPE = N_SPE + 1
HW_SPE = SPE_IMG * SPE_IMG
BN_EPS = 1e-5
LN_EPS = 1e-6

_VMEM = pl.BlockSpec(memory_space=pltpu.MemorySpace.VMEM)


def _pad8(n):
    return -(-n // 8) * 8


# per-branch packed-weight layouts (name, #rows); every segment starts on an
# 8-sublane boundary so all in-kernel slices are tile aligned.
# widths: 64 (= D_INNER) and 32 (= EMBED)
_M64_LAYOUT = (("w_in_x", EMBED), ("w_in_z", EMBED), ("w_dt", D_INNER),
               ("w_b_t", D_STATE), ("w_c_t", D_STATE), ("a_t", D_STATE),
               ("conv_w", D_CONV), ("conv_b", 1), ("dt_b", 1), ("d", 1))
_M32_LAYOUT = (("w_out", D_INNER), ("ln_g", 1), ("ln_b", 1))


def _offsets(layout):
    offs, off = {}, 0
    for name, rows in layout:
        offs[name] = off
        off += _pad8(rows)
    return offs, off


_M64_OFFS, _M64_ROWS = _offsets(_M64_LAYOUT)
_M32_OFFS, _M32_ROWS = _offsets(_M32_LAYOUT)


# ------------------------------ in-kernel helpers ----------------------------
def _sigmoid(v):
    return 1.0 / (1.0 + jnp.exp(-v))


def _silu(v):
    return v * _sigmoid(v)


def _softplus(v):
    return jnp.maximum(v, 0.0) + jnp.log1p(jnp.exp(-jnp.abs(v)))


def _dotf(a, b):
    return jnp.dot(a, b, preferred_element_type=jnp.float32)


def _read_branch(m64_ref, m32_ref):
    p = {}
    for name, rows in _M64_LAYOUT:
        off = _M64_OFFS[name]
        p[name] = m64_ref[off:off + rows, :]
    for name, rows in _M32_LAYOUT:
        off = _M32_OFFS[name]
        p[name] = m32_ref[off:off + rows, :]
    # w_b_t / w_c_t are packed back-to-back (both are 8-row aligned): read the
    # stacked (2*S, Din) block so B and C projections use a single matmul.
    off_b = _M64_OFFS["w_b_t"]
    p["w_bc_t"] = m64_ref[off_b:off_b + 2 * D_STATE, :]
    return p


def _mamba_block(x_seq, p, L, B):
    """block_1D (bi=True, cls=True): LN -> Mamba SSM fwd & flipped-but-cls ->
    average -> residual.  x_seq: (L*B, E), rows token-major (l, b)."""
    # LayerNorm (eps 1e-6)
    mu = jnp.mean(x_seq, axis=-1, keepdims=True)
    xc = x_seq - mu
    var = jnp.mean(xc * xc, axis=-1, keepdims=True)
    xn = xc * jax.lax.rsqrt(var + LN_EPS) * p["ln_g"] + p["ln_b"]

    # in_proj (shared by both directions: only the token order differs)
    xpre = _dotf(xn, p["w_in_x"])                # (L*B, D_INNER)
    gate = _silu(_dotf(xn, p["w_in_z"]))         # SiLU(z) at original positions

    # processing orders: forward and "flip all tokens except the trailing cls"
    orders = (tuple(range(L)), tuple(range(L - 2, -1, -1)) + (L - 1,))

    # depthwise *causal* conv1d, evaluated in each direction's processing order
    conv_blocks = []
    for order in orders:
        for t in range(L):
            acc = None
            for j in range(D_CONV):
                if t - j < 0:
                    break
                src = order[t - j]
                tap = p["conv_w"][D_CONV - 1 - j:D_CONV - j, :]
                term = xpre[src * B:(src + 1) * B, :] * tap
                acc = term if acc is None else acc + term
            conv_blocks.append(acc)
    conv_all = _silu(jnp.concatenate(conv_blocks, axis=0) + p["conv_b"])  # (2*L*B, Din)

    # dt (x_proj folded with dt_proj); B & C projections via ONE stacked matmul
    dt_all = _softplus(_dotf(conv_all, p["w_dt"]) + p["dt_b"])            # (2*L*B, Din)
    contract = (((1,), (1,)), ((), ()))
    bc_mat = jax.lax.dot_general(p["w_bc_t"], conv_all, contract,
                                 preferred_element_type=jnp.float32)      # (2S, 2*L*B)
    b_mat = bc_mat[:D_STATE]                                              # (S, 2*L*B)
    c_mat = bc_mat[D_STATE:]                                              # (S, 2*L*B)

    # selective scan: fully unrolled, one (S, Din) state per (direction, batch).
    # Direction outputs are summed directly into the per-original-position rows.
    y_rows = [None] * (L * B)
    for d, order in enumerate(orders):
        for b in range(B):
            h = jnp.zeros((D_STATE, D_INNER), jnp.float32)
            for t in range(L):
                r = (d * L + t) * B + b
                u_t = conv_all[r:r + 1, :]                 # (1, Din)
                dt_t = dt_all[r:r + 1, :]                  # (1, Din)
                B_t = b_mat[:, r:r + 1]                    # (S, 1)
                C_t = c_mat[:, r:r + 1]                    # (S, 1)
                h = jnp.exp(dt_t * p["a_t"]) * h + B_t * (dt_t * u_t)
                y = jnp.sum(h * C_t, axis=0, keepdims=True) + p["d"] * u_t
                dest = order[t] * B + b                    # scatter to orig pos
                y_rows[dest] = y if y_rows[dest] is None else y_rows[dest] + y
    y = jnp.concatenate(y_rows, axis=0) * 0.5 * gate       # gate identical for both dirs
    return _dotf(y, p["w_out"]) + x_seq                    # out_proj + residual


# ------------------------------ the fused model kernel -----------------------
def _model_kernel(*refs):
    out_ref = refs[-1]
    it = iter(refs[:-1])

    x_spa_pc = next(it)[...]          # (N_SPA*B, P*P*C)   per-patch pixels
    x_spe_tok = next(it)[...]         # (N_SPE*B, 2*HW_SPE) per-token band pairs
    w1_big = next(it)[...]
    b1_big = next(it)[...]
    w_spa = next(it)[...]
    b_spa = next(it)[...]
    w_spe = next(it)[...]
    b_spe = next(it)[...]
    spa_pos = next(it)[...]
    spa_cls = next(it)[...]
    spe_pos = next(it)[...]
    spe_cls = next(it)[...]
    blocks = []
    for _ in range(DEPTH):
        spa_p = _read_branch(next(it), next(it))
        spe_p = _read_branch(next(it), next(it))
        l1_w = next(it)[...]
        blocks.append((spa_p, spe_p, l1_w))
    w_head = next(it)[...]
    b_head = next(it)[...]

    B = BATCH

    # ---- stem: dimen_redu (1x1 conv + BN + ReLU + 1x1 conv + BN, folded) ----
    hidden = jnp.maximum(_dotf(x_spa_pc, w1_big) + b1_big, 0.0)
    spa_emb = _dotf(hidden, w_spa) + b_spa                    # (N_SPA*B, E)
    x_spa = jnp.concatenate([spa_emb + spa_pos, spa_cls], axis=0)   # (L_SPA*B, E)
    spe_emb = _dotf(x_spe_tok, w_spe) + b_spe                 # (N_SPE*B, E)
    x_spe = jnp.concatenate([spe_emb + spe_pos, spe_cls], axis=0)   # (L_SPE*B, E)

    # ---- spectral_spatial_block stack ----
    for spa_p, spe_p, l1_w in blocks:
        x_spa = _mamba_block(x_spa, spa_p, L_SPA, B)
        x_spe = _mamba_block(x_spe, spe_p, L_SPE, B)
        # fu gating: sigmoid(Linear((x_spa_center + mean(x_spe)) / 2))
        c = (L_SPA - 1) // 2
        spa_c = x_spa[c * B:(c + 1) * B, :]                   # (B, E)
        spe_c = x_spe[0:B, :]
        for l in range(1, L_SPE):
            spe_c = spe_c + x_spe[l * B:(l + 1) * B, :]
        spe_c = spe_c * (1.0 / L_SPE)
        sig = _sigmoid(_dotf((spa_c + spe_c) * 0.5, l1_w))    # (B, E)
        x_spa = x_spa * jnp.tile(sig, (L_SPA, 1))
        x_spe = x_spe * jnp.tile(sig, (L_SPE, 1))

    # ---- head (global_pool=False): average of the two cls tokens -> Linear ----
    spa_last = x_spa[(L_SPA - 1) * B:, :]
    spe_last = x_spe[(L_SPE - 1) * B:, :]
    pooled = (spa_last + spe_last) * 0.5
    out_ref[...] = _dotf(pooled, w_head) + b_head


# ------------------------------ parameter construction -----------------------
def positional_embedding_1d(seq_len, embed_size):
    position = jnp.arange(seq_len, dtype=jnp.float32)[:, None]
    div_term = jnp.exp(jnp.arange(0, embed_size, 2, dtype=jnp.float32)
                       * -(jnp.log(10000.0) / embed_size))
    pe = jnp.zeros((seq_len, embed_size), jnp.float32)
    pe = pe.at[:, 0::2].set(jnp.sin(position * div_term))
    pe = pe.at[:, 1::2].set(jnp.cos(position * div_term))
    return pe


def _sincos_1d(embed_dim, pos):
    omega = jnp.arange(embed_dim // 2, dtype=jnp.float32) / (embed_dim / 2.0)
    omega = 1.0 / (10000.0 ** omega)
    out = pos.reshape(-1)[:, None] * omega[None, :]
    return jnp.concatenate([jnp.sin(out), jnp.cos(out)], axis=1)


def get_2d_sincos_pos_embed(embed_dim, grid_size, cls_token=False):
    gy, gx = jnp.meshgrid(jnp.arange(grid_size, dtype=jnp.float32),
                          jnp.arange(grid_size, dtype=jnp.float32), indexing="ij")
    pe = jnp.concatenate([_sincos_1d(embed_dim // 2, gy),
                          _sincos_1d(embed_dim // 2, gx)], axis=1)
    if cls_token:
        pe = jnp.concatenate([jnp.zeros((1, embed_dim), jnp.float32), pe], axis=0)
    return pe


def init_params(key):
    keys = jax.random.split(key, 128)
    ki = iter(keys)

    def nrm(shape, scale=0.02):
        return (scale * jax.random.normal(next(ki), shape)).astype(jnp.float32)

    params = {
        # dimen_redu: Conv2d(C,hid,1)+BN2d, ReLU, Conv2d(hid,hid,1)+BN2d (eval stats)
        "dr_w1": nrm((HID_CHANS, IN_CHANS), 0.1), "dr_b1": nrm((HID_CHANS,), 0.02),
        "bn1_g": jnp.ones((HID_CHANS,), jnp.float32), "bn1_b": jnp.zeros((HID_CHANS,), jnp.float32),
        "bn1_m": jnp.zeros((HID_CHANS,), jnp.float32), "bn1_v": jnp.ones((HID_CHANS,), jnp.float32),
        "dr_w2": nrm((HID_CHANS, HID_CHANS), 0.1), "dr_b2": nrm((HID_CHANS,), 0.02),
        "bn2_g": jnp.ones((HID_CHANS,), jnp.float32), "bn2_b": jnp.zeros((HID_CHANS,), jnp.float32),
        "bn2_m": jnp.zeros((HID_CHANS,), jnp.float32), "bn2_v": jnp.ones((HID_CHANS,), jnp.float32),
        # PatchEmbed_2D: Conv2d(hid, E, k=P, s=P)
        "spa_proj_w": nrm((EMBED, HID_CHANS, SPA_PATCH, SPA_PATCH), 0.02),
        "spa_proj_b": nrm((EMBED,), 0.02),
        # PatchEmbed_Spe: Conv1d(HW_SPE, E, k=2, s=2)
        "spe_proj_w": nrm((EMBED, HW_SPE, SPE_PATCH), 0.02),
        "spe_proj_b": nrm((EMBED,), 0.02),
        "spa_cls": jnp.zeros((EMBED,), jnp.float32),
        "spe_cls": jnp.zeros((EMBED,), jnp.float32),
        "head_w": nrm((EMBED, NCLASS), 0.02),
        "head_b": jnp.zeros((NCLASS,), jnp.float32),
    }
    blocks = []
    for _ in range(DEPTH):
        blk = {"l1_w": nrm((EMBED, EMBED), 0.05)}
        for br in ("spa", "spe"):
            blk[br] = {
                "ln_g": jnp.ones((EMBED,), jnp.float32),
                "ln_b": jnp.zeros((EMBED,), jnp.float32),
                "w_in": nrm((EMBED, 2 * D_INNER), 0.05),
                "conv_w": nrm((D_CONV, D_INNER), 0.1),
                "conv_b": nrm((D_INNER,), 0.02),
                "w_x": nrm((D_INNER, DT_RANK + 2 * D_STATE), 0.05),
                "w_dt": nrm((DT_RANK, D_INNER), 0.3),
                "dt_b": nrm((D_INNER,), 0.1),
                # A = -exp(A_log), A_log = log(arange(1, d_state+1)); stored (S, Din)
                "a_t": -jnp.tile(jnp.arange(1, D_STATE + 1, dtype=jnp.float32)[:, None],
                                 (1, D_INNER)),
                "d": jnp.ones((D_INNER,), jnp.float32),
                "w_out": nrm((D_INNER, EMBED), 0.05),
            }
        blocks.append(blk)
    params["blocks"] = blocks
    return params


def _pack(entries, layout, total_rows, width):
    """Pack named 2-D pieces into one matrix with 8-row-aligned segments."""
    rows = []
    for name, n in layout:
        a = entries[name]
        assert a.shape == (n, width), (name, a.shape)
        pad = _pad8(n) - n
        if pad:
            a = jnp.concatenate([a, jnp.zeros((pad, width), jnp.float32)], axis=0)
        rows.append(a)
    out = jnp.concatenate(rows, axis=0)
    assert out.shape == (total_rows, width)
    return out


def prepare_weights(params):
    """One-off folding of BN / strided convs / dt_proj into matmul weights and
    packing into the flat operand list the fused kernel expects."""
    P = SPA_PATCH
    # fold eval-mode BatchNorm into the 1x1 convs
    s1 = params["bn1_g"] / jnp.sqrt(params["bn1_v"] + BN_EPS)
    w1p = params["dr_w1"].T * s1[None, :]                               # (C, hid)
    b1p = (params["dr_b1"] - params["bn1_m"]) * s1 + params["bn1_b"]
    s2 = params["bn2_g"] / jnp.sqrt(params["bn2_v"] + BN_EPS)
    w2p = params["dr_w2"].T * s2[None, :]                               # (hid, hid)
    b2p = (params["dr_b2"] - params["bn2_m"]) * s2 + params["bn2_b"]
    # block-diagonal (per-pixel) first 1x1 conv -> no reshape needed in-kernel
    w1_big = jnp.kron(jnp.eye(P * P, dtype=jnp.float32), w1p)           # (P*P*C, P*P*hid)
    b1_big = jnp.tile(b1p, (P * P,)).reshape(1, -1)
    # fold second 1x1 conv+BN into the spatial patch projection (Conv2d k=P,s=P)
    wspa3 = jnp.transpose(params["spa_proj_w"], (2, 3, 1, 0)).reshape(P * P, HID_CHANS, EMBED)
    w_spa = jnp.einsum("hk,pke->phe", w2p, wspa3).reshape(P * P * HID_CHANS, EMBED)
    b_spa = (jnp.einsum("k,pke->e", b2p, wspa3) + params["spa_proj_b"]).reshape(1, EMBED)
    # spectral patch projection (Conv1d k=2,s=2 over bands -> matmul)
    w_spe = jnp.transpose(params["spe_proj_w"], (2, 1, 0)).reshape(SPE_PATCH * HW_SPE, EMBED)
    b_spe = params["spe_proj_b"].reshape(1, EMBED)
    # positional embeddings, expanded to the token-major (l, b) row layout
    spa_pe = get_2d_sincos_pos_embed(EMBED, GRID, cls_token=True)       # (N_SPA+1, E)
    spe_pe = positional_embedding_1d(N_SPE + 1, EMBED)                  # (N_SPE+1, E)
    spa_pos = jnp.repeat(spa_pe[:N_SPA], BATCH, axis=0)
    spe_pos = jnp.repeat(spe_pe[:N_SPE], BATCH, axis=0)
    spa_cls = jnp.broadcast_to(params["spa_cls"][None, :] + spa_pe[N_SPA:N_SPA + 1],
                               (BATCH, EMBED))
    spe_cls = jnp.broadcast_to(params["spe_cls"][None, :] + spe_pe[N_SPE:N_SPE + 1],
                               (BATCH, EMBED))

    flat = [w1_big, b1_big, w_spa, b_spa, w_spe, b_spe,
            spa_pos, spa_cls, spe_pos, spe_cls]
    for blk in params["blocks"]:
        for br in ("spa", "spe"):
            p = blk[br]
            branch = {
                "ln_g": p["ln_g"].reshape(1, EMBED),
                "ln_b": p["ln_b"].reshape(1, EMBED),
                "w_in_x": p["w_in"][:, :D_INNER],
                "w_in_z": p["w_in"][:, D_INNER:],
                "conv_w": p["conv_w"],
                "conv_b": p["conv_b"].reshape(1, D_INNER),
                # fold dt_proj into x_proj; keep B/C projections pre-transposed
                "w_dt": jnp.dot(p["w_x"][:, :DT_RANK], p["w_dt"]),
                "dt_b": p["dt_b"].reshape(1, D_INNER),
                "w_b_t": p["w_x"][:, DT_RANK:DT_RANK + D_STATE].T,
                "w_c_t": p["w_x"][:, DT_RANK + D_STATE:].T,
                "a_t": p["a_t"],
                "d": p["d"].reshape(1, D_INNER),
                "w_out": p["w_out"],
            }
            m64 = _pack(branch, _M64_LAYOUT, _M64_ROWS, D_INNER)
            m32 = _pack(branch, _M32_LAYOUT, _M32_ROWS, EMBED)
            flat.extend([m64, m32])
        flat.append(blk["l1_w"])
    flat.append(params["head_w"])
    flat.append(params["head_b"].reshape(1, NCLASS))
    return tuple(jnp.asarray(a, jnp.float32) for a in flat)


# ------------------------------ wrapper ---------------------------------------
def _preprocess(x):
    """Cheap XLA data re-arrangement: patchify for the spatial branch and
    center-crop / band-pair grouping for the spectral branch."""
    B, C, H, W = x.shape
    P = SPA_PATCH
    g = H // P
    xt = jnp.transpose(x, (0, 2, 3, 1))                                 # (B, H, W, C)
    xt = xt.reshape(B, g, P, g, P, C)
    xt = jnp.transpose(xt, (1, 3, 0, 2, 4, 5))                          # (gy, gx, B, py, px, C)
    x_spa_pc = xt.reshape(N_SPA * B, P * P * C)

    half_spa, half_spe = SPA_IMG // 2, SPE_IMG // 2
    lo, hi = half_spa - half_spe, half_spa + half_spe + 1
    xc = x[:, :, lo:hi, lo:hi].reshape(B, C, HW_SPE)
    xc = xc.reshape(B, N_SPE, SPE_PATCH, HW_SPE)
    xc = jnp.transpose(xc, (1, 0, 2, 3)).reshape(N_SPE * B, SPE_PATCH * HW_SPE)
    return x_spa_pc, xc


@jax.jit
def model_forward(flat_w, x):
    x_spa_pc, x_spe_tok = _preprocess(x)
    inputs = (x_spa_pc, x_spe_tok) + tuple(flat_w)
    return pl.pallas_call(
        _model_kernel,
        out_shape=jax.ShapeDtypeStruct((x.shape[0], NCLASS), jnp.float32),
        in_specs=[_VMEM] * len(inputs),
        out_specs=_VMEM,
    )(*inputs)


if __name__ == "__main__":
    key = jax.random.PRNGKey(0)
    pkey, xkey = jax.random.split(key)
    params = init_params(pkey)
    flat_w = prepare_weights(params)
    x = jax.random.normal(xkey, (BATCH, IN_CHANS, SPA_IMG, SPA_IMG), dtype=jnp.float32)

    out = model_forward(flat_w, x)
    out = jax.block_until_ready(out)

    assert out.shape == (BATCH, NCLASS), out.shape
    assert bool(jnp.all(jnp.isfinite(out)))
    print("KERNEL_OK")
</pallas_src>

<mosaic_0001>
module attributes {stable_mosaic.version = 11 : i64} {
  func.func @_model_kernel(%arg0: memref<8x256xf32, #tpu.memory_space<vmem>>, %arg1: memref<4x50xf32, #tpu.memory_space<vmem>>, %arg2: memref<256x512xf32, #tpu.memory_space<vmem>>, %arg3: memref<1x512xf32, #tpu.memory_space<vmem>>, %arg4: memref<512x32xf32, #tpu.memory_space<vmem>>, %arg5: memref<1x32xf32, #tpu.memory_space<vmem>>, %arg6: memref<50x32xf32, #tpu.memory_space<vmem>>, %arg7: memref<1x32xf32, #tpu.memory_space<vmem>>, %arg8: memref<8x32xf32, #tpu.memory_space<vmem>>, %arg9: memref<2x32xf32, #tpu.memory_space<vmem>>, %arg10: memref<4x32xf32, #tpu.memory_space<vmem>>, %arg11: memref<2x32xf32, #tpu.memory_space<vmem>>, %arg12: memref<208x64xf32, #tpu.memory_space<vmem>>, %arg13: memref<80x32xf32, #tpu.memory_space<vmem>>, %arg14: memref<208x64xf32, #tpu.memory_space<vmem>>, %arg15: memref<80x32xf32, #tpu.memory_space<vmem>>, %arg16: memref<32x32xf32, #tpu.memory_space<vmem>>, %arg17: memref<208x64xf32, #tpu.memory_space<vmem>>, %arg18: memref<80x32xf32, #tpu.memory_space<vmem>>, %arg19: memref<208x64xf32, #tpu.memory_space<vmem>>, %arg20: memref<80x32xf32, #tpu.memory_space<vmem>>, %arg21: memref<32x32xf32, #tpu.memory_space<vmem>>, %arg22: memref<32x10xf32, #tpu.memory_space<vmem>>, %arg23: memref<1x10xf32, #tpu.memory_space<vmem>>, %arg24: memref<2x10xf32, #tpu.memory_space<vmem>>) attributes {dimension_semantics = [], scalar_prefetch = 0 : i64, scratch_operands = 0 : i64, tpu.core_type = #tpu.core_type<tc>} {
    %c0 = arith.constant 0 : index
    %c0_0 = arith.constant 0 : index
    %0 = vector.load %arg0[%c0, %c0_0] : memref<8x256xf32, #tpu.memory_space<vmem>>, vector<8x256xf32>
    %c0_1 = arith.constant 0 : index
    %c0_2 = arith.constant 0 : index
    %1 = vector.load %arg1[%c0_1, %c0_2] : memref<4x50xf32, #tpu.memory_space<vmem>>, vector<4x50xf32>
    %c0_3 = arith.constant 0 : index
    %c0_4 = arith.constant 0 : index
    %2 = vector.load %arg2[%c0_3, %c0_4] : memref<256x512xf32, #tpu.memory_space<vmem>>, vector<256x512xf32>
    %c0_5 = arith.constant 0 : index
    %c0_6 = arith.constant 0 : index
    %3 = vector.load %arg3[%c0_5, %c0_6] : memref<1x512xf32, #tpu.memory_space<vmem>>, vector<1x512xf32>
    %c0_7 = arith.constant 0 : index
    %c0_8 = arith.constant 0 : index
    %4 = vector.load %arg4[%c0_7, %c0_8] : memref<512x32xf32, #tpu.memory_space<vmem>>, vector<512x32xf32>
    %c0_9 = arith.constant 0 : index
    %c0_10 = arith.constant 0 : index
    %5 = vector.load %arg5[%c0_9, %c0_10] : memref<1x32xf32, #tpu.memory_space<vmem>>, vector<1x32xf32>
    %c0_11 = arith.constant 0 : index
    %c0_12 = arith.constant 0 : index
    %6 = vector.load %arg6[%c0_11, %c0_12] : memref<50x32xf32, #tpu.memory_space<vmem>>, vector<50x32xf32>
    %c0_13 = arith.constant 0 : index
    %c0_14 = arith.constant 0 : index
    %7 = vector.load %arg7[%c0_13, %c0_14] : memref<1x32xf32, #tpu.memory_space<vmem>>, vector<1x32xf32>
    %c0_15 = arith.constant 0 : index
    %c0_16 = arith.constant 0 : index
    %8 = vector.load %arg8[%c0_15, %c0_16] : memref<8x32xf32, #tpu.memory_space<vmem>>, vector<8x32xf32>
    %c0_17 = arith.constant 0 : index
    %c0_18 = arith.constant 0 : index
    %9 = vector.load %arg9[%c0_17, %c0_18] : memref<2x32xf32, #tpu.memory_space<vmem>>, vector<2x32xf32>
    %c0_19 = arith.constant 0 : index
    %c0_20 = arith.constant 0 : index
    %10 = vector.load %arg10[%c0_19, %c0_20] : memref<4x32xf32, #tpu.memory_space<vmem>>, vector<4x32xf32>
    %c0_21 = arith.constant 0 : index
    %c0_22 = arith.constant 0 : index
    %11 = vector.load %arg11[%c0_21, %c0_22] : memref<2x32xf32, #tpu.memory_space<vmem>>, vector<2x32xf32>
    %c0_23 = arith.constant 0 : index
    %c0_24 = arith.constant 0 : index
    %12 = vector.load %arg12[%c0_23, %c0_24] : memref<208x64xf32, #tpu.memory_space<vmem>>, vector<32x64xf32>
    %c32 = arith.constant 32 : index
    %c0_25 = arith.constant 0 : index
    %13 = vector.load %arg12[%c32, %c0_25] : memref<208x64xf32, #tpu.memory_space<vmem>>, vector<32x64xf32>
    %c64 = arith.constant 64 : index
    %c0_26 = arith.constant 0 : index
    %14 = vector.load %arg12[%c64, %c0_26] : memref<208x64xf32, #tpu.memory_space<vmem>>, vector<64x64xf32>
    %c160 = arith.constant 160 : index
    %c0_27 = arith.constant 0 : index
    %15 = vector.load %arg12[%c160, %c0_27] : memref<208x64xf32, #tpu.memory_space<vmem>>, vector<16x64xf32>
    %c176 = arith.constant 176 : index
    %c0_28 = arith.constant 0 : index
    %16 = vector.load %arg12[%c176, %c0_28] : memref<208x64xf32, #tpu.memory_space<vmem>>, vector<4x64xf32>
    %c184 = arith.constant 184 : index
    %c0_29 = arith.constant 0 : index
    %17 = vector.load %arg12[%c184, %c0_29] : memref<208x64xf32, #tpu.memory_space<vmem>>, vector<1x64xf32>
    %c192 = arith.constant 192 : index
    %c0_30 = arith.constant 0 : index
    %18 = vector.load %arg12[%c192, %c0_30] : memref<208x64xf32, #tpu.memory_space<vmem>>, vector<1x64xf32>
    %c200 = arith.constant 200 : index
    %c0_31 = arith.constant 0 : index
    %19 = vector.load %arg12[%c200, %c0_31] : memref<208x64xf32, #tpu.memory_space<vmem>>, vector<1x64xf32>
    %c0_32 = arith.constant 0 : index
    %c0_33 = arith.constant 0 : index
    %20 = vector.load %arg13[%c0_32, %c0_33] : memref<80x32xf32, #tpu.memory_space<vmem>>, vector<64x32xf32>
    %c64_34 = arith.constant 64 : index
    %c0_35 = arith.constant 0 : index
    %21 = vector.load %arg13[%c64_34, %c0_35] : memref<80x32xf32, #tpu.memory_space<vmem>>, vector<1x32xf32>
    %c72 = arith.constant 72 : index
    %c0_36 = arith.constant 0 : index
    %22 = vector.load %arg13[%c72, %c0_36] : memref<80x32xf32, #tpu.memory_space<vmem>>, vector<1x32xf32>
    %c128 = arith.constant 128 : index
    %c0_37 = arith.constant 0 : index
    %23 = vector.load %arg12[%c128, %c0_37] : memref<208x64xf32, #tpu.memory_space<vmem>>, vector<32x64xf32>
    %c0_38 = arith.constant 0 : index
    %c0_39 = arith.constant 0 : index
    %24 = vector.load %arg14[%c0_38, %c0_39] : memref<208x64xf32, #tpu.memory_space<vmem>>, vector<32x64xf32>
    %c32_40 = arith.constant 32 : index
    %c0_41 = arith.constant 0 : index
    %25 = vector.load %arg14[%c32_40, %c0_41] : memref<208x64xf32, #tpu.memory_space<vmem>>, vector<32x64xf32>
    %c64_42 = arith.constant 64 : index
    %c0_43 = arith.constant 0 : index
    %26 = vector.load %arg14[%c64_42, %c0_43] : memref<208x64xf32, #tpu.memory_space<vmem>>, vector<64x64xf32>
    %c160_44 = arith.constant 160 : index
    %c0_45 = arith.constant 0 : index
    %27 = vector.load %arg14[%c160_44, %c0_45] : memref<208x64xf32, #tpu.memory_space<vmem>>, vector<16x64xf32>
    %c176_46 = arith.constant 176 : index
    %c0_47 = arith.constant 0 : index
    %28 = vector.load %arg14[%c176_46, %c0_47] : memref<208x64xf32, #tpu.memory_space<vmem>>, vector<4x64xf32>
    %c184_48 = arith.constant 184 : index
    %c0_49 = arith.constant 0 : index
    %29 = vector.load %arg14[%c184_48, %c0_49] : memref<208x64xf32, #tpu.memory_space<vmem>>, vector<1x64xf32>
    %c192_50 = arith.constant 192 : index
    %c0_51 = arith.constant 0 : index
    %30 = vector.load %arg14[%c192_50, %c0_51] : memref<208x64xf32, #tpu.memory_space<vmem>>, vector<1x64xf32>
    %c200_52 = arith.constant 200 : index
    %c0_53 = arith.constant 0 : index
    %31 = vector.load %arg14[%c200_52, %c0_53] : memref<208x64xf32, #tpu.memory_space<vmem>>, vector<1x64xf32>
    %c0_54 = arith.constant 0 : index
    %c0_55 = arith.constant 0 : index
    %32 = vector.load %arg15[%c0_54, %c0_55] : memref<80x32xf32, #tpu.memory_space<vmem>>, vector<64x32xf32>
    %c64_56 = arith.constant 64 : index
    %c0_57 = arith.constant 0 : index
    %33 = vector.load %arg15[%c64_56, %c0_57] : memref<80x32xf32, #tpu.memory_space<vmem>>, vector<1x32xf32>
    %c72_58 = arith.constant 72 : index
    %c0_59 = arith.constant 0 : index
    %34 = vector.load %arg15[%c72_58, %c0_59] : memref<80x32xf32, #tpu.memory_space<vmem>>, vector<1x32xf32>
    %c128_60 = arith.constant 128 : index
    %c0_61 = arith.constant 0 : index
    %35 = vector.load %arg14[%c128_60, %c0_61] : memref<208x64xf32, #tpu.memory_space<vmem>>, vector<32x64xf32>
    %c0_62 = arith.constant 0 : index
    %c0_63 = arith.constant 0 : index
    %36 = vector.load %arg16[%c0_62, %c0_63] : memref<32x32xf32, #tpu.memory_space<vmem>>, vector<32x32xf32>
    %c0_64 = arith.constant 0 : index
    %c0_65 = arith.constant 0 : index
    %37 = vector.load %arg17[%c0_64, %c0_65] : memref<208x64xf32, #tpu.memory_space<vmem>>, vector<32x64xf32>
    %c32_66 = arith.constant 32 : index
    %c0_67 = arith.constant 0 : index
    %38 = vector.load %arg17[%c32_66, %c0_67] : memref<208x64xf32, #tpu.memory_space<vmem>>, vector<32x64xf32>
    %c64_68 = arith.constant 64 : index
    %c0_69 = arith.constant 0 : index
    %39 = vector.load %arg17[%c64_68, %c0_69] : memref<208x64xf32, #tpu.memory_space<vmem>>, vector<64x64xf32>
    %c160_70 = arith.constant 160 : index
    %c0_71 = arith.constant 0 : index
    %40 = vector.load %arg17[%c160_70, %c0_71] : memref<208x64xf32, #tpu.memory_space<vmem>>, vector<16x64xf32>
    %c176_72 = arith.constant 176 : index
    %c0_73 = arith.constant 0 : index
    %41 = vector.load %arg17[%c176_72, %c0_73] : memref<208x64xf32, #tpu.memory_space<vmem>>, vector<4x64xf32>
    %c184_74 = arith.constant 184 : index
    %c0_75 = arith.constant 0 : index
    %42 = vector.load %arg17[%c184_74, %c0_75] : memref<208x64xf32, #tpu.memory_space<vmem>>, vector<1x64xf32>
    %c192_76 = arith.constant 192 : index
    %c0_77 = arith.constant 0 : index
    %43 = vector.load %arg17[%c192_76, %c0_77] : memref<208x64xf32, #tpu.memory_space<vmem>>, vector<1x64xf32>
    %c200_78 = arith.constant 200 : index
    %c0_79 = arith.constant 0 : index
    %44 = vector.load %arg17[%c200_78, %c0_79] : memref<208x64xf32, #tpu.memory_space<vmem>>, vector<1x64xf32>
    %c0_80 = arith.constant 0 : index
    %c0_81 = arith.constant 0 : index
    %45 = vector.load %arg18[%c0_80, %c0_81] : memref<80x32xf32, #tpu.memory_space<vmem>>, vector<64x32xf32>
    %c64_82 = arith.constant 64 : index
    %c0_83 = arith.constant 0 : index
    %46 = vector.load %arg18[%c64_82, %c0_83] : memref<80x32xf32, #tpu.memory_space<vmem>>, vector<1x32xf32>
    %c72_84 = arith.constant 72 : index
    %c0_85 = arith.constant 0 : index
    %47 = vector.load %arg18[%c72_84, %c0_85] : memref<80x32xf32, #tpu.memory_space<vmem>>, vector<1x32xf32>
    %c128_86 = arith.constant 128 : index
    %c0_87 = arith.constant 0 : index
    %48 = vector.load %arg17[%c128_86, %c0_87] : memref<208x64xf32, #tpu.memory_space<vmem>>, vector<32x64xf32>
    %c0_88 = arith.constant 0 : index
    %c0_89 = arith.constant 0 : index
    %49 = vector.load %arg19[%c0_88, %c0_89] : memref<208x64xf32, #tpu.memory_space<vmem>>, vector<32x64xf32>
    %c32_90 = arith.constant 32 : index
    %c0_91 = arith.constant 0 : index
    %50 = vector.load %arg19[%c32_90, %c0_91] : memref<208x64xf32, #tpu.memory_space<vmem>>, vector<32x64xf32>
    %c64_92 = arith.constant 64 : index
    %c0_93 = arith.constant 0 : index
    %51 = vector.load %arg19[%c64_92, %c0_93] : memref<208x64xf32, #tpu.memory_space<vmem>>, vector<64x64xf32>
    %c160_94 = arith.constant 160 : index
    %c0_95 = arith.constant 0 : index
    %52 = vector.load %arg19[%c160_94, %c0_95] : memref<208x64xf32, #tpu.memory_space<vmem>>, vector<16x64xf32>
    %c176_96 = arith.constant 176 : index
    %c0_97 = arith.constant 0 : index
    %53 = vector.load %arg19[%c176_96, %c0_97] : memref<208x64xf32, #tpu.memory_space<vmem>>, vector<4x64xf32>
    %c184_98 = arith.constant 184 : index
    %c0_99 = arith.constant 0 : index
    %54 = vector.load %arg19[%c184_98, %c0_99] : memref<208x64xf32, #tpu.memory_space<vmem>>, vector<1x64xf32>
    %c192_100 = arith.constant 192 : index
    %c0_101 = arith.constant 0 : index
    %55 = vector.load %arg19[%c192_100, %c0_101] : memref<208x64xf32, #tpu.memory_space<vmem>>, vector<1x64xf32>
    %c200_102 = arith.constant 200 : index
    %c0_103 = arith.constant 0 : index
    %56 = vector.load %arg19[%c200_102, %c0_103] : memref<208x64xf32, #tpu.memory_space<vmem>>, vector<1x64xf32>
    %c0_104 = arith.constant 0 : index
    %c0_105 = arith.constant 0 : index
    %57 = vector.load %arg20[%c0_104, %c0_105] : memref<80x32xf32, #tpu.memory_space<vmem>>, vector<64x32xf32>
    %c64_106 = arith.constant 64 : index
    %c0_107 = arith.constant 0 : index
    %58 = vector.load %arg20[%c64_106, %c0_107] : memref<80x32xf32, #tpu.memory_space<vmem>>, vector<1x32xf32>
    %c72_108 = arith.constant 72 : index
    %c0_109 = arith.constant 0 : index
    %59 = vector.load %arg20[%c72_108, %c0_109] : memref<80x32xf32, #tpu.memory_space<vmem>>, vector<1x32xf32>
    %c128_110 = arith.constant 128 : index
    %c0_111 = arith.constant 0 : index
    %60 = vector.load %arg19[%c128_110, %c0_111] : memref<208x64xf32, #tpu.memory_space<vmem>>, vector<32x64xf32>
    %c0_112 = arith.constant 0 : index
    %c0_113 = arith.constant 0 : index
    %61 = vector.load %arg21[%c0_112, %c0_113] : memref<32x32xf32, #tpu.memory_space<vmem>>, vector<32x32xf32>
    %c0_114 = arith.constant 0 : index
    %c0_115 = arith.constant 0 : index
    %62 = vector.load %arg22[%c0_114, %c0_115] : memref<32x10xf32, #tpu.memory_space<vmem>>, vector<32x10xf32>
    %c0_116 = arith.constant 0 : index
    %c0_117 = arith.constant 0 : index
    %63 = vector.load %arg23[%c0_116, %c0_117] : memref<1x10xf32, #tpu.memory_space<vmem>>, vector<1x10xf32>
    %cst = arith.constant dense<0.000000e+00> : vector<8x512xf32>
    %64 = tpu.matmul %0, %2, %cst {dimension_numbers = #tpu.dot_dimension_numbers<[1], [0], [0], [1], [0, 0, 1, 1], [], []>} : vector<8x256xf32>, vector<256x512xf32>, vector<8x512xf32> -> vector<8x512xf32>
    %65 = vector.broadcast %3 : vector<1x512xf32> to vector<8x512xf32>
    %66 = arith.addf %64, %65 : vector<8x512xf32>
    %cst_118 = arith.constant 0.000000e+00 : f32
    %67 = vector.broadcast %cst_118 : f32 to vector<8x512xf32>
    %68 = arith.maximumf %66, %67 : vector<8x512xf32>
    %cst_119 = arith.constant dense<0.000000e+00> : vector<8x32xf32>
    %69 = tpu.matmul %68, %4, %cst_119 {dimension_numbers = #tpu.dot_dimension_numbers<[1], [0], [0], [1], [0, 0, 1, 1], [], []>} : vector<8x512xf32>, vector<512x32xf32>, vector<8x32xf32> -> vector<8x32xf32>
    %70 = vector.broadcast %5 : vector<1x32xf32> to vector<8x32xf32>
    %71 = arith.addf %69, %70 : vector<8x32xf32>
    %72 = arith.addf %71, %8 : vector<8x32xf32>
    %73 = tpu.concatenate %72, %9 in 0 : vector<8x32xf32>, vector<2x32xf32> -> vector<10x32xf32>
    %cst_120 = arith.constant dense<0.000000e+00> : vector<4x32xf32>
    %74 = tpu.matmul %1, %6, %cst_120 {dimension_numbers = #tpu.dot_dimension_numbers<[1], [0], [0], [1], [0, 0, 1, 1], [], []>} : vector<4x50xf32>, vector<50x32xf32>, vector<4x32xf32> -> vector<4x32xf32>
    %75 = vector.broadcast %7 : vector<1x32xf32> to vector<4x32xf32>
    %76 = arith.addf %74, %75 : vector<4x32xf32>
    %77 = arith.addf %76, %10 : vector<4x32xf32>
    %78 = tpu.concatenate %77, %11 in 0 : vector<4x32xf32>, vector<2x32xf32> -> vector<6x32xf32>
    %cst_121 = arith.constant dense<0.000000e+00> : vector<10xf32>
    %79 = vector.multi_reduction <add>, %73, %cst_121 [1] : vector<10x32xf32> to vector<10xf32>
    %80 = vector.shape_cast %79 : vector<10xf32> to vector<10x1xf32>
    %cst_122 = arith.constant 3.200000e+01 : f32
    %81 = vector.broadcast %cst_122 : f32 to vector<10x1xf32>
    %82 = arith.divf %80, %81 : vector<10x1xf32>
    %83 = vector.broadcast %82 : vector<10x1xf32> to vector<10x32xf32>
    %84 = arith.subf %73, %83 : vector<10x32xf32>
    %85 = arith.mulf %84, %84 : vector<10x32xf32>
    %cst_123 = arith.constant dense<0.000000e+00> : vector<10xf32>
    %86 = vector.multi_reduction <add>, %85, %cst_123 [1] : vector<10x32xf32> to vector<10xf32>
    %87 = vector.shape_cast %86 : vector<10xf32> to vector<10x1xf32>
    %cst_124 = arith.constant 3.200000e+01 : f32
    %88 = vector.broadcast %cst_124 : f32 to vector<10x1xf32>
    %89 = arith.divf %87, %88 : vector<10x1xf32>
    %cst_125 = arith.constant 9.99999997E-7 : f32
    %90 = vector.broadcast %cst_125 : f32 to vector<10x1xf32>
    %91 = arith.addf %89, %90 : vector<10x1xf32>
    %92 = math.rsqrt %91 : vector<10x1xf32>
    %93 = vector.broadcast %92 : vector<10x1xf32> to vector<10x32xf32>
    %94 = arith.mulf %84, %93 : vector<10x32xf32>
    %95 = vector.broadcast %21 : vector<1x32xf32> to vector<10x32xf32>
    %96 = arith.mulf %94, %95 : vector<10x32xf32>
    %97 = vector.broadcast %22 : vector<1x32xf32> to vector<10x32xf32>
    %98 = arith.addf %96, %97 : vector<10x32xf32>
    %cst_126 = arith.constant dense<0.000000e+00> : vector<10x64xf32>
    %99 = tpu.matmul %98, %12, %cst_126 {dimension_numbers = #tpu.dot_dimension_numbers<[1], [0], [0], [1], [0, 0, 1, 1], [], []>} : vector<10x32xf32>, vector<32x64xf32>, vector<10x64xf32> -> vector<10x64xf32>
    %cst_127 = arith.constant dense<0.000000e+00> : vector<10x64xf32>
    %100 = tpu.matmul %98, %13, %cst_127 {dimension_numbers = #tpu.dot_dimension_numbers<[1], [0], [0], [1], [0, 0, 1, 1], [], []>} : vector<10x32xf32>, vector<32x64xf32>, vector<10x64xf32> -> vector<10x64xf32>
    %cst_128 = arith.constant 0.000000e+00 : f32
    %101 = vector.broadcast %cst_128 : f32 to vector<10x64xf32>
    %102 = arith.subf %101, %100 : vector<10x64xf32>
    %103 = math.exp %102 : vector<10x64xf32>
    %cst_129 = arith.constant 1.000000e+00 : f32
    %104 = vector.broadcast %cst_129 : f32 to vector<10x64xf32>
    %105 = arith.addf %104, %103 : vector<10x64xf32>
    %cst_130 = arith.constant 1.000000e+00 : f32
    %106 = vector.broadcast %cst_130 : f32 to vector<10x64xf32>
    %107 = arith.divf %106, %105 : vector<10x64xf32>
    %108 = arith.mulf %100, %107 : vector<10x64xf32>
    %109 = vector.extract_strided_slice %16 {offsets = [3, 0], sizes = [1, 64], strides = [1, 1]} : vector<4x64xf32> to vector<1x64xf32>
    %110 = vector.extract_strided_slice %99 {offsets = [0, 0], sizes = [2, 64], strides = [1, 1]} : vector<10x64xf32> to vector<2x64xf32>
    %111 = vector.broadcast %109 : vector<1x64xf32> to vector<2x64xf32>
    %112 = arith.mulf %110, %111 : vector<2x64xf32>
    %113 = vector.extract_strided_slice %16 {offsets = [3, 0], sizes = [1, 64], strides = [1, 1]} : vector<4x64xf32> to vector<1x64xf32>
    %114 = vector.extract_strided_slice %99 {offsets = [2, 0], sizes = [2, 64], strides = [1, 1]} : vector<10x64xf32> to vector<2x64xf32>
    %115 = vector.broadcast %113 : vector<1x64xf32> to vector<2x64xf32>
    %116 = arith.mulf %114, %115 : vector<2x64xf32>
    %117 = vector.extract_strided_slice %16 {offsets = [2, 0], sizes = [1, 64], strides = [1, 1]} : vector<4x64xf32> to vector<1x64xf32>
    %118 = vector.extract_strided_slice %99 {offsets = [0, 0], sizes = [2, 64], strides = [1, 1]} : vector<10x64xf32> to vector<2x64xf32>
    %119 = vector.broadcast %117 : vector<1x64xf32> to vector<2x64xf32>
    %120 = arith.mulf %118, %119 : vector<2x64xf32>
    %121 = arith.addf %116, %120 : vector<2x64xf32>
    %122 = vector.extract_strided_slice %16 {offsets = [3, 0], sizes = [1, 64], strides = [1, 1]} : vector<4x64xf32> to vector<1x64xf32>
    %123 = vector.extract_strided_slice %99 {offsets = [4, 0], sizes = [2, 64], strides = [1, 1]} : vector<10x64xf32> to vector<2x64xf32>
    %124 = vector.broadcast %122 : vector<1x64xf32> to vector<2x64xf32>
    %125 = arith.mulf %123, %124 : vector<2x64xf32>
    %126 = vector.extract_strided_slice %16 {offsets = [2, 0], sizes = [1, 64], strides = [1, 1]} : vector<4x64xf32> to vector<1x64xf32>
    %127 = vector.extract_strided_slice %99 {offsets = [2, 0], sizes = [2, 64], strides = [1, 1]} : vector<10x64xf32> to vector<2x64xf32>
    %128 = vector.broadcast %126 : vector<1x64xf32> to vector<2x64xf32>
    %129 = arith.mulf %127, %128 : vector<2x64xf32>
    %130 = arith.addf %125, %129 : vector<2x64xf32>
    %131 = vector.extract_strided_slice %16 {offsets = [1, 0], sizes = [1, 64], strides = [1, 1]} : vector<4x64xf32> to vector<1x64xf32>
    %132 = vector.extract_strided_slice %99 {offsets = [0, 0], sizes = [2, 64], strides = [1, 1]} : vector<10x64xf32> to vector<2x64xf32>
    %133 = vector.broadcast %131 : vector<1x64xf32> to vector<2x64xf32>
    %134 = arith.mulf %132, %133 : vector<2x64xf32>
    %135 = arith.addf %130, %134 : vector<2x64xf32>
    %136 = vector.extract_strided_slice %16 {offsets = [3, 0], sizes = [1, 64], strides = [1, 1]} : vector<4x64xf32> to vector<1x64xf32>
    %137 = vector.extract_strided_slice %99 {offsets = [6, 0], sizes = [2, 64], strides = [1, 1]} : vector<10x64xf32> to vector<2x64xf32>
    %138 = vector.broadcast %136 : vector<1x64xf32> to vector<2x64xf32>
    %139 = arith.mulf %137, %138 : vector<2x64xf32>
    %140 = vector.extract_strided_slice %16 {offsets = [2, 0], sizes = [1, 64], strides = [1, 1]} : vector<4x64xf32> to vector<1x64xf32>
    %141 = vector.extract_strided_slice %99 {offsets = [4, 0], sizes = [2, 64], strides = [1, 1]} : vector<10x64xf32> to vector<2x64xf32>
    %142 = vector.broadcast %140 : vector<1x64xf32> to vector<2x64xf32>
    %143 = arith.mulf %141, %142 : vector<2x64xf32>
    %144 = arith.addf %139, %143 : vector<2x64xf32>
    %145 = vector.extract_strided_slice %16 {offsets = [1, 0], sizes = [1, 64], strides = [1, 1]} : vector<4x64xf32> to vector<1x64xf32>
    %146 = vector.extract_strided_slice %99 {offsets = [2, 0], sizes = [2, 64], strides = [1, 1]} : vector<10x64xf32> to vector<2x64xf32>
    %147 = vector.broadcast %145 : vector<1x64xf32> to vector<2x64xf32>
    %148 = arith.mulf %146, %147 : vector<2x64xf32>
    %149 = arith.addf %144, %148 : vector<2x64xf32>
    %150 = vector.extract_strided_slice %16 {offsets = [0, 0], sizes = [1, 64], strides = [1, 1]} : vector<4x64xf32> to vector<1x64xf32>
    %151 = vector.extract_strided_slice %99 {offsets = [0, 0], sizes = [2, 64], strides = [1, 1]} : vector<10x64xf32> to vector<2x64xf32>
    %152 = vector.broadcast %150 : vector<1x64xf32> to vector<2x64xf32>
    %153 = arith.mulf %151, %152 : vector<2x64xf32>
    %154 = arith.addf %149, %153 : vector<2x64xf32>
    %155 = vector.extract_strided_slice %16 {offsets = [3, 0], sizes = [1, 64], strides = [1, 1]} : vector<4x64xf32> to vector<1x64xf32>
    %156 = vector.extract_strided_slice %99 {offsets = [8, 0], sizes = [2, 64], strides = [1, 1]} : vector<10x64xf32> to vector<2x64xf32>
    %157 = vector.broadcast %155 : vector<1x64xf32> to vector<2x64xf32>
    %158 = arith.mulf %156, %157 : vector<2x64xf32>
    %159 = vector.extract_strided_slice %16 {offsets = [2, 0], sizes = [1, 64], strides = [1, 1]} : vector<4x64xf32> to vector<1x64xf32>
    %160 = vector.extract_strided_slice %99 {offsets = [6, 0], sizes = [2, 64], strides = [1, 1]} : vector<10x64xf32> to vector<2x64xf32>
    %161 = vector.broadcast %159 : vector<1x64xf32> to vector<2x64xf32>
    %162 = arith.mulf %160, %161 : vector<2x64xf32>
    %163 = arith.addf %158, %162 : vector<2x64xf32>
    %164 = vector.extract_strided_slice %16 {offsets = [1, 0], sizes = [1, 64], strides = [1, 1]} : vector<4x64xf32> to vector<1x64xf32>
    %165 = vector.extract_strided_slice %99 {offsets = [4, 0], sizes = [2, 64], strides = [1, 1]} : vector<10x64xf32> to vector<2x64xf32>
    %166 = vector.broadcast %164 : vector<1x64xf32> to vector<2x64xf32>
    %167 = arith.mulf %165, %166 : vector<2x64xf32>
    %168 = arith.addf %163, %167 : vector<2x64xf32>
    %169 = vector.extract_strided_slice %16 {offsets = [0, 0], sizes = [1, 64], strides = [1, 1]} : vector<4x64xf32> to vector<1x64xf32>
    %170 = vector.extract_strided_slice %99 {offsets = [2, 0], sizes = [2, 64], strides = [1, 1]} : vector<10x64xf32> to vector<2x64xf32>
    %171 = vector.broadcast %169 : vector<1x64xf32> to vector<2x64xf32>
    %172 = arith.mulf %170, %171 : vector<2x64xf32>
    %173 = arith.addf %168, %172 : vector<2x64xf32>
    %174 = vector.extract_strided_slice %16 {offsets = [3, 0], sizes = [1, 64], strides = [1, 1]} : vector<4x64xf32> to vector<1x64xf32>
    %175 = vector.extract_strided_slice %99 {offsets = [6, 0], sizes = [2, 64], strides = [1, 1]} : vector<10x64xf32> to vector<2x64xf32>
    %176 = vector.broadcast %174 : vector<1x64xf32> to vector<2x64xf32>
    %177 = arith.mulf %175, %176 : vector<2x64xf32>
    %178 = vector.extract_strided_slice %16 {offsets = [3, 0], sizes = [1, 64], strides = [1, 1]} : vector<4x64xf32> to vector<1x64xf32>
    %179 = vector.extract_strided_slice %99 {offsets = [4, 0], sizes = [2, 64], strides = [1, 1]} : vector<10x64xf32> to vector<2x64xf32>
    %180 = vector.broadcast %178 : vector<1x64xf32> to vector<2x64xf32>
    %181 = arith.mulf %179, %180 : vector<2x64xf32>
    %182 = vector.extract_strided_slice %16 {offsets = [2, 0], sizes = [1, 64], strides = [1, 1]} : vector<4x64xf32> to vector<1x64xf32>
    %183 = vector.extract_strided_slice %99 {offsets = [6, 0], sizes = [2, 64], strides = [1, 1]} : vector<10x64xf32> to vector<2x64xf32>
    %184 = vector.broadcast %182 : vector<1x64xf32> to vector<2x64xf32>
    %185 = arith.mulf %183, %184 : vector<2x64xf32>
    %186 = arith.addf %181, %185 : vector<2x64xf32>
    %187 = vector.extract_strided_slice %16 {offsets = [3, 0], sizes = [1, 64], strides = [1, 1]} : vector<4x64xf32> to vector<1x64xf32>
    %188 = vector.extract_strided_slice %99 {offsets = [2, 0], sizes = [2, 64], strides = [1, 1]} : vector<10x64xf32> to vector<2x64xf32>
    %189 = vector.broadcast %187 : vector<1x64xf32> to vector<2x64xf32>
    %190 = arith.mulf %188, %189 : vector<2x64xf32>
    %191 = vector.extract_strided_slice %16 {offsets = [2, 0], sizes = [1, 64], strides = [1, 1]} : vector<4x64xf32> to vector<1x64xf32>
    %192 = vector.extract_strided_slice %99 {offsets = [4, 0], sizes = [2, 64], strides = [1, 1]} : vector<10x64xf32> to vector<2x64xf32>
    %193 = vector.broadcast %191 : vector<1x64xf32> to vector<2x64xf32>
    %194 = arith.mulf %192, %193 : vector<2x64xf32>
    %195 = arith.addf %190, %194 : vector<2x64xf32>
    %196 = vector.extract_strided_slice %16 {offsets = [1, 0], sizes = [1, 64], strides = [1, 1]} : vector<4x64xf32> to vector<1x64xf32>
    %197 = vector.extract_strided_slice %99 {offsets = [6, 0], sizes = [2, 64], strides = [1, 1]} : vector<10x64xf32> to vector<2x64xf32>
    %198 = vector.broadcast %196 : vector<1x64xf32> to vector<2x64xf32>
    %199 = arith.mulf %197, %198 : vector<2x64xf32>
    %200 = arith.addf %195, %199 : vector<2x64xf32>
    %201 = vector.extract_strided_slice %16 {offsets = [3, 0], sizes = [1, 64], strides = [1, 1]} : vector<4x64xf32> to vector<1x64xf32>
    %202 = vector.extract_strided_slice %99 {offsets = [0, 0], sizes = [2, 64], strides = [1, 1]} : vector<10x64xf32> to vector<2x64xf32>
    %203 = vector.broadcast %201 : vector<1x64xf32> to vector<2x64xf32>
    %204 = arith.mulf %202, %203 : vector<2x64xf32>
    %205 = vector.extract_strided_slice %16 {offsets = [2, 0], sizes = [1, 64], strides = [1, 1]} : vector<4x64xf32> to vector<1x64xf32>
    %206 = vector.extract_strided_slice %99 {offsets = [2, 0], sizes = [2, 64], strides = [1, 1]} : vector<10x64xf32> to vector<2x64xf32>
    %207 = vector.broadcast %205 : vector<1x64xf32> to vector<2x64xf32>
    %208 = arith.mulf %206, %207 : vector<2x64xf32>
    %209 = arith.addf %204, %208 : vector<2x64xf32>
    %210 = vector.extract_strided_slice %16 {offsets = [1, 0], sizes = [1, 64], strides = [1, 1]} : vector<4x64xf32> to vector<1x64xf32>
    %211 = vector.extract_strided_slice %99 {offsets = [4, 0], sizes = [2, 64], strides = [1, 1]} : vector<10x64xf32> to vector<2x64xf32>
    %212 = vector.broadcast %210 : vector<1x64xf32> to vector<2x64xf32>
    %213 = arith.mulf %211, %212 : vector<2x64xf32>
    %214 = arith.addf %209, %213 : vector<2x64xf32>
    %215 = vector.extract_strided_slice %16 {offsets = [0, 0], sizes = [1, 64], strides = [1, 1]} : vector<4x64xf32> to vector<1x64xf32>
    %216 = vector.extract_strided_slice %99 {offsets = [6, 0], sizes = [2, 64], strides = [1, 1]} : vector<10x64xf32> to vector<2x64xf32>
    %217 = vector.broadcast %215 : vector<1x64xf32> to vector<2x64xf32>
    %218 = arith.mulf %216, %217 : vector<2x64xf32>
    %219 = arith.addf %214, %218 : vector<2x64xf32>
    %220 = vector.extract_strided_slice %16 {offsets = [3, 0], sizes = [1, 64], strides = [1, 1]} : vector<4x64xf32> to vector<1x64xf32>
    %221 = vector.extract_strided_slice %99 {offsets = [8, 0], sizes = [2, 64], strides = [1, 1]} : vector<10x64xf32> to vector<2x64xf32>
    %222 = vector.broadcast %220 : vector<1x64xf32> to vector<2x64xf32>
    %223 = arith.mulf %221, %222 : vector<2x64xf32>
    %224 = vector.extract_strided_slice %16 {offsets = [2, 0], sizes = [1, 64], strides = [1, 1]} : vector<4x64xf32> to vector<1x64xf32>
    %225 = vector.extract_strided_slice %99 {offsets = [0, 0], sizes = [2, 64], strides = [1, 1]} : vector<10x64xf32> to vector<2x64xf32>
    %226 = vector.broadcast %224 : vector<1x64xf32> to vector<2x64xf32>
    %227 = arith.mulf %225, %226 : vector<2x64xf32>
    %228 = arith.addf %223, %227 : vector<2x64xf32>
    %229 = vector.extract_strided_slice %16 {offsets = [1, 0], sizes = [1, 64], strides = [1, 1]} : vector<4x64xf32> to vector<1x64xf32>
    %230 = vector.extract_strided_slice %99 {offsets = [2, 0], sizes = [2, 64], strides = [1, 1]} : vector<10x64xf32> to vector<2x64xf32>
    %231 = vector.broadcast %229 : vector<1x64xf32> to vector<2x64xf32>
    %232 = arith.mulf %230, %231 : vector<2x64xf32>
    %233 = arith.addf %228, %232 : vector<2x64xf32>
    %234 = vector.extract_strided_slice %16 {offsets = [0, 0], sizes = [1, 64], strides = [1, 1]} : vector<4x64xf32> to vector<1x64xf32>
    %235 = vector.extract_strided_slice %99 {offsets = [4, 0], sizes = [2, 64], strides = [1, 1]} : vector<10x64xf32> to vector<2x64xf32>
    %236 = vector.broadcast %234 : vector<1x64xf32> to vector<2x64xf32>
    %237 = arith.mulf %235, %236 : vector<2x64xf32>
    %238 = arith.addf %233, %237 : vector<2x64xf32>
    %239 = tpu.concatenate %112, %121, %135, %154, %173, %177, %186, %200, %219, %238 in 0 : vector<2x64xf32>, vector<2x64xf32>, vector<2x64xf32>, vector<2x64xf32>, vector<2x64xf32>, vector<2x64xf32>, vector<2x64xf32>, vector<2x64xf32>, vector<2x64xf32>, vector<2x64xf32> -> vector<20x64xf32>
    %240 = vector.broadcast %17 : vector<1x64xf32> to vector<20x64xf32>
    %241 = arith.addf %239, %240 : vector<20x64xf32>
    %cst_131 = arith.constant 0.000000e+00 : f32
    %242 = vector.broadcast %cst_131 : f32 to vector<20x64xf32>
    %243 = arith.subf %242, %241 : vector<20x64xf32>
    %244 = math.exp %243 : vector<20x64xf32>
    %cst_132 = arith.constant 1.000000e+00 : f32
    %245 = vector.broadcast %cst_132 : f32 to vector<20x64xf32>
    %246 = arith.addf %245, %244 : vector<20x64xf32>
    %cst_133 = arith.constant 1.000000e+00 : f32
    %247 = vector.broadcast %cst_133 : f32 to vector<20x64xf32>
    %248 = arith.divf %247, %246 : vector<20x64xf32>
    %249 = arith.mulf %241, %248 : vector<20x64xf32>
    %cst_134 = arith.constant dense<0.000000e+00> : vector<20x64xf32>
    %250 = tpu.matmul %249, %14, %cst_134 {dimension_numbers = #tpu.dot_dimension_numbers<[1], [0], [0], [1], [0, 0, 1, 1], [], []>} : vector<20x64xf32>, vector<64x64xf32>, vector<20x64xf32> -> vector<20x64xf32>
    %251 = vector.broadcast %18 : vector<1x64xf32> to vector<20x64xf32>
    %252 = arith.addf %250, %251 : vector<20x64xf32>
    %cst_135 = arith.constant 0.000000e+00 : f32
    %253 = vector.broadcast %cst_135 : f32 to vector<20x64xf32>
    %254 = arith.maximumf %252, %253 : vector<20x64xf32>
    %255 = math.absf %252 : vector<20x64xf32>
    %cst_136 = arith.constant 0.000000e+00 : f32
    %256 = vector.broadcast %cst_136 : f32 to vector<20x64xf32>
    %257 = arith.subf %256, %255 : vector<20x64xf32>
    %258 = math.exp %257 : vector<20x64xf32>
    %259 = math.log1p %258 : vector<20x64xf32>
    %260 = arith.addf %254, %259 : vector<20x64xf32>
    %cst_137 = arith.constant dense<0.000000e+00> : vector<32x20xf32>
    %261 = tpu.matmul %23, %249, %cst_137 {dimension_numbers = #tpu.dot_dimension_numbers<[1], [1], [0], [0], [0, 0, 1, 0], [], []>} : vector<32x64xf32>, vector<20x64xf32>, vector<32x20xf32> -> vector<32x20xf32>
    %262 = vector.extract_strided_slice %261 {offsets = [0, 0], sizes = [16, 20], strides = [1, 1]} : vector<32x20xf32> to vector<16x20xf32>
    %263 = vector.extract_strided_slice %261 {offsets = [16, 0], sizes = [16, 20], strides = [1, 1]} : vector<32x20xf32> to vector<16x20xf32>
    %cst_138 = arith.constant 0.000000e+00 : f32
    %264 = vector.broadcast %cst_138 : f32 to vector<16x64xf32>
    %265 = vector.extract_strided_slice %249 {offsets = [0, 0], sizes = [1, 64], strides = [1, 1]} : vector<20x64xf32> to vector<1x64xf32>
    %266 = vector.extract_strided_slice %260 {offsets = [0, 0], sizes = [1, 64], strides = [1, 1]} : vector<20x64xf32> to vector<1x64xf32>
    %267 = vector.extract_strided_slice %262 {offsets = [0, 0], sizes = [16, 1], strides = [1, 1]} : vector<16x20xf32> to vector<16x1xf32>
    %268 = vector.extract_strided_slice %263 {offsets = [0, 0], sizes = [16, 1], strides = [1, 1]} : vector<16x20xf32> to vector<16x1xf32>
    %269 = vector.broadcast %266 : vector<1x64xf32> to vector<16x64xf32>
    %270 = arith.mulf %269, %15 : vector<16x64xf32>
    %271 = math.exp %270 : vector<16x64xf32>
    %272 = arith.mulf %271, %264 : vector<16x64xf32>
    %273 = arith.mulf %266, %265 : vector<1x64xf32>
    %274 = vector.broadcast %267 : vector<16x1xf32> to vector<16x64xf32>
    %275 = vector.broadcast %273 : vector<1x64xf32> to vector<16x64xf32>
    %276 = arith.mulf %274, %275 : vector<16x64xf32>
    %277 = arith.addf %272, %276 : vector<16x64xf32>
    %278 = vector.broadcast %268 : vector<16x1xf32> to vector<16x64xf32>
    %279 = arith.mulf %277, %278 : vector<16x64xf32>
    %cst_139 = arith.constant dense<0.000000e+00> : vector<64xf32>
    %280 = vector.multi_reduction <add>, %279, %cst_139 [0] : vector<16x64xf32> to vector<64xf32>
    %281 = vector.shape_cast %280 : vector<64xf32> to vector<1x64xf32>
    %282 = arith.mulf %19, %265 : vector<1x64xf32>
    %283 = arith.addf %281, %282 : vector<1x64xf32>
    %284 = vector.extract_strided_slice %249 {offsets = [2, 0], sizes = [1, 64], strides = [1, 1]} : vector<20x64xf32> to vector<1x64xf32>
    %285 = vector.extract_strided_slice %260 {offsets = [2, 0], sizes = [1, 64], strides = [1, 1]} : vector<20x64xf32> to vector<1x64xf32>
    %286 = vector.extract_strided_slice %262 {offsets = [0, 2], sizes = [16, 1], strides = [1, 1]} : vector<16x20xf32> to vector<16x1xf32>
    %287 = vector.extract_strided_slice %263 {offsets = [0, 2], sizes = [16, 1], strides = [1, 1]} : vector<16x20xf32> to vector<16x1xf32>
    %288 = vector.broadcast %285 : vector<1x64xf32> to vector<16x64xf32>
    %289 = arith.mulf %288, %15 : vector<16x64xf32>
    %290 = math.exp %289 : vector<16x64xf32>
    %291 = arith.mulf %290, %277 : vector<16x64xf32>
    %292 = arith.mulf %285, %284 : vector<1x64xf32>
    %293 = vector.broadcast %286 : vector<16x1xf32> to vector<16x64xf32>
    %294 = vector.broadcast %292 : vector<1x64xf32> to vector<16x64xf32>
    %295 = arith.mulf %293, %294 : vector<16x64xf32>
    %296 = arith.addf %291, %295 : vector<16x64xf32>
    %297 = vector.broadcast %287 : vector<16x1xf32> to vector<16x64xf32>
    %298 = arith.mulf %296, %297 : vector<16x64xf32>
    %cst_140 = arith.constant dense<0.000000e+00> : vector<64xf32>
    %299 = vector.multi_reduction <add>, %298, %cst_140 [0] : vector<16x64xf32> to vector<64xf32>
    %300 = vector.shape_cast %299 : vector<64xf32> to vector<1x64xf32>
    %301 = arith.mulf %19, %284 : vector<1x64xf32>
    %302 = arith.addf %300, %301 : vector<1x64xf32>
    %303 = vector.extract_strided_slice %249 {offsets = [4, 0], sizes = [1, 64], strides = [1, 1]} : vector<20x64xf32> to vector<1x64xf32>
    %304 = vector.extract_strided_slice %260 {offsets = [4, 0], sizes = [1, 64], strides = [1, 1]} : vector<20x64xf32> to vector<1x64xf32>
    %305 = vector.extract_strided_slice %262 {offsets = [0, 4], sizes = [16, 1], strides = [1, 1]} : vector<16x20xf32> to vector<16x1xf32>
    %306 = vector.extract_strided_slice %263 {offsets = [0, 4], sizes = [16, 1], strides = [1, 1]} : vector<16x20xf32> to vector<16x1xf32>
    %307 = vector.broadcast %304 : vector<1x64xf32> to vector<16x64xf32>
    %308 = arith.mulf %307, %15 : vector<16x64xf32>
    %309 = math.exp %308 : vector<16x64xf32>
    %310 = arith.mulf %309, %296 : vector<16x64xf32>
    %311 = arith.mulf %304, %303 : vector<1x64xf32>
    %312 = vector.broadcast %305 : vector<16x1xf32> to vector<16x64xf32>
    %313 = vector.broadcast %311 : vector<1x64xf32> to vector<16x64xf32>
    %314 = arith.mulf %312, %313 : vector<16x64xf32>
    %315 = arith.addf %310, %314 : vector<16x64xf32>
    %316 = vector.broadcast %306 : vector<16x1xf32> to vector<16x64xf32>
    %317 = arith.mulf %315, %316 : vector<16x64xf32>
    %cst_141 = arith.constant dense<0.000000e+00> : vector<64xf32>
    %318 = vector.multi_reduction <add>, %317, %cst_141 [0] : vector<16x64xf32> to vector<64xf32>
    %319 = vector.shape_cast %318 : vector<64xf32> to vector<1x64xf32>
    %320 = arith.mulf %19, %303 : vector<1x64xf32>
    %321 = arith.addf %319, %320 : vector<1x64xf32>
    %322 = vector.extract_strided_slice %249 {offsets = [6, 0], sizes = [1, 64], strides = [1, 1]} : vector<20x64xf32> to vector<1x64xf32>
    %323 = vector.extract_strided_slice %260 {offsets = [6, 0], sizes = [1, 64], strides = [1, 1]} : vector<20x64xf32> to vector<1x64xf32>
    %324 = vector.extract_strided_slice %262 {offsets = [0, 6], sizes = [16, 1], strides = [1, 1]} : vector<16x20xf32> to vector<16x1xf32>
    %325 = vector.extract_strided_slice %263 {offsets = [0, 6], sizes = [16, 1], strides = [1, 1]} : vector<16x20xf32> to vector<16x1xf32>
    %326 = vector.broadcast %323 : vector<1x64xf32> to vector<16x64xf32>
    %327 = arith.mulf %326, %15 : vector<16x64xf32>
    %328 = math.exp %327 : vector<16x64xf32>
    %329 = arith.mulf %328, %315 : vector<16x64xf32>
    %330 = arith.mulf %323, %322 : vector<1x64xf32>
    %331 = vector.broadcast %324 : vector<16x1xf32> to vector<16x64xf32>
    %332 = vector.broadcast %330 : vector<1x64xf32> to vector<16x64xf32>
    %333 = arith.mulf %331, %332 : vector<16x64xf32>
    %334 = arith.addf %329, %333 : vector<16x64xf32>
    %335 = vector.broadcast %325 : vector<16x1xf32> to vector<16x64xf32>
    %336 = arith.mulf %334, %335 : vector<16x64xf32>
    %cst_142 = arith.constant dense<0.000000e+00> : vector<64xf32>
    %337 = vector.multi_reduction <add>, %336, %cst_142 [0] : vector<16x64xf32> to vector<64xf32>
    %338 = vector.shape_cast %337 : vector<64xf32> to vector<1x64xf32>
    %339 = arith.mulf %19, %322 : vector<1x64xf32>
    %340 = arith.addf %338, %339 : vector<1x64xf32>
    %341 = vector.extract_strided_slice %249 {offsets = [8, 0], sizes = [1, 64], strides = [1, 1]} : vector<20x64xf32> to vector<1x64xf32>
    %342 = vector.extract_strided_slice %260 {offsets = [8, 0], sizes = [1, 64], strides = [1, 1]} : vector<20x64xf32> to vector<1x64xf32>
    %343 = vector.extract_strided_slice %262 {offsets = [0, 8], sizes = [16, 1], strides = [1, 1]} : vector<16x20xf32> to vector<16x1xf32>
    %344 = vector.extract_strided_slice %263 {offsets = [0, 8], sizes = [16, 1], strides = [1, 1]} : vector<16x20xf32> to vector<16x1xf32>
    %345 = vector.broadcast %342 : vector<1x64xf32> to vector<16x64xf32>
    %346 = arith.mulf %345, %15 : vector<16x64xf32>
    %347 = math.exp %346 : vector<16x64xf32>
    %348 = arith.mulf %347, %334 : vector<16x64xf32>
    %349 = arith.mulf %342, %341 : vector<1x64xf32>
    %350 = vector.broadcast %343 : vector<16x1xf32> to vector<16x64xf32>
    %351 = vector.broadcast %349 : vector<1x64xf32> to vector<16x64xf32>
    %352 = arith.mulf %350, %351 : vector<16x64xf32>
    %353 = arith.addf %348, %352 : vector<16x64xf32>
    %354 = vector.broadcast %344 : vector<16x1xf32> to vector<16x64xf32>
    %355 = arith.mulf %353, %354 : vector<16x64xf32>
    %cst_143 = arith.constant dense<0.000000e+00> : vector<64xf32>
    %356 = vector.multi_reduction <add>, %355, %cst_143 [0] : vector<16x64xf32> to vector<64xf32>
    %357 = vector.shape_cast %356 : vector<64xf32> to vector<1x64xf32>
    %358 = arith.mulf %19, %341 : vector<1x64xf32>
    %359 = arith.addf %357, %358 : vector<1x64xf32>
    %cst_144 = arith.constant 0.000000e+00 : f32
    %360 = vector.broadcast %cst_144 : f32 to vector<16x64xf32>
    %361 = vector.extract_strided_slice %249 {offsets = [1, 0], sizes = [1, 64], strides = [1, 1]} : vector<20x64xf32> to vector<1x64xf32>
    %362 = vector.extract_strided_slice %260 {offsets = [1, 0], sizes = [1, 64], strides = [1, 1]} : vector<20x64xf32> to vector<1x64xf32>
    %363 = vector.extract_strided_slice %262 {offsets = [0, 1], sizes = [16, 1], strides = [1, 1]} : vector<16x20xf32> to vector<16x1xf32>
    %364 = vector.extract_strided_slice %263 {offsets = [0, 1], sizes = [16, 1], strides = [1, 1]} : vector<16x20xf32> to vector<16x1xf32>
    %365 = vector.broadcast %362 : vector<1x64xf32> to vector<16x64xf32>
    %366 = arith.mulf %365, %15 : vector<16x64xf32>
    %367 = math.exp %366 : vector<16x64xf32>
    %368 = arith.mulf %367, %360 : vector<16x64xf32>
    %369 = arith.mulf %362, %361 : vector<1x64xf32>
    %370 = vector.broadcast %363 : vector<16x1xf32> to vector<16x64xf32>
    %371 = vector.broadcast %369 : vector<1x64xf32> to vector<16x64xf32>
    %372 = arith.mulf %370, %371 : vector<16x64xf32>
    %373 = arith.addf %368, %372 : vector<16x64xf32>
    %374 = vector.broadcast %364 : vector<16x1xf32> to vector<16x64xf32>
    %375 = arith.mulf %373, %374 : vector<16x64xf32>
    %cst_145 = arith.constant dense<0.000000e+00> : vector<64xf32>
    %376 = vector.multi_reduction <add>, %375, %cst_145 [0] : vector<16x64xf32> to vector<64xf32>
    %377 = vector.shape_cast %376 : vector<64xf32> to vector<1x64xf32>
    %378 = arith.mulf %19, %361 : vector<1x64xf32>
    %379 = arith.addf %377, %378 : vector<1x64xf32>
    %380 = vector.extract_strided_slice %249 {offsets = [3, 0], sizes = [1, 64], strides = [1, 1]} : vector<20x64xf32> to vector<1x64xf32>
    %381 = vector.extract_strided_slice %260 {offsets = [3, 0], sizes = [1, 64], strides = [1, 1]} : vector<20x64xf32> to vector<1x64xf32>
    %382 = vector.extract_strided_slice %262 {offsets = [0, 3], sizes = [16, 1], strides = [1, 1]} : vector<16x20xf32> to vector<16x1xf32>
    %383 = vector.extract_strided_slice %263 {offsets = [0, 3], sizes = [16, 1], strides = [1, 1]} : vector<16x20xf32> to vector<16x1xf32>
    %384 = vector.broadcast %381 : vector<1x64xf32> to vector<16x64xf32>
    %385 = arith.mulf %384, %15 : vector<16x64xf32>
    %386 = math.exp %385 : vector<16x64xf32>
    %387 = arith.mulf %386, %373 : vector<16x64xf32>
    %388 = arith.mulf %381, %380 : vector<1x64xf32>
    %389 = vector.broadcast %382 : vector<16x1xf32> to vector<16x64xf32>
    %390 = vector.broadcast %388 : vector<1x64xf32> to vector<16x64xf32>
    %391 = arith.mulf %389, %390 : vector<16x64xf32>
    %392 = arith.addf %387, %391 : vector<16x64xf32>
    %393 = vector.broadcast %383 : vector<16x1xf32> to vector<16x64xf32>
    %394 = arith.mulf %392, %393 : vector<16x64xf32>
    %cst_146 = arith.constant dense<0.000000e+00> : vector<64xf32>
    %395 = vector.multi_reduction <add>, %394, %cst_146 [0] : vector<16x64xf32> to vector<64xf32>
    %396 = vector.shape_cast %395 : vector<64xf32> to vector<1x64xf32>
    %397 = arith.mulf %19, %380 : vector<1x64xf32>
    %398 = arith.addf %396, %397 : vector<1x64xf32>
    %399 = vector.extract_strided_slice %249 {offsets = [5, 0], sizes = [1, 64], strides = [1, 1]} : vector<20x64xf32> to vector<1x64xf32>
    %400 = vector.extract_strided_slice %260 {offsets = [5, 0], sizes = [1, 64], strides = [1, 1]} : vector<20x64xf32> to vector<1x64xf32>
    %401 = vector.extract_strided_slice %262 {offsets = [0, 5], sizes = [16, 1], strides = [1, 1]} : vector<16x20xf32> to vector<16x1xf32>
    %402 = vector.extract_strided_slice %263 {offsets = [0, 5], sizes = [16, 1], strides = [1, 1]} : vector<16x20xf32> to vector<16x1xf32>
    %403 = vector.broadcast %400 : vector<1x64xf32> to vector<16x64xf32>
    %404 = arith.mulf %403, %15 : vector<16x64xf32>
    %405 = math.exp %404 : vector<16x64xf32>
    %406 = arith.mulf %405, %392 : vector<16x64xf32>
    %407 = arith.mulf %400, %399 : vector<1x64xf32>
    %408 = vector.broadcast %401 : vector<16x1xf32> to vector<16x64xf32>
    %409 = vector.broadcast %407 : vector<1x64xf32> to vector<16x64xf32>
    %410 = arith.mulf %408, %409 : vector<16x64xf32>
    %411 = arith.addf %406, %410 : vector<16x64xf32>
    %412 = vector.broadcast %402 : vector<16x1xf32> to vector<16x64xf32>
    %413 = arith.mulf %411, %412 : vector<16x64xf32>
    %cst_147 = arith.constant dense<0.000000e+00> : vector<64xf32>
    %414 = vector.multi_reduction <add>, %413, %cst_147 [0] : vector<16x64xf32> to vector<64xf32>
    %415 = vector.shape_cast %414 : vector<64xf32> to vector<1x64xf32>
    %416 = arith.mulf %19, %399 : vector<1x64xf32>
    %417 = arith.addf %415, %416 : vector<1x64xf32>
    %418 = vector.extract_strided_slice %249 {offsets = [7, 0], sizes = [1, 64], strides = [1, 1]} : vector<20x64xf32> to vector<1x64xf32>
    %419 = vector.extract_strided_slice %260 {offsets = [7, 0], sizes = [1, 64], strides = [1, 1]} : vector<20x64xf32> to vector<1x64xf32>
    %420 = vector.extract_strided_slice %262 {offsets = [0, 7], sizes = [16, 1], strides = [1, 1]} : vector<16x20xf32> to vector<16x1xf32>
    %421 = vector.extract_strided_slice %263 {offsets = [0, 7], sizes = [16, 1], strides = [1, 1]} : vector<16x20xf32> to vector<16x1xf32>
    %422 = vector.broadcast %419 : vector<1x64xf32> to vector<16x64xf32>
    %423 = arith.mulf %422, %15 : vector<16x64xf32>
    %424 = math.exp %423 : vector<16x64xf32>
    %425 = arith.mulf %424, %411 : vector<16x64xf32>
    %426 = arith.mulf %419, %418 : vector<1x64xf32>
    %427 = vector.broadcast %420 : vector<16x1xf32> to vector<16x64xf32>
    %428 = vector.broadcast %426 : vector<1x64xf32> to vector<16x64xf32>
    %429 = arith.mulf %427, %428 : vector<16x64xf32>
    %430 = arith.addf %425, %429 : vector<16x64xf32>
    %431 = vector.broadcast %421 : vector<16x1xf32> to vector<16x64xf32>
    %432 = arith.mulf %430, %431 : vector<16x64xf32>
    %cst_148 = arith.constant dense<0.000000e+00> : vector<64xf32>
    %433 = vector.multi_reduction <add>, %432, %cst_148 [0] : vector<16x64xf32> to vector<64xf32>
    %434 = vector.shape_cast %433 : vector<64xf32> to vector<1x64xf32>
    %435 = arith.mulf %19, %418 : vector<1x64xf32>
    %436 = arith.addf %434, %435 : vector<1x64xf32>
    %437 = vector.extract_strided_slice %249 {offsets = [9, 0], sizes = [1, 64], strides = [1, 1]} : vector<20x64xf32> to vector<1x64xf32>
    %438 = vector.extract_strided_slice %260 {offsets = [9, 0], sizes = [1, 64], strides = [1, 1]} : vector<20x64xf32> to vector<1x64xf32>
    %439 = vector.extract_strided_slice %262 {offsets = [0, 9], sizes = [16, 1], strides = [1, 1]} : vector<16x20xf32> to vector<16x1xf32>
    %440 = vector.extract_strided_slice %263 {offsets = [0, 9], sizes = [16, 1], strides = [1, 1]} : vector<16x20xf32> to vector<16x1xf32>
    %441 = vector.broadcast %438 : vector<1x64xf32> to vector<16x64xf32>
    %442 = arith.mulf %441, %15 : vector<16x64xf32>
    %443 = math.exp %442 : vector<16x64xf32>
    %444 = arith.mulf %443, %430 : vector<16x64xf32>
    %445 = arith.mulf %438, %437 : vector<1x64xf32>
    %446 = vector.broadcast %439 : vector<16x1xf32> to vector<16x64xf32>
    %447 = vector.broadcast %445 : vector<1x64xf32> to vector<16x64xf32>
    %448 = arith.mulf %446, %447 : vector<16x64xf32>
    %449 = arith.addf %444, %448 : vector<16x64xf32>
    %450 = vector.broadcast %440 : vector<16x1xf32> to vector<16x64xf32>
    %451 = arith.mulf %449, %450 : vector<16x64xf32>
    %cst_149 = arith.constant dense<0.000000e+00> : vector<64xf32>
    %452 = vector.multi_reduction <add>, %451, %cst_149 [0] : vector<16x64xf32> to vector<64xf32>
    %453 = vector.shape_cast %452 : vector<64xf32> to vector<1x64xf32>
    %454 = arith.mulf %19, %437 : vector<1x64xf32>
    %455 = arith.addf %453, %454 : vector<1x64xf32>
    %cst_150 = arith.constant 0.000000e+00 : f32
    %456 = vector.broadcast %cst_150 : f32 to vector<16x64xf32>
    %457 = vector.extract_strided_slice %249 {offsets = [10, 0], sizes = [1, 64], strides = [1, 1]} : vector<20x64xf32> to vector<1x64xf32>
    %458 = vector.extract_strided_slice %260 {offsets = [10, 0], sizes = [1, 64], strides = [1, 1]} : vector<20x64xf32> to vector<1x64xf32>
    %459 = vector.extract_strided_slice %262 {offsets = [0, 10], sizes = [16, 1], strides = [1, 1]} : vector<16x20xf32> to vector<16x1xf32>
    %460 = vector.extract_strided_slice %263 {offsets = [0, 10], sizes = [16, 1], strides = [1, 1]} : vector<16x20xf32> to vector<16x1xf32>
    %461 = vector.broadcast %458 : vector<1x64xf32> to vector<16x64xf32>
    %462 = arith.mulf %461, %15 : vector<16x64xf32>
    %463 = math.exp %462 : vector<16x64xf32>
    %464 = arith.mulf %463, %456 : vector<16x64xf32>
    %465 = arith.mulf %458, %457 : vector<1x64xf32>
    %466 = vector.broadcast %459 : vector<16x1xf32> to vector<16x64xf32>
    %467 = vector.broadcast %465 : vector<1x64xf32> to vector<16x64xf32>
    %468 = arith.mulf %466, %467 : vector<16x64xf32>
    %469 = arith.addf %464, %468 : vector<16x64xf32>
    %470 = vector.broadcast %460 : vector<16x1xf32> to vector<16x64xf32>
    %471 = arith.mulf %469, %470 : vector<16x64xf32>
    %cst_151 = arith.constant dense<0.000000e+00> : vector<64xf32>
    %472 = vector.multi_reduction <add>, %471, %cst_151 [0] : vector<16x64xf32> to vector<64xf32>
    %473 = vector.shape_cast %472 : vector<64xf32> to vector<1x64xf32>
    %474 = arith.mulf %19, %457 : vector<1x64xf32>
    %475 = arith.addf %473, %474 : vector<1x64xf32>
    %476 = arith.addf %340, %475 : vector<1x64xf32>
    %477 = vector.extract_strided_slice %249 {offsets = [12, 0], sizes = [1, 64], strides = [1, 1]} : vector<20x64xf32> to vector<1x64xf32>
    %478 = vector.extract_strided_slice %260 {offsets = [12, 0], sizes = [1, 64], strides = [1, 1]} : vector<20x64xf32> to vector<1x64xf32>
    %479 = vector.extract_strided_slice %262 {offsets = [0, 12], sizes = [16, 1], strides = [1, 1]} : vector<16x20xf32> to vector<16x1xf32>
    %480 = vector.extract_strided_slice %263 {offsets = [0, 12], sizes = [16, 1], strides = [1, 1]} : vector<16x20xf32> to vector<16x1xf32>
    %481 = vector.broadcast %478 : vector<1x64xf32> to vector<16x64xf32>
    %482 = arith.mulf %481, %15 : vector<16x64xf32>
    %483 = math.exp %482 : vector<16x64xf32>
    %484 = arith.mulf %483, %469 : vector<16x64xf32>
    %485 = arith.mulf %478, %477 : vector<1x64xf32>
    %486 = vector.broadcast %479 : vector<16x1xf32> to vector<16x64xf32>
    %487 = vector.broadcast %485 : vector<1x64xf32> to vector<16x64xf32>
    %488 = arith.mulf %486, %487 : vector<16x64xf32>
    %489 = arith.addf %484, %488 : vector<16x64xf32>
    %490 = vector.broadcast %480 : vector<16x1xf32> to vector<16x64xf32>
    %491 = arith.mulf %489, %490 : vector<16x64xf32>
    %cst_152 = arith.constant dense<0.000000e+00> : vector<64xf32>
    %492 = vector.multi_reduction <add>, %491, %cst_152 [0] : vector<16x64xf32> to vector<64xf32>
    %493 = vector.shape_cast %492 : vector<64xf32> to vector<1x64xf32>
    %494 = arith.mulf %19, %477 : vector<1x64xf32>
    %495 = arith.addf %493, %494 : vector<1x64xf32>
    %496 = arith.addf %321, %495 : vector<1x64xf32>
    %497 = vector.extract_strided_slice %249 {offsets = [14, 0], sizes = [1, 64], strides = [1, 1]} : vector<20x64xf32> to vector<1x64xf32>
    %498 = vector.extract_strided_slice %260 {offsets = [14, 0], sizes = [1, 64], strides = [1, 1]} : vector<20x64xf32> to vector<1x64xf32>
    %499 = vector.extract_strided_slice %262 {offsets = [0, 14], sizes = [16, 1], strides = [1, 1]} : vector<16x20xf32> to vector<16x1xf32>
    %500 = vector.extract_strided_slice %263 {offsets = [0, 14], sizes = [16, 1], strides = [1, 1]} : vector<16x20xf32> to vector<16x1xf32>
    %501 = vector.broadcast %498 : vector<1x64xf32> to vector<16x64xf32>
    %502 = arith.mulf %501, %15 : vector<16x64xf32>
    %503 = math.exp %502 : vector<16x64xf32>
    %504 = arith.mulf %503, %489 : vector<16x64xf32>
    %505 = arith.mulf %498, %497 : vector<1x64xf32>
    %506 = vector.broadcast %499 : vector<16x1xf32> to vector<16x64xf32>
    %507 = vector.broadcast %505 : vector<1x64xf32> to vector<16x64xf32>
    %508 = arith.mulf %506, %507 : vector<16x64xf32>
    %509 = arith.addf %504, %508 : vector<16x64xf32>
    %510 = vector.broadcast %500 : vector<16x1xf32> to vector<16x64xf32>
    %511 = arith.mulf %509, %510 : vector<16x64xf32>
    %cst_153 = arith.constant dense<0.000000e+00> : vector<64xf32>
    %512 = vector.multi_reduction <add>, %511, %cst_153 [0] : vector<16x64xf32> to vector<64xf32>
    %513 = vector.shape_cast %512 : vector<64xf32> to vector<1x64xf32>
    %514 = arith.mulf %19, %497 : vector<1x64xf32>
    %515 = arith.addf %513, %514 : vector<1x64xf32>
    %516 = arith.addf %302, %515 : vector<1x64xf32>
    %517 = vector.extract_strided_slice %249 {offsets = [16, 0], sizes = [1, 64], strides = [1, 1]} : vector<20x64xf32> to vector<1x64xf32>
    %518 = vector.extract_strided_slice %260 {offsets = [16, 0], sizes = [1, 64], strides = [1, 1]} : vector<20x64xf32> to vector<1x64xf32>
    %519 = vector.extract_strided_slice %262 {offsets = [0, 16], sizes = [16, 1], strides = [1, 1]} : vector<16x20xf32> to vector<16x1xf32>
    %520 = vector.extract_strided_slice %263 {offsets = [0, 16], sizes = [16, 1], strides = [1, 1]} : vector<16x20xf32> to vector<16x1xf32>
    %521 = vector.broadcast %518 : vector<1x64xf32> to vector<16x64xf32>
    %522 = arith.mulf %521, %15 : vector<16x64xf32>
    %523 = math.exp %522 : vector<16x64xf32>
    %524 = arith.mulf %523, %509 : vector<16x64xf32>
    %525 = arith.mulf %518, %517 : vector<1x64xf32>
    %526 = vector.broadcast %519 : vector<16x1xf32> to vector<16x64xf32>
    %527 = vector.broadcast %525 : vector<1x64xf32> to vector<16x64xf32>
    %528 = arith.mulf %526, %527 : vector<16x64xf32>
    %529 = arith.addf %524, %528 : vector<16x64xf32>
    %530 = vector.broadcast %520 : vector<16x1xf32> to vector<16x64xf32>
    %531 = arith.mulf %529, %530 : vector<16x64xf32>
    %cst_154 = arith.constant dense<0.000000e+00> : vector<64xf32>
    %532 = vector.multi_reduction <add>, %531, %cst_154 [0] : vector<16x64xf32> to vector<64xf32>
    %533 = vector.shape_cast %532 : vector<64xf32> to vector<1x64xf32>
    %534 = arith.mulf %19, %517 : vector<1x64xf32>
    %535 = arith.addf %533, %534 : vector<1x64xf32>
    %536 = arith.addf %283, %535 : vector<1x64xf32>
    %537 = vector.extract_strided_slice %249 {offsets = [18, 0], sizes = [1, 64], strides = [1, 1]} : vector<20x64xf32> to vector<1x64xf32>
    %538 = vector.extract_strided_slice %260 {offsets = [18, 0], sizes = [1, 64], strides = [1, 1]} : vector<20x64xf32> to vector<1x64xf32>
    %539 = vector.extract_strided_slice %262 {offsets = [0, 18], sizes = [16, 1], strides = [1, 1]} : vector<16x20xf32> to vector<16x1xf32>
    %540 = vector.extract_strided_slice %263 {offsets = [0, 18], sizes = [16, 1], strides = [1, 1]} : vector<16x20xf32> to vector<16x1xf32>
    %541 = vector.broadcast %538 : vector<1x64xf32> to vector<16x64xf32>
    %542 = arith.mulf %541, %15 : vector<16x64xf32>
    %543 = math.exp %542 : vector<16x64xf32>
    %544 = arith.mulf %543, %529 : vector<16x64xf32>
    %545 = arith.mulf %538, %537 : vector<1x64xf32>
    %546 = vector.broadcast %539 : vector<16x1xf32> to vector<16x64xf32>
    %547 = vector.broadcast %545 : vector<1x64xf32> to vector<16x64xf32>
    %548 = arith.mulf %546, %547 : vector<16x64xf32>
    %549 = arith.addf %544, %548 : vector<16x64xf32>
    %550 = vector.broadcast %540 : vector<16x1xf32> to vector<16x64xf32>
    %551 = arith.mulf %549, %550 : vector<16x64xf32>
    %cst_155 = arith.constant dense<0.000000e+00> : vector<64xf32>
    %552 = vector.multi_reduction <add>, %551, %cst_155 [0] : vector<16x64xf32> to vector<64xf32>
    %553 = vector.shape_cast %552 : vector<64xf32> to vector<1x64xf32>
    %554 = arith.mulf %19, %537 : vector<1x64xf32>
    %555 = arith.addf %553, %554 : vector<1x64xf32>
    %556 = arith.addf %359, %555 : vector<1x64xf32>
    %cst_156 = arith.constant 0.000000e+00 : f32
    %557 = vector.broadcast %cst_156 : f32 to vector<16x64xf32>
    %558 = vector.extract_strided_slice %249 {offsets = [11, 0], sizes = [1, 64], strides = [1, 1]} : vector<20x64xf32> to vector<1x64xf32>
    %559 = vector.extract_strided_slice %260 {offsets = [11, 0], sizes = [1, 64], strides = [1, 1]} : vector<20x64xf32> to vector<1x64xf32>
    %560 = vector.extract_strided_slice %262 {offsets = [0, 11], sizes = [16, 1], strides = [1, 1]} : vector<16x20xf32> to vector<16x1xf32>
    %561 = vector.extract_strided_slice %263 {offsets = [0, 11], sizes = [16, 1], strides = [1, 1]} : vector<16x20xf32> to vector<16x1xf32>
    %562 = vector.broadcast %559 : vector<1x64xf32> to vector<16x64xf32>
    %563 = arith.mulf %562, %15 : vector<16x64xf32>
    %564 = math.exp %563 : vector<16x64xf32>
    %565 = arith.mulf %564, %557 : vector<16x64xf32>
    %566 = arith.mulf %559, %558 : vector<1x64xf32>
    %567 = vector.broadcast %560 : vector<16x1xf32> to vector<16x64xf32>
    %568 = vector.broadcast %566 : vector<1x64xf32> to vector<16x64xf32>
    %569 = arith.mulf %567, %568 : vector<16x64xf32>
    %570 = arith.addf %565, %569 : vector<16x64xf32>
    %571 = vector.broadcast %561 : vector<16x1xf32> to vector<16x64xf32>
    %572 = arith.mulf %570, %571 : vector<16x64xf32>
    %cst_157 = arith.constant dense<0.000000e+00> : vector<64xf32>
    %573 = vector.multi_reduction <add>, %572, %cst_157 [0] : vector<16x64xf32> to vector<64xf32>
    %574 = vector.shape_cast %573 : vector<64xf32> to vector<1x64xf32>
    %575 = arith.mulf %19, %558 : vector<1x64xf32>
    %576 = arith.addf %574, %575 : vector<1x64xf32>
    %577 = arith.addf %436, %576 : vector<1x64xf32>
    %578 = vector.extract_strided_slice %249 {offsets = [13, 0], sizes = [1, 64], strides = [1, 1]} : vector<20x64xf32> to vector<1x64xf32>
    %579 = vector.extract_strided_slice %260 {offsets = [13, 0], sizes = [1, 64], strides = [1, 1]} : vector<20x64xf32> to vector<1x64xf32>
    %580 = vector.extract_strided_slice %262 {offsets = [0, 13], sizes = [16, 1], strides = [1, 1]} : vector<16x20xf32> to vector<16x1xf32>
    %581 = vector.extract_strided_slice %263 {offsets = [0, 13], sizes = [16, 1], strides = [1, 1]} : vector<16x20xf32> to vector<16x1xf32>
    %582 = vector.broadcast %579 : vector<1x64xf32> to vector<16x64xf32>
    %583 = arith.mulf %582, %15 : vector<16x64xf32>
    %584 = math.exp %583 : vector<16x64xf32>
    %585 = arith.mulf %584, %570 : vector<16x64xf32>
    %586 = arith.mulf %579, %578 : vector<1x64xf32>
    %587 = vector.broadcast %580 : vector<16x1xf32> to vector<16x64xf32>
    %588 = vector.broadcast %586 : vector<1x64xf32> to vector<16x64xf32>
    %589 = arith.mulf %587, %588 : vector<16x64xf32>
    %590 = arith.addf %585, %589 : vector<16x64xf32>
    %591 = vector.broadcast %581 : vector<16x1xf32> to vector<16x64xf32>
    %592 = arith.mulf %590, %591 : vector<16x64xf32>
    %cst_158 = arith.constant dense<0.000000e+00> : vector<64xf32>
    %593 = vector.multi_reduction <add>, %592, %cst_158 [0] : vector<16x64xf32> to vector<64xf32>
    %594 = vector.shape_cast %593 : vector<64xf32> to vector<1x64xf32>
    %595 = arith.mulf %19, %578 : vector<1x64xf32>
    %596 = arith.addf %594, %595 : vector<1x64xf32>
    %597 = arith.addf %417, %596 : vector<1x64xf32>
    %598 = vector.extract_strided_slice %249 {offsets = [15, 0], sizes = [1, 64], strides = [1, 1]} : vector<20x64xf32> to vector<1x64xf32>
    %599 = vector.extract_strided_slice %260 {offsets = [15, 0], sizes = [1, 64], strides = [1, 1]} : vector<20x64xf32> to vector<1x64xf32>
    %600 = vector.extract_strided_slice %262 {offsets = [0, 15], sizes = [16, 1], strides = [1, 1]} : vector<16x20xf32> to vector<16x1xf32>
    %601 = vector.extract_strided_slice %263 {offsets = [0, 15], sizes = [16, 1], strides = [1, 1]} : vector<16x20xf32> to vector<16x1xf32>
    %602 = vector.broadcast %599 : vector<1x64xf32> to vector<16x64xf32>
    %603 = arith.mulf %602, %15 : vector<16x64xf32>
    %604 = math.exp %603 : vector<16x64xf32>
    %605 = arith.mulf %604, %590 : vector<16x64xf32>
    %606 = arith.mulf %599, %598 : vector<1x64xf32>
    %607 = vector.broadcast %600 : vector<16x1xf32> to vector<16x64xf32>
    %608 = vector.broadcast %606 : vector<1x64xf32> to vector<16x64xf32>
    %609 = arith.mulf %607, %608 : vector<16x64xf32>
    %610 = arith.addf %605, %609 : vector<16x64xf32>
    %611 = vector.broadcast %601 : vector<16x1xf32> to vector<16x64xf32>
    %612 = arith.mulf %610, %611 : vector<16x64xf32>
    %cst_159 = arith.constant dense<0.000000e+00> : vector<64xf32>
    %613 = vector.multi_reduction <add>, %612, %cst_159 [0] : vector<16x64xf32> to vector<64xf32>
    %614 = vector.shape_cast %613 : vector<64xf32> to vector<1x64xf32>
    %615 = arith.mulf %19, %598 : vector<1x64xf32>
    %616 = arith.addf %614, %615 : vector<1x64xf32>
    %617 = arith.addf %398, %616 : vector<1x64xf32>
    %618 = vector.extract_strided_slice %249 {offsets = [17, 0], sizes = [1, 64], strides = [1, 1]} : vector<20x64xf32> to vector<1x64xf32>
    %619 = vector.extract_strided_slice %260 {offsets = [17, 0], sizes = [1, 64], strides = [1, 1]} : vector<20x64xf32> to vector<1x64xf32>
    %620 = vector.extract_strided_slice %262 {offsets = [0, 17], sizes = [16, 1], strides = [1, 1]} : vector<16x20xf32> to vector<16x1xf32>
    %621 = vector.extract_strided_slice %263 {offsets = [0, 17], sizes = [16, 1], strides = [1, 1]} : vector<16x20xf32> to vector<16x1xf32>
    %622 = vector.broadcast %619 : vector<1x64xf32> to vector<16x64xf32>
    %623 = arith.mulf %622, %15 : vector<16x64xf32>
    %624 = math.exp %623 : vector<16x64xf32>
    %625 = arith.mulf %624, %610 : vector<16x64xf32>
    %626 = arith.mulf %619, %618 : vector<1x64xf32>
    %627 = vector.broadcast %620 : vector<16x1xf32> to vector<16x64xf32>
    %628 = vector.broadcast %626 : vector<1x64xf32> to vector<16x64xf32>
    %629 = arith.mulf %627, %628 : vector<16x64xf32>
    %630 = arith.addf %625, %629 : vector<16x64xf32>
    %631 = vector.broadcast %621 : vector<16x1xf32> to vector<16x64xf32>
    %632 = arith.mulf %630, %631 : vector<16x64xf32>
    %cst_160 = arith.constant dense<0.000000e+00> : vector<64xf32>
    %633 = vector.multi_reduction <add>, %632, %cst_160 [0] : vector<16x64xf32> to vector<64xf32>
    %634 = vector.shape_cast %633 : vector<64xf32> to vector<1x64xf32>
    %635 = arith.mulf %19, %618 : vector<1x64xf32>
    %636 = arith.addf %634, %635 : vector<1x64xf32>
    %637 = arith.addf %379, %636 : vector<1x64xf32>
    %638 = vector.extract_strided_slice %249 {offsets = [19, 0], sizes = [1, 64], strides = [1, 1]} : vector<20x64xf32> to vector<1x64xf32>
    %639 = vector.extract_strided_slice %260 {offsets = [19, 0], sizes = [1, 64], strides = [1, 1]} : vector<20x64xf32> to vector<1x64xf32>
    %640 = vector.extract_strided_slice %262 {offsets = [0, 19], sizes = [16, 1], strides = [1, 1]} : vector<16x20xf32> to vector<16x1xf32>
    %641 = vector.extract_strided_slice %263 {offsets = [0, 19], sizes = [16, 1], strides = [1, 1]} : vector<16x20xf32> to vector<16x1xf32>
    %642 = vector.broadcast %639 : vector<1x64xf32> to vector<16x64xf32>
    %643 = arith.mulf %642, %15 : vector<16x64xf32>
    %644 = math.exp %643 : vector<16x64xf32>
    %645 = arith.mulf %644, %630 : vector<16x64xf32>
    %646 = arith.mulf %639, %638 : vector<1x64xf32>
    %647 = vector.broadcast %640 : vector<16x1xf32> to vector<16x64xf32>
    %648 = vector.broadcast %646 : vector<1x64xf32> to vector<16x64xf32>
    %649 = arith.mulf %647, %648 : vector<16x64xf32>
    %650 = arith.addf %645, %649 : vector<16x64xf32>
    %651 = vector.broadcast %641 : vector<16x1xf32> to vector<16x64xf32>
    %652 = arith.mulf %650, %651 : vector<16x64xf32>
    %cst_161 = arith.constant dense<0.000000e+00> : vector<64xf32>
    %653 = vector.multi_reduction <add>, %652, %cst_161 [0] : vector<16x64xf32> to vector<64xf32>
    %654 = vector.shape_cast %653 : vector<64xf32> to vector<1x64xf32>
    %655 = arith.mulf %19, %638 : vector<1x64xf32>
    %656 = arith.addf %654, %655 : vector<1x64xf32>
    %657 = arith.addf %455, %656 : vector<1x64xf32>
    %658 = tpu.concatenate %536, %637, %516, %617, %496, %597, %476, %577, %556, %657 in 0 : vector<1x64xf32>, vector<1x64xf32>, vector<1x64xf32>, vector<1x64xf32>, vector<1x64xf32>, vector<1x64xf32>, vector<1x64xf32>, vector<1x64xf32>, vector<1x64xf32>, vector<1x64xf32> -> vector<10x64xf32>
    %cst_162 = arith.constant 5.000000e-01 : f32
    %659 = vector.broadcast %cst_162 : f32 to vector<10x64xf32>
    %660 = arith.mulf %658, %659 : vector<10x64xf32>
    %661 = arith.mulf %660, %108 : vector<10x64xf32>
    %cst_163 = arith.constant dense<0.000000e+00> : vector<10x32xf32>
    %662 = tpu.matmul %661, %20, %cst_163 {dimension_numbers = #tpu.dot_dimension_numbers<[1], [0], [0], [1], [0, 0, 1, 1], [], []>} : vector<10x64xf32>, vector<64x32xf32>, vector<10x32xf32> -> vector<10x32xf32>
    %663 = arith.addf %662, %73 : vector<10x32xf32>
    %cst_164 = arith.constant dense<0.000000e+00> : vector<6xf32>
    %664 = vector.multi_reduction <add>, %78, %cst_164 [1] : vector<6x32xf32> to vector<6xf32>
    %665 = vector.shape_cast %664 : vector<6xf32> to vector<6x1xf32>
    %cst_165 = arith.constant 3.200000e+01 : f32
    %666 = vector.broadcast %cst_165 : f32 to vector<6x1xf32>
    %667 = arith.divf %665, %666 : vector<6x1xf32>
    %668 = vector.broadcast %667 : vector<6x1xf32> to vector<6x32xf32>
    %669 = arith.subf %78, %668 : vector<6x32xf32>
    %670 = arith.mulf %669, %669 : vector<6x32xf32>
    %cst_166 = arith.constant dense<0.000000e+00> : vector<6xf32>
    %671 = vector.multi_reduction <add>, %670, %cst_166 [1] : vector<6x32xf32> to vector<6xf32>
    %672 = vector.shape_cast %671 : vector<6xf32> to vector<6x1xf32>
    %cst_167 = arith.constant 3.200000e+01 : f32
    %673 = vector.broadcast %cst_167 : f32 to vector<6x1xf32>
    %674 = arith.divf %672, %673 : vector<6x1xf32>
    %cst_168 = arith.constant 9.99999997E-7 : f32
    %675 = vector.broadcast %cst_168 : f32 to vector<6x1xf32>
    %676 = arith.addf %674, %675 : vector<6x1xf32>
    %677 = math.rsqrt %676 : vector<6x1xf32>
    %678 = vector.broadcast %677 : vector<6x1xf32> to vector<6x32xf32>
    %679 = arith.mulf %669, %678 : vector<6x32xf32>
    %680 = vector.broadcast %33 : vector<1x32xf32> to vector<6x32xf32>
    %681 = arith.mulf %679, %680 : vector<6x32xf32>
    %682 = vector.broadcast %34 : vector<1x32xf32> to vector<6x32xf32>
    %683 = arith.addf %681, %682 : vector<6x32xf32>
    %cst_169 = arith.constant dense<0.000000e+00> : vector<6x64xf32>
    %684 = tpu.matmul %683, %24, %cst_169 {dimension_numbers = #tpu.dot_dimension_numbers<[1], [0], [0], [1], [0, 0, 1, 1], [], []>} : vector<6x32xf32>, vector<32x64xf32>, vector<6x64xf32> -> vector<6x64xf32>
    %cst_170 = arith.constant dense<0.000000e+00> : vector<6x64xf32>
    %685 = tpu.matmul %683, %25, %cst_170 {dimension_numbers = #tpu.dot_dimension_numbers<[1], [0], [0], [1], [0, 0, 1, 1], [], []>} : vector<6x32xf32>, vector<32x64xf32>, vector<6x64xf32> -> vector<6x64xf32>
    %cst_171 = arith.constant 0.000000e+00 : f32
    %686 = vector.broadcast %cst_171 : f32 to vector<6x64xf32>
    %687 = arith.subf %686, %685 : vector<6x64xf32>
    %688 = math.exp %687 : vector<6x64xf32>
    %cst_172 = arith.constant 1.000000e+00 : f32
    %689 = vector.broadcast %cst_172 : f32 to vector<6x64xf32>
    %690 = arith.addf %689, %688 : vector<6x64xf32>
    %cst_173 = arith.constant 1.000000e+00 : f32
    %691 = vector.broadcast %cst_173 : f32 to vector<6x64xf32>
    %692 = arith.divf %691, %690 : vector<6x64xf32>
    %693 = arith.mulf %685, %692 : vector<6x64xf32>
    %694 = vector.extract_strided_slice %28 {offsets = [3, 0], sizes = [1, 64], strides = [1, 1]} : vector<4x64xf32> to vector<1x64xf32>
    %695 = vector.extract_strided_slice %684 {offsets = [0, 0], sizes = [2, 64], strides = [1, 1]} : vector<6x64xf32> to vector<2x64xf32>
    %696 = vector.broadcast %694 : vector<1x64xf32> to vector<2x64xf32>
    %697 = arith.mulf %695, %696 : vector<2x64xf32>
    %698 = vector.extract_strided_slice %28 {offsets = [3, 0], sizes = [1, 64], strides = [1, 1]} : vector<4x64xf32> to vector<1x64xf32>
    %699 = vector.extract_strided_slice %684 {offsets = [2, 0], sizes = [2, 64], strides = [1, 1]} : vector<6x64xf32> to vector<2x64xf32>
    %700 = vector.broadcast %698 : vector<1x64xf32> to vector<2x64xf32>
    %701 = arith.mulf %699, %700 : vector<2x64xf32>
    %702 = vector.extract_strided_slice %28 {offsets = [2, 0], sizes = [1, 64], strides = [1, 1]} : vector<4x64xf32> to vector<1x64xf32>
    %703 = vector.extract_strided_slice %684 {offsets = [0, 0], sizes = [2, 64], strides = [1, 1]} : vector<6x64xf32> to vector<2x64xf32>
    %704 = vector.broadcast %702 : vector<1x64xf32> to vector<2x64xf32>
    %705 = arith.mulf %703, %704 : vector<2x64xf32>
    %706 = arith.addf %701, %705 : vector<2x64xf32>
    %707 = vector.extract_strided_slice %28 {offsets = [3, 0], sizes = [1, 64], strides = [1, 1]} : vector<4x64xf32> to vector<1x64xf32>
    %708 = vector.extract_strided_slice %684 {offsets = [4, 0], sizes = [2, 64], strides = [1, 1]} : vector<6x64xf32> to vector<2x64xf32>
    %709 = vector.broadcast %707 : vector<1x64xf32> to vector<2x64xf32>
    %710 = arith.mulf %708, %709 : vector<2x64xf32>
    %711 = vector.extract_strided_slice %28 {offsets = [2, 0], sizes = [1, 64], strides = [1, 1]} : vector<4x64xf32> to vector<1x64xf32>
    %712 = vector.extract_strided_slice %684 {offsets = [2, 0], sizes = [2, 64], strides = [1, 1]} : vector<6x64xf32> to vector<2x64xf32>
    %713 = vector.broadcast %711 : vector<1x64xf32> to vector<2x64xf32>
    %714 = arith.mulf %712, %713 : vector<2x64xf32>
    %715 = arith.addf %710, %714 : vector<2x64xf32>
    %716 = vector.extract_strided_slice %28 {offsets = [1, 0], sizes = [1, 64], strides = [1, 1]} : vector<4x64xf32> to vector<1x64xf32>
    %717 = vector.extract_strided_slice %684 {offsets = [0, 0], sizes = [2, 64], strides = [1, 1]} : vector<6x64xf32> to vector<2x64xf32>
    %718 = vector.broadcast %716 : vector<1x64xf32> to vector<2x64xf32>
    %719 = arith.mulf %717, %718 : vector<2x64xf32>
    %720 = arith.addf %715, %719 : vector<2x64xf32>
    %721 = vector.extract_strided_slice %28 {offsets = [3, 0], sizes = [1, 64], strides = [1, 1]} : vector<4x64xf32> to vector<1x64xf32>
    %722 = vector.extract_strided_slice %684 {offsets = [2, 0], sizes = [2, 64], strides = [1, 1]} : vector<6x64xf32> to vector<2x64xf32>
    %723 = vector.broadcast %721 : vector<1x64xf32> to vector<2x64xf32>
    %724 = arith.mulf %722, %723 : vector<2x64xf32>
    %725 = vector.extract_strided_slice %28 {offsets = [3, 0], sizes = [1, 64], strides = [1, 1]} : vector<4x64xf32> to vector<1x64xf32>
    %726 = vector.extract_strided_slice %684 {offsets = [0, 0], sizes = [2, 64], strides = [1, 1]} : vector<6x64xf32> to vector<2x64xf32>
    %727 = vector.broadcast %725 : vector<1x64xf32> to vector<2x64xf32>
    %728 = arith.mulf %726, %727 : vector<2x64xf32>
    %729 = vector.extract_strided_slice %28 {offsets = [2, 0], sizes = [1, 64], strides = [1, 1]} : vector<4x64xf32> to vector<1x64xf32>
    %730 = vector.extract_strided_slice %684 {offsets = [2, 0], sizes = [2, 64], strides = [1, 1]} : vector<6x64xf32> to vector<2x64xf32>
    %731 = vector.broadcast %729 : vector<1x64xf32> to vector<2x64xf32>
    %732 = arith.mulf %730, %731 : vector<2x64xf32>
    %733 = arith.addf %728, %732 : vector<2x64xf32>
    %734 = vector.extract_strided_slice %28 {offsets = [3, 0], sizes = [1, 64], strides = [1, 1]} : vector<4x64xf32> to vector<1x64xf32>
    %735 = vector.extract_strided_slice %684 {offsets = [4, 0], sizes = [2, 64], strides = [1, 1]} : vector<6x64xf32> to vector<2x64xf32>
    %736 = vector.broadcast %734 : vector<1x64xf32> to vector<2x64xf32>
    %737 = arith.mulf %735, %736 : vector<2x64xf32>
    %738 = vector.extract_strided_slice %28 {offsets = [2, 0], sizes = [1, 64], strides = [1, 1]} : vector<4x64xf32> to vector<1x64xf32>
    %739 = vector.extract_strided_slice %684 {offsets = [0, 0], sizes = [2, 64], strides = [1, 1]} : vector<6x64xf32> to vector<2x64xf32>
    %740 = vector.broadcast %738 : vector<1x64xf32> to vector<2x64xf32>
    %741 = arith.mulf %739, %740 : vector<2x64xf32>
    %742 = arith.addf %737, %741 : vector<2x64xf32>
    %743 = vector.extract_strided_slice %28 {offsets = [1, 0], sizes = [1, 64], strides = [1, 1]} : vector<4x64xf32> to vector<1x64xf32>
    %744 = vector.extract_strided_slice %684 {offsets = [2, 0], sizes = [2, 64], strides = [1, 1]} : vector<6x64xf32> to vector<2x64xf32>
    %745 = vector.broadcast %743 : vector<1x64xf32> to vector<2x64xf32>
    %746 = arith.mulf %744, %745 : vector<2x64xf32>
    %747 = arith.addf %742, %746 : vector<2x64xf32>
    %748 = tpu.concatenate %697, %706, %720, %724, %733, %747 in 0 : vector<2x64xf32>, vector<2x64xf32>, vector<2x64xf32>, vector<2x64xf32>, vector<2x64xf32>, vector<2x64xf32> -> vector<12x64xf32>
    %749 = vector.broadcast %29 : vector<1x64xf32> to vector<12x64xf32>
    %750 = arith.addf %748, %749 : vector<12x64xf32>
    %cst_174 = arith.constant 0.000000e+00 : f32
    %751 = vector.broadcast %cst_174 : f32 to vector<12x64xf32>
    %752 = arith.subf %751, %750 : vector<12x64xf32>
    %753 = math.exp %752 : vector<12x64xf32>
    %cst_175 = arith.constant 1.000000e+00 : f32
    %754 = vector.broadcast %cst_175 : f32 to vector<12x64xf32>
    %755 = arith.addf %754, %753 : vector<12x64xf32>
    %cst_176 = arith.constant 1.000000e+00 : f32
    %756 = vector.broadcast %cst_176 : f32 to vector<12x64xf32>
    %757 = arith.divf %756, %755 : vector<12x64xf32>
    %758 = arith.mulf %750, %757 : vector<12x64xf32>
    %cst_177 = arith.constant dense<0.000000e+00> : vector<12x64xf32>
    %759 = tpu.matmul %758, %26, %cst_177 {dimension_numbers = #tpu.dot_dimension_numbers<[1], [0], [0], [1], [0, 0, 1, 1], [], []>} : vector<12x64xf32>, vector<64x64xf32>, vector<12x64xf32> -> vector<12x64xf32>
    %760 = vector.broadcast %30 : vector<1x64xf32> to vector<12x64xf32>
    %761 = arith.addf %759, %760 : vector<12x64xf32>
    %cst_178 = arith.constant 0.000000e+00 : f32
    %762 = vector.broadcast %cst_178 : f32 to vector<12x64xf32>
    %763 = arith.maximumf %761, %762 : vector<12x64xf32>
    %764 = math.absf %761 : vector<12x64xf32>
    %cst_179 = arith.constant 0.000000e+00 : f32
    %765 = vector.broadcast %cst_179 : f32 to vector<12x64xf32>
    %766 = arith.subf %765, %764 : vector<12x64xf32>
    %767 = math.exp %766 : vector<12x64xf32>
    %768 = math.log1p %767 : vector<12x64xf32>
    %769 = arith.addf %763, %768 : vector<12x64xf32>
    %cst_180 = arith.constant dense<0.000000e+00> : vector<32x12xf32>
    %770 = tpu.matmul %35, %758, %cst_180 {dimension_numbers = #tpu.dot_dimension_numbers<[1], [1], [0], [0], [0, 0, 1, 0], [], []>} : vector<32x64xf32>, vector<12x64xf32>, vector<32x12xf32> -> vector<32x12xf32>
    %771 = vector.extract_strided_slice %770 {offsets = [0, 0], sizes = [16, 12], strides = [1, 1]} : vector<32x12xf32> to vector<16x12xf32>
    %772 = vector.extract_strided_slice %770 {offsets = [16, 0], sizes = [16, 12], strides = [1, 1]} : vector<32x12xf32> to vector<16x12xf32>
    %cst_181 = arith.constant 0.000000e+00 : f32
    %773 = vector.broadcast %cst_181 : f32 to vector<16x64xf32>
    %774 = vector.extract_strided_slice %758 {offsets = [0, 0], sizes = [1, 64], strides = [1, 1]} : vector<12x64xf32> to vector<1x64xf32>
    %775 = vector.extract_strided_slice %769 {offsets = [0, 0], sizes = [1, 64], strides = [1, 1]} : vector<12x64xf32> to vector<1x64xf32>
    %776 = vector.extract_strided_slice %771 {offsets = [0, 0], sizes = [16, 1], strides = [1, 1]} : vector<16x12xf32> to vector<16x1xf32>
    %777 = vector.extract_strided_slice %772 {offsets = [0, 0], sizes = [16, 1], strides = [1, 1]} : vector<16x12xf32> to vector<16x1xf32>
    %778 = vector.broadcast %775 : vector<1x64xf32> to vector<16x64xf32>
    %779 = arith.mulf %778, %27 : vector<16x64xf32>
    %780 = math.exp %779 : vector<16x64xf32>
    %781 = arith.mulf %780, %773 : vector<16x64xf32>
    %782 = arith.mulf %775, %774 : vector<1x64xf32>
    %783 = vector.broadcast %776 : vector<16x1xf32> to vector<16x64xf32>
    %784 = vector.broadcast %782 : vector<1x64xf32> to vector<16x64xf32>
    %785 = arith.mulf %783, %784 : vector<16x64xf32>
    %786 = arith.addf %781, %785 : vector<16x64xf32>
    %787 = vector.broadcast %777 : vector<16x1xf32> to vector<16x64xf32>
    %788 = arith.mulf %786, %787 : vector<16x64xf32>
    %cst_182 = arith.constant dense<0.000000e+00> : vector<64xf32>
    %789 = vector.multi_reduction <add>, %788, %cst_182 [0] : vector<16x64xf32> to vector<64xf32>
    %790 = vector.shape_cast %789 : vector<64xf32> to vector<1x64xf32>
    %791 = arith.mulf %31, %774 : vector<1x64xf32>
    %792 = arith.addf %790, %791 : vector<1x64xf32>
    %793 = vector.extract_strided_slice %758 {offsets = [2, 0], sizes = [1, 64], strides = [1, 1]} : vector<12x64xf32> to vector<1x64xf32>
    %794 = vector.extract_strided_slice %769 {offsets = [2, 0], sizes = [1, 64], strides = [1, 1]} : vector<12x64xf32> to vector<1x64xf32>
    %795 = vector.extract_strided_slice %771 {offsets = [0, 2], sizes = [16, 1], strides = [1, 1]} : vector<16x12xf32> to vector<16x1xf32>
    %796 = vector.extract_strided_slice %772 {offsets = [0, 2], sizes = [16, 1], strides = [1, 1]} : vector<16x12xf32> to vector<16x1xf32>
    %797 = vector.broadcast %794 : vector<1x64xf32> to vector<16x64xf32>
    %798 = arith.mulf %797, %27 : vector<16x64xf32>
    %799 = math.exp %798 : vector<16x64xf32>
    %800 = arith.mulf %799, %786 : vector<16x64xf32>
    %801 = arith.mulf %794, %793 : vector<1x64xf32>
    %802 = vector.broadcast %795 : vector<16x1xf32> to vector<16x64xf32>
    %803 = vector.broadcast %801 : vector<1x64xf32> to vector<16x64xf32>
    %804 = arith.mulf %802, %803 : vector<16x64xf32>
    %805 = arith.addf %800, %804 : vector<16x64xf32>
    %806 = vector.broadcast %796 : vector<16x1xf32> to vector<16x64xf32>
    %807 = arith.mulf %805, %806 : vector<16x64xf32>
    %cst_183 = arith.constant dense<0.000000e+00> : vector<64xf32>
    %808 = vector.multi_reduction <add>, %807, %cst_183 [0] : vector<16x64xf32> to vector<64xf32>
    %809 = vector.shape_cast %808 : vector<64xf32> to vector<1x64xf32>
    %810 = arith.mulf %31, %793 : vector<1x64xf32>
    %811 = arith.addf %809, %810 : vector<1x64xf32>
    %812 = vector.extract_strided_slice %758 {offsets = [4, 0], sizes = [1, 64], strides = [1, 1]} : vector<12x64xf32> to vector<1x64xf32>
    %813 = vector.extract_strided_slice %769 {offsets = [4, 0], sizes = [1, 64], strides = [1, 1]} : vector<12x64xf32> to vector<1x64xf32>
    %814 = vector.extract_strided_slice %771 {offsets = [0, 4], sizes = [16, 1], strides = [1, 1]} : vector<16x12xf32> to vector<16x1xf32>
    %815 = vector.extract_strided_slice %772 {offsets = [0, 4], sizes = [16, 1], strides = [1, 1]} : vector<16x12xf32> to vector<16x1xf32>
    %816 = vector.broadcast %813 : vector<1x64xf32> to vector<16x64xf32>
    %817 = arith.mulf %816, %27 : vector<16x64xf32>
    %818 = math.exp %817 : vector<16x64xf32>
    %819 = arith.mulf %818, %805 : vector<16x64xf32>
    %820 = arith.mulf %813, %812 : vector<1x64xf32>
    %821 = vector.broadcast %814 : vector<16x1xf32> to vector<16x64xf32>
    %822 = vector.broadcast %820 : vector<1x64xf32> to vector<16x64xf32>
    %823 = arith.mulf %821, %822 : vector<16x64xf32>
    %824 = arith.addf %819, %823 : vector<16x64xf32>
    %825 = vector.broadcast %815 : vector<16x1xf32> to vector<16x64xf32>
    %826 = arith.mulf %824, %825 : vector<16x64xf32>
    %cst_184 = arith.constant dense<0.000000e+00> : vector<64xf32>
    %827 = vector.multi_reduction <add>, %826, %cst_184 [0] : vector<16x64xf32> to vector<64xf32>
    %828 = vector.shape_cast %827 : vector<64xf32> to vector<1x64xf32>
    %829 = arith.mulf %31, %812 : vector<1x64xf32>
    %830 = arith.addf %828, %829 : vector<1x64xf32>
    %cst_185 = arith.constant 0.000000e+00 : f32
    %831 = vector.broadcast %cst_185 : f32 to vector<16x64xf32>
    %832 = vector.extract_strided_slice %758 {offsets = [1, 0], sizes = [1, 64], strides = [1, 1]} : vector<12x64xf32> to vector<1x64xf32>
    %833 = vector.extract_strided_slice %769 {offsets = [1, 0], sizes = [1, 64], strides = [1, 1]} : vector<12x64xf32> to vector<1x64xf32>
    %834 = vector.extract_strided_slice %771 {offsets = [0, 1], sizes = [16, 1], strides = [1, 1]} : vector<16x12xf32> to vector<16x1xf32>
    %835 = vector.extract_strided_slice %772 {offsets = [0, 1], sizes = [16, 1], strides = [1, 1]} : vector<16x12xf32> to vector<16x1xf32>
    %836 = vector.broadcast %833 : vector<1x64xf32> to vector<16x64xf32>
    %837 = arith.mulf %836, %27 : vector<16x64xf32>
    %838 = math.exp %837 : vector<16x64xf32>
    %839 = arith.mulf %838, %831 : vector<16x64xf32>
    %840 = arith.mulf %833, %832 : vector<1x64xf32>
    %841 = vector.broadcast %834 : vector<16x1xf32> to vector<16x64xf32>
    %842 = vector.broadcast %840 : vector<1x64xf32> to vector<16x64xf32>
    %843 = arith.mulf %841, %842 : vector<16x64xf32>
    %844 = arith.addf %839, %843 : vector<16x64xf32>
    %845 = vector.broadcast %835 : vector<16x1xf32> to vector<16x64xf32>
    %846 = arith.mulf %844, %845 : vector<16x64xf32>
    %cst_186 = arith.constant dense<0.000000e+00> : vector<64xf32>
    %847 = vector.multi_reduction <add>, %846, %cst_186 [0] : vector<16x64xf32> to vector<64xf32>
    %848 = vector.shape_cast %847 : vector<64xf32> to vector<1x64xf32>
    %849 = arith.mulf %31, %832 : vector<1x64xf32>
    %850 = arith.addf %848, %849 : vector<1x64xf32>
    %851 = vector.extract_strided_slice %758 {offsets = [3, 0], sizes = [1, 64], strides = [1, 1]} : vector<12x64xf32> to vector<1x64xf32>
    %852 = vector.extract_strided_slice %769 {offsets = [3, 0], sizes = [1, 64], strides = [1, 1]} : vector<12x64xf32> to vector<1x64xf32>
    %853 = vector.extract_strided_slice %771 {offsets = [0, 3], sizes = [16, 1], strides = [1, 1]} : vector<16x12xf32> to vector<16x1xf32>
    %854 = vector.extract_strided_slice %772 {offsets = [0, 3], sizes = [16, 1], strides = [1, 1]} : vector<16x12xf32> to vector<16x1xf32>
    %855 = vector.broadcast %852 : vector<1x64xf32> to vector<16x64xf32>
    %856 = arith.mulf %855, %27 : vector<16x64xf32>
    %857 = math.exp %856 : vector<16x64xf32>
    %858 = arith.mulf %857, %844 : vector<16x64xf32>
    %859 = arith.mulf %852, %851 : vector<1x64xf32>
    %860 = vector.broadcast %853 : vector<16x1xf32> to vector<16x64xf32>
    %861 = vector.broadcast %859 : vector<1x64xf32> to vector<16x64xf32>
    %862 = arith.mulf %860, %861 : vector<16x64xf32>
    %863 = arith.addf %858, %862 : vector<16x64xf32>
    %864 = vector.broadcast %854 : vector<16x1xf32> to vector<16x64xf32>
    %865 = arith.mulf %863, %864 : vector<16x64xf32>
    %cst_187 = arith.constant dense<0.000000e+00> : vector<64xf32>
    %866 = vector.multi_reduction <add>, %865, %cst_187 [0] : vector<16x64xf32> to vector<64xf32>
    %867 = vector.shape_cast %866 : vector<64xf32> to vector<1x64xf32>
    %868 = arith.mulf %31, %851 : vector<1x64xf32>
    %869 = arith.addf %867, %868 : vector<1x64xf32>
    %870 = vector.extract_strided_slice %758 {offsets = [5, 0], sizes = [1, 64], strides = [1, 1]} : vector<12x64xf32> to vector<1x64xf32>
    %871 = vector.extract_strided_slice %769 {offsets = [5, 0], sizes = [1, 64], strides = [1, 1]} : vector<12x64xf32> to vector<1x64xf32>
    %872 = vector.extract_strided_slice %771 {offsets = [0, 5], sizes = [16, 1], strides = [1, 1]} : vector<16x12xf32> to vector<16x1xf32>
    %873 = vector.extract_strided_slice %772 {offsets = [0, 5], sizes = [16, 1], strides = [1, 1]} : vector<16x12xf32> to vector<16x1xf32>
    %874 = vector.broadcast %871 : vector<1x64xf32> to vector<16x64xf32>
    %875 = arith.mulf %874, %27 : vector<16x64xf32>
    %876 = math.exp %875 : vector<16x64xf32>
    %877 = arith.mulf %876, %863 : vector<16x64xf32>
    %878 = arith.mulf %871, %870 : vector<1x64xf32>
    %879 = vector.broadcast %872 : vector<16x1xf32> to vector<16x64xf32>
    %880 = vector.broadcast %878 : vector<1x64xf32> to vector<16x64xf32>
    %881 = arith.mulf %879, %880 : vector<16x64xf32>
    %882 = arith.addf %877, %881 : vector<16x64xf32>
    %883 = vector.broadcast %873 : vector<16x1xf32> to vector<16x64xf32>
    %884 = arith.mulf %882, %883 : vector<16x64xf32>
    %cst_188 = arith.constant dense<0.000000e+00> : vector<64xf32>
    %885 = vector.multi_reduction <add>, %884, %cst_188 [0] : vector<16x64xf32> to vector<64xf32>
    %886 = vector.shape_cast %885 : vector<64xf32> to vector<1x64xf32>
    %887 = arith.mulf %31, %870 : vector<1x64xf32>
    %888 = arith.addf %886, %887 : vector<1x64xf32>
    %cst_189 = arith.constant 0.000000e+00 : f32
    %889 = vector.broadcast %cst_189 : f32 to vector<16x64xf32>
    %890 = vector.extract_strided_slice %758 {offsets = [6, 0], sizes = [1, 64], strides = [1, 1]} : vector<12x64xf32> to vector<1x64xf32>
    %891 = vector.extract_strided_slice %769 {offsets = [6, 0], sizes = [1, 64], strides = [1, 1]} : vector<12x64xf32> to vector<1x64xf32>
    %892 = vector.extract_strided_slice %771 {offsets = [0, 6], sizes = [16, 1], strides = [1, 1]} : vector<16x12xf32> to vector<16x1xf32>
    %893 = vector.extract_strided_slice %772 {offsets = [0, 6], sizes = [16, 1], strides = [1, 1]} : vector<16x12xf32> to vector<16x1xf32>
    %894 = vector.broadcast %891 : vector<1x64xf32> to vector<16x64xf32>
    %895 = arith.mulf %894, %27 : vector<16x64xf32>
    %896 = math.exp %895 : vector<16x64xf32>
    %897 = arith.mulf %896, %889 : vector<16x64xf32>
    %898 = arith.mulf %891, %890 : vector<1x64xf32>
    %899 = vector.broadcast %892 : vector<16x1xf32> to vector<16x64xf32>
    %900 = vector.broadcast %898 : vector<1x64xf32> to vector<16x64xf32>
    %901 = arith.mulf %899, %900 : vector<16x64xf32>
    %902 = arith.addf %897, %901 : vector<16x64xf32>
    %903 = vector.broadcast %893 : vector<16x1xf32> to vector<16x64xf32>
    %904 = arith.mulf %902, %903 : vector<16x64xf32>
    %cst_190 = arith.constant dense<0.000000e+00> : vector<64xf32>
    %905 = vector.multi_reduction <add>, %904, %cst_190 [0] : vector<16x64xf32> to vector<64xf32>
    %906 = vector.shape_cast %905 : vector<64xf32> to vector<1x64xf32>
    %907 = arith.mulf %31, %890 : vector<1x64xf32>
    %908 = arith.addf %906, %907 : vector<1x64xf32>
    %909 = arith.addf %811, %908 : vector<1x64xf32>
    %910 = vector.extract_strided_slice %758 {offsets = [8, 0], sizes = [1, 64], strides = [1, 1]} : vector<12x64xf32> to vector<1x64xf32>
    %911 = vector.extract_strided_slice %769 {offsets = [8, 0], sizes = [1, 64], strides = [1, 1]} : vector<12x64xf32> to vector<1x64xf32>
    %912 = vector.extract_strided_slice %771 {offsets = [0, 8], sizes = [16, 1], strides = [1, 1]} : vector<16x12xf32> to vector<16x1xf32>
    %913 = vector.extract_strided_slice %772 {offsets = [0, 8], sizes = [16, 1], strides = [1, 1]} : vector<16x12xf32> to vector<16x1xf32>
    %914 = vector.broadcast %911 : vector<1x64xf32> to vector<16x64xf32>
    %915 = arith.mulf %914, %27 : vector<16x64xf32>
    %916 = math.exp %915 : vector<16x64xf32>
    %917 = arith.mulf %916, %902 : vector<16x64xf32>
    %918 = arith.mulf %911, %910 : vector<1x64xf32>
    %919 = vector.broadcast %912 : vector<16x1xf32> to vector<16x64xf32>
    %920 = vector.broadcast %918 : vector<1x64xf32> to vector<16x64xf32>
    %921 = arith.mulf %919, %920 : vector<16x64xf32>
    %922 = arith.addf %917, %921 : vector<16x64xf32>
    %923 = vector.broadcast %913 : vector<16x1xf32> to vector<16x64xf32>
    %924 = arith.mulf %922, %923 : vector<16x64xf32>
    %cst_191 = arith.constant dense<0.000000e+00> : vector<64xf32>
    %925 = vector.multi_reduction <add>, %924, %cst_191 [0] : vector<16x64xf32> to vector<64xf32>
    %926 = vector.shape_cast %925 : vector<64xf32> to vector<1x64xf32>
    %927 = arith.mulf %31, %910 : vector<1x64xf32>
    %928 = arith.addf %926, %927 : vector<1x64xf32>
    %929 = arith.addf %792, %928 : vector<1x64xf32>
    %930 = vector.extract_strided_slice %758 {offsets = [10, 0], sizes = [1, 64], strides = [1, 1]} : vector<12x64xf32> to vector<1x64xf32>
    %931 = vector.extract_strided_slice %769 {offsets = [10, 0], sizes = [1, 64], strides = [1, 1]} : vector<12x64xf32> to vector<1x64xf32>
    %932 = vector.extract_strided_slice %771 {offsets = [0, 10], sizes = [16, 1], strides = [1, 1]} : vector<16x12xf32> to vector<16x1xf32>
    %933 = vector.extract_strided_slice %772 {offsets = [0, 10], sizes = [16, 1], strides = [1, 1]} : vector<16x12xf32> to vector<16x1xf32>
    %934 = vector.broadcast %931 : vector<1x64xf32> to vector<16x64xf32>
    %935 = arith.mulf %934, %27 : vector<16x64xf32>
    %936 = math.exp %935 : vector<16x64xf32>
    %937 = arith.mulf %936, %922 : vector<16x64xf32>
    %938 = arith.mulf %931, %930 : vector<1x64xf32>
    %939 = vector.broadcast %932 : vector<16x1xf32> to vector<16x64xf32>
    %940 = vector.broadcast %938 : vector<1x64xf32> to vector<16x64xf32>
    %941 = arith.mulf %939, %940 : vector<16x64xf32>
    %942 = arith.addf %937, %941 : vector<16x64xf32>
    %943 = vector.broadcast %933 : vector<16x1xf32> to vector<16x64xf32>
    %944 = arith.mulf %942, %943 : vector<16x64xf32>
    %cst_192 = arith.constant dense<0.000000e+00> : vector<64xf32>
    %945 = vector.multi_reduction <add>, %944, %cst_192 [0] : vector<16x64xf32> to vector<64xf32>
    %946 = vector.shape_cast %945 : vector<64xf32> to vector<1x64xf32>
    %947 = arith.mulf %31, %930 : vector<1x64xf32>
    %948 = arith.addf %946, %947 : vector<1x64xf32>
    %949 = arith.addf %830, %948 : vector<1x64xf32>
    %cst_193 = arith.constant 0.000000e+00 : f32
    %950 = vector.broadcast %cst_193 : f32 to vector<16x64xf32>
    %951 = vector.extract_strided_slice %758 {offsets = [7, 0], sizes = [1, 64], strides = [1, 1]} : vector<12x64xf32> to vector<1x64xf32>
    %952 = vector.extract_strided_slice %769 {offsets = [7, 0], sizes = [1, 64], strides = [1, 1]} : vector<12x64xf32> to vector<1x64xf32>
    %953 = vector.extract_strided_slice %771 {offsets = [0, 7], sizes = [16, 1], strides = [1, 1]} : vector<16x12xf32> to vector<16x1xf32>
    %954 = vector.extract_strided_slice %772 {offsets = [0, 7], sizes = [16, 1], strides = [1, 1]} : vector<16x12xf32> to vector<16x1xf32>
    %955 = vector.broadcast %952 : vector<1x64xf32> to vector<16x64xf32>
    %956 = arith.mulf %955, %27 : vector<16x64xf32>
    %957 = math.exp %956 : vector<16x64xf32>
    %958 = arith.mulf %957, %950 : vector<16x64xf32>
    %959 = arith.mulf %952, %951 : vector<1x64xf32>
    %960 = vector.broadcast %953 : vector<16x1xf32> to vector<16x64xf32>
    %961 = vector.broadcast %959 : vector<1x64xf32> to vector<16x64xf32>
    %962 = arith.mulf %960, %961 : vector<16x64xf32>
    %963 = arith.addf %958, %962 : vector<16x64xf32>
    %964 = vector.broadcast %954 : vector<16x1xf32> to vector<16x64xf32>
    %965 = arith.mulf %963, %964 : vector<16x64xf32>
    %cst_194 = arith.constant dense<0.000000e+00> : vector<64xf32>
    %966 = vector.multi_reduction <add>, %965, %cst_194 [0] : vector<16x64xf32> to vector<64xf32>
    %967 = vector.shape_cast %966 : vector<64xf32> to vector<1x64xf32>
    %968 = arith.mulf %31, %951 : vector<1x64xf32>
    %969 = arith.addf %967, %968 : vector<1x64xf32>
    %970 = arith.addf %869, %969 : vector<1x64xf32>
    %971 = vector.extract_strided_slice %758 {offsets = [9, 0], sizes = [1, 64], strides = [1, 1]} : vector<12x64xf32> to vector<1x64xf32>
    %972 = vector.extract_strided_slice %769 {offsets = [9, 0], sizes = [1, 64], strides = [1, 1]} : vector<12x64xf32> to vector<1x64xf32>
    %973 = vector.extract_strided_slice %771 {offsets = [0, 9], sizes = [16, 1], strides = [1, 1]} : vector<16x12xf32> to vector<16x1xf32>
    %974 = vector.extract_strided_slice %772 {offsets = [0, 9], sizes = [16, 1], strides = [1, 1]} : vector<16x12xf32> to vector<16x1xf32>
    %975 = vector.broadcast %972 : vector<1x64xf32> to vector<16x64xf32>
    %976 = arith.mulf %975, %27 : vector<16x64xf32>
    %977 = math.exp %976 : vector<16x64xf32>
    %978 = arith.mulf %977, %963 : vector<16x64xf32>
    %979 = arith.mulf %972, %971 : vector<1x64xf32>
    %980 = vector.broadcast %973 : vector<16x1xf32> to vector<16x64xf32>
    %981 = vector.broadcast %979 : vector<1x64xf32> to vector<16x64xf32>
    %982 = arith.mulf %980, %981 : vector<16x64xf32>
    %983 = arith.addf %978, %982 : vector<16x64xf32>
    %984 = vector.broadcast %974 : vector<16x1xf32> to vector<16x64xf32>
    %985 = arith.mulf %983, %984 : vector<16x64xf32>
    %cst_195 = arith.constant dense<0.000000e+00> : vector<64xf32>
    %986 = vector.multi_reduction <add>, %985, %cst_195 [0] : vector<16x64xf32> to vector<64xf32>
    %987 = vector.shape_cast %986 : vector<64xf32> to vector<1x64xf32>
    %988 = arith.mulf %31, %971 : vector<1x64xf32>
    %989 = arith.addf %987, %988 : vector<1x64xf32>
    %990 = arith.addf %850, %989 : vector<1x64xf32>
    %991 = vector.extract_strided_slice %758 {offsets = [11, 0], sizes = [1, 64], strides = [1, 1]} : vector<12x64xf32> to vector<1x64xf32>
    %992 = vector.extract_strided_slice %769 {offsets = [11, 0], sizes = [1, 64], strides = [1, 1]} : vector<12x64xf32> to vector<1x64xf32>
    %993 = vector.extract_strided_slice %771 {offsets = [0, 11], sizes = [16, 1], strides = [1, 1]} : vector<16x12xf32> to vector<16x1xf32>
    %994 = vector.extract_strided_slice %772 {offsets = [0, 11], sizes = [16, 1], strides = [1, 1]} : vector<16x12xf32> to vector<16x1xf32>
    %995 = vector.broadcast %992 : vector<1x64xf32> to vector<16x64xf32>
    %996 = arith.mulf %995, %27 : vector<16x64xf32>
    %997 = math.exp %996 : vector<16x64xf32>
    %998 = arith.mulf %997, %983 : vector<16x64xf32>
    %999 = arith.mulf %992, %991 : vector<1x64xf32>
    %1000 = vector.broadcast %993 : vector<16x1xf32> to vector<16x64xf32>
    %1001 = vector.broadcast %999 : vector<1x64xf32> to vector<16x64xf32>
    %1002 = arith.mulf %1000, %1001 : vector<16x64xf32>
    %1003 = arith.addf %998, %1002 : vector<16x64xf32>
    %1004 = vector.broadcast %994 : vector<16x1xf32> to vector<16x64xf32>
    %1005 = arith.mulf %1003, %1004 : vector<16x64xf32>
    %cst_196 = arith.constant dense<0.000000e+00> : vector<64xf32>
    %1006 = vector.multi_reduction <add>, %1005, %cst_196 [0] : vector<16x64xf32> to vector<64xf32>
    %1007 = vector.shape_cast %1006 : vector<64xf32> to vector<1x64xf32>
    %1008 = arith.mulf %31, %991 : vector<1x64xf32>
    %1009 = arith.addf %1007, %1008 : vector<1x64xf32>
    %1010 = arith.addf %888, %1009 : vector<1x64xf32>
    %1011 = tpu.concatenate %929, %990, %909, %970, %949, %1010 in 0 : vector<1x64xf32>, vector<1x64xf32>, vector<1x64xf32>, vector<1x64xf32>, vector<1x64xf32>, vector<1x64xf32> -> vector<6x64xf32>
    %cst_197 = arith.constant 5.000000e-01 : f32
    %1012 = vector.broadcast %cst_197 : f32 to vector<6x64xf32>
    %1013 = arith.mulf %1011, %1012 : vector<6x64xf32>
    %1014 = arith.mulf %1013, %693 : vector<6x64xf32>
    %cst_198 = arith.constant dense<0.000000e+00> : vector<6x32xf32>
    %1015 = tpu.matmul %1014, %32, %cst_198 {dimension_numbers = #tpu.dot_dimension_numbers<[1], [0], [0], [1], [0, 0, 1, 1], [], []>} : vector<6x64xf32>, vector<64x32xf32>, vector<6x32xf32> -> vector<6x32xf32>
    %1016 = arith.addf %1015, %78 : vector<6x32xf32>
    %1017 = vector.extract_strided_slice %663 {offsets = [4, 0], sizes = [2, 32], strides = [1, 1]} : vector<10x32xf32> to vector<2x32xf32>
    %1018 = vector.extract_strided_slice %1016 {offsets = [0, 0], sizes = [2, 32], strides = [1, 1]} : vector<6x32xf32> to vector<2x32xf32>
    %1019 = vector.extract_strided_slice %1016 {offsets = [2, 0], sizes = [2, 32], strides = [1, 1]} : vector<6x32xf32> to vector<2x32xf32>
    %1020 = arith.addf %1018, %1019 : vector<2x32xf32>
    %1021 = vector.extract_strided_slice %1016 {offsets = [4, 0], sizes = [2, 32], strides = [1, 1]} : vector<6x32xf32> to vector<2x32xf32>
    %1022 = arith.addf %1020, %1021 : vector<2x32xf32>
    %cst_199 = arith.constant 0.333333343 : f32
    %1023 = vector.broadcast %cst_199 : f32 to vector<2x32xf32>
    %1024 = arith.mulf %1022, %1023 : vector<2x32xf32>
    %1025 = arith.addf %1017, %1024 : vector<2x32xf32>
    %cst_200 = arith.constant 5.000000e-01 : f32
    %1026 = vector.broadcast %cst_200 : f32 to vector<2x32xf32>
    %1027 = arith.mulf %1025, %1026 : vector<2x32xf32>
    %cst_201 = arith.constant dense<0.000000e+00> : vector<2x32xf32>
    %1028 = tpu.matmul %1027, %36, %cst_201 {dimension_numbers = #tpu.dot_dimension_numbers<[1], [0], [0], [1], [0, 0, 1, 1], [], []>} : vector<2x32xf32>, vector<32x32xf32>, vector<2x32xf32> -> vector<2x32xf32>
    %cst_202 = arith.constant 0.000000e+00 : f32
    %1029 = vector.broadcast %cst_202 : f32 to vector<2x32xf32>
    %1030 = arith.subf %1029, %1028 : vector<2x32xf32>
    %1031 = math.exp %1030 : vector<2x32xf32>
    %cst_203 = arith.constant 1.000000e+00 : f32
    %1032 = vector.broadcast %cst_203 : f32 to vector<2x32xf32>
    %1033 = arith.addf %1032, %1031 : vector<2x32xf32>
    %cst_204 = arith.constant 1.000000e+00 : f32
    %1034 = vector.broadcast %cst_204 : f32 to vector<2x32xf32>
    %1035 = arith.divf %1034, %1033 : vector<2x32xf32>
    %1036 = tpu.concatenate %1035, %1035, %1035, %1035, %1035 in 0 : vector<2x32xf32>, vector<2x32xf32>, vector<2x32xf32>, vector<2x32xf32>, vector<2x32xf32> -> vector<10x32xf32>
    %1037 = arith.mulf %663, %1036 : vector<10x32xf32>
    %1038 = tpu.concatenate %1035, %1035, %1035 in 0 : vector<2x32xf32>, vector<2x32xf32>, vector<2x32xf32> -> vector<6x32xf32>
    %1039 = arith.mulf %1016, %1038 : vector<6x32xf32>
    %cst_205 = arith.constant dense<0.000000e+00> : vector<10xf32>
    %1040 = vector.multi_reduction <add>, %1037, %cst_205 [1] : vector<10x32xf32> to vector<10xf32>
    %1041 = vector.shape_cast %1040 : vector<10xf32> to vector<10x1xf32>
    %cst_206 = arith.constant 3.200000e+01 : f32
    %1042 = vector.broadcast %cst_206 : f32 to vector<10x1xf32>
    %1043 = arith.divf %1041, %1042 : vector<10x1xf32>
    %1044 = vector.broadcast %1043 : vector<10x1xf32> to vector<10x32xf32>
    %1045 = arith.subf %1037, %1044 : vector<10x32xf32>
    %1046 = arith.mulf %1045, %1045 : vector<10x32xf32>
    %cst_207 = arith.constant dense<0.000000e+00> : vector<10xf32>
    %1047 = vector.multi_reduction <add>, %1046, %cst_207 [1] : vector<10x32xf32> to vector<10xf32>
    %1048 = vector.shape_cast %1047 : vector<10xf32> to vector<10x1xf32>
    %cst_208 = arith.constant 3.200000e+01 : f32
    %1049 = vector.broadcast %cst_208 : f32 to vector<10x1xf32>
    %1050 = arith.divf %1048, %1049 : vector<10x1xf32>
    %cst_209 = arith.constant 9.99999997E-7 : f32
    %1051 = vector.broadcast %cst_209 : f32 to vector<10x1xf32>
    %1052 = arith.addf %1050, %1051 : vector<10x1xf32>
    %1053 = math.rsqrt %1052 : vector<10x1xf32>
    %1054 = vector.broadcast %1053 : vector<10x1xf32> to vector<10x32xf32>
    %1055 = arith.mulf %1045, %1054 : vector<10x32xf32>
    %1056 = vector.broadcast %46 : vector<1x32xf32> to vector<10x32xf32>
    %1057 = arith.mulf %1055, %1056 : vector<10x32xf32>
    %1058 = vector.broadcast %47 : vector<1x32xf32> to vector<10x32xf32>
    %1059 = arith.addf %1057, %1058 : vector<10x32xf32>
    %cst_210 = arith.constant dense<0.000000e+00> : vector<10x64xf32>
    %1060 = tpu.matmul %1059, %37, %cst_210 {dimension_numbers = #tpu.dot_dimension_numbers<[1], [0], [0], [1], [0, 0, 1, 1], [], []>} : vector<10x32xf32>, vector<32x64xf32>, vector<10x64xf32> -> vector<10x64xf32>
    %cst_211 = arith.constant dense<0.000000e+00> : vector<10x64xf32>
    %1061 = tpu.matmul %1059, %38, %cst_211 {dimension_numbers = #tpu.dot_dimension_numbers<[1], [0], [0], [1], [0, 0, 1, 1], [], []>} : vector<10x32xf32>, vector<32x64xf32>, vector<10x64xf32> -> vector<10x64xf32>
    %cst_212 = arith.constant 0.000000e+00 : f32
    %1062 = vector.broadcast %cst_212 : f32 to vector<10x64xf32>
    %1063 = arith.subf %1062, %1061 : vector<10x64xf32>
    %1064 = math.exp %1063 : vector<10x64xf32>
    %cst_213 = arith.constant 1.000000e+00 : f32
    %1065 = vector.broadcast %cst_213 : f32 to vector<10x64xf32>
    %1066 = arith.addf %1065, %1064 : vector<10x64xf32>
    %cst_214 = arith.constant 1.000000e+00 : f32
    %1067 = vector.broadcast %cst_214 : f32 to vector<10x64xf32>
    %1068 = arith.divf %1067, %1066 : vector<10x64xf32>
    %1069 = arith.mulf %1061, %1068 : vector<10x64xf32>
    %1070 = vector.extract_strided_slice %41 {offsets = [3, 0], sizes = [1, 64], strides = [1, 1]} : vector<4x64xf32> to vector<1x64xf32>
    %1071 = vector.extract_strided_slice %1060 {offsets = [0, 0], sizes = [2, 64], strides = [1, 1]} : vector<10x64xf32> to vector<2x64xf32>
    %1072 = vector.broadcast %1070 : vector<1x64xf32> to vector<2x64xf32>
    %1073 = arith.mulf %1071, %1072 : vector<2x64xf32>
    %1074 = vector.extract_strided_slice %41 {offsets = [3, 0], sizes = [1, 64], strides = [1, 1]} : vector<4x64xf32> to vector<1x64xf32>
    %1075 = vector.extract_strided_slice %1060 {offsets = [2, 0], sizes = [2, 64], strides = [1, 1]} : vector<10x64xf32> to vector<2x64xf32>
    %1076 = vector.broadcast %1074 : vector<1x64xf32> to vector<2x64xf32>
    %1077 = arith.mulf %1075, %1076 : vector<2x64xf32>
    %1078 = vector.extract_strided_slice %41 {offsets = [2, 0], sizes = [1, 64], strides = [1, 1]} : vector<4x64xf32> to vector<1x64xf32>
    %1079 = vector.extract_strided_slice %1060 {offsets = [0, 0], sizes = [2, 64], strides = [1, 1]} : vector<10x64xf32> to vector<2x64xf32>
    %1080 = vector.broadcast %1078 : vector<1x64xf32> to vector<2x64xf32>
    %1081 = arith.mulf %1079, %1080 : vector<2x64xf32>
    %1082 = arith.addf %1077, %1081 : vector<2x64xf32>
    %1083 = vector.extract_strided_slice %41 {offsets = [3, 0], sizes = [1, 64], strides = [1, 1]} : vector<4x64xf32> to vector<1x64xf32>
    %1084 = vector.extract_strided_slice %1060 {offsets = [4, 0], sizes = [2, 64], strides = [1, 1]} : vector<10x64xf32> to vector<2x64xf32>
    %1085 = vector.broadcast %1083 : vector<1x64xf32> to vector<2x64xf32>
    %1086 = arith.mulf %1084, %1085 : vector<2x64xf32>
    %1087 = vector.extract_strided_slice %41 {offsets = [2, 0], sizes = [1, 64], strides = [1, 1]} : vector<4x64xf32> to vector<1x64xf32>
    %1088 = vector.extract_strided_slice %1060 {offsets = [2, 0], sizes = [2, 64], strides = [1, 1]} : vector<10x64xf32> to vector<2x64xf32>
    %1089 = vector.broadcast %1087 : vector<1x64xf32> to vector<2x64xf32>
    %1090 = arith.mulf %1088, %1089 : vector<2x64xf32>
    %1091 = arith.addf %1086, %1090 : vector<2x64xf32>
    %1092 = vector.extract_strided_slice %41 {offsets = [1, 0], sizes = [1, 64], strides = [1, 1]} : vector<4x64xf32> to vector<1x64xf32>
    %1093 = vector.extract_strided_slice %1060 {offsets = [0, 0], sizes = [2, 64], strides = [1, 1]} : vector<10x64xf32> to vector<2x64xf32>
    %1094 = vector.broadcast %1092 : vector<1x64xf32> to vector<2x64xf32>
    %1095 = arith.mulf %1093, %1094 : vector<2x64xf32>
    %1096 = arith.addf %1091, %1095 : vector<2x64xf32>
    %1097 = vector.extract_strided_slice %41 {offsets = [3, 0], sizes = [1, 64], strides = [1, 1]} : vector<4x64xf32> to vector<1x64xf32>
    %1098 = vector.extract_strided_slice %1060 {offsets = [6, 0], sizes = [2, 64], strides = [1, 1]} : vector<10x64xf32> to vector<2x64xf32>
    %1099 = vector.broadcast %1097 : vector<1x64xf32> to vector<2x64xf32>
    %1100 = arith.mulf %1098, %1099 : vector<2x64xf32>
    %1101 = vector.extract_strided_slice %41 {offsets = [2, 0], sizes = [1, 64], strides = [1, 1]} : vector<4x64xf32> to vector<1x64xf32>
    %1102 = vector.extract_strided_slice %1060 {offsets = [4, 0], sizes = [2, 64], strides = [1, 1]} : vector<10x64xf32> to vector<2x64xf32>
    %1103 = vector.broadcast %1101 : vector<1x64xf32> to vector<2x64xf32>
    %1104 = arith.mulf %1102, %1103 : vector<2x64xf32>
    %1105 = arith.addf %1100, %1104 : vector<2x64xf32>
    %1106 = vector.extract_strided_slice %41 {offsets = [1, 0], sizes = [1, 64], strides = [1, 1]} : vector<4x64xf32> to vector<1x64xf32>
    %1107 = vector.extract_strided_slice %1060 {offsets = [2, 0], sizes = [2, 64], strides = [1, 1]} : vector<10x64xf32> to vector<2x64xf32>
    %1108 = vector.broadcast %1106 : vector<1x64xf32> to vector<2x64xf32>
    %1109 = arith.mulf %1107, %1108 : vector<2x64xf32>
    %1110 = arith.addf %1105, %1109 : vector<2x64xf32>
    %1111 = vector.extract_strided_slice %41 {offsets = [0, 0], sizes = [1, 64], strides = [1, 1]} : vector<4x64xf32> to vector<1x64xf32>
    %1112 = vector.extract_strided_slice %1060 {offsets = [0, 0], sizes = [2, 64], strides = [1, 1]} : vector<10x64xf32> to vector<2x64xf32>
    %1113 = vector.broadcast %1111 : vector<1x64xf32> to vector<2x64xf32>
    %1114 = arith.mulf %1112, %1113 : vector<2x64xf32>
    %1115 = arith.addf %1110, %1114 : vector<2x64xf32>
    %1116 = vector.extract_strided_slice %41 {offsets = [3, 0], sizes = [1, 64], strides = [1, 1]} : vector<4x64xf32> to vector<1x64xf32>
    %1117 = vector.extract_strided_slice %1060 {offsets = [8, 0], sizes = [2, 64], strides = [1, 1]} : vector<10x64xf32> to vector<2x64xf32>
    %1118 = vector.broadcast %1116 : vector<1x64xf32> to vector<2x64xf32>
    %1119 = arith.mulf %1117, %1118 : vector<2x64xf32>
    %1120 = vector.extract_strided_slice %41 {offsets = [2, 0], sizes = [1, 64], strides = [1, 1]} : vector<4x64xf32> to vector<1x64xf32>
    %1121 = vector.extract_strided_slice %1060 {offsets = [6, 0], sizes = [2, 64], strides = [1, 1]} : vector<10x64xf32> to vector<2x64xf32>
    %1122 = vector.broadcast %1120 : vector<1x64xf32> to vector<2x64xf32>
    %1123 = arith.mulf %1121, %1122 : vector<2x64xf32>
    %1124 = arith.addf %1119, %1123 : vector<2x64xf32>
    %1125 = vector.extract_strided_slice %41 {offsets = [1, 0], sizes = [1, 64], strides = [1, 1]} : vector<4x64xf32> to vector<1x64xf32>
    %1126 = vector.extract_strided_slice %1060 {offsets = [4, 0], sizes = [2, 64], strides = [1, 1]} : vector<10x64xf32> to vector<2x64xf32>
    %1127 = vector.broadcast %1125 : vector<1x64xf32> to vector<2x64xf32>
    %1128 = arith.mulf %1126, %1127 : vector<2x64xf32>
    %1129 = arith.addf %1124, %1128 : vector<2x64xf32>
    %1130 = vector.extract_strided_slice %41 {offsets = [0, 0], sizes = [1, 64], strides = [1, 1]} : vector<4x64xf32> to vector<1x64xf32>
    %1131 = vector.extract_strided_slice %1060 {offsets = [2, 0], sizes = [2, 64], strides = [1, 1]} : vector<10x64xf32> to vector<2x64xf32>
    %1132 = vector.broadcast %1130 : vector<1x64xf32> to vector<2x64xf32>
    %1133 = arith.mulf %1131, %1132 : vector<2x64xf32>
    %1134 = arith.addf %1129, %1133 : vector<2x64xf32>
    %1135 = vector.extract_strided_slice %41 {offsets = [3, 0], sizes = [1, 64], strides = [1, 1]} : vector<4x64xf32> to vector<1x64xf32>
    %1136 = vector.extract_strided_slice %1060 {offsets = [6, 0], sizes = [2, 64], strides = [1, 1]} : vector<10x64xf32> to vector<2x64xf32>
    %1137 = vector.broadcast %1135 : vector<1x64xf32> to vector<2x64xf32>
    %1138 = arith.mulf %1136, %1137 : vector<2x64xf32>
    %1139 = vector.extract_strided_slice %41 {offsets = [3, 0], sizes = [1, 64], strides = [1, 1]} : vector<4x64xf32> to vector<1x64xf32>
    %1140 = vector.extract_strided_slice %1060 {offsets = [4, 0], sizes = [2, 64], strides = [1, 1]} : vector<10x64xf32> to vector<2x64xf32>
    %1141 = vector.broadcast %1139 : vector<1x64xf32> to vector<2x64xf32>
    %1142 = arith.mulf %1140, %1141 : vector<2x64xf32>
    %1143 = vector.extract_strided_slice %41 {offsets = [2, 0], sizes = [1, 64], strides = [1, 1]} : vector<4x64xf32> to vector<1x64xf32>
    %1144 = vector.extract_strided_slice %1060 {offsets = [6, 0], sizes = [2, 64], strides = [1, 1]} : vector<10x64xf32> to vector<2x64xf32>
    %1145 = vector.broadcast %1143 : vector<1x64xf32> to vector<2x64xf32>
    %1146 = arith.mulf %1144, %1145 : vector<2x64xf32>
    %1147 = arith.addf %1142, %1146 : vector<2x64xf32>
    %1148 = vector.extract_strided_slice %41 {offsets = [3, 0], sizes = [1, 64], strides = [1, 1]} : vector<4x64xf32> to vector<1x64xf32>
    %1149 = vector.extract_strided_slice %1060 {offsets = [2, 0], sizes = [2, 64], strides = [1, 1]} : vector<10x64xf32> to vector<2x64xf32>
    %1150 = vector.broadcast %1148 : vector<1x64xf32> to vector<2x64xf32>
    %1151 = arith.mulf %1149, %1150 : vector<2x64xf32>
    %1152 = vector.extract_strided_slice %41 {offsets = [2, 0], sizes = [1, 64], strides = [1, 1]} : vector<4x64xf32> to vector<1x64xf32>
    %1153 = vector.extract_strided_slice %1060 {offsets = [4, 0], sizes = [2, 64], strides = [1, 1]} : vector<10x64xf32> to vector<2x64xf32>
    %1154 = vector.broadcast %1152 : vector<1x64xf32> to vector<2x64xf32>
    %1155 = arith.mulf %1153, %1154 : vector<2x64xf32>
    %1156 = arith.addf %1151, %1155 : vector<2x64xf32>
    %1157 = vector.extract_strided_slice %41 {offsets = [1, 0], sizes = [1, 64], strides = [1, 1]} : vector<4x64xf32> to vector<1x64xf32>
    %1158 = vector.extract_strided_slice %1060 {offsets = [6, 0], sizes = [2, 64], strides = [1, 1]} : vector<10x64xf32> to vector<2x64xf32>
    %1159 = vector.broadcast %1157 : vector<1x64xf32> to vector<2x64xf32>
    %1160 = arith.mulf %1158, %1159 : vector<2x64xf32>
    %1161 = arith.addf %1156, %1160 : vector<2x64xf32>
    %1162 = vector.extract_strided_slice %41 {offsets = [3, 0], sizes = [1, 64], strides = [1, 1]} : vector<4x64xf32> to vector<1x64xf32>
    %1163 = vector.extract_strided_slice %1060 {offsets = [0, 0], sizes = [2, 64], strides = [1, 1]} : vector<10x64xf32> to vector<2x64xf32>
    %1164 = vector.broadcast %1162 : vector<1x64xf32> to vector<2x64xf32>
    %1165 = arith.mulf %1163, %1164 : vector<2x64xf32>
    %1166 = vector.extract_strided_slice %41 {offsets = [2, 0], sizes = [1, 64], strides = [1, 1]} : vector<4x64xf32> to vector<1x64xf32>
    %1167 = vector.extract_strided_slice %1060 {offsets = [2, 0], sizes = [2, 64], strides = [1, 1]} : vector<10x64xf32> to vector<2x64xf32>
    %1168 = vector.broadcast %1166 : vector<1x64xf32> to vector<2x64xf32>
    %1169 = arith.mulf %1167, %1168 : vector<2x64xf32>
    %1170 = arith.addf %1165, %1169 : vector<2x64xf32>
    %1171 = vector.extract_strided_slice %41 {offsets = [1, 0], sizes = [1, 64], strides = [1, 1]} : vector<4x64xf32> to vector<1x64xf32>
    %1172 = vector.extract_strided_slice %1060 {offsets = [4, 0], sizes = [2, 64], strides = [1, 1]} : vector<10x64xf32> to vector<2x64xf32>
    %1173 = vector.broadcast %1171 : vector<1x64xf32> to vector<2x64xf32>
    %1174 = arith.mulf %1172, %1173 : vector<2x64xf32>
    %1175 = arith.addf %1170, %1174 : vector<2x64xf32>
    %1176 = vector.extract_strided_slice %41 {offsets = [0, 0], sizes = [1, 64], strides = [1, 1]} : vector<4x64xf32> to vector<1x64xf32>
    %1177 = vector.extract_strided_slice %1060 {offsets = [6, 0], sizes = [2, 64], strides = [1, 1]} : vector<10x64xf32> to vector<2x64xf32>
    %1178 = vector.broadcast %1176 : vector<1x64xf32> to vector<2x64xf32>
    %1179 = arith.mulf %1177, %1178 : vector<2x64xf32>
    %1180 = arith.addf %1175, %1179 : vector<2x64xf32>
    %1181 = vector.extract_strided_slice %41 {offsets = [3, 0], sizes = [1, 64], strides = [1, 1]} : vector<4x64xf32> to vector<1x64xf32>
    %1182 = vector.extract_strided_slice %1060 {offsets = [8, 0], sizes = [2, 64], strides = [1, 1]} : vector<10x64xf32> to vector<2x64xf32>
    %1183 = vector.broadcast %1181 : vector<1x64xf32> to vector<2x64xf32>
    %1184 = arith.mulf %1182, %1183 : vector<2x64xf32>
    %1185 = vector.extract_strided_slice %41 {offsets = [2, 0], sizes = [1, 64], strides = [1, 1]} : vector<4x64xf32> to vector<1x64xf32>
    %1186 = vector.extract_strided_slice %1060 {offsets = [0, 0], sizes = [2, 64], strides = [1, 1]} : vector<10x64xf32> to vector<2x64xf32>
    %1187 = vector.broadcast %1185 : vector<1x64xf32> to vector<2x64xf32>
    %1188 = arith.mulf %1186, %1187 : vector<2x64xf32>
    %1189 = arith.addf %1184, %1188 : vector<2x64xf32>
    %1190 = vector.extract_strided_slice %41 {offsets = [1, 0], sizes = [1, 64], strides = [1, 1]} : vector<4x64xf32> to vector<1x64xf32>
    %1191 = vector.extract_strided_slice %1060 {offsets = [2, 0], sizes = [2, 64], strides = [1, 1]} : vector<10x64xf32> to vector<2x64xf32>
    %1192 = vector.broadcast %1190 : vector<1x64xf32> to vector<2x64xf32>
    %1193 = arith.mulf %1191, %1192 : vector<2x64xf32>
    %1194 = arith.addf %1189, %1193 : vector<2x64xf32>
    %1195 = vector.extract_strided_slice %41 {offsets = [0, 0], sizes = [1, 64], strides = [1, 1]} : vector<4x64xf32> to vector<1x64xf32>
    %1196 = vector.extract_strided_slice %1060 {offsets = [4, 0], sizes = [2, 64], strides = [1, 1]} : vector<10x64xf32> to vector<2x64xf32>
    %1197 = vector.broadcast %1195 : vector<1x64xf32> to vector<2x64xf32>
    %1198 = arith.mulf %1196, %1197 : vector<2x64xf32>
    %1199 = arith.addf %1194, %1198 : vector<2x64xf32>
    %1200 = tpu.concatenate %1073, %1082, %1096, %1115, %1134, %1138, %1147, %1161, %1180, %1199 in 0 : vector<2x64xf32>, vector<2x64xf32>, vector<2x64xf32>, vector<2x64xf32>, vector<2x64xf32>, vector<2x64xf32>, vector<2x64xf32>, vector<2x64xf32>, vector<2x64xf32>, vector<2x64xf32> -> vector<20x64xf32>
    %1201 = vector.broadcast %42 : vector<1x64xf32> to vector<20x64xf32>
    %1202 = arith.addf %1200, %1201 : vector<20x64xf32>
    %cst_215 = arith.constant 0.000000e+00 : f32
    %1203 = vector.broadcast %cst_215 : f32 to vector<20x64xf32>
    %1204 = arith.subf %1203, %1202 : vector<20x64xf32>
    %1205 = math.exp %1204 : vector<20x64xf32>
    %cst_216 = arith.constant 1.000000e+00 : f32
    %1206 = vector.broadcast %cst_216 : f32 to vector<20x64xf32>
    %1207 = arith.addf %1206, %1205 : vector<20x64xf32>
    %cst_217 = arith.constant 1.000000e+00 : f32
    %1208 = vector.broadcast %cst_217 : f32 to vector<20x64xf32>
    %1209 = arith.divf %1208, %1207 : vector<20x64xf32>
    %1210 = arith.mulf %1202, %1209 : vector<20x64xf32>
    %cst_218 = arith.constant dense<0.000000e+00> : vector<20x64xf32>
    %1211 = tpu.matmul %1210, %39, %cst_218 {dimension_numbers = #tpu.dot_dimension_numbers<[1], [0], [0], [1], [0, 0, 1, 1], [], []>} : vector<20x64xf32>, vector<64x64xf32>, vector<20x64xf32> -> vector<20x64xf32>
    %1212 = vector.broadcast %43 : vector<1x64xf32> to vector<20x64xf32>
    %1213 = arith.addf %1211, %1212 : vector<20x64xf32>
    %cst_219 = arith.constant 0.000000e+00 : f32
    %1214 = vector.broadcast %cst_219 : f32 to vector<20x64xf32>
    %1215 = arith.maximumf %1213, %1214 : vector<20x64xf32>
    %1216 = math.absf %1213 : vector<20x64xf32>
    %cst_220 = arith.constant 0.000000e+00 : f32
    %1217 = vector.broadcast %cst_220 : f32 to vector<20x64xf32>
    %1218 = arith.subf %1217, %1216 : vector<20x64xf32>
    %1219 = math.exp %1218 : vector<20x64xf32>
    %1220 = math.log1p %1219 : vector<20x64xf32>
    %1221 = arith.addf %1215, %1220 : vector<20x64xf32>
    %cst_221 = arith.constant dense<0.000000e+00> : vector<32x20xf32>
    %1222 = tpu.matmul %48, %1210, %cst_221 {dimension_numbers = #tpu.dot_dimension_numbers<[1], [1], [0], [0], [0, 0, 1, 0], [], []>} : vector<32x64xf32>, vector<20x64xf32>, vector<32x20xf32> -> vector<32x20xf32>
    %1223 = vector.extract_strided_slice %1222 {offsets = [0, 0], sizes = [16, 20], strides = [1, 1]} : vector<32x20xf32> to vector<16x20xf32>
    %1224 = vector.extract_strided_slice %1222 {offsets = [16, 0], sizes = [16, 20], strides = [1, 1]} : vector<32x20xf32> to vector<16x20xf32>
    %cst_222 = arith.constant 0.000000e+00 : f32
    %1225 = vector.broadcast %cst_222 : f32 to vector<16x64xf32>
    %1226 = vector.extract_strided_slice %1210 {offsets = [0, 0], sizes = [1, 64], strides = [1, 1]} : vector<20x64xf32> to vector<1x64xf32>
    %1227 = vector.extract_strided_slice %1221 {offsets = [0, 0], sizes = [1, 64], strides = [1, 1]} : vector<20x64xf32> to vector<1x64xf32>
    %1228 = vector.extract_strided_slice %1223 {offsets = [0, 0], sizes = [16, 1], strides = [1, 1]} : vector<16x20xf32> to vector<16x1xf32>
    %1229 = vector.extract_strided_slice %1224 {offsets = [0, 0], sizes = [16, 1], strides = [1, 1]} : vector<16x20xf32> to vector<16x1xf32>
    %1230 = vector.broadcast %1227 : vector<1x64xf32> to vector<16x64xf32>
    %1231 = arith.mulf %1230, %40 : vector<16x64xf32>
    %1232 = math.exp %1231 : vector<16x64xf32>
    %1233 = arith.mulf %1232, %1225 : vector<16x64xf32>
    %1234 = arith.mulf %1227, %1226 : vector<1x64xf32>
    %1235 = vector.broadcast %1228 : vector<16x1xf32> to vector<16x64xf32>
    %1236 = vector.broadcast %1234 : vector<1x64xf32> to vector<16x64xf32>
    %1237 = arith.mulf %1235, %1236 : vector<16x64xf32>
    %1238 = arith.addf %1233, %1237 : vector<16x64xf32>
    %1239 = vector.broadcast %1229 : vector<16x1xf32> to vector<16x64xf32>
    %1240 = arith.mulf %1238, %1239 : vector<16x64xf32>
    %cst_223 = arith.constant dense<0.000000e+00> : vector<64xf32>
    %1241 = vector.multi_reduction <add>, %1240, %cst_223 [0] : vector<16x64xf32> to vector<64xf32>
    %1242 = vector.shape_cast %1241 : vector<64xf32> to vector<1x64xf32>
    %1243 = arith.mulf %44, %1226 : vector<1x64xf32>
    %1244 = arith.addf %1242, %1243 : vector<1x64xf32>
    %1245 = vector.extract_strided_slice %1210 {offsets = [2, 0], sizes = [1, 64], strides = [1, 1]} : vector<20x64xf32> to vector<1x64xf32>
    %1246 = vector.extract_strided_slice %1221 {offsets = [2, 0], sizes = [1, 64], strides = [1, 1]} : vector<20x64xf32> to vector<1x64xf32>
    %1247 = vector.extract_strided_slice %1223 {offsets = [0, 2], sizes = [16, 1], strides = [1, 1]} : vector<16x20xf32> to vector<16x1xf32>
    %1248 = vector.extract_strided_slice %1224 {offsets = [0, 2], sizes = [16, 1], strides = [1, 1]} : vector<16x20xf32> to vector<16x1xf32>
    %1249 = vector.broadcast %1246 : vector<1x64xf32> to vector<16x64xf32>
    %1250 = arith.mulf %1249, %40 : vector<16x64xf32>
    %1251 = math.exp %1250 : vector<16x64xf32>
    %1252 = arith.mulf %1251, %1238 : vector<16x64xf32>
    %1253 = arith.mulf %1246, %1245 : vector<1x64xf32>
    %1254 = vector.broadcast %1247 : vector<16x1xf32> to vector<16x64xf32>
    %1255 = vector.broadcast %1253 : vector<1x64xf32> to vector<16x64xf32>
    %1256 = arith.mulf %1254, %1255 : vector<16x64xf32>
    %1257 = arith.addf %1252, %1256 : vector<16x64xf32>
    %1258 = vector.broadcast %1248 : vector<16x1xf32> to vector<16x64xf32>
    %1259 = arith.mulf %1257, %1258 : vector<16x64xf32>
    %cst_224 = arith.constant dense<0.000000e+00> : vector<64xf32>
    %1260 = vector.multi_reduction <add>, %1259, %cst_224 [0] : vector<16x64xf32> to vector<64xf32>
    %1261 = vector.shape_cast %1260 : vector<64xf32> to vector<1x64xf32>
    %1262 = arith.mulf %44, %1245 : vector<1x64xf32>
    %1263 = arith.addf %1261, %1262 : vector<1x64xf32>
    %1264 = vector.extract_strided_slice %1210 {offsets = [4, 0], sizes = [1, 64], strides = [1, 1]} : vector<20x64xf32> to vector<1x64xf32>
    %1265 = vector.extract_strided_slice %1221 {offsets = [4, 0], sizes = [1, 64], strides = [1, 1]} : vector<20x64xf32> to vector<1x64xf32>
    %1266 = vector.extract_strided_slice %1223 {offsets = [0, 4], sizes = [16, 1], strides = [1, 1]} : vector<16x20xf32> to vector<16x1xf32>
    %1267 = vector.extract_strided_slice %1224 {offsets = [0, 4], sizes = [16, 1], strides = [1, 1]} : vector<16x20xf32> to vector<16x1xf32>
    %1268 = vector.broadcast %1265 : vector<1x64xf32> to vector<16x64xf32>
    %1269 = arith.mulf %1268, %40 : vector<16x64xf32>
    %1270 = math.exp %1269 : vector<16x64xf32>
    %1271 = arith.mulf %1270, %1257 : vector<16x64xf32>
    %1272 = arith.mulf %1265, %1264 : vector<1x64xf32>
    %1273 = vector.broadcast %1266 : vector<16x1xf32> to vector<16x64xf32>
    %1274 = vector.broadcast %1272 : vector<1x64xf32> to vector<16x64xf32>
    %1275 = arith.mulf %1273, %1274 : vector<16x64xf32>
    %1276 = arith.addf %1271, %1275 : vector<16x64xf32>
    %1277 = vector.broadcast %1267 : vector<16x1xf32> to vector<16x64xf32>
    %1278 = arith.mulf %1276, %1277 : vector<16x64xf32>
    %cst_225 = arith.constant dense<0.000000e+00> : vector<64xf32>
    %1279 = vector.multi_reduction <add>, %1278, %cst_225 [0] : vector<16x64xf32> to vector<64xf32>
    %1280 = vector.shape_cast %1279 : vector<64xf32> to vector<1x64xf32>
    %1281 = arith.mulf %44, %1264 : vector<1x64xf32>
    %1282 = arith.addf %1280, %1281 : vector<1x64xf32>
    %1283 = vector.extract_strided_slice %1210 {offsets = [6, 0], sizes = [1, 64], strides = [1, 1]} : vector<20x64xf32> to vector<1x64xf32>
    %1284 = vector.extract_strided_slice %1221 {offsets = [6, 0], sizes = [1, 64], strides = [1, 1]} : vector<20x64xf32> to vector<1x64xf32>
    %1285 = vector.extract_strided_slice %1223 {offsets = [0, 6], sizes = [16, 1], strides = [1, 1]} : vector<16x20xf32> to vector<16x1xf32>
    %1286 = vector.extract_strided_slice %1224 {offsets = [0, 6], sizes = [16, 1], strides = [1, 1]} : vector<16x20xf32> to vector<16x1xf32>
    %1287 = vector.broadcast %1284 : vector<1x64xf32> to vector<16x64xf32>
    %1288 = arith.mulf %1287, %40 : vector<16x64xf32>
    %1289 = math.exp %1288 : vector<16x64xf32>
    %1290 = arith.mulf %1289, %1276 : vector<16x64xf32>
    %1291 = arith.mulf %1284, %1283 : vector<1x64xf32>
    %1292 = vector.broadcast %1285 : vector<16x1xf32> to vector<16x64xf32>
    %1293 = vector.broadcast %1291 : vector<1x64xf32> to vector<16x64xf32>
    %1294 = arith.mulf %1292, %1293 : vector<16x64xf32>
    %1295 = arith.addf %1290, %1294 : vector<16x64xf32>
    %1296 = vector.broadcast %1286 : vector<16x1xf32> to vector<16x64xf32>
    %1297 = arith.mulf %1295, %1296 : vector<16x64xf32>
    %cst_226 = arith.constant dense<0.000000e+00> : vector<64xf32>
    %1298 = vector.multi_reduction <add>, %1297, %cst_226 [0] : vector<16x64xf32> to vector<64xf32>
    %1299 = vector.shape_cast %1298 : vector<64xf32> to vector<1x64xf32>
    %1300 = arith.mulf %44, %1283 : vector<1x64xf32>
    %1301 = arith.addf %1299, %1300 : vector<1x64xf32>
    %1302 = vector.extract_strided_slice %1210 {offsets = [8, 0], sizes = [1, 64], strides = [1, 1]} : vector<20x64xf32> to vector<1x64xf32>
    %1303 = vector.extract_strided_slice %1221 {offsets = [8, 0], sizes = [1, 64], strides = [1, 1]} : vector<20x64xf32> to vector<1x64xf32>
    %1304 = vector.extract_strided_slice %1223 {offsets = [0, 8], sizes = [16, 1], strides = [1, 1]} : vector<16x20xf32> to vector<16x1xf32>
    %1305 = vector.extract_strided_slice %1224 {offsets = [0, 8], sizes = [16, 1], strides = [1, 1]} : vector<16x20xf32> to vector<16x1xf32>
    %1306 = vector.broadcast %1303 : vector<1x64xf32> to vector<16x64xf32>
    %1307 = arith.mulf %1306, %40 : vector<16x64xf32>
    %1308 = math.exp %1307 : vector<16x64xf32>
    %1309 = arith.mulf %1308, %1295 : vector<16x64xf32>
    %1310 = arith.mulf %1303, %1302 : vector<1x64xf32>
    %1311 = vector.broadcast %1304 : vector<16x1xf32> to vector<16x64xf32>
    %1312 = vector.broadcast %1310 : vector<1x64xf32> to vector<16x64xf32>
    %1313 = arith.mulf %1311, %1312 : vector<16x64xf32>
    %1314 = arith.addf %1309, %1313 : vector<16x64xf32>
    %1315 = vector.broadcast %1305 : vector<16x1xf32> to vector<16x64xf32>
    %1316 = arith.mulf %1314, %1315 : vector<16x64xf32>
    %cst_227 = arith.constant dense<0.000000e+00> : vector<64xf32>
    %1317 = vector.multi_reduction <add>, %1316, %cst_227 [0] : vector<16x64xf32> to vector<64xf32>
    %1318 = vector.shape_cast %1317 : vector<64xf32> to vector<1x64xf32>
    %1319 = arith.mulf %44, %1302 : vector<1x64xf32>
    %1320 = arith.addf %1318, %1319 : vector<1x64xf32>
    %cst_228 = arith.constant 0.000000e+00 : f32
    %1321 = vector.broadcast %cst_228 : f32 to vector<16x64xf32>
    %1322 = vector.extract_strided_slice %1210 {offsets = [1, 0], sizes = [1, 64], strides = [1, 1]} : vector<20x64xf32> to vector<1x64xf32>
    %1323 = vector.extract_strided_slice %1221 {offsets = [1, 0], sizes = [1, 64], strides = [1, 1]} : vector<20x64xf32> to vector<1x64xf32>
    %1324 = vector.extract_strided_slice %1223 {offsets = [0, 1], sizes = [16, 1], strides = [1, 1]} : vector<16x20xf32> to vector<16x1xf32>
    %1325 = vector.extract_strided_slice %1224 {offsets = [0, 1], sizes = [16, 1], strides = [1, 1]} : vector<16x20xf32> to vector<16x1xf32>
    %1326 = vector.broadcast %1323 : vector<1x64xf32> to vector<16x64xf32>
    %1327 = arith.mulf %1326, %40 : vector<16x64xf32>
    %1328 = math.exp %1327 : vector<16x64xf32>
    %1329 = arith.mulf %1328, %1321 : vector<16x64xf32>
    %1330 = arith.mulf %1323, %1322 : vector<1x64xf32>
    %1331 = vector.broadcast %1324 : vector<16x1xf32> to vector<16x64xf32>
    %1332 = vector.broadcast %1330 : vector<1x64xf32> to vector<16x64xf32>
    %1333 = arith.mulf %1331, %1332 : vector<16x64xf32>
    %1334 = arith.addf %1329, %1333 : vector<16x64xf32>
    %1335 = vector.broadcast %1325 : vector<16x1xf32> to vector<16x64xf32>
    %1336 = arith.mulf %1334, %1335 : vector<16x64xf32>
    %cst_229 = arith.constant dense<0.000000e+00> : vector<64xf32>
    %1337 = vector.multi_reduction <add>, %1336, %cst_229 [0] : vector<16x64xf32> to vector<64xf32>
    %1338 = vector.shape_cast %1337 : vector<64xf32> to vector<1x64xf32>
    %1339 = arith.mulf %44, %1322 : vector<1x64xf32>
    %1340 = arith.addf %1338, %1339 : vector<1x64xf32>
    %1341 = vector.extract_strided_slice %1210 {offsets = [3, 0], sizes = [1, 64], strides = [1, 1]} : vector<20x64xf32> to vector<1x64xf32>
    %1342 = vector.extract_strided_slice %1221 {offsets = [3, 0], sizes = [1, 64], strides = [1, 1]} : vector<20x64xf32> to vector<1x64xf32>
    %1343 = vector.extract_strided_slice %1223 {offsets = [0, 3], sizes = [16, 1], strides = [1, 1]} : vector<16x20xf32> to vector<16x1xf32>
    %1344 = vector.extract_strided_slice %1224 {offsets = [0, 3], sizes = [16, 1], strides = [1, 1]} : vector<16x20xf32> to vector<16x1xf32>
    %1345 = vector.broadcast %1342 : vector<1x64xf32> to vector<16x64xf32>
    %1346 = arith.mulf %1345, %40 : vector<16x64xf32>
    %1347 = math.exp %1346 : vector<16x64xf32>
    %1348 = arith.mulf %1347, %1334 : vector<16x64xf32>
    %1349 = arith.mulf %1342, %1341 : vector<1x64xf32>
    %1350 = vector.broadcast %1343 : vector<16x1xf32> to vector<16x64xf32>
    %1351 = vector.broadcast %1349 : vector<1x64xf32> to vector<16x64xf32>
    %1352 = arith.mulf %1350, %1351 : vector<16x64xf32>
    %1353 = arith.addf %1348, %1352 : vector<16x64xf32>
    %1354 = vector.broadcast %1344 : vector<16x1xf32> to vector<16x64xf32>
    %1355 = arith.mulf %1353, %1354 : vector<16x64xf32>
    %cst_230 = arith.constant dense<0.000000e+00> : vector<64xf32>
    %1356 = vector.multi_reduction <add>, %1355, %cst_230 [0] : vector<16x64xf32> to vector<64xf32>
    %1357 = vector.shape_cast %1356 : vector<64xf32> to vector<1x64xf32>
    %1358 = arith.mulf %44, %1341 : vector<1x64xf32>
    %1359 = arith.addf %1357, %1358 : vector<1x64xf32>
    %1360 = vector.extract_strided_slice %1210 {offsets = [5, 0], sizes = [1, 64], strides = [1, 1]} : vector<20x64xf32> to vector<1x64xf32>
    %1361 = vector.extract_strided_slice %1221 {offsets = [5, 0], sizes = [1, 64], strides = [1, 1]} : vector<20x64xf32> to vector<1x64xf32>
    %1362 = vector.extract_strided_slice %1223 {offsets = [0, 5], sizes = [16, 1], strides = [1, 1]} : vector<16x20xf32> to vector<16x1xf32>
    %1363 = vector.extract_strided_slice %1224 {offsets = [0, 5], sizes = [16, 1], strides = [1, 1]} : vector<16x20xf32> to vector<16x1xf32>
    %1364 = vector.broadcast %1361 : vector<1x64xf32> to vector<16x64xf32>
    %1365 = arith.mulf %1364, %40 : vector<16x64xf32>
    %1366 = math.exp %1365 : vector<16x64xf32>
    %1367 = arith.mulf %1366, %1353 : vector<16x64xf32>
    %1368 = arith.mulf %1361, %1360 : vector<1x64xf32>
    %1369 = vector.broadcast %1362 : vector<16x1xf32> to vector<16x64xf32>
    %1370 = vector.broadcast %1368 : vector<1x64xf32> to vector<16x64xf32>
    %1371 = arith.mulf %1369, %1370 : vector<16x64xf32>
    %1372 = arith.addf %1367, %1371 : vector<16x64xf32>
    %1373 = vector.broadcast %1363 : vector<16x1xf32> to vector<16x64xf32>
    %1374 = arith.mulf %1372, %1373 : vector<16x64xf32>
    %cst_231 = arith.constant dense<0.000000e+00> : vector<64xf32>
    %1375 = vector.multi_reduction <add>, %1374, %cst_231 [0] : vector<16x64xf32> to vector<64xf32>
    %1376 = vector.shape_cast %1375 : vector<64xf32> to vector<1x64xf32>
    %1377 = arith.mulf %44, %1360 : vector<1x64xf32>
    %1378 = arith.addf %1376, %1377 : vector<1x64xf32>
    %1379 = vector.extract_strided_slice %1210 {offsets = [7, 0], sizes = [1, 64], strides = [1, 1]} : vector<20x64xf32> to vector<1x64xf32>
    %1380 = vector.extract_strided_slice %1221 {offsets = [7, 0], sizes = [1, 64], strides = [1, 1]} : vector<20x64xf32> to vector<1x64xf32>
    %1381 = vector.extract_strided_slice %1223 {offsets = [0, 7], sizes = [16, 1], strides = [1, 1]} : vector<16x20xf32> to vector<16x1xf32>
    %1382 = vector.extract_strided_slice %1224 {offsets = [0, 7], sizes = [16, 1], strides = [1, 1]} : vector<16x20xf32> to vector<16x1xf32>
    %1383 = vector.broadcast %1380 : vector<1x64xf32> to vector<16x64xf32>
    %1384 = arith.mulf %1383, %40 : vector<16x64xf32>
    %1385 = math.exp %1384 : vector<16x64xf32>
    %1386 = arith.mulf %1385, %1372 : vector<16x64xf32>
    %1387 = arith.mulf %1380, %1379 : vector<1x64xf32>
    %1388 = vector.broadcast %1381 : vector<16x1xf32> to vector<16x64xf32>
    %1389 = vector.broadcast %1387 : vector<1x64xf32> to vector<16x64xf32>
    %1390 = arith.mulf %1388, %1389 : vector<16x64xf32>
    %1391 = arith.addf %1386, %1390 : vector<16x64xf32>
    %1392 = vector.broadcast %1382 : vector<16x1xf32> to vector<16x64xf32>
    %1393 = arith.mulf %1391, %1392 : vector<16x64xf32>
    %cst_232 = arith.constant dense<0.000000e+00> : vector<64xf32>
    %1394 = vector.multi_reduction <add>, %1393, %cst_232 [0] : vector<16x64xf32> to vector<64xf32>
    %1395 = vector.shape_cast %1394 : vector<64xf32> to vector<1x64xf32>
    %1396 = arith.mulf %44, %1379 : vector<1x64xf32>
    %1397 = arith.addf %1395, %1396 : vector<1x64xf32>
    %1398 = vector.extract_strided_slice %1210 {offsets = [9, 0], sizes = [1, 64], strides = [1, 1]} : vector<20x64xf32> to vector<1x64xf32>
    %1399 = vector.extract_strided_slice %1221 {offsets = [9, 0], sizes = [1, 64], strides = [1, 1]} : vector<20x64xf32> to vector<1x64xf32>
    %1400 = vector.extract_strided_slice %1223 {offsets = [0, 9], sizes = [16, 1], strides = [1, 1]} : vector<16x20xf32> to vector<16x1xf32>
    %1401 = vector.extract_strided_slice %1224 {offsets = [0, 9], sizes = [16, 1], strides = [1, 1]} : vector<16x20xf32> to vector<16x1xf32>
    %1402 = vector.broadcast %1399 : vector<1x64xf32> to vector<16x64xf32>
    %1403 = arith.mulf %1402, %40 : vector<16x64xf32>
    %1404 = math.exp %1403 : vector<16x64xf32>
    %1405 = arith.mulf %1404, %1391 : vector<16x64xf32>
    %1406 = arith.mulf %1399, %1398 : vector<1x64xf32>
    %1407 = vector.broadcast %1400 : vector<16x1xf32> to vector<16x64xf32>
    %1408 = vector.broadcast %1406 : vector<1x64xf32> to vector<16x64xf32>
    %1409 = arith.mulf %1407, %1408 : vector<16x64xf32>
    %1410 = arith.addf %1405, %1409 : vector<16x64xf32>
    %1411 = vector.broadcast %1401 : vector<16x1xf32> to vector<16x64xf32>
    %1412 = arith.mulf %1410, %1411 : vector<16x64xf32>
    %cst_233 = arith.constant dense<0.000000e+00> : vector<64xf32>
    %1413 = vector.multi_reduction <add>, %1412, %cst_233 [0] : vector<16x64xf32> to vector<64xf32>
    %1414 = vector.shape_cast %1413 : vector<64xf32> to vector<1x64xf32>
    %1415 = arith.mulf %44, %1398 : vector<1x64xf32>
    %1416 = arith.addf %1414, %1415 : vector<1x64xf32>
    %cst_234 = arith.constant 0.000000e+00 : f32
    %1417 = vector.broadcast %cst_234 : f32 to vector<16x64xf32>
    %1418 = vector.extract_strided_slice %1210 {offsets = [10, 0], sizes = [1, 64], strides = [1, 1]} : vector<20x64xf32> to vector<1x64xf32>
    %1419 = vector.extract_strided_slice %1221 {offsets = [10, 0], sizes = [1, 64], strides = [1, 1]} : vector<20x64xf32> to vector<1x64xf32>
    %1420 = vector.extract_strided_slice %1223 {offsets = [0, 10], sizes = [16, 1], strides = [1, 1]} : vector<16x20xf32> to vector<16x1xf32>
    %1421 = vector.extract_strided_slice %1224 {offsets = [0, 10], sizes = [16, 1], strides = [1, 1]} : vector<16x20xf32> to vector<16x1xf32>
    %1422 = vector.broadcast %1419 : vector<1x64xf32> to vector<16x64xf32>
    %1423 = arith.mulf %1422, %40 : vector<16x64xf32>
    %1424 = math.exp %1423 : vector<16x64xf32>
    %1425 = arith.mulf %1424, %1417 : vector<16x64xf32>
    %1426 = arith.mulf %1419, %1418 : vector<1x64xf32>
    %1427 = vector.broadcast %1420 : vector<16x1xf32> to vector<16x64xf32>
    %1428 = vector.broadcast %1426 : vector<1x64xf32> to vector<16x64xf32>
    %1429 = arith.mulf %1427, %1428 : vector<16x64xf32>
    %1430 = arith.addf %1425, %1429 : vector<16x64xf32>
    %1431 = vector.broadcast %1421 : vector<16x1xf32> to vector<16x64xf32>
    %1432 = arith.mulf %1430, %1431 : vector<16x64xf32>
    %cst_235 = arith.constant dense<0.000000e+00> : vector<64xf32>
    %1433 = vector.multi_reduction <add>, %1432, %cst_235 [0] : vector<16x64xf32> to vector<64xf32>
    %1434 = vector.shape_cast %1433 : vector<64xf32> to vector<1x64xf32>
    %1435 = arith.mulf %44, %1418 : vector<1x64xf32>
    %1436 = arith.addf %1434, %1435 : vector<1x64xf32>
    %1437 = arith.addf %1301, %1436 : vector<1x64xf32>
    %1438 = vector.extract_strided_slice %1210 {offsets = [12, 0], sizes = [1, 64], strides = [1, 1]} : vector<20x64xf32> to vector<1x64xf32>
    %1439 = vector.extract_strided_slice %1221 {offsets = [12, 0], sizes = [1, 64], strides = [1, 1]} : vector<20x64xf32> to vector<1x64xf32>
    %1440 = vector.extract_strided_slice %1223 {offsets = [0, 12], sizes = [16, 1], strides = [1, 1]} : vector<16x20xf32> to vector<16x1xf32>
    %1441 = vector.extract_strided_slice %1224 {offsets = [0, 12], sizes = [16, 1], strides = [1, 1]} : vector<16x20xf32> to vector<16x1xf32>
    %1442 = vector.broadcast %1439 : vector<1x64xf32> to vector<16x64xf32>
    %1443 = arith.mulf %1442, %40 : vector<16x64xf32>
    %1444 = math.exp %1443 : vector<16x64xf32>
    %1445 = arith.mulf %1444, %1430 : vector<16x64xf32>
    %1446 = arith.mulf %1439, %1438 : vector<1x64xf32>
    %1447 = vector.broadcast %1440 : vector<16x1xf32> to vector<16x64xf32>
    %1448 = vector.broadcast %1446 : vector<1x64xf32> to vector<16x64xf32>
    %1449 = arith.mulf %1447, %1448 : vector<16x64xf32>
    %1450 = arith.addf %1445, %1449 : vector<16x64xf32>
    %1451 = vector.broadcast %1441 : vector<16x1xf32> to vector<16x64xf32>
    %1452 = arith.mulf %1450, %1451 : vector<16x64xf32>
    %cst_236 = arith.constant dense<0.000000e+00> : vector<64xf32>
    %1453 = vector.multi_reduction <add>, %1452, %cst_236 [0] : vector<16x64xf32> to vector<64xf32>
    %1454 = vector.shape_cast %1453 : vector<64xf32> to vector<1x64xf32>
    %1455 = arith.mulf %44, %1438 : vector<1x64xf32>
    %1456 = arith.addf %1454, %1455 : vector<1x64xf32>
    %1457 = arith.addf %1282, %1456 : vector<1x64xf32>
    %1458 = vector.extract_strided_slice %1210 {offsets = [14, 0], sizes = [1, 64], strides = [1, 1]} : vector<20x64xf32> to vector<1x64xf32>
    %1459 = vector.extract_strided_slice %1221 {offsets = [14, 0], sizes = [1, 64], strides = [1, 1]} : vector<20x64xf32> to vector<1x64xf32>
    %1460 = vector.extract_strided_slice %1223 {offsets = [0, 14], sizes = [16, 1], strides = [1, 1]} : vector<16x20xf32> to vector<16x1xf32>
    %1461 = vector.extract_strided_slice %1224 {offsets = [0, 14], sizes = [16, 1], strides = [1, 1]} : vector<16x20xf32> to vector<16x1xf32>
    %1462 = vector.broadcast %1459 : vector<1x64xf32> to vector<16x64xf32>
    %1463 = arith.mulf %1462, %40 : vector<16x64xf32>
    %1464 = math.exp %1463 : vector<16x64xf32>
    %1465 = arith.mulf %1464, %1450 : vector<16x64xf32>
    %1466 = arith.mulf %1459, %1458 : vector<1x64xf32>
    %1467 = vector.broadcast %1460 : vector<16x1xf32> to vector<16x64xf32>
    %1468 = vector.broadcast %1466 : vector<1x64xf32> to vector<16x64xf32>
    %1469 = arith.mulf %1467, %1468 : vector<16x64xf32>
    %1470 = arith.addf %1465, %1469 : vector<16x64xf32>
    %1471 = vector.broadcast %1461 : vector<16x1xf32> to vector<16x64xf32>
    %1472 = arith.mulf %1470, %1471 : vector<16x64xf32>
    %cst_237 = arith.constant dense<0.000000e+00> : vector<64xf32>
    %1473 = vector.multi_reduction <add>, %1472, %cst_237 [0] : vector<16x64xf32> to vector<64xf32>
    %1474 = vector.shape_cast %1473 : vector<64xf32> to vector<1x64xf32>
    %1475 = arith.mulf %44, %1458 : vector<1x64xf32>
    %1476 = arith.addf %1474, %1475 : vector<1x64xf32>
    %1477 = arith.addf %1263, %1476 : vector<1x64xf32>
    %1478 = vector.extract_strided_slice %1210 {offsets = [16, 0], sizes = [1, 64], strides = [1, 1]} : vector<20x64xf32> to vector<1x64xf32>
    %1479 = vector.extract_strided_slice %1221 {offsets = [16, 0], sizes = [1, 64], strides = [1, 1]} : vector<20x64xf32> to vector<1x64xf32>
    %1480 = vector.extract_strided_slice %1223 {offsets = [0, 16], sizes = [16, 1], strides = [1, 1]} : vector<16x20xf32> to vector<16x1xf32>
    %1481 = vector.extract_strided_slice %1224 {offsets = [0, 16], sizes = [16, 1], strides = [1, 1]} : vector<16x20xf32> to vector<16x1xf32>
    %1482 = vector.broadcast %1479 : vector<1x64xf32> to vector<16x64xf32>
    %1483 = arith.mulf %1482, %40 : vector<16x64xf32>
    %1484 = math.exp %1483 : vector<16x64xf32>
    %1485 = arith.mulf %1484, %1470 : vector<16x64xf32>
    %1486 = arith.mulf %1479, %1478 : vector<1x64xf32>
    %1487 = vector.broadcast %1480 : vector<16x1xf32> to vector<16x64xf32>
    %1488 = vector.broadcast %1486 : vector<1x64xf32> to vector<16x64xf32>
    %1489 = arith.mulf %1487, %1488 : vector<16x64xf32>
    %1490 = arith.addf %1485, %1489 : vector<16x64xf32>
    %1491 = vector.broadcast %1481 : vector<16x1xf32> to vector<16x64xf32>
    %1492 = arith.mulf %1490, %1491 : vector<16x64xf32>
    %cst_238 = arith.constant dense<0.000000e+00> : vector<64xf32>
    %1493 = vector.multi_reduction <add>, %1492, %cst_238 [0] : vector<16x64xf32> to vector<64xf32>
    %1494 = vector.shape_cast %1493 : vector<64xf32> to vector<1x64xf32>
    %1495 = arith.mulf %44, %1478 : vector<1x64xf32>
    %1496 = arith.addf %1494, %1495 : vector<1x64xf32>
    %1497 = arith.addf %1244, %1496 : vector<1x64xf32>
    %1498 = vector.extract_strided_slice %1210 {offsets = [18, 0], sizes = [1, 64], strides = [1, 1]} : vector<20x64xf32> to vector<1x64xf32>
    %1499 = vector.extract_strided_slice %1221 {offsets = [18, 0], sizes = [1, 64], strides = [1, 1]} : vector<20x64xf32> to vector<1x64xf32>
    %1500 = vector.extract_strided_slice %1223 {offsets = [0, 18], sizes = [16, 1], strides = [1, 1]} : vector<16x20xf32> to vector<16x1xf32>
    %1501 = vector.extract_strided_slice %1224 {offsets = [0, 18], sizes = [16, 1], strides = [1, 1]} : vector<16x20xf32> to vector<16x1xf32>
    %1502 = vector.broadcast %1499 : vector<1x64xf32> to vector<16x64xf32>
    %1503 = arith.mulf %1502, %40 : vector<16x64xf32>
    %1504 = math.exp %1503 : vector<16x64xf32>
    %1505 = arith.mulf %1504, %1490 : vector<16x64xf32>
    %1506 = arith.mulf %1499, %1498 : vector<1x64xf32>
    %1507 = vector.broadcast %1500 : vector<16x1xf32> to vector<16x64xf32>
    %1508 = vector.broadcast %1506 : vector<1x64xf32> to vector<16x64xf32>
    %1509 = arith.mulf %1507, %1508 : vector<16x64xf32>
    %1510 = arith.addf %1505, %1509 : vector<16x64xf32>
    %1511 = vector.broadcast %1501 : vector<16x1xf32> to vector<16x64xf32>
    %1512 = arith.mulf %1510, %1511 : vector<16x64xf32>
    %cst_239 = arith.constant dense<0.000000e+00> : vector<64xf32>
    %1513 = vector.multi_reduction <add>, %1512, %cst_239 [0] : vector<16x64xf32> to vector<64xf32>
    %1514 = vector.shape_cast %1513 : vector<64xf32> to vector<1x64xf32>
    %1515 = arith.mulf %44, %1498 : vector<1x64xf32>
    %1516 = arith.addf %1514, %1515 : vector<1x64xf32>
    %1517 = arith.addf %1320, %1516 : vector<1x64xf32>
    %cst_240 = arith.constant 0.000000e+00 : f32
    %1518 = vector.broadcast %cst_240 : f32 to vector<16x64xf32>
    %1519 = vector.extract_strided_slice %1210 {offsets = [11, 0], sizes = [1, 64], strides = [1, 1]} : vector<20x64xf32> to vector<1x64xf32>
    %1520 = vector.extract_strided_slice %1221 {offsets = [11, 0], sizes = [1, 64], strides = [1, 1]} : vector<20x64xf32> to vector<1x64xf32>
    %1521 = vector.extract_strided_slice %1223 {offsets = [0, 11], sizes = [16, 1], strides = [1, 1]} : vector<16x20xf32> to vector<16x1xf32>
    %1522 = vector.extract_strided_slice %1224 {offsets = [0, 11], sizes = [16, 1], strides = [1, 1]} : vector<16x20xf32> to vector<16x1xf32>
    %1523 = vector.broadcast %1520 : vector<1x64xf32> to vector<16x64xf32>
    %1524 = arith.mulf %1523, %40 : vector<16x64xf32>
    %1525 = math.exp %1524 : vector<16x64xf32>
    %1526 = arith.mulf %1525, %1518 : vector<16x64xf32>
    %1527 = arith.mulf %1520, %1519 : vector<1x64xf32>
    %1528 = vector.broadcast %1521 : vector<16x1xf32> to vector<16x64xf32>
    %1529 = vector.broadcast %1527 : vector<1x64xf32> to vector<16x64xf32>
    %1530 = arith.mulf %1528, %1529 : vector<16x64xf32>
    %1531 = arith.addf %1526, %1530 : vector<16x64xf32>
    %1532 = vector.broadcast %1522 : vector<16x1xf32> to vector<16x64xf32>
    %1533 = arith.mulf %1531, %1532 : vector<16x64xf32>
    %cst_241 = arith.constant dense<0.000000e+00> : vector<64xf32>
    %1534 = vector.multi_reduction <add>, %1533, %cst_241 [0] : vector<16x64xf32> to vector<64xf32>
    %1535 = vector.shape_cast %1534 : vector<64xf32> to vector<1x64xf32>
    %1536 = arith.mulf %44, %1519 : vector<1x64xf32>
    %1537 = arith.addf %1535, %1536 : vector<1x64xf32>
    %1538 = arith.addf %1397, %1537 : vector<1x64xf32>
    %1539 = vector.extract_strided_slice %1210 {offsets = [13, 0], sizes = [1, 64], strides = [1, 1]} : vector<20x64xf32> to vector<1x64xf32>
    %1540 = vector.extract_strided_slice %1221 {offsets = [13, 0], sizes = [1, 64], strides = [1, 1]} : vector<20x64xf32> to vector<1x64xf32>
    %1541 = vector.extract_strided_slice %1223 {offsets = [0, 13], sizes = [16, 1], strides = [1, 1]} : vector<16x20xf32> to vector<16x1xf32>
    %1542 = vector.extract_strided_slice %1224 {offsets = [0, 13], sizes = [16, 1], strides = [1, 1]} : vector<16x20xf32> to vector<16x1xf32>
    %1543 = vector.broadcast %1540 : vector<1x64xf32> to vector<16x64xf32>
    %1544 = arith.mulf %1543, %40 : vector<16x64xf32>
    %1545 = math.exp %1544 : vector<16x64xf32>
    %1546 = arith.mulf %1545, %1531 : vector<16x64xf32>
    %1547 = arith.mulf %1540, %1539 : vector<1x64xf32>
    %1548 = vector.broadcast %1541 : vector<16x1xf32> to vector<16x64xf32>
    %1549 = vector.broadcast %1547 : vector<1x64xf32> to vector<16x64xf32>
    %1550 = arith.mulf %1548, %1549 : vector<16x64xf32>
    %1551 = arith.addf %1546, %1550 : vector<16x64xf32>
    %1552 = vector.broadcast %1542 : vector<16x1xf32> to vector<16x64xf32>
    %1553 = arith.mulf %1551, %1552 : vector<16x64xf32>
    %cst_242 = arith.constant dense<0.000000e+00> : vector<64xf32>
    %1554 = vector.multi_reduction <add>, %1553, %cst_242 [0] : vector<16x64xf32> to vector<64xf32>
    %1555 = vector.shape_cast %1554 : vector<64xf32> to vector<1x64xf32>
    %1556 = arith.mulf %44, %1539 : vector<1x64xf32>
    %1557 = arith.addf %1555, %1556 : vector<1x64xf32>
    %1558 = arith.addf %1378, %1557 : vector<1x64xf32>
    %1559 = vector.extract_strided_slice %1210 {offsets = [15, 0], sizes = [1, 64], strides = [1, 1]} : vector<20x64xf32> to vector<1x64xf32>
    %1560 = vector.extract_strided_slice %1221 {offsets = [15, 0], sizes = [1, 64], strides = [1, 1]} : vector<20x64xf32> to vector<1x64xf32>
    %1561 = vector.extract_strided_slice %1223 {offsets = [0, 15], sizes = [16, 1], strides = [1, 1]} : vector<16x20xf32> to vector<16x1xf32>
    %1562 = vector.extract_strided_slice %1224 {offsets = [0, 15], sizes = [16, 1], strides = [1, 1]} : vector<16x20xf32> to vector<16x1xf32>
    %1563 = vector.broadcast %1560 : vector<1x64xf32> to vector<16x64xf32>
    %1564 = arith.mulf %1563, %40 : vector<16x64xf32>
    %1565 = math.exp %1564 : vector<16x64xf32>
    %1566 = arith.mulf %1565, %1551 : vector<16x64xf32>
    %1567 = arith.mulf %1560, %1559 : vector<1x64xf32>
    %1568 = vector.broadcast %1561 : vector<16x1xf32> to vector<16x64xf32>
    %1569 = vector.broadcast %1567 : vector<1x64xf32> to vector<16x64xf32>
    %1570 = arith.mulf %1568, %1569 : vector<16x64xf32>
    %1571 = arith.addf %1566, %1570 : vector<16x64xf32>
    %1572 = vector.broadcast %1562 : vector<16x1xf32> to vector<16x64xf32>
    %1573 = arith.mulf %1571, %1572 : vector<16x64xf32>
    %cst_243 = arith.constant dense<0.000000e+00> : vector<64xf32>
    %1574 = vector.multi_reduction <add>, %1573, %cst_243 [0] : vector<16x64xf32> to vector<64xf32>
    %1575 = vector.shape_cast %1574 : vector<64xf32> to vector<1x64xf32>
    %1576 = arith.mulf %44, %1559 : vector<1x64xf32>
    %1577 = arith.addf %1575, %1576 : vector<1x64xf32>
    %1578 = arith.addf %1359, %1577 : vector<1x64xf32>
    %1579 = vector.extract_strided_slice %1210 {offsets = [17, 0], sizes = [1, 64], strides = [1, 1]} : vector<20x64xf32> to vector<1x64xf32>
    %1580 = vector.extract_strided_slice %1221 {offsets = [17, 0], sizes = [1, 64], strides = [1, 1]} : vector<20x64xf32> to vector<1x64xf32>
    %1581 = vector.extract_strided_slice %1223 {offsets = [0, 17], sizes = [16, 1], strides = [1, 1]} : vector<16x20xf32> to vector<16x1xf32>
    %1582 = vector.extract_strided_slice %1224 {offsets = [0, 17], sizes = [16, 1], strides = [1, 1]} : vector<16x20xf32> to vector<16x1xf32>
    %1583 = vector.broadcast %1580 : vector<1x64xf32> to vector<16x64xf32>
    %1584 = arith.mulf %1583, %40 : vector<16x64xf32>
    %1585 = math.exp %1584 : vector<16x64xf32>
    %1586 = arith.mulf %1585, %1571 : vector<16x64xf32>
    %1587 = arith.mulf %1580, %1579 : vector<1x64xf32>
    %1588 = vector.broadcast %1581 : vector<16x1xf32> to vector<16x64xf32>
    %1589 = vector.broadcast %1587 : vector<1x64xf32> to vector<16x64xf32>
    %1590 = arith.mulf %1588, %1589 : vector<16x64xf32>
    %1591 = arith.addf %1586, %1590 : vector<16x64xf32>
    %1592 = vector.broadcast %1582 : vector<16x1xf32> to vector<16x64xf32>
    %1593 = arith.mulf %1591, %1592 : vector<16x64xf32>
    %cst_244 = arith.constant dense<0.000000e+00> : vector<64xf32>
    %1594 = vector.multi_reduction <add>, %1593, %cst_244 [0] : vector<16x64xf32> to vector<64xf32>
    %1595 = vector.shape_cast %1594 : vector<64xf32> to vector<1x64xf32>
    %1596 = arith.mulf %44, %1579 : vector<1x64xf32>
    %1597 = arith.addf %1595, %1596 : vector<1x64xf32>
    %1598 = arith.addf %1340, %1597 : vector<1x64xf32>
    %1599 = vector.extract_strided_slice %1210 {offsets = [19, 0], sizes = [1, 64], strides = [1, 1]} : vector<20x64xf32> to vector<1x64xf32>
    %1600 = vector.extract_strided_slice %1221 {offsets = [19, 0], sizes = [1, 64], strides = [1, 1]} : vector<20x64xf32> to vector<1x64xf32>
    %1601 = vector.extract_strided_slice %1223 {offsets = [0, 19], sizes = [16, 1], strides = [1, 1]} : vector<16x20xf32> to vector<16x1xf32>
    %1602 = vector.extract_strided_slice %1224 {offsets = [0, 19], sizes = [16, 1], strides = [1, 1]} : vector<16x20xf32> to vector<16x1xf32>
    %1603 = vector.broadcast %1600 : vector<1x64xf32> to vector<16x64xf32>
    %1604 = arith.mulf %1603, %40 : vector<16x64xf32>
    %1605 = math.exp %1604 : vector<16x64xf32>
    %1606 = arith.mulf %1605, %1591 : vector<16x64xf32>
    %1607 = arith.mulf %1600, %1599 : vector<1x64xf32>
    %1608 = vector.broadcast %1601 : vector<16x1xf32> to vector<16x64xf32>
    %1609 = vector.broadcast %1607 : vector<1x64xf32> to vector<16x64xf32>
    %1610 = arith.mulf %1608, %1609 : vector<16x64xf32>
    %1611 = arith.addf %1606, %1610 : vector<16x64xf32>
    %1612 = vector.broadcast %1602 : vector<16x1xf32> to vector<16x64xf32>
    %1613 = arith.mulf %1611, %1612 : vector<16x64xf32>
    %cst_245 = arith.constant dense<0.000000e+00> : vector<64xf32>
    %1614 = vector.multi_reduction <add>, %1613, %cst_245 [0] : vector<16x64xf32> to vector<64xf32>
    %1615 = vector.shape_cast %1614 : vector<64xf32> to vector<1x64xf32>
    %1616 = arith.mulf %44, %1599 : vector<1x64xf32>
    %1617 = arith.addf %1615, %1616 : vector<1x64xf32>
    %1618 = arith.addf %1416, %1617 : vector<1x64xf32>
    %1619 = tpu.concatenate %1497, %1598, %1477, %1578, %1457, %1558, %1437, %1538, %1517, %1618 in 0 : vector<1x64xf32>, vector<1x64xf32>, vector<1x64xf32>, vector<1x64xf32>, vector<1x64xf32>, vector<1x64xf32>, vector<1x64xf32>, vector<1x64xf32>, vector<1x64xf32>, vector<1x64xf32> -> vector<10x64xf32>
    %cst_246 = arith.constant 5.000000e-01 : f32
    %1620 = vector.broadcast %cst_246 : f32 to vector<10x64xf32>
    %1621 = arith.mulf %1619, %1620 : vector<10x64xf32>
    %1622 = arith.mulf %1621, %1069 : vector<10x64xf32>
    %cst_247 = arith.constant dense<0.000000e+00> : vector<10x32xf32>
    %1623 = tpu.matmul %1622, %45, %cst_247 {dimension_numbers = #tpu.dot_dimension_numbers<[1], [0], [0], [1], [0, 0, 1, 1], [], []>} : vector<10x64xf32>, vector<64x32xf32>, vector<10x32xf32> -> vector<10x32xf32>
    %1624 = arith.addf %1623, %1037 : vector<10x32xf32>
    %cst_248 = arith.constant dense<0.000000e+00> : vector<6xf32>
    %1625 = vector.multi_reduction <add>, %1039, %cst_248 [1] : vector<6x32xf32> to vector<6xf32>
    %1626 = vector.shape_cast %1625 : vector<6xf32> to vector<6x1xf32>
    %cst_249 = arith.constant 3.200000e+01 : f32
    %1627 = vector.broadcast %cst_249 : f32 to vector<6x1xf32>
    %1628 = arith.divf %1626, %1627 : vector<6x1xf32>
    %1629 = vector.broadcast %1628 : vector<6x1xf32> to vector<6x32xf32>
    %1630 = arith.subf %1039, %1629 : vector<6x32xf32>
    %1631 = arith.mulf %1630, %1630 : vector<6x32xf32>
    %cst_250 = arith.constant dense<0.000000e+00> : vector<6xf32>
    %1632 = vector.multi_reduction <add>, %1631, %cst_250 [1] : vector<6x32xf32> to vector<6xf32>
    %1633 = vector.shape_cast %1632 : vector<6xf32> to vector<6x1xf32>
    %cst_251 = arith.constant 3.200000e+01 : f32
    %1634 = vector.broadcast %cst_251 : f32 to vector<6x1xf32>
    %1635 = arith.divf %1633, %1634 : vector<6x1xf32>
    %cst_252 = arith.constant 9.99999997E-7 : f32
    %1636 = vector.broadcast %cst_252 : f32 to vector<6x1xf32>
    %1637 = arith.addf %1635, %1636 : vector<6x1xf32>
    %1638 = math.rsqrt %1637 : vector<6x1xf32>
    %1639 = vector.broadcast %1638 : vector<6x1xf32> to vector<6x32xf32>
    %1640 = arith.mulf %1630, %1639 : vector<6x32xf32>
    %1641 = vector.broadcast %58 : vector<1x32xf32> to vector<6x32xf32>
    %1642 = arith.mulf %1640, %1641 : vector<6x32xf32>
    %1643 = vector.broadcast %59 : vector<1x32xf32> to vector<6x32xf32>
    %1644 = arith.addf %1642, %1643 : vector<6x32xf32>
    %cst_253 = arith.constant dense<0.000000e+00> : vector<6x64xf32>
    %1645 = tpu.matmul %1644, %49, %cst_253 {dimension_numbers = #tpu.dot_dimension_numbers<[1], [0], [0], [1], [0, 0, 1, 1], [], []>} : vector<6x32xf32>, vector<32x64xf32>, vector<6x64xf32> -> vector<6x64xf32>
    %cst_254 = arith.constant dense<0.000000e+00> : vector<6x64xf32>
    %1646 = tpu.matmul %1644, %50, %cst_254 {dimension_numbers = #tpu.dot_dimension_numbers<[1], [0], [0], [1], [0, 0, 1, 1], [], []>} : vector<6x32xf32>, vector<32x64xf32>, vector<6x64xf32> -> vector<6x64xf32>
    %cst_255 = arith.constant 0.000000e+00 : f32
    %1647 = vector.broadcast %cst_255 : f32 to vector<6x64xf32>
    %1648 = arith.subf %1647, %1646 : vector<6x64xf32>
    %1649 = math.exp %1648 : vector<6x64xf32>
    %cst_256 = arith.constant 1.000000e+00 : f32
    %1650 = vector.broadcast %cst_256 : f32 to vector<6x64xf32>
    %1651 = arith.addf %1650, %1649 : vector<6x64xf32>
    %cst_257 = arith.constant 1.000000e+00 : f32
    %1652 = vector.broadcast %cst_257 : f32 to vector<6x64xf32>
    %1653 = arith.divf %1652, %1651 : vector<6x64xf32>
    %1654 = arith.mulf %1646, %1653 : vector<6x64xf32>
    %1655 = vector.extract_strided_slice %53 {offsets = [3, 0], sizes = [1, 64], strides = [1, 1]} : vector<4x64xf32> to vector<1x64xf32>
    %1656 = vector.extract_strided_slice %1645 {offsets = [0, 0], sizes = [2, 64], strides = [1, 1]} : vector<6x64xf32> to vector<2x64xf32>
    %1657 = vector.broadcast %1655 : vector<1x64xf32> to vector<2x64xf32>
    %1658 = arith.mulf %1656, %1657 : vector<2x64xf32>
    %1659 = vector.extract_strided_slice %53 {offsets = [3, 0], sizes = [1, 64], strides = [1, 1]} : vector<4x64xf32> to vector<1x64xf32>
    %1660 = vector.extract_strided_slice %1645 {offsets = [2, 0], sizes = [2, 64], strides = [1, 1]} : vector<6x64xf32> to vector<2x64xf32>
    %1661 = vector.broadcast %1659 : vector<1x64xf32> to vector<2x64xf32>
    %1662 = arith.mulf %1660, %1661 : vector<2x64xf32>
    %1663 = vector.extract_strided_slice %53 {offsets = [2, 0], sizes = [1, 64], strides = [1, 1]} : vector<4x64xf32> to vector<1x64xf32>
    %1664 = vector.extract_strided_slice %1645 {offsets = [0, 0], sizes = [2, 64], strides = [1, 1]} : vector<6x64xf32> to vector<2x64xf32>
    %1665 = vector.broadcast %1663 : vector<1x64xf32> to vector<2x64xf32>
    %1666 = arith.mulf %1664, %1665 : vector<2x64xf32>
    %1667 = arith.addf %1662, %1666 : vector<2x64xf32>
    %1668 = vector.extract_strided_slice %53 {offsets = [3, 0], sizes = [1, 64], strides = [1, 1]} : vector<4x64xf32> to vector<1x64xf32>
    %1669 = vector.extract_strided_slice %1645 {offsets = [4, 0], sizes = [2, 64], strides = [1, 1]} : vector<6x64xf32> to vector<2x64xf32>
    %1670 = vector.broadcast %1668 : vector<1x64xf32> to vector<2x64xf32>
    %1671 = arith.mulf %1669, %1670 : vector<2x64xf32>
    %1672 = vector.extract_strided_slice %53 {offsets = [2, 0], sizes = [1, 64], strides = [1, 1]} : vector<4x64xf32> to vector<1x64xf32>
    %1673 = vector.extract_strided_slice %1645 {offsets = [2, 0], sizes = [2, 64], strides = [1, 1]} : vector<6x64xf32> to vector<2x64xf32>
    %1674 = vector.broadcast %1672 : vector<1x64xf32> to vector<2x64xf32>
    %1675 = arith.mulf %1673, %1674 : vector<2x64xf32>
    %1676 = arith.addf %1671, %1675 : vector<2x64xf32>
    %1677 = vector.extract_strided_slice %53 {offsets = [1, 0], sizes = [1, 64], strides = [1, 1]} : vector<4x64xf32> to vector<1x64xf32>
    %1678 = vector.extract_strided_slice %1645 {offsets = [0, 0], sizes = [2, 64], strides = [1, 1]} : vector<6x64xf32> to vector<2x64xf32>
    %1679 = vector.broadcast %1677 : vector<1x64xf32> to vector<2x64xf32>
    %1680 = arith.mulf %1678, %1679 : vector<2x64xf32>
    %1681 = arith.addf %1676, %1680 : vector<2x64xf32>
    %1682 = vector.extract_strided_slice %53 {offsets = [3, 0], sizes = [1, 64], strides = [1, 1]} : vector<4x64xf32> to vector<1x64xf32>
    %1683 = vector.extract_strided_slice %1645 {offsets = [2, 0], sizes = [2, 64], strides = [1, 1]} : vector<6x64xf32> to vector<2x64xf32>
    %1684 = vector.broadcast %1682 : vector<1x64xf32> to vector<2x64xf32>
    %1685 = arith.mulf %1683, %1684 : vector<2x64xf32>
    %1686 = vector.extract_strided_slice %53 {offsets = [3, 0], sizes = [1, 64], strides = [1, 1]} : vector<4x64xf32> to vector<1x64xf32>
    %1687 = vector.extract_strided_slice %1645 {offsets = [0, 0], sizes = [2, 64], strides = [1, 1]} : vector<6x64xf32> to vector<2x64xf32>
    %1688 = vector.broadcast %1686 : vector<1x64xf32> to vector<2x64xf32>
    %1689 = arith.mulf %1687, %1688 : vector<2x64xf32>
    %1690 = vector.extract_strided_slice %53 {offsets = [2, 0], sizes = [1, 64], strides = [1, 1]} : vector<4x64xf32> to vector<1x64xf32>
    %1691 = vector.extract_strided_slice %1645 {offsets = [2, 0], sizes = [2, 64], strides = [1, 1]} : vector<6x64xf32> to vector<2x64xf32>
    %1692 = vector.broadcast %1690 : vector<1x64xf32> to vector<2x64xf32>
    %1693 = arith.mulf %1691, %1692 : vector<2x64xf32>
    %1694 = arith.addf %1689, %1693 : vector<2x64xf32>
    %1695 = vector.extract_strided_slice %53 {offsets = [3, 0], sizes = [1, 64], strides = [1, 1]} : vector<4x64xf32> to vector<1x64xf32>
    %1696 = vector.extract_strided_slice %1645 {offsets = [4, 0], sizes = [2, 64], strides = [1, 1]} : vector<6x64xf32> to vector<2x64xf32>
    %1697 = vector.broadcast %1695 : vector<1x64xf32> to vector<2x64xf32>
    %1698 = arith.mulf %1696, %1697 : vector<2x64xf32>
    %1699 = vector.extract_strided_slice %53 {offsets = [2, 0], sizes = [1, 64], strides = [1, 1]} : vector<4x64xf32> to vector<1x64xf32>
    %1700 = vector.extract_strided_slice %1645 {offsets = [0, 0], sizes = [2, 64], strides = [1, 1]} : vector<6x64xf32> to vector<2x64xf32>
    %1701 = vector.broadcast %1699 : vector<1x64xf32> to vector<2x64xf32>
    %1702 = arith.mulf %1700, %1701 : vector<2x64xf32>
    %1703 = arith.addf %1698, %1702 : vector<2x64xf32>
    %1704 = vector.extract_strided_slice %53 {offsets = [1, 0], sizes = [1, 64], strides = [1, 1]} : vector<4x64xf32> to vector<1x64xf32>
    %1705 = vector.extract_strided_slice %1645 {offsets = [2, 0], sizes = [2, 64], strides = [1, 1]} : vector<6x64xf32> to vector<2x64xf32>
    %1706 = vector.broadcast %1704 : vector<1x64xf32> to vector<2x64xf32>
    %1707 = arith.mulf %1705, %1706 : vector<2x64xf32>
    %1708 = arith.addf %1703, %1707 : vector<2x64xf32>
    %1709 = tpu.concatenate %1658, %1667, %1681, %1685, %1694, %1708 in 0 : vector<2x64xf32>, vector<2x64xf32>, vector<2x64xf32>, vector<2x64xf32>, vector<2x64xf32>, vector<2x64xf32> -> vector<12x64xf32>
    %1710 = vector.broadcast %54 : vector<1x64xf32> to vector<12x64xf32>
    %1711 = arith.addf %1709, %1710 : vector<12x64xf32>
    %cst_258 = arith.constant 0.000000e+00 : f32
    %1712 = vector.broadcast %cst_258 : f32 to vector<12x64xf32>
    %1713 = arith.subf %1712, %1711 : vector<12x64xf32>
    %1714 = math.exp %1713 : vector<12x64xf32>
    %cst_259 = arith.constant 1.000000e+00 : f32
    %1715 = vector.broadcast %cst_259 : f32 to vector<12x64xf32>
    %1716 = arith.addf %1715, %1714 : vector<12x64xf32>
    %cst_260 = arith.constant 1.000000e+00 : f32
    %1717 = vector.broadcast %cst_260 : f32 to vector<12x64xf32>
    %1718 = arith.divf %1717, %1716 : vector<12x64xf32>
    %1719 = arith.mulf %1711, %1718 : vector<12x64xf32>
    %cst_261 = arith.constant dense<0.000000e+00> : vector<12x64xf32>
    %1720 = tpu.matmul %1719, %51, %cst_261 {dimension_numbers = #tpu.dot_dimension_numbers<[1], [0], [0], [1], [0, 0, 1, 1], [], []>} : vector<12x64xf32>, vector<64x64xf32>, vector<12x64xf32> -> vector<12x64xf32>
    %1721 = vector.broadcast %55 : vector<1x64xf32> to vector<12x64xf32>
    %1722 = arith.addf %1720, %1721 : vector<12x64xf32>
    %cst_262 = arith.constant 0.000000e+00 : f32
    %1723 = vector.broadcast %cst_262 : f32 to vector<12x64xf32>
    %1724 = arith.maximumf %1722, %1723 : vector<12x64xf32>
    %1725 = math.absf %1722 : vector<12x64xf32>
    %cst_263 = arith.constant 0.000000e+00 : f32
    %1726 = vector.broadcast %cst_263 : f32 to vector<12x64xf32>
    %1727 = arith.subf %1726, %1725 : vector<12x64xf32>
    %1728 = math.exp %1727 : vector<12x64xf32>
    %1729 = math.log1p %1728 : vector<12x64xf32>
    %1730 = arith.addf %1724, %1729 : vector<12x64xf32>
    %cst_264 = arith.constant dense<0.000000e+00> : vector<32x12xf32>
    %1731 = tpu.matmul %60, %1719, %cst_264 {dimension_numbers = #tpu.dot_dimension_numbers<[1], [1], [0], [0], [0, 0, 1, 0], [], []>} : vector<32x64xf32>, vector<12x64xf32>, vector<32x12xf32> -> vector<32x12xf32>
    %1732 = vector.extract_strided_slice %1731 {offsets = [0, 0], sizes = [16, 12], strides = [1, 1]} : vector<32x12xf32> to vector<16x12xf32>
    %1733 = vector.extract_strided_slice %1731 {offsets = [16, 0], sizes = [16, 12], strides = [1, 1]} : vector<32x12xf32> to vector<16x12xf32>
    %cst_265 = arith.constant 0.000000e+00 : f32
    %1734 = vector.broadcast %cst_265 : f32 to vector<16x64xf32>
    %1735 = vector.extract_strided_slice %1719 {offsets = [0, 0], sizes = [1, 64], strides = [1, 1]} : vector<12x64xf32> to vector<1x64xf32>
    %1736 = vector.extract_strided_slice %1730 {offsets = [0, 0], sizes = [1, 64], strides = [1, 1]} : vector<12x64xf32> to vector<1x64xf32>
    %1737 = vector.extract_strided_slice %1732 {offsets = [0, 0], sizes = [16, 1], strides = [1, 1]} : vector<16x12xf32> to vector<16x1xf32>
    %1738 = vector.extract_strided_slice %1733 {offsets = [0, 0], sizes = [16, 1], strides = [1, 1]} : vector<16x12xf32> to vector<16x1xf32>
    %1739 = vector.broadcast %1736 : vector<1x64xf32> to vector<16x64xf32>
    %1740 = arith.mulf %1739, %52 : vector<16x64xf32>
    %1741 = math.exp %1740 : vector<16x64xf32>
    %1742 = arith.mulf %1741, %1734 : vector<16x64xf32>
    %1743 = arith.mulf %1736, %1735 : vector<1x64xf32>
    %1744 = vector.broadcast %1737 : vector<16x1xf32> to vector<16x64xf32>
    %1745 = vector.broadcast %1743 : vector<1x64xf32> to vector<16x64xf32>
    %1746 = arith.mulf %1744, %1745 : vector<16x64xf32>
    %1747 = arith.addf %1742, %1746 : vector<16x64xf32>
    %1748 = vector.broadcast %1738 : vector<16x1xf32> to vector<16x64xf32>
    %1749 = arith.mulf %1747, %1748 : vector<16x64xf32>
    %cst_266 = arith.constant dense<0.000000e+00> : vector<64xf32>
    %1750 = vector.multi_reduction <add>, %1749, %cst_266 [0] : vector<16x64xf32> to vector<64xf32>
    %1751 = vector.shape_cast %1750 : vector<64xf32> to vector<1x64xf32>
    %1752 = arith.mulf %56, %1735 : vector<1x64xf32>
    %1753 = arith.addf %1751, %1752 : vector<1x64xf32>
    %1754 = vector.extract_strided_slice %1719 {offsets = [2, 0], sizes = [1, 64], strides = [1, 1]} : vector<12x64xf32> to vector<1x64xf32>
    %1755 = vector.extract_strided_slice %1730 {offsets = [2, 0], sizes = [1, 64], strides = [1, 1]} : vector<12x64xf32> to vector<1x64xf32>
    %1756 = vector.extract_strided_slice %1732 {offsets = [0, 2], sizes = [16, 1], strides = [1, 1]} : vector<16x12xf32> to vector<16x1xf32>
    %1757 = vector.extract_strided_slice %1733 {offsets = [0, 2], sizes = [16, 1], strides = [1, 1]} : vector<16x12xf32> to vector<16x1xf32>
    %1758 = vector.broadcast %1755 : vector<1x64xf32> to vector<16x64xf32>
    %1759 = arith.mulf %1758, %52 : vector<16x64xf32>
    %1760 = math.exp %1759 : vector<16x64xf32>
    %1761 = arith.mulf %1760, %1747 : vector<16x64xf32>
    %1762 = arith.mulf %1755, %1754 : vector<1x64xf32>
    %1763 = vector.broadcast %1756 : vector<16x1xf32> to vector<16x64xf32>
    %1764 = vector.broadcast %1762 : vector<1x64xf32> to vector<16x64xf32>
    %1765 = arith.mulf %1763, %1764 : vector<16x64xf32>
    %1766 = arith.addf %1761, %1765 : vector<16x64xf32>
    %1767 = vector.broadcast %1757 : vector<16x1xf32> to vector<16x64xf32>
    %1768 = arith.mulf %1766, %1767 : vector<16x64xf32>
    %cst_267 = arith.constant dense<0.000000e+00> : vector<64xf32>
    %1769 = vector.multi_reduction <add>, %1768, %cst_267 [0] : vector<16x64xf32> to vector<64xf32>
    %1770 = vector.shape_cast %1769 : vector<64xf32> to vector<1x64xf32>
    %1771 = arith.mulf %56, %1754 : vector<1x64xf32>
    %1772 = arith.addf %1770, %1771 : vector<1x64xf32>
    %1773 = vector.extract_strided_slice %1719 {offsets = [4, 0], sizes = [1, 64], strides = [1, 1]} : vector<12x64xf32> to vector<1x64xf32>
    %1774 = vector.extract_strided_slice %1730 {offsets = [4, 0], sizes = [1, 64], strides = [1, 1]} : vector<12x64xf32> to vector<1x64xf32>
    %1775 = vector.extract_strided_slice %1732 {offsets = [0, 4], sizes = [16, 1], strides = [1, 1]} : vector<16x12xf32> to vector<16x1xf32>
    %1776 = vector.extract_strided_slice %1733 {offsets = [0, 4], sizes = [16, 1], strides = [1, 1]} : vector<16x12xf32> to vector<16x1xf32>
    %1777 = vector.broadcast %1774 : vector<1x64xf32> to vector<16x64xf32>
    %1778 = arith.mulf %1777, %52 : vector<16x64xf32>
    %1779 = math.exp %1778 : vector<16x64xf32>
    %1780 = arith.mulf %1779, %1766 : vector<16x64xf32>
    %1781 = arith.mulf %1774, %1773 : vector<1x64xf32>
    %1782 = vector.broadcast %1775 : vector<16x1xf32> to vector<16x64xf32>
    %1783 = vector.broadcast %1781 : vector<1x64xf32> to vector<16x64xf32>
    %1784 = arith.mulf %1782, %1783 : vector<16x64xf32>
    %1785 = arith.addf %1780, %1784 : vector<16x64xf32>
    %1786 = vector.broadcast %1776 : vector<16x1xf32> to vector<16x64xf32>
    %1787 = arith.mulf %1785, %1786 : vector<16x64xf32>
    %cst_268 = arith.constant dense<0.000000e+00> : vector<64xf32>
    %1788 = vector.multi_reduction <add>, %1787, %cst_268 [0] : vector<16x64xf32> to vector<64xf32>
    %1789 = vector.shape_cast %1788 : vector<64xf32> to vector<1x64xf32>
    %1790 = arith.mulf %56, %1773 : vector<1x64xf32>
    %1791 = arith.addf %1789, %1790 : vector<1x64xf32>
    %cst_269 = arith.constant 0.000000e+00 : f32
    %1792 = vector.broadcast %cst_269 : f32 to vector<16x64xf32>
    %1793 = vector.extract_strided_slice %1719 {offsets = [1, 0], sizes = [1, 64], strides = [1, 1]} : vector<12x64xf32> to vector<1x64xf32>
    %1794 = vector.extract_strided_slice %1730 {offsets = [1, 0], sizes = [1, 64], strides = [1, 1]} : vector<12x64xf32> to vector<1x64xf32>
    %1795 = vector.extract_strided_slice %1732 {offsets = [0, 1], sizes = [16, 1], strides = [1, 1]} : vector<16x12xf32> to vector<16x1xf32>
    %1796 = vector.extract_strided_slice %1733 {offsets = [0, 1], sizes = [16, 1], strides = [1, 1]} : vector<16x12xf32> to vector<16x1xf32>
    %1797 = vector.broadcast %1794 : vector<1x64xf32> to vector<16x64xf32>
    %1798 = arith.mulf %1797, %52 : vector<16x64xf32>
    %1799 = math.exp %1798 : vector<16x64xf32>
    %1800 = arith.mulf %1799, %1792 : vector<16x64xf32>
    %1801 = arith.mulf %1794, %1793 : vector<1x64xf32>
    %1802 = vector.broadcast %1795 : vector<16x1xf32> to vector<16x64xf32>
    %1803 = vector.broadcast %1801 : vector<1x64xf32> to vector<16x64xf32>
    %1804 = arith.mulf %1802, %1803 : vector<16x64xf32>
    %1805 = arith.addf %1800, %1804 : vector<16x64xf32>
    %1806 = vector.broadcast %1796 : vector<16x1xf32> to vector<16x64xf32>
    %1807 = arith.mulf %1805, %1806 : vector<16x64xf32>
    %cst_270 = arith.constant dense<0.000000e+00> : vector<64xf32>
    %1808 = vector.multi_reduction <add>, %1807, %cst_270 [0] : vector<16x64xf32> to vector<64xf32>
    %1809 = vector.shape_cast %1808 : vector<64xf32> to vector<1x64xf32>
    %1810 = arith.mulf %56, %1793 : vector<1x64xf32>
    %1811 = arith.addf %1809, %1810 : vector<1x64xf32>
    %1812 = vector.extract_strided_slice %1719 {offsets = [3, 0], sizes = [1, 64], strides = [1, 1]} : vector<12x64xf32> to vector<1x64xf32>
    %1813 = vector.extract_strided_slice %1730 {offsets = [3, 0], sizes = [1, 64], strides = [1, 1]} : vector<12x64xf32> to vector<1x64xf32>
    %1814 = vector.extract_strided_slice %1732 {offsets = [0, 3], sizes = [16, 1], strides = [1, 1]} : vector<16x12xf32> to vector<16x1xf32>
    %1815 = vector.extract_strided_slice %1733 {offsets = [0, 3], sizes = [16, 1], strides = [1, 1]} : vector<16x12xf32> to vector<16x1xf32>
    %1816 = vector.broadcast %1813 : vector<1x64xf32> to vector<16x64xf32>
    %1817 = arith.mulf %1816, %52 : vector<16x64xf32>
    %1818 = math.exp %1817 : vector<16x64xf32>
    %1819 = arith.mulf %1818, %1805 : vector<16x64xf32>
    %1820 = arith.mulf %1813, %1812 : vector<1x64xf32>
    %1821 = vector.broadcast %1814 : vector<16x1xf32> to vector<16x64xf32>
    %1822 = vector.broadcast %1820 : vector<1x64xf32> to vector<16x64xf32>
    %1823 = arith.mulf %1821, %1822 : vector<16x64xf32>
    %1824 = arith.addf %1819, %1823 : vector<16x64xf32>
    %1825 = vector.broadcast %1815 : vector<16x1xf32> to vector<16x64xf32>
    %1826 = arith.mulf %1824, %1825 : vector<16x64xf32>
    %cst_271 = arith.constant dense<0.000000e+00> : vector<64xf32>
    %1827 = vector.multi_reduction <add>, %1826, %cst_271 [0] : vector<16x64xf32> to vector<64xf32>
    %1828 = vector.shape_cast %1827 : vector<64xf32> to vector<1x64xf32>
    %1829 = arith.mulf %56, %1812 : vector<1x64xf32>
    %1830 = arith.addf %1828, %1829 : vector<1x64xf32>
    %1831 = vector.extract_strided_slice %1719 {offsets = [5, 0], sizes = [1, 64], strides = [1, 1]} : vector<12x64xf32> to vector<1x64xf32>
    %1832 = vector.extract_strided_slice %1730 {offsets = [5, 0], sizes = [1, 64], strides = [1, 1]} : vector<12x64xf32> to vector<1x64xf32>
    %1833 = vector.extract_strided_slice %1732 {offsets = [0, 5], sizes = [16, 1], strides = [1, 1]} : vector<16x12xf32> to vector<16x1xf32>
    %1834 = vector.extract_strided_slice %1733 {offsets = [0, 5], sizes = [16, 1], strides = [1, 1]} : vector<16x12xf32> to vector<16x1xf32>
    %1835 = vector.broadcast %1832 : vector<1x64xf32> to vector<16x64xf32>
    %1836 = arith.mulf %1835, %52 : vector<16x64xf32>
    %1837 = math.exp %1836 : vector<16x64xf32>
    %1838 = arith.mulf %1837, %1824 : vector<16x64xf32>
    %1839 = arith.mulf %1832, %1831 : vector<1x64xf32>
    %1840 = vector.broadcast %1833 : vector<16x1xf32> to vector<16x64xf32>
    %1841 = vector.broadcast %1839 : vector<1x64xf32> to vector<16x64xf32>
    %1842 = arith.mulf %1840, %1841 : vector<16x64xf32>
    %1843 = arith.addf %1838, %1842 : vector<16x64xf32>
    %1844 = vector.broadcast %1834 : vector<16x1xf32> to vector<16x64xf32>
    %1845 = arith.mulf %1843, %1844 : vector<16x64xf32>
    %cst_272 = arith.constant dense<0.000000e+00> : vector<64xf32>
    %1846 = vector.multi_reduction <add>, %1845, %cst_272 [0] : vector<16x64xf32> to vector<64xf32>
    %1847 = vector.shape_cast %1846 : vector<64xf32> to vector<1x64xf32>
    %1848 = arith.mulf %56, %1831 : vector<1x64xf32>
    %1849 = arith.addf %1847, %1848 : vector<1x64xf32>
    %cst_273 = arith.constant 0.000000e+00 : f32
    %1850 = vector.broadcast %cst_273 : f32 to vector<16x64xf32>
    %1851 = vector.extract_strided_slice %1719 {offsets = [6, 0], sizes = [1, 64], strides = [1, 1]} : vector<12x64xf32> to vector<1x64xf32>
    %1852 = vector.extract_strided_slice %1730 {offsets = [6, 0], sizes = [1, 64], strides = [1, 1]} : vector<12x64xf32> to vector<1x64xf32>
    %1853 = vector.extract_strided_slice %1732 {offsets = [0, 6], sizes = [16, 1], strides = [1, 1]} : vector<16x12xf32> to vector<16x1xf32>
    %1854 = vector.extract_strided_slice %1733 {offsets = [0, 6], sizes = [16, 1], strides = [1, 1]} : vector<16x12xf32> to vector<16x1xf32>
    %1855 = vector.broadcast %1852 : vector<1x64xf32> to vector<16x64xf32>
    %1856 = arith.mulf %1855, %52 : vector<16x64xf32>
    %1857 = math.exp %1856 : vector<16x64xf32>
    %1858 = arith.mulf %1857, %1850 : vector<16x64xf32>
    %1859 = arith.mulf %1852, %1851 : vector<1x64xf32>
    %1860 = vector.broadcast %1853 : vector<16x1xf32> to vector<16x64xf32>
    %1861 = vector.broadcast %1859 : vector<1x64xf32> to vector<16x64xf32>
    %1862 = arith.mulf %1860, %1861 : vector<16x64xf32>
    %1863 = arith.addf %1858, %1862 : vector<16x64xf32>
    %1864 = vector.broadcast %1854 : vector<16x1xf32> to vector<16x64xf32>
    %1865 = arith.mulf %1863, %1864 : vector<16x64xf32>
    %cst_274 = arith.constant dense<0.000000e+00> : vector<64xf32>
    %1866 = vector.multi_reduction <add>, %1865, %cst_274 [0] : vector<16x64xf32> to vector<64xf32>
    %1867 = vector.shape_cast %1866 : vector<64xf32> to vector<1x64xf32>
    %1868 = arith.mulf %56, %1851 : vector<1x64xf32>
    %1869 = arith.addf %1867, %1868 : vector<1x64xf32>
    %1870 = arith.addf %1772, %1869 : vector<1x64xf32>
    %1871 = vector.extract_strided_slice %1719 {offsets = [8, 0], sizes = [1, 64], strides = [1, 1]} : vector<12x64xf32> to vector<1x64xf32>
    %1872 = vector.extract_strided_slice %1730 {offsets = [8, 0], sizes = [1, 64], strides = [1, 1]} : vector<12x64xf32> to vector<1x64xf32>
    %1873 = vector.extract_strided_slice %1732 {offsets = [0, 8], sizes = [16, 1], strides = [1, 1]} : vector<16x12xf32> to vector<16x1xf32>
    %1874 = vector.extract_strided_slice %1733 {offsets = [0, 8], sizes = [16, 1], strides = [1, 1]} : vector<16x12xf32> to vector<16x1xf32>
    %1875 = vector.broadcast %1872 : vector<1x64xf32> to vector<16x64xf32>
    %1876 = arith.mulf %1875, %52 : vector<16x64xf32>
    %1877 = math.exp %1876 : vector<16x64xf32>
    %1878 = arith.mulf %1877, %1863 : vector<16x64xf32>
    %1879 = arith.mulf %1872, %1871 : vector<1x64xf32>
    %1880 = vector.broadcast %1873 : vector<16x1xf32> to vector<16x64xf32>
    %1881 = vector.broadcast %1879 : vector<1x64xf32> to vector<16x64xf32>
    %1882 = arith.mulf %1880, %1881 : vector<16x64xf32>
    %1883 = arith.addf %1878, %1882 : vector<16x64xf32>
    %1884 = vector.broadcast %1874 : vector<16x1xf32> to vector<16x64xf32>
    %1885 = arith.mulf %1883, %1884 : vector<16x64xf32>
    %cst_275 = arith.constant dense<0.000000e+00> : vector<64xf32>
    %1886 = vector.multi_reduction <add>, %1885, %cst_275 [0] : vector<16x64xf32> to vector<64xf32>
    %1887 = vector.shape_cast %1886 : vector<64xf32> to vector<1x64xf32>
    %1888 = arith.mulf %56, %1871 : vector<1x64xf32>
    %1889 = arith.addf %1887, %1888 : vector<1x64xf32>
    %1890 = arith.addf %1753, %1889 : vector<1x64xf32>
    %1891 = vector.extract_strided_slice %1719 {offsets = [10, 0], sizes = [1, 64], strides = [1, 1]} : vector<12x64xf32> to vector<1x64xf32>
    %1892 = vector.extract_strided_slice %1730 {offsets = [10, 0], sizes = [1, 64], strides = [1, 1]} : vector<12x64xf32> to vector<1x64xf32>
    %1893 = vector.extract_strided_slice %1732 {offsets = [0, 10], sizes = [16, 1], strides = [1, 1]} : vector<16x12xf32> to vector<16x1xf32>
    %1894 = vector.extract_strided_slice %1733 {offsets = [0, 10], sizes = [16, 1], strides = [1, 1]} : vector<16x12xf32> to vector<16x1xf32>
    %1895 = vector.broadcast %1892 : vector<1x64xf32> to vector<16x64xf32>
    %1896 = arith.mulf %1895, %52 : vector<16x64xf32>
    %1897 = math.exp %1896 : vector<16x64xf32>
    %1898 = arith.mulf %1897, %1883 : vector<16x64xf32>
    %1899 = arith.mulf %1892, %1891 : vector<1x64xf32>
    %1900 = vector.broadcast %1893 : vector<16x1xf32> to vector<16x64xf32>
    %1901 = vector.broadcast %1899 : vector<1x64xf32> to vector<16x64xf32>
    %1902 = arith.mulf %1900, %1901 : vector<16x64xf32>
    %1903 = arith.addf %1898, %1902 : vector<16x64xf32>
    %1904 = vector.broadcast %1894 : vector<16x1xf32> to vector<16x64xf32>
    %1905 = arith.mulf %1903, %1904 : vector<16x64xf32>
    %cst_276 = arith.constant dense<0.000000e+00> : vector<64xf32>
    %1906 = vector.multi_reduction <add>, %1905, %cst_276 [0] : vector<16x64xf32> to vector<64xf32>
    %1907 = vector.shape_cast %1906 : vector<64xf32> to vector<1x64xf32>
    %1908 = arith.mulf %56, %1891 : vector<1x64xf32>
    %1909 = arith.addf %1907, %1908 : vector<1x64xf32>
    %1910 = arith.addf %1791, %1909 : vector<1x64xf32>
    %cst_277 = arith.constant 0.000000e+00 : f32
    %1911 = vector.broadcast %cst_277 : f32 to vector<16x64xf32>
    %1912 = vector.extract_strided_slice %1719 {offsets = [7, 0], sizes = [1, 64], strides = [1, 1]} : vector<12x64xf32> to vector<1x64xf32>
    %1913 = vector.extract_strided_slice %1730 {offsets = [7, 0], sizes = [1, 64], strides = [1, 1]} : vector<12x64xf32> to vector<1x64xf32>
    %1914 = vector.extract_strided_slice %1732 {offsets = [0, 7], sizes = [16, 1], strides = [1, 1]} : vector<16x12xf32> to vector<16x1xf32>
    %1915 = vector.extract_strided_slice %1733 {offsets = [0, 7], sizes = [16, 1], strides = [1, 1]} : vector<16x12xf32> to vector<16x1xf32>
    %1916 = vector.broadcast %1913 : vector<1x64xf32> to vector<16x64xf32>
    %1917 = arith.mulf %1916, %52 : vector<16x64xf32>
    %1918 = math.exp %1917 : vector<16x64xf32>
    %1919 = arith.mulf %1918, %1911 : vector<16x64xf32>
    %1920 = arith.mulf %1913, %1912 : vector<1x64xf32>
    %1921 = vector.broadcast %1914 : vector<16x1xf32> to vector<16x64xf32>
    %1922 = vector.broadcast %1920 : vector<1x64xf32> to vector<16x64xf32>
    %1923 = arith.mulf %1921, %1922 : vector<16x64xf32>
    %1924 = arith.addf %1919, %1923 : vector<16x64xf32>
    %1925 = vector.broadcast %1915 : vector<16x1xf32> to vector<16x64xf32>
    %1926 = arith.mulf %1924, %1925 : vector<16x64xf32>
    %cst_278 = arith.constant dense<0.000000e+00> : vector<64xf32>
    %1927 = vector.multi_reduction <add>, %1926, %cst_278 [0] : vector<16x64xf32> to vector<64xf32>
    %1928 = vector.shape_cast %1927 : vector<64xf32> to vector<1x64xf32>
    %1929 = arith.mulf %56, %1912 : vector<1x64xf32>
    %1930 = arith.addf %1928, %1929 : vector<1x64xf32>
    %1931 = arith.addf %1830, %1930 : vector<1x64xf32>
    %1932 = vector.extract_strided_slice %1719 {offsets = [9, 0], sizes = [1, 64], strides = [1, 1]} : vector<12x64xf32> to vector<1x64xf32>
    %1933 = vector.extract_strided_slice %1730 {offsets = [9, 0], sizes = [1, 64], strides = [1, 1]} : vector<12x64xf32> to vector<1x64xf32>
    %1934 = vector.extract_strided_slice %1732 {offsets = [0, 9], sizes = [16, 1], strides = [1, 1]} : vector<16x12xf32> to vector<16x1xf32>
    %1935 = vector.extract_strided_slice %1733 {offsets = [0, 9], sizes = [16, 1], strides = [1, 1]} : vector<16x12xf32> to vector<16x1xf32>
    %1936 = vector.broadcast %1933 : vector<1x64xf32> to vector<16x64xf32>
    %1937 = arith.mulf %1936, %52 : vector<16x64xf32>
    %1938 = math.exp %1937 : vector<16x64xf32>
    %1939 = arith.mulf %1938, %1924 : vector<16x64xf32>
    %1940 = arith.mulf %1933, %1932 : vector<1x64xf32>
    %1941 = vector.broadcast %1934 : vector<16x1xf32> to vector<16x64xf32>
    %1942 = vector.broadcast %1940 : vector<1x64xf32> to vector<16x64xf32>
    %1943 = arith.mulf %1941, %1942 : vector<16x64xf32>
    %1944 = arith.addf %1939, %1943 : vector<16x64xf32>
    %1945 = vector.broadcast %1935 : vector<16x1xf32> to vector<16x64xf32>
    %1946 = arith.mulf %1944, %1945 : vector<16x64xf32>
    %cst_279 = arith.constant dense<0.000000e+00> : vector<64xf32>
    %1947 = vector.multi_reduction <add>, %1946, %cst_279 [0] : vector<16x64xf32> to vector<64xf32>
    %1948 = vector.shape_cast %1947 : vector<64xf32> to vector<1x64xf32>
    %1949 = arith.mulf %56, %1932 : vector<1x64xf32>
    %1950 = arith.addf %1948, %1949 : vector<1x64xf32>
    %1951 = arith.addf %1811, %1950 : vector<1x64xf32>
    %1952 = vector.extract_strided_slice %1719 {offsets = [11, 0], sizes = [1, 64], strides = [1, 1]} : vector<12x64xf32> to vector<1x64xf32>
    %1953 = vector.extract_strided_slice %1730 {offsets = [11, 0], sizes = [1, 64], strides = [1, 1]} : vector<12x64xf32> to vector<1x64xf32>
    %1954 = vector.extract_strided_slice %1732 {offsets = [0, 11], sizes = [16, 1], strides = [1, 1]} : vector<16x12xf32> to vector<16x1xf32>
    %1955 = vector.extract_strided_slice %1733 {offsets = [0, 11], sizes = [16, 1], strides = [1, 1]} : vector<16x12xf32> to vector<16x1xf32>
    %1956 = vector.broadcast %1953 : vector<1x64xf32> to vector<16x64xf32>
    %1957 = arith.mulf %1956, %52 : vector<16x64xf32>
    %1958 = math.exp %1957 : vector<16x64xf32>
    %1959 = arith.mulf %1958, %1944 : vector<16x64xf32>
    %1960 = arith.mulf %1953, %1952 : vector<1x64xf32>
    %1961 = vector.broadcast %1954 : vector<16x1xf32> to vector<16x64xf32>
    %1962 = vector.broadcast %1960 : vector<1x64xf32> to vector<16x64xf32>
    %1963 = arith.mulf %1961, %1962 : vector<16x64xf32>
    %1964 = arith.addf %1959, %1963 : vector<16x64xf32>
    %1965 = vector.broadcast %1955 : vector<16x1xf32> to vector<16x64xf32>
    %1966 = arith.mulf %1964, %1965 : vector<16x64xf32>
    %cst_280 = arith.constant dense<0.000000e+00> : vector<64xf32>
    %1967 = vector.multi_reduction <add>, %1966, %cst_280 [0] : vector<16x64xf32> to vector<64xf32>
    %1968 = vector.shape_cast %1967 : vector<64xf32> to vector<1x64xf32>
    %1969 = arith.mulf %56, %1952 : vector<1x64xf32>
    %1970 = arith.addf %1968, %1969 : vector<1x64xf32>
    %1971 = arith.addf %1849, %1970 : vector<1x64xf32>
    %1972 = tpu.concatenate %1890, %1951, %1870, %1931, %1910, %1971 in 0 : vector<1x64xf32>, vector<1x64xf32>, vector<1x64xf32>, vector<1x64xf32>, vector<1x64xf32>, vector<1x64xf32> -> vector<6x64xf32>
    %cst_281 = arith.constant 5.000000e-01 : f32
    %1973 = vector.broadcast %cst_281 : f32 to vector<6x64xf32>
    %1974 = arith.mulf %1972, %1973 : vector<6x64xf32>
    %1975 = arith.mulf %1974, %1654 : vector<6x64xf32>
    %cst_282 = arith.constant dense<0.000000e+00> : vector<6x32xf32>
    %1976 = tpu.matmul %1975, %57, %cst_282 {dimension_numbers = #tpu.dot_dimension_numbers<[1], [0], [0], [1], [0, 0, 1, 1], [], []>} : vector<6x64xf32>, vector<64x32xf32>, vector<6x32xf32> -> vector<6x32xf32>
    %1977 = arith.addf %1976, %1039 : vector<6x32xf32>
    %1978 = vector.extract_strided_slice %1624 {offsets = [4, 0], sizes = [2, 32], strides = [1, 1]} : vector<10x32xf32> to vector<2x32xf32>
    %1979 = vector.extract_strided_slice %1977 {offsets = [0, 0], sizes = [2, 32], strides = [1, 1]} : vector<6x32xf32> to vector<2x32xf32>
    %1980 = vector.extract_strided_slice %1977 {offsets = [2, 0], sizes = [2, 32], strides = [1, 1]} : vector<6x32xf32> to vector<2x32xf32>
    %1981 = arith.addf %1979, %1980 : vector<2x32xf32>
    %1982 = vector.extract_strided_slice %1977 {offsets = [4, 0], sizes = [2, 32], strides = [1, 1]} : vector<6x32xf32> to vector<2x32xf32>
    %1983 = arith.addf %1981, %1982 : vector<2x32xf32>
    %cst_283 = arith.constant 0.333333343 : f32
    %1984 = vector.broadcast %cst_283 : f32 to vector<2x32xf32>
    %1985 = arith.mulf %1983, %1984 : vector<2x32xf32>
    %1986 = arith.addf %1978, %1985 : vector<2x32xf32>
    %cst_284 = arith.constant 5.000000e-01 : f32
    %1987 = vector.broadcast %cst_284 : f32 to vector<2x32xf32>
    %1988 = arith.mulf %1986, %1987 : vector<2x32xf32>
    %cst_285 = arith.constant dense<0.000000e+00> : vector<2x32xf32>
    %1989 = tpu.matmul %1988, %61, %cst_285 {dimension_numbers = #tpu.dot_dimension_numbers<[1], [0], [0], [1], [0, 0, 1, 1], [], []>} : vector<2x32xf32>, vector<32x32xf32>, vector<2x32xf32> -> vector<2x32xf32>
    %cst_286 = arith.constant 0.000000e+00 : f32
    %1990 = vector.broadcast %cst_286 : f32 to vector<2x32xf32>
    %1991 = arith.subf %1990, %1989 : vector<2x32xf32>
    %1992 = math.exp %1991 : vector<2x32xf32>
    %cst_287 = arith.constant 1.000000e+00 : f32
    %1993 = vector.broadcast %cst_287 : f32 to vector<2x32xf32>
    %1994 = arith.addf %1993, %1992 : vector<2x32xf32>
    %cst_288 = arith.constant 1.000000e+00 : f32
    %1995 = vector.broadcast %cst_288 : f32 to vector<2x32xf32>
    %1996 = arith.divf %1995, %1994 : vector<2x32xf32>
    %1997 = tpu.concatenate %1996, %1996, %1996, %1996, %1996 in 0 : vector<2x32xf32>, vector<2x32xf32>, vector<2x32xf32>, vector<2x32xf32>, vector<2x32xf32> -> vector<10x32xf32>
    %1998 = arith.mulf %1624, %1997 : vector<10x32xf32>
    %1999 = tpu.concatenate %1996, %1996, %1996 in 0 : vector<2x32xf32>, vector<2x32xf32>, vector<2x32xf32> -> vector<6x32xf32>
    %2000 = arith.mulf %1977, %1999 : vector<6x32xf32>
    %2001 = vector.extract_strided_slice %1998 {offsets = [8, 0], sizes = [2, 32], strides = [1, 1]} : vector<10x32xf32> to vector<2x32xf32>
    %2002 = vector.extract_strided_slice %2000 {offsets = [4, 0], sizes = [2, 32], strides = [1, 1]} : vector<6x32xf32> to vector<2x32xf32>
    %2003 = arith.addf %2001, %2002 : vector<2x32xf32>
    %cst_289 = arith.constant 5.000000e-01 : f32
    %2004 = vector.broadcast %cst_289 : f32 to vector<2x32xf32>
    %2005 = arith.mulf %2003, %2004 : vector<2x32xf32>
    %cst_290 = arith.constant dense<0.000000e+00> : vector<2x10xf32>
    %2006 = tpu.matmul %2005, %62, %cst_290 {dimension_numbers = #tpu.dot_dimension_numbers<[1], [0], [0], [1], [0, 0, 1, 1], [], []>} : vector<2x32xf32>, vector<32x10xf32>, vector<2x10xf32> -> vector<2x10xf32>
    %2007 = vector.broadcast %63 : vector<1x10xf32> to vector<2x10xf32>
    %2008 = arith.addf %2006, %2007 : vector<2x10xf32>
    %c0_291 = arith.constant 0 : index
    %c0_292 = arith.constant 0 : index
    %2009 = vector.load %arg24[%c0_291, %c0_292] : memref<2x10xf32, #tpu.memory_space<vmem>>, vector<2x10xf32>
    tpu.vector_store %arg24[%c0_291, %c0_292], %2008 {strides = array<i32>} : memref<2x10xf32, #tpu.memory_space<vmem>>, vector<2x10xf32>,
    return
  }
}

</mosaic_0001>

<llo_original>
// kernel: model_forward.1
$region0: #{model_forward.1}
  #allocation0 [shape = 'u32[]', space=smem, size = 0x4, offset = 0x4, fixed_abs, tag = 'smem constant byte address 0x4 - core index']
  #allocation1 [shape = 'u32[144,128]{1,0:T(1,128)}', space=vmem, size = 0x12000, scoped, tag = 'internal scratch']
  %s0 = inlined_call_operand.vmem [shape: f32[8,256], index: 0, kind: input, shape index: {}]
  %s1 = inlined_call_operand.vmem [shape: f32[4,50], index: 1, kind: input, shape index: {}]
  %s2 = inlined_call_operand.vmem [shape: f32[256,512], index: 2, kind: input, shape index: {}]
  %s3 = inlined_call_operand.vmem [shape: f32[1,512], index: 3, kind: input, shape index: {}]
  %s4 = inlined_call_operand.vmem [shape: f32[512,32], index: 4, kind: input, shape index: {}]
  %s5 = inlined_call_operand.vmem [shape: f32[1,32], index: 5, kind: input, shape index: {}]
  %s6 = inlined_call_operand.vmem [shape: f32[50,32], index: 6, kind: input, shape index: {}]
  %s7 = inlined_call_operand.vmem [shape: f32[1,32], index: 7, kind: input, shape index: {}]
  %s8 = inlined_call_operand.vmem [shape: f32[8,32], index: 8, kind: input, shape index: {}]
  %s9 = inlined_call_operand.vmem [shape: f32[2,32], index: 9, kind: input, shape index: {}]
  %s10 = inlined_call_operand.vmem [shape: f32[4,32], index: 10, kind: input, shape index: {}]
  %s11 = inlined_call_operand.vmem [shape: f32[2,32], index: 11, kind: input, shape index: {}]
  %s12 = inlined_call_operand.vmem [shape: f32[208,64], index: 12, kind: input, shape index: {}]
  %s13 = inlined_call_operand.vmem [shape: f32[80,32], index: 13, kind: input, shape index: {}]
  %s14 = inlined_call_operand.vmem [shape: f32[208,64], index: 14, kind: input, shape index: {}]
  %s15 = inlined_call_operand.vmem [shape: f32[80,32], index: 15, kind: input, shape index: {}]
  %s16 = inlined_call_operand.vmem [shape: f32[32,32], index: 16, kind: input, shape index: {}]
  %s17 = inlined_call_operand.vmem [shape: f32[208,64], index: 17, kind: input, shape index: {}]
  %s18 = inlined_call_operand.vmem [shape: f32[80,32], index: 18, kind: input, shape index: {}]
  %s19 = inlined_call_operand.vmem [shape: f32[208,64], index: 19, kind: input, shape index: {}]
  %s20 = inlined_call_operand.vmem [shape: f32[80,32], index: 20, kind: input, shape index: {}]
  %s21 = inlined_call_operand.vmem [shape: f32[32,32], index: 21, kind: input, shape index: {}]
  %s22 = inlined_call_operand.vmem [shape: f32[32,10], index: 22, kind: input, shape index: {}]
  %s23 = inlined_call_operand.vmem [shape: f32[1,10], index: 23, kind: input, shape index: {}]
  %s24 = inlined_call_operand.hbm [shape: f32[2,10], index: 24, kind: output, shape index: {}]
  %s25 = sld [smem:[#allocation0]]
  $region106: #{model_forward.1} parent=0
    _
  %s27 = ssub.s32 1, %s25
  %s28 = scalar_select 0, %s27, %s25
  $region1: #{model_forward.1} parent=0
    #allocation2 [shape = 'u8[1024]{0}', space=vmem, size = 0x400, scoped, tag = 'output window, operand 0, single buffered']
    #allocation3 [shape = 's32[1]{0}', space=sflag, size = 0x4, scoped, tag = 'scoped memory for model_forward.1']
    %29 = vsyncpa [#allocation3], 0
    // Predicated region
    $region2: #{model_forward.1} parent=1 // pred_check
      _
    $region3: #{model_forward.1} parent=1 // pred_check_branch
      %31 = sbr.rel (0) target = $region5
    $region4: #{model_forward.1} parent=1 // pred_region
      _
    $region5: #{model_forward.1} parent=1 // pred_fallthru
      _
    // Predicated region
    $region6: #{model_forward.1} parent=1 // pred_check
      _
    $region7: #{model_forward.1} parent=1 // pred_check_branch
      %33 = sbr.rel (0) target = $region9
    $region8: #{model_forward.1} parent=1 // pred_region
      _
    $region9: #{model_forward.1} parent=1 // pred_fallthru
      _
    // Predicated region
    $region10: #{model_forward.1} parent=1 // pred_check
      _
    $region11: #{model_forward.1} parent=1 // pred_check_branch
      %35 = sbr.rel (0) target = $region13
    $region12: #{model_forward.1} parent=1 // pred_region
      _
    $region13: #{model_forward.1} parent=1 // pred_fallthru
      _
    // Predicated region
    $region14: #{model_forward.1} parent=1 // pred_check
      _
    $region15: #{model_forward.1} parent=1 // pred_check_branch
      %37 = sbr.rel (0) target = $region17
    $region16: #{model_forward.1} parent=1 // pred_region
      _
    $region17: #{model_forward.1} parent=1 // pred_fallthru
      _
    // Predicated region
    $region18: #{model_forward.1} parent=1 // pred_check
      _
    $region19: #{model_forward.1} parent=1 // pred_check_branch
      %39 = sbr.rel (0) target = $region21
    $region20: #{model_forward.1} parent=1 // pred_region
      _
    $region21: #{model_forward.1} parent=1 // pred_fallthru
      _
    // Predicated region
    $region22: #{model_forward.1} parent=1 // pred_check
      _
    $region23: #{model_forward.1} parent=1 // pred_check_branch
      %41 = sbr.rel (0) target = $region25
    $region24: #{model_forward.1} parent=1 // pred_region
      _
    $region25: #{model_forward.1} parent=1 // pred_fallthru
      _
    // Predicated region
    $region26: #{model_forward.1} parent=1 // pred_check
      _
    $region27: #{model_forward.1} parent=1 // pred_check_branch
      %43 = sbr.rel (0) target = $region29
    $region28: #{model_forward.1} parent=1 // pred_region
      _
    $region29: #{model_forward.1} parent=1 // pred_fallthru
      _
    // Predicated region
    $region30: #{model_forward.1} parent=1 // pred_check
      _
    $region31: #{model_forward.1} parent=1 // pred_check_branch
      %45 = sbr.rel (0) target = $region33
    $region32: #{model_forward.1} parent=1 // pred_region
      _
    $region33: #{model_forward.1} parent=1 // pred_fallthru
      _
    // Predicated region
    $region34: #{model_forward.1} parent=1 // pred_check
      _
    $region35: #{model_forward.1} parent=1 // pred_check_branch
      %47 = sbr.rel (0) target = $region37
    $region36: #{model_forward.1} parent=1 // pred_region
      _
    $region37: #{model_forward.1} parent=1 // pred_fallthru
      _
    // Predicated region
    $region38: #{model_forward.1} parent=1 // pred_check
      _
    $region39: #{model_forward.1} parent=1 // pred_check_branch
      %49 = sbr.rel (0) target = $region41
    $region40: #{model_forward.1} parent=1 // pred_region
      _
    $region41: #{model_forward.1} parent=1 // pred_fallthru
      _
    // Predicated region
    $region42: #{model_forward.1} parent=1 // pred_check
      _
    $region43: #{model_forward.1} parent=1 // pred_check_branch
      %51 = sbr.rel (0) target = $region45
    $region44: #{model_forward.1} parent=1 // pred_region
      _
    $region45: #{model_forward.1} parent=1 // pred_fallthru
      _
    // Predicated region
    $region46: #{model_forward.1} parent=1 // pred_check
      _
    $region47: #{model_forward.1} parent=1 // pred_check_branch
      %53 = sbr.rel (0) target = $region49
    $region48: #{model_forward.1} parent=1 // pred_region
      _
    $region49: #{model_forward.1} parent=1 // pred_fallthru
      _
    // Predicated region
    $region50: #{model_forward.1} parent=1 // pred_check
      _
    $region51: #{model_forward.1} parent=1 // pred_check_branch
      %55 = sbr.rel (0) target = $region53
    $region52: #{model_forward.1} parent=1 // pred_region
      _
    $region53: #{model_forward.1} parent=1 // pred_fallthru
      _
    // Predicated region
    $region54: #{model_forward.1} parent=1 // pred_check
      _
    $region55: #{model_forward.1} parent=1 // pred_check_branch
      %57 = sbr.rel (0) target = $region57
    $region56: #{model_forward.1} parent=1 // pred_region
      _
    $region57: #{model_forward.1} parent=1 // pred_fallthru
      _
    // Predicated region
    $region58: #{model_forward.1} parent=1 // pred_check
      _
    $region59: #{model_forward.1} parent=1 // pred_check_branch
      %59 = sbr.rel (0) target = $region61
    $region60: #{model_forward.1} parent=1 // pred_region
      _
    $region61: #{model_forward.1} parent=1 // pred_fallthru
      _
    // Predicated region
    $region62: #{model_forward.1} parent=1 // pred_check
      _
    $region63: #{model_forward.1} parent=1 // pred_check_branch
      %61 = sbr.rel (0) target = $region65
    $region64: #{model_forward.1} parent=1 // pred_region
      _
    $region65: #{model_forward.1} parent=1 // pred_fallthru
      _
    // Predicated region
    $region66: #{model_forward.1} parent=1 // pred_check
      _
    $region67: #{model_forward.1} parent=1 // pred_check_branch
      %63 = sbr.rel (0) target = $region69
    $region68: #{model_forward.1} parent=1 // pred_region
      _
    $region69: #{model_forward.1} parent=1 // pred_fallthru
      _
    // Predicated region
    $region70: #{model_forward.1} parent=1 // pred_check
      _
    $region71: #{model_forward.1} parent=1 // pred_check_branch
      %65 = sbr.rel (0) target = $region73
    $region72: #{model_forward.1} parent=1 // pred_region
      _
    $region73: #{model_forward.1} parent=1 // pred_fallthru
      _
    // Predicated region
    $region74: #{model_forward.1} parent=1 // pred_check
      _
    $region75: #{model_forward.1} parent=1 // pred_check_branch
      %67 = sbr.rel (0) target = $region77
    $region76: #{model_forward.1} parent=1 // pred_region
      _
    $region77: #{model_forward.1} parent=1 // pred_fallthru
      _
    // Predicated region
    $region78: #{model_forward.1} parent=1 // pred_check
      _
    $region79: #{model_forward.1} parent=1 // pred_check_branch
      %69 = sbr.rel (0) target = $region81
    $region80: #{model_forward.1} parent=1 // pred_region
      _
    $region81: #{model_forward.1} parent=1 // pred_fallthru
      _
    // Predicated region
    $region82: #{model_forward.1} parent=1 // pred_check
      _
    $region83: #{model_forward.1} parent=1 // pred_check_branch
      %71 = sbr.rel (0) target = $region85
    $region84: #{model_forward.1} parent=1 // pred_region
      _
    $region85: #{model_forward.1} parent=1 // pred_fallthru
      _
    // Predicated region
    $region86: #{model_forward.1} parent=1 // pred_check
      _
    $region87: #{model_forward.1} parent=1 // pred_check_branch
      %73 = sbr.rel (0) target = $region89
    $region88: #{model_forward.1} parent=1 // pred_region
      _
    $region89: #{model_forward.1} parent=1 // pred_fallthru
      _
    // Predicated region
    $region90: #{model_forward.1} parent=1 // pred_check
      _
    $region91: #{model_forward.1} parent=1 // pred_check_branch
      %75 = sbr.rel (0) target = $region93
    $region92: #{model_forward.1} parent=1 // pred_region
      _
    $region93: #{model_forward.1} parent=1 // pred_fallthru
      _
    // Predicated region
    $region94: #{model_forward.1} parent=1 // pred_check
      _
    $region95: #{model_forward.1} parent=1 // pred_check_branch
      %77 = sbr.rel (0) target = $region97
    $region96: #{model_forward.1} parent=1 // pred_region
      _
    $region97: #{model_forward.1} parent=1 // pred_fallthru
      _
    %v78 = vld [vmem:[%s0] sm:$0xff]
    %v79 = vld [vmem:[%s0 + $0x8] sm:$0xff]
    %v80 = vld [vmem:[%s1] sm:$0xf]
    %v81 = vld [vmem:[%s2] sm:$0xff]
    %v82 = vld [vmem:[%s2 + $0x8] sm:$0xff]
    %v83 = vld [vmem:[%s2 + $0x10] sm:$0xff]
    %v84 = vld [vmem:[%s2 + $0x18] sm:$0xff]
    %v85 = vld [vmem:[%s2 + $0x20] sm:$0xff]
    %v86 = vld [vmem:[%s2 + $0x28] sm:$0xff]
    %v87 = vld [vmem:[%s2 + $0x30] sm:$0xff]
    %v88 = vld [vmem:[%s2 + $0x38] sm:$0xff]
    %v89 = vld [vmem:[%s2 + $0x40] sm:$0xff]
    %v90 = vld [vmem:[%s2 + $0x48] sm:$0xff]
    %v91 = vld [vmem:[%s2 + $0x50] sm:$0xff]
    %v92 = vld [vmem:[%s2 + $0x58] sm:$0xff]
    %v93 = vld [vmem:[%s2 + $0x60] sm:$0xff]
    %v94 = vld [vmem:[%s2 + $0x68] sm:$0xff]
    %v95 = vld [vmem:[%s2 + $0x70] sm:$0xff]
    %v96 = vld [vmem:[%s2 + $0x78] sm:$0xff]
    %v97 = vld [vmem:[%s2 + $0x80] sm:$0xff]
    %v98 = vld [vmem:[%s2 + $0x88] sm:$0xff]
    %v99 = vld [vmem:[%s2 + $0x90] sm:$0xff]
    %v100 = vld [vmem:[%s2 + $0x98] sm:$0xff]
    %v101 = vld [vmem:[%s2 + $0xa0] sm:$0xff]
    %v102 = vld [vmem:[%s2 + $0xa8] sm:$0xff]
    %v103 = vld [vmem:[%s2 + $0xb0] sm:$0xff]
    %v104 = vld [vmem:[%s2 + $0xb8] sm:$0xff]
    %v105 = vld [vmem:[%s2 + $0xc0] sm:$0xff]
    %v106 = vld [vmem:[%s2 + $0xc8] sm:$0xff]
    %v107 = vld [vmem:[%s2 + $0xd0] sm:$0xff]
    %v108 = vld [vmem:[%s2 + $0xd8] sm:$0xff]
    %v109 = vld [vmem:[%s2 + $0xe0] sm:$0xff]
    %v110 = vld [vmem:[%s2 + $0xe8] sm:$0xff]
    %v111 = vld [vmem:[%s2 + $0xf0] sm:$0xff]
    %v112 = vld [vmem:[%s2 + $0xf8] sm:$0xff]
    %v113 = vld [vmem:[%s2 + $0x100] sm:$0xff]
    %v114 = vld [vmem:[%s2 + $0x108] sm:$0xff]
    %v115 = vld [vmem:[%s2 + $0x110] sm:$0xff]
    %v116 = vld [vmem:[%s2 + $0x118] sm:$0xff]
    %v117 = vld [vmem:[%s2 + $0x120] sm:$0xff]
    %v118 = vld [vmem:[%s2 + $0x128] sm:$0xff]
    %v119 = vld [vmem:[%s2 + $0x130] sm:$0xff]
    %v120 = vld [vmem:[%s2 + $0x138] sm:$0xff]
    %v121 = vld [vmem:[%s2 + $0x140] sm:$0xff]
    %v122 = vld [vmem:[%s2 + $0x148] sm:$0xff]
    %v123 = vld [vmem:[%s2 + $0x150] sm:$0xff]
    %v124 = vld [vmem:[%s2 + $0x158] sm:$0xff]
    %v125 = vld [vmem:[%s2 + $0x160] sm:$0xff]
    %v126 = vld [vmem:[%s2 + $0x168] sm:$0xff]
    %v127 = vld [vmem:[%s2 + $0x170] sm:$0xff]
    %v128 = vld [vmem:[%s2 + $0x178] sm:$0xff]
    %v129 = vld [vmem:[%s2 + $0x180] sm:$0xff]
    %v130 = vld [vmem:[%s2 + $0x188] sm:$0xff]
    %v131 = vld [vmem:[%s2 + $0x190] sm:$0xff]
    %v132 = vld [vmem:[%s2 + $0x198] sm:$0xff]
    %v133 = vld [vmem:[%s2 + $0x1a0] sm:$0xff]
    %v134 = vld [vmem:[%s2 + $0x1a8] sm:$0xff]
    %v135 = vld [vmem:[%s2 + $0x1b0] sm:$0xff]
    %v136 = vld [vmem:[%s2 + $0x1b8] sm:$0xff]
    %v137 = vld [vmem:[%s2 + $0x1c0] sm:$0xff]
    %v138 = vld [vmem:[%s2 + $0x1c8] sm:$0xff]
    %v139 = vld [vmem:[%s2 + $0x1d0] sm:$0xff]
    %v140 = vld [vmem:[%s2 + $0x1d8] sm:$0xff]
    %v141 = vld [vmem:[%s2 + $0x1e0] sm:$0xff]
    %v142 = vld [vmem:[%s2 + $0x1e8] sm:$0xff]
    %v143 = vld [vmem:[%s2 + $0x1f0] sm:$0xff]
    %v144 = vld [vmem:[%s2 + $0x1f8] sm:$0xff]
    %v145 = vld [vmem:[%s2 + $0x200] sm:$0xff]
    %v146 = vld [vmem:[%s2 + $0x208] sm:$0xff]
    %v147 = vld [vmem:[%s2 + $0x210] sm:$0xff]
    %v148 = vld [vmem:[%s2 + $0x218] sm:$0xff]
    %v149 = vld [vmem:[%s2 + $0x220] sm:$0xff]
    %v150 = vld [vmem:[%s2 + $0x228] sm:$0xff]
    %v151 = vld [vmem:[%s2 + $0x230] sm:$0xff]
    %v152 = vld [vmem:[%s2 + $0x238] sm:$0xff]
    %v153 = vld [vmem:[%s2 + $0x240] sm:$0xff]
    %v154 = vld [vmem:[%s2 + $0x248] sm:$0xff]
    %v155 = vld [vmem:[%s2 + $0x250] sm:$0xff]
    %v156 = vld [vmem:[%s2 + $0x258] sm:$0xff]
    %v157 = vld [vmem:[%s2 + $0x260] sm:$0xff]
    %v158 = vld [vmem:[%s2 + $0x268] sm:$0xff]
    %v159 = vld [vmem:[%s2 + $0x270] sm:$0xff]
    %v160 = vld [vmem:[%s2 + $0x278] sm:$0xff]
    %v161 = vld [vmem:[%s2 + $0x280] sm:$0xff]
    %v162 = vld [vmem:[%s2 + $0x288] sm:$0xff]
    %v163 = vld [vmem:[%s2 + $0x290] sm:$0xff]
    %v164 = vld [vmem:[%s2 + $0x298] sm:$0xff]
    %v165 = vld [vmem:[%s2 + $0x2a0] sm:$0xff]
    %v166 = vld [vmem:[%s2 + $0x2a8] sm:$0xff]
    %v167 = vld [vmem:[%s2 + $0x2b0] sm:$0xff]
    %v168 = vld [vmem:[%s2 + $0x2b8] sm:$0xff]
    %v169 = vld [vmem:[%s2 + $0x2c0] sm:$0xff]
    %v170 = vld [vmem:[%s2 + $0x2c8] sm:$0xff]
    %v171 = vld [vmem:[%s2 + $0x2d0] sm:$0xff]
    %v172 = vld [vmem:[%s2 + $0x2d8] sm:$0xff]
    %v173 = vld [vmem:[%s2 + $0x2e0] sm:$0xff]
    %v174 = vld [vmem:[%s2 + $0x2e8] sm:$0xff]
    %v175 = vld [vmem:[%s2 + $0x2f0] sm:$0xff]
    %v176 = vld [vmem:[%s2 + $0x2f8] sm:$0xff]
    %v177 = vld [vmem:[%s2 + $0x300] sm:$0xff]
    %v178 = vld [vmem:[%s2 + $0x308] sm:$0xff]
    %v179 = vld [vmem:[%s2 + $0x310] sm:$0xff]
    %v180 = vld [vmem:[%s2 + $0x318] sm:$0xff]
    %v181 = vld [vmem:[%s2 + $0x320] sm:$0xff]
    %v182 = vld [vmem:[%s2 + $0x328] sm:$0xff]
    %v183 = vld [vmem:[%s2 + $0x330] sm:$0xff]
    %v184 = vld [vmem:[%s2 + $0x338] sm:$0xff]
    %v185 = vld [vmem:[%s2 + $0x340] sm:$0xff]
    %v186 = vld [vmem:[%s2 + $0x348] sm:$0xff]
    %v187 = vld [vmem:[%s2 + $0x350] sm:$0xff]
    %v188 = vld [vmem:[%s2 + $0x358] sm:$0xff]
    %v189 = vld [vmem:[%s2 + $0x360] sm:$0xff]
    %v190 = vld [vmem:[%s2 + $0x368] sm:$0xff]
    %v191 = vld [vmem:[%s2 + $0x370] sm:$0xff]
    %v192 = vld [vmem:[%s2 + $0x378] sm:$0xff]
    %v193 = vld [vmem:[%s2 + $0x380] sm:$0xff]
    %v194 = vld [vmem:[%s2 + $0x388] sm:$0xff]
    %v195 = vld [vmem:[%s2 + $0x390] sm:$0xff]
    %v196 = vld [vmem:[%s2 + $0x398] sm:$0xff]
    %v197 = vld [vmem:[%s2 + $0x3a0] sm:$0xff]
    %v198 = vld [vmem:[%s2 + $0x3a8] sm:$0xff]
    %v199 = vld [vmem:[%s2 + $0x3b0] sm:$0xff]
    %v200 = vld [vmem:[%s2 + $0x3b8] sm:$0xff]
    %v201 = vld [vmem:[%s2 + $0x3c0] sm:$0xff]
    %v202 = vld [vmem:[%s2 + $0x3c8] sm:$0xff]
    %v203 = vld [vmem:[%s2 + $0x3d0] sm:$0xff]
    %v204 = vld [vmem:[%s2 + $0x3d8] sm:$0xff]
    %v205 = vld [vmem:[%s2 + $0x3e0] sm:$0xff]
    %v206 = vld [vmem:[%s2 + $0x3e8] sm:$0xff]
    %v207 = vld [vmem:[%s2 + $0x3f0] sm:$0xff]
    %v208 = vld [vmem:[%s2 + $0x3f8] sm:$0xff]
    %v209 = vld [vmem:[%s3] sm:$0xf]
    %v210 = vld [vmem:[%s4] sm:$0xff]
    %v211 = vld [vmem:[%s4 + $0x8] sm:$0xff]
    %v212 = vld [vmem:[%s4 + $0x10] sm:$0xff]
    %v213 = vld [vmem:[%s4 + $0x18] sm:$0xff]
    %v214 = vld [vmem:[%s4 + $0x20] sm:$0xff]
    %v215 = vld [vmem:[%s4 + $0x28] sm:$0xff]
    %v216 = vld [vmem:[%s4 + $0x30] sm:$0xff]
    %v217 = vld [vmem:[%s4 + $0x38] sm:$0xff]
    %v218 = vld [vmem:[%s4 + $0x40] sm:$0xff]
    %v219 = vld [vmem:[%s4 + $0x48] sm:$0xff]
    %v220 = vld [vmem:[%s4 + $0x50] sm:$0xff]
    %v221 = vld [vmem:[%s4 + $0x58] sm:$0xff]
    %v222 = vld [vmem:[%s4 + $0x60] sm:$0xff]
    %v223 = vld [vmem:[%s4 + $0x68] sm:$0xff]
    %v224 = vld [vmem:[%s4 + $0x70] sm:$0xff]
    %v225 = vld [vmem:[%s4 + $0x78] sm:$0xff]
    %v226 = vld [vmem:[%s4 + $0x80] sm:$0xff]
    %v227 = vld [vmem:[%s4 + $0x88] sm:$0xff]
    %v228 = vld [vmem:[%s4 + $0x90] sm:$0xff]
    %v229 = vld [vmem:[%s4 + $0x98] sm:$0xff]
    %v230 = vld [vmem:[%s4 + $0xa0] sm:$0xff]
    %v231 = vld [vmem:[%s4 + $0xa8] sm:$0xff]
    %v232 = vld [vmem:[%s4 + $0xb0] sm:$0xff]
    %v233 = vld [vmem:[%s4 + $0xb8] sm:$0xff]
    %v234 = vld [vmem:[%s4 + $0xc0] sm:$0xff]
    %v235 = vld [vmem:[%s4 + $0xc8] sm:$0xff]
    %v236 = vld [vmem:[%s4 + $0xd0] sm:$0xff]
    %v237 = vld [vmem:[%s4 + $0xd8] sm:$0xff]
    %v238 = vld [vmem:[%s4 + $0xe0] sm:$0xff]
    %v239 = vld [vmem:[%s4 + $0xe8] sm:$0xff]
    %v240 = vld [vmem:[%s4 + $0xf0] sm:$0xff]
    %v241 = vld [vmem:[%s4 + $0xf8] sm:$0xff]
    %v242 = vld [vmem:[%s4 + $0x100] sm:$0xff]
    %v243 = vld [vmem:[%s4 + $0x108] sm:$0xff]
    %v244 = vld [vmem:[%s4 + $0x110] sm:$0xff]
    %v245 = vld [vmem:[%s4 + $0x118] sm:$0xff]
    %v246 = vld [vmem:[%s4 + $0x120] sm:$0xff]
    %v247 = vld [vmem:[%s4 + $0x128] sm:$0xff]
    %v248 = vld [vmem:[%s4 + $0x130] sm:$0xff]
    %v249 = vld [vmem:[%s4 + $0x138] sm:$0xff]
    %v250 = vld [vmem:[%s4 + $0x140] sm:$0xff]
    %v251 = vld [vmem:[%s4 + $0x148] sm:$0xff]
    %v252 = vld [vmem:[%s4 + $0x150] sm:$0xff]
    %v253 = vld [vmem:[%s4 + $0x158] sm:$0xff]
    %v254 = vld [vmem:[%s4 + $0x160] sm:$0xff]
    %v255 = vld [vmem:[%s4 + $0x168] sm:$0xff]
    %v256 = vld [vmem:[%s4 + $0x170] sm:$0xff]
    %v257 = vld [vmem:[%s4 + $0x178] sm:$0xff]
    %v258 = vld [vmem:[%s4 + $0x180] sm:$0xff]
    %v259 = vld [vmem:[%s4 + $0x188] sm:$0xff]
    %v260 = vld [vmem:[%s4 + $0x190] sm:$0xff]
    %v261 = vld [vmem:[%s4 + $0x198] sm:$0xff]
    %v262 = vld [vmem:[%s4 + $0x1a0] sm:$0xff]
    %v263 = vld [vmem:[%s4 + $0x1a8] sm:$0xff]
    %v264 = vld [vmem:[%s4 + $0x1b0] sm:$0xff]
    %v265 = vld [vmem:[%s4 + $0x1b8] sm:$0xff]
    %v266 = vld [vmem:[%s4 + $0x1c0] sm:$0xff]
    %v267 = vld [vmem:[%s4 + $0x1c8] sm:$0xff]
    %v268 = vld [vmem:[%s4 + $0x1d0] sm:$0xff]
    %v269 = vld [vmem:[%s4 + $0x1d8] sm:$0xff]
    %v270 = vld [vmem:[%s4 + $0x1e0] sm:$0xff]
    %v271 = vld [vmem:[%s4 + $0x1e8] sm:$0xff]
    %v272 = vld [vmem:[%s4 + $0x1f0] sm:$0xff]
    %v273 = vld [vmem:[%s4 + $0x1f8] sm:$0xff]
    %v274 = vld [vmem:[%s5] sm:$0x1]
    %v275 = vld [vmem:[%s6] sm:$0xff]
    %v276 = vld [vmem:[%s6 + $0x8] sm:$0xff]
    %v277 = vld [vmem:[%s6 + $0x10] sm:$0xff]
    %v278 = vld [vmem:[%s6 + $0x18] sm:$0xff]
    %v279 = vld [vmem:[%s6 + $0x20] sm:$0xff]
    %v280 = vld [vmem:[%s6 + $0x28] sm:$0xff]
    %v281 = vld [vmem:[%s6 + $0x30] sm:$0x3]
    %v282 = vld [vmem:[%s7] sm:$0x1]
    %v283 = vld [vmem:[%s8] sm:$0xff]
    %v284 = vld [vmem:[%s9] sm:$0x3]
    %v285 = vld [vmem:[%s10] sm:$0xf]
    %v286 = vld [vmem:[%s11] sm:$0x3]
    %v287 = vld [vmem:[%s12] sm:$0xff]
    %v288 = vld [vmem:[%s12 + $0x8] sm:$0xff]
    %v289 = vld [vmem:[%s12 + $0x10] sm:$0xff]
    %v290 = vld [vmem:[%s12 + $0x18] sm:$0xff]
    %v291 = vld [vmem:[%s12 + $0x20] sm:$0xff]
    %v292 = vld [vmem:[%s12 + $0x28] sm:$0xff]
    %v293 = vld [vmem:[%s12 + $0x30] sm:$0xff]
    %v294 = vld [vmem:[%s12 + $0x38] sm:$0xff]
    %v295 = vld [vmem:[%s12 + $0x40] sm:$0xff]
    %v296 = vld [vmem:[%s12 + $0x48] sm:$0xff]
    %v297 = vld [vmem:[%s12 + $0x50] sm:$0xff]
    %v298 = vld [vmem:[%s12 + $0x58] sm:$0xff]
    %v299 = vld [vmem:[%s12 + $0x60] sm:$0xff]
    %v300 = vld [vmem:[%s12 + $0x68] sm:$0xff]
    %v301 = vld [vmem:[%s12 + $0x70] sm:$0xff]
    %v302 = vld [vmem:[%s12 + $0x78] sm:$0xff]
    %v303 = vld [vmem:[%s12 + $0xa0] sm:$0xff]
    %v304 = vld [vmem:[%s12 + $0xa8] sm:$0xff]
    %v305 = vld [vmem:[%s12 + $0xb0] sm:$0xf]
    %v306 = vld [vmem:[%s12 + $0xb8] sm:$0x1]
    %v307 = vld [vmem:[%s12 + $0xc0] sm:$0x1]
    %v308 = vld [vmem:[%s12 + $0xc8] sm:$0x1]
    %v309 = vld [vmem:[%s13] sm:$0xff]
    %v310 = vld [vmem:[%s13 + $0x8] sm:$0xff]
    %v311 = vld [vmem:[%s13 + $0x10] sm:$0xff]
    %v312 = vld [vmem:[%s13 + $0x18] sm:$0xff]
    %v313 = vld [vmem:[%s13 + $0x20] sm:$0xff]
    %v314 = vld [vmem:[%s13 + $0x28] sm:$0xff]
    %v315 = vld [vmem:[%s13 + $0x30] sm:$0xff]
    %v316 = vld [vmem:[%s13 + $0x38] sm:$0xff]
    %v317 = vld [vmem:[%s13 + $0x40] sm:$0x1]
    %v318 = vld [vmem:[%s13 + $0x48] sm:$0x1]
    %v319 = vld [vmem:[%s12 + $0x80] sm:$0xff]
    %v320 = vld [vmem:[%s12 + $0x88] sm:$0xff]
    %v321 = vld [vmem:[%s12 + $0x90] sm:$0xff]
    %v322 = vld [vmem:[%s12 + $0x98] sm:$0xff]
    %v323 = vld [vmem:[%s14] sm:$0xff]
    %v324 = vld [vmem:[%s14 + $0x8] sm:$0xff]
    %v325 = vld [vmem:[%s14 + $0x10] sm:$0xff]
    %v326 = vld [vmem:[%s14 + $0x18] sm:$0xff]
    %v327 = vld [vmem:[%s14 + $0x20] sm:$0xff]
    %v328 = vld [vmem:[%s14 + $0x28] sm:$0xff]
    %v329 = vld [vmem:[%s14 + $0x30] sm:$0xff]
    %v330 = vld [vmem:[%s14 + $0x38] sm:$0xff]
    %v331 = vld [vmem:[%s14 + $0x40] sm:$0xff]
    %v332 = vld [vmem:[%s14 + $0x48] sm:$0xff]
    %v333 = vld [vmem:[%s14 + $0x50] sm:$0xff]
    %v334 = vld [vmem:[%s14 + $0x58] sm:$0xff]
    %v335 = vld [vmem:[%s14 + $0x60] sm:$0xff]
    %v336 = vld [vmem:[%s14 + $0x68] sm:$0xff]
    %v337 = vld [vmem:[%s14 + $0x70] sm:$0xff]
    %v338 = vld [vmem:[%s14 + $0x78] sm:$0xff]
    %v339 = vld [vmem:[%s14 + $0xa0] sm:$0xff]
    %v340 = vld [vmem:[%s14 + $0xa8] sm:$0xff]
    %v341 = vld [vmem:[%s14 + $0xb0] sm:$0xf]
    %v342 = vld [vmem:[%s14 + $0xb8] sm:$0x1]
    %v343 = vld [vmem:[%s14 + $0xc0] sm:$0x1]
    %v344 = vld [vmem:[%s14 + $0xc8] sm:$0x1]
    %v345 = vld [vmem:[%s15] sm:$0xff]
    %v346 = vld [vmem:[%s15 + $0x8] sm:$0xff]
    %v347 = vld [vmem:[%s15 + $0x10] sm:$0xff]
    %v348 = vld [vmem:[%s15 + $0x18] sm:$0xff]
    %v349 = vld [vmem:[%s15 + $0x20] sm:$0xff]
    %v350 = vld [vmem:[%s15 + $0x28] sm:$0xff]
    %v351 = vld [vmem:[%s15 + $0x30] sm:$0xff]
    %v352 = vld [vmem:[%s15 + $0x38] sm:$0xff]
    %v353 = vld [vmem:[%s15 + $0x40] sm:$0x1]
    %v354 = vld [vmem:[%s15 + $0x48] sm:$0x1]
    %v355 = vld [vmem:[%s14 + $0x80] sm:$0xff]
    %v356 = vld [vmem:[%s14 + $0x88] sm:$0xff]
    %v357 = vld [vmem:[%s14 + $0x90] sm:$0xff]
    %v358 = vld [vmem:[%s14 + $0x98] sm:$0xff]
    %v359 = vld [vmem:[%s16] sm:$0xff]
    %v360 = vld [vmem:[%s16 + $0x8] sm:$0xff]
    %v361 = vld [vmem:[%s16 + $0x10] sm:$0xff]
    %v362 = vld [vmem:[%s16 + $0x18] sm:$0xff]
    %v363 = vld [vmem:[%s17] sm:$0xff]
    %v364 = vld [vmem:[%s17 + $0x8] sm:$0xff]
    %v365 = vld [vmem:[%s17 + $0x10] sm:$0xff]
    %v366 = vld [vmem:[%s17 + $0x18] sm:$0xff]
    %v367 = vld [vmem:[%s17 + $0x20] sm:$0xff]
    %v368 = vld [vmem:[%s17 + $0x28] sm:$0xff]
    %v369 = vld [vmem:[%s17 + $0x30] sm:$0xff]
    %v370 = vld [vmem:[%s17 + $0x38] sm:$0xff]
    %v371 = vld [vmem:[%s17 + $0x40] sm:$0xff]
    %v372 = vld [vmem:[%s17 + $0x48] sm:$0xff]
    %v373 = vld [vmem:[%s17 + $0x50] sm:$0xff]
    %v374 = vld [vmem:[%s17 + $0x58] sm:$0xff]
    %v375 = vld [vmem:[%s17 + $0x60] sm:$0xff]
    %v376 = vld [vmem:[%s17 + $0x68] sm:$0xff]
    %v377 = vld [vmem:[%s17 + $0x70] sm:$0xff]
    %v378 = vld [vmem:[%s17 + $0x78] sm:$0xff]
    %v379 = vld [vmem:[%s17 + $0xa0] sm:$0xff]
    %v380 = vld [vmem:[%s17 + $0xa8] sm:$0xff]
    %v381 = vld [vmem:[%s17 + $0xb0] sm:$0xf]
    %v382 = vld [vmem:[%s17 + $0xb8] sm:$0x1]
    %v383 = vld [vmem:[%s17 + $0xc0] sm:$0x1]
    %v384 = vld [vmem:[%s17 + $0xc8] sm:$0x1]
    %v385 = vld [vmem:[%s18] sm:$0xff]
    %v386 = vld [vmem:[%s18 + $0x8] sm:$0xff]
    %v387 = vld [vmem:[%s18 + $0x10] sm:$0xff]
    %v388 = vld [vmem:[%s18 + $0x18] sm:$0xff]
    %v389 = vld [vmem:[%s18 + $0x20] sm:$0xff]
    %v390 = vld [vmem:[%s18 + $0x28] sm:$0xff]
    %v391 = vld [vmem:[%s18 + $0x30] sm:$0xff]
    %v392 = vld [vmem:[%s18 + $0x38] sm:$0xff]
    %v393 = vld [vmem:[%s18 + $0x40] sm:$0x1]
    %v394 = vld [vmem:[%s18 + $0x48] sm:$0x1]
    %v395 = vld [vmem:[%s17 + $0x80] sm:$0xff]
    %v396 = vld [vmem:[%s17 + $0x88] sm:$0xff]
    %v397 = vld [vmem:[%s17 + $0x90] sm:$0xff]
    %v398 = vld [vmem:[%s17 + $0x98] sm:$0xff]
    %v399 = vld [vmem:[%s19] sm:$0xff]
    %v400 = vld [vmem:[%s19 + $0x8] sm:$0xff]
    %v401 = vld [vmem:[%s19 + $0x10] sm:$0xff]
    %v402 = vld [vmem:[%s19 + $0x18] sm:$0xff]
    %v403 = vld [vmem:[%s19 + $0x20] sm:$0xff]
    %v404 = vld [vmem:[%s19 + $0x28] sm:$0xff]
    %v405 = vld [vmem:[%s19 + $0x30] sm:$0xff]
    %v406 = vld [vmem:[%s19 + $0x38] sm:$0xff]
    %v407 = vld [vmem:[%s19 + $0x40] sm:$0xff]
    %v408 = vld [vmem:[%s19 + $0x48] sm:$0xff]
    %v409 = vld [vmem:[%s19 + $0x50] sm:$0xff]
    %v410 = vld [vmem:[%s19 + $0x58] sm:$0xff]
    %v411 = vld [vmem:[%s19 + $0x60] sm:$0xff]
    %v412 = vld [vmem:[%s19 + $0x68] sm:$0xff]
    %v413 = vld [vmem:[%s19 + $0x70] sm:$0xff]
    %v414 = vld [vmem:[%s19 + $0x78] sm:$0xff]
    %v415 = vld [vmem:[%s19 + $0xa0] sm:$0xff]
    %v416 = vld [vmem:[%s19 + $0xa8] sm:$0xff]
    %v417 = vld [vmem:[%s19 + $0xb0] sm:$0xf]
    %v418 = vld [vmem:[%s19 + $0xb8] sm:$0x1]
    %v419 = vld [vmem:[%s19 + $0xc0] sm:$0x1]
    %v420 = vld [vmem:[%s19 + $0xc8] sm:$0x1]
    %v421 = vld [vmem:[%s20] sm:$0xff]
    %v422 = vld [vmem:[%s20 + $0x8] sm:$0xff]
    %v423 = vld [vmem:[%s20 + $0x10] sm:$0xff]
    %v424 = vld [vmem:[%s20 + $0x18] sm:$0xff]
    %v425 = vld [vmem:[%s20 + $0x20] sm:$0xff]
    %v426 = vld [vmem:[%s20 + $0x28] sm:$0xff]
    %v427 = vld [vmem:[%s20 + $0x30] sm:$0xff]
    %v428 = vld [vmem:[%s20 + $0x38] sm:$0xff]
    %v429 = vld [vmem:[%s20 + $0x40] sm:$0x1]
    %v430 = vld [vmem:[%s20 + $0x48] sm:$0x1]
    %v431 = vld [vmem:[%s19 + $0x80] sm:$0xff]
    %v432 = vld [vmem:[%s19 + $0x88] sm:$0xff]
    %v433 = vld [vmem:[%s19 + $0x90] sm:$0xff]
    %v434 = vld [vmem:[%s19 + $0x98] sm:$0xff]
    %v435 = vld [vmem:[%s21] sm:$0xff]
    %v436 = vld [vmem:[%s21 + $0x8] sm:$0xff]
    %v437 = vld [vmem:[%s21 + $0x10] sm:$0xff]
    %v438 = vld [vmem:[%s21 + $0x18] sm:$0xff]
    %v439 = vld [vmem:[%s22] sm:$0xff]
    %v440 = vld [vmem:[%s22 + $0x8] sm:$0xff]
    %v441 = vld [vmem:[%s22 + $0x10] sm:$0xff]
    %v442 = vld [vmem:[%s22 + $0x18] sm:$0xff]
    %v443 = vld [vmem:[%s23] sm:$0x1]
    %v445 = vlaneseq
    %v446 = vshrl.u32 %v445, 7
    %v447 = vsub.s32 0, %v446
    %v448 = vrot.slane %v209, %v447
    %v449 = vlaneseq
    %v450 = vshrl.u32 %v449, 7
    %v451 = vsub.s32 1, %v450
    %v452 = vrot.slane %v209, %v451
    %v453 = vlaneseq
    %v454 = vshrl.u32 %v453, 7
    %v455 = vsub.s32 2, %v454
    %v456 = vrot.slane %v209, %v455
    %v457 = vlaneseq
    %v458 = vshrl.u32 %v457, 7
    %v459 = vsub.s32 3, %v458
    %v460 = vrot.slane %v209, %v459
    %465 = vmatprep.subr.mxu0 %v82
    %466 = vmatpush1.msra.mxu0 %v81
    %467 = vmatprep.subr.mxu0 %v86
    %468 = vmatpush1.msra.mxu0 %v85
    %469 = vmatprep.subr.mxu0 %v90
    %470 = vmatpush1.msra.mxu0 %v89
    %471 = vmatprep.subr.mxu0 %v94
    %472 = vmatpush1.msra.mxu0 %v93
    %473 = vmatprep.subr.mxu0 %v98
    %474 = vmatpush1.msra.mxu0 %v97
    %475 = vmatprep.subr.mxu0 %v102
    %476 = vmatpush1.msra.mxu0 %v101
    %477 = vmatprep.subr.mxu0 %v106
    %478 = vmatpush1.msra.mxu0 %v105
    %479 = vmatprep.subr.mxu0 %v110
    %480 = vmatpush1.msra.mxu0 %v109
    %481 = vmatprep.subr.mxu0 %v114
    %482 = vmatpush1.msra.mxu0 %v113
    %483 = vmatprep.subr.mxu0 %v118
    %484 = vmatpush1.msra.mxu0 %v117
    %485 = vmatprep.subr.mxu0 %v122
    %486 = vmatpush1.msra.mxu0 %v121
    %487 = vmatprep.subr.mxu0 %v126
    %488 = vmatpush1.msra.mxu0 %v125
    %489 = vmatprep.subr.mxu0 %v130
    %490 = vmatpush1.msra.mxu0 %v129
    %491 = vmatprep.subr.mxu0 %v134
    %492 = vmatpush1.msra.mxu0 %v133
    %493 = vmatprep.subr.mxu0 %v138
    %494 = vmatpush1.msra.mxu0 %v137
    %495 = vmatprep.subr.mxu0 %v142
    %496 = vmatpush1.msra.mxu0 %v141
    %497 = vmatprep.subr.mxu0 %v146
    %498 = vmatpush1.msra.mxu0 %v145
    %499 = vmatprep.subr.mxu0 %v150
    %500 = vmatpush1.msra.mxu0 %v149
    %501 = vmatprep.subr.mxu0 %v154
    %502 = vmatpush1.msra.mxu0 %v153
    %503 = vmatprep.subr.mxu0 %v158
    %504 = vmatpush1.msra.mxu0 %v157
    %505 = vmatprep.subr.mxu0 %v162
    %506 = vmatpush1.msra.mxu0 %v161
    %507 = vmatprep.subr.mxu0 %v166
    %508 = vmatpush1.msra.mxu0 %v165
    %509 = vmatprep.subr.mxu0 %v170
    %510 = vmatpush1.msra.mxu0 %v169
    %511 = vmatprep.subr.mxu0 %v174
    %512 = vmatpush1.msra.mxu0 %v173
    %513 = vmatprep.subr.mxu0 %v178
    %514 = vmatpush1.msra.mxu0 %v177
    %515 = vmatprep.subr.mxu0 %v182
    %516 = vmatpush1.msra.mxu0 %v181
    %517 = vmatprep.subr.mxu0 %v186
    %518 = vmatpush1.msra.mxu0 %v185
    %519 = vmatprep.subr.mxu0 %v190
    %520 = vmatpush1.msra.mxu0 %v189
    %521 = vmatprep.subr.mxu0 %v194
    %522 = vmatpush1.msra.mxu0 %v193
    %523 = vmatprep.subr.mxu0 %v198
    %524 = vmatpush1.msra.mxu0 %v197
    %525 = vmatprep.subr.mxu0 %v202
    %526 = vmatpush1.msra.mxu0 %v201
    %527 = vmatprep.subr.mxu0 %v206
    %528 = vmatpush1.msra.mxu0 %v205
    %529 = vmatprep.mubr.f32.mxu0 %v79
    %530 = vmatmul.mubr.f32.gmra.mrb[0].mxu0 %v78
    %v531 = vpop.f32.mrb[0].mxu0
    %v532 = vadd.f32 %v448, %v531
    %v533 = vpop.f32.mrb[0].mxu0
    %v534 = vadd.f32 %v452, %v533
    %535 = vdwg.mxu0
    %536 = vmatprep.subr.mxu0 %v84
    %537 = vmatpush1.msra.mxu0 %v83
    %538 = vmatprep.subr.mxu0 %v88
    %539 = vmatpush1.msra.mxu0 %v87
    %540 = vmatprep.subr.mxu0 %v92
    %541 = vmatpush1.msra.mxu0 %v91
    %542 = vmatprep.subr.mxu0 %v96
    %543 = vmatpush1.msra.mxu0 %v95
    %544 = vmatprep.subr.mxu0 %v100
    %545 = vmatpush1.msra.mxu0 %v99
    %546 = vmatprep.subr.mxu0 %v104
    %547 = vmatpush1.msra.mxu0 %v103
    %548 = vmatprep.subr.mxu0 %v108
    %549 = vmatpush1.msra.mxu0 %v107
    %550 = vmatprep.subr.mxu0 %v112
    %551 = vmatpush1.msra.mxu0 %v111
    %552 = vmatprep.subr.mxu0 %v116
    %553 = vmatpush1.msra.mxu0 %v115
    %554 = vmatprep.subr.mxu0 %v120
    %555 = vmatpush1.msra.mxu0 %v119
    %556 = vmatprep.subr.mxu0 %v124
    %557 = vmatpush1.msra.mxu0 %v123
    %558 = vmatprep.subr.mxu0 %v128
    %559 = vmatpush1.msra.mxu0 %v127
    %560 = vmatprep.subr.mxu0 %v132
    %561 = vmatpush1.msra.mxu0 %v131
    %562 = vmatprep.subr.mxu0 %v136
    %563 = vmatpush1.msra.mxu0 %v135
    %564 = vmatprep.subr.mxu0 %v140
    %565 = vmatpush1.msra.mxu0 %v139
    %566 = vmatprep.subr.mxu0 %v144
    %567 = vmatpush1.msra.mxu0 %v143
    %568 = vmatprep.subr.mxu0 %v148
    %569 = vmatpush1.msra.mxu0 %v147
    %570 = vmatprep.subr.mxu0 %v152
    %571 = vmatpush1.msra.mxu0 %v151
    %572 = vmatprep.subr.mxu0 %v156
    %573 = vmatpush1.msra.mxu0 %v155
    %574 = vmatprep.subr.mxu0 %v160
    %575 = vmatpush1.msra.mxu0 %v159
    %576 = vmatprep.subr.mxu0 %v164
    %577 = vmatpush1.msra.mxu0 %v163
    %578 = vmatprep.subr.mxu0 %v168
    %579 = vmatpush1.msra.mxu0 %v167
    %580 = vmatprep.subr.mxu0 %v172
    %581 = vmatpush1.msra.mxu0 %v171
    %582 = vmatprep.subr.mxu0 %v176
    %583 = vmatpush1.msra.mxu0 %v175
    %584 = vmatprep.subr.mxu0 %v180
    %585 = vmatpush1.msra.mxu0 %v179
    %586 = vmatprep.subr.mxu0 %v184
    %587 = vmatpush1.msra.mxu0 %v183
    %588 = vmatprep.subr.mxu0 %v188
    %589 = vmatpush1.msra.mxu0 %v187
    %590 = vmatprep.subr.mxu0 %v192
    %591 = vmatpush1.msra.mxu0 %v191
    %592 = vmatprep.subr.mxu0 %v196
    %593 = vmatpush1.msra.mxu0 %v195
    %594 = vmatprep.subr.mxu0 %v200
    %595 = vmatpush1.msra.mxu0 %v199
    %596 = vmatprep.subr.mxu0 %v204
    %597 = vmatpush1.msra.mxu0 %v203
    %598 = vmatprep.subr.mxu0 %v208
    %599 = vmatpush1.msra.mxu0 %v207
    %600 = vmatprep.mubr.f32.mxu0 %v79
    %601 = vmatmul.mubr.f32.gmra.mrb[0].mxu0 %v78
    %v602 = vpop.f32.mrb[0].mxu0
    %v603 = vadd.f32 %v456, %v602
    %v604 = vpop.f32.mrb[0].mxu0
    %v605 = vadd.f32 %v460, %v604
    %606 = vdwg.mxu0
    %v607 = vmax.f32 %v532, 0.0
    %v608 = vmax.f32 %v534, 0.0
    %v609 = vmax.f32 %v603, 0.0
    %v610 = vmax.f32 %v605, 0.0
    %v612 = vlaneseq
    %v613 = vshrl.u32 %v612, 7
    %v614 = vsub.s32 0, %v613
    %v615 = vrot.slane %v274, %v614
    %617 = vmatprep.subr.mxu0 0.0
    %618 = vmatpush1.msra.mxu0 %v210
    %619 = vmatprep.subr.mxu0 0.0
    %620 = vmatpush1.msra.mxu0 %v211
    %621 = vmatprep.subr.mxu0 0.0
    %622 = vmatpush1.msra.mxu0 %v212
    %623 = vmatprep.subr.mxu0 0.0
    %624 = vmatpush1.msra.mxu0 %v213
    %625 = vmatprep.subr.mxu0 0.0
    %626 = vmatpush1.msra.mxu0 %v214
    %627 = vmatprep.subr.mxu0 0.0
    %628 = vmatpush1.msra.mxu0 %v215
    %629 = vmatprep.subr.mxu0 0.0
    %630 = vmatpush1.msra.mxu0 %v216
    %631 = vmatprep.subr.mxu0 0.0
    %632 = vmatpush1.msra.mxu0 %v217
    %633 = vmatprep.subr.mxu0 0.0
    %634 = vmatpush1.msra.mxu0 %v218
    %635 = vmatprep.subr.mxu0 0.0
    %636 = vmatpush1.msra.mxu0 %v219
    %637 = vmatprep.subr.mxu0 0.0
    %638 = vmatpush1.msra.mxu0 %v220
    %639 = vmatprep.subr.mxu0 0.0
    %640 = vmatpush1.msra.mxu0 %v221
    %641 = vmatprep.subr.mxu0 0.0
    %642 = vmatpush1.msra.mxu0 %v222
    %643 = vmatprep.subr.mxu0 0.0
    %644 = vmatpush1.msra.mxu0 %v223
    %645 = vmatprep.subr.mxu0 0.0
    %646 = vmatpush1.msra.mxu0 %v224
    %647 = vmatprep.subr.mxu0 0.0
    %648 = vmatpush1.msra.mxu0 %v225
    %649 = vmatprep.subr.mxu0 0.0
    %650 = vmatpush1.msra.mxu0 %v226
    %651 = vmatprep.subr.mxu0 0.0
    %652 = vmatpush1.msra.mxu0 %v227
    %653 = vmatprep.subr.mxu0 0.0
    %654 = vmatpush1.msra.mxu0 %v228
    %655 = vmatprep.subr.mxu0 0.0
    %656 = vmatpush1.msra.mxu0 %v229
    %657 = vmatprep.subr.mxu0 0.0
    %658 = vmatpush1.msra.mxu0 %v230
    %659 = vmatprep.subr.mxu0 0.0
    %660 = vmatpush1.msra.mxu0 %v231
    %661 = vmatprep.subr.mxu0 0.0
    %662 = vmatpush1.msra.mxu0 %v232
    %663 = vmatprep.subr.mxu0 0.0
    %664 = vmatpush1.msra.mxu0 %v233
    %665 = vmatprep.subr.mxu0 0.0
    %666 = vmatpush1.msra.mxu0 %v234
    %667 = vmatprep.subr.mxu0 0.0
    %668 = vmatpush1.msra.mxu0 %v235
    %669 = vmatprep.subr.mxu0 0.0
    %670 = vmatpush1.msra.mxu0 %v236
    %671 = vmatprep.subr.mxu0 0.0
    %672 = vmatpush1.msra.mxu0 %v237
    %673 = vmatprep.subr.mxu0 0.0
    %674 = vmatpush1.msra.mxu0 %v238
    %675 = vmatprep.subr.mxu0 0.0
    %676 = vmatpush1.msra.mxu0 %v239
    %677 = vmatprep.subr.mxu0 0.0
    %678 = vmatpush1.msra.mxu0 %v240
    %679 = vmatprep.subr.mxu0 0.0
    %680 = vmatpush1.msra.mxu0 %v241
    %681 = vmatprep.mubr.f32.mxu0 %v608
    %682 = vmatmul.mubr.f32.gmra.mrb[0].mxu0 %v607
    %v683 = vpop.f32.mrb[0].mxu0
    %v684 = vadd.f32 %v615, %v683
    %v685 = vpop.f32.mrb[0].mxu0
    %686 = vdwg.mxu0
    %687 = vmatprep.subr.mxu0 0.0
    %688 = vmatpush1.msra.mxu0 %v242
    %689 = vmatprep.subr.mxu0 0.0
    %690 = vmatpush1.msra.mxu0 %v243
    %691 = vmatprep.subr.mxu0 0.0
    %692 = vmatpush1.msra.mxu0 %v244
    %693 = vmatprep.subr.mxu0 0.0
    %694 = vmatpush1.msra.mxu0 %v245
    %695 = vmatprep.subr.mxu0 0.0
    %696 = vmatpush1.msra.mxu0 %v246
    %697 = vmatprep.subr.mxu0 0.0
    %698 = vmatpush1.msra.mxu0 %v247
    %699 = vmatprep.subr.mxu0 0.0
    %700 = vmatpush1.msra.mxu0 %v248
    %701 = vmatprep.subr.mxu0 0.0
    %702 = vmatpush1.msra.mxu0 %v249
    %703 = vmatprep.subr.mxu0 0.0
    %704 = vmatpush1.msra.mxu0 %v250
    %705 = vmatprep.subr.mxu0 0.0
    %706 = vmatpush1.msra.mxu0 %v251
    %707 = vmatprep.subr.mxu0 0.0
    %708 = vmatpush1.msra.mxu0 %v252
    %709 = vmatprep.subr.mxu0 0.0
    %710 = vmatpush1.msra.mxu0 %v253
    %711 = vmatprep.subr.mxu0 0.0
    %712 = vmatpush1.msra.mxu0 %v254
    %713 = vmatprep.subr.mxu0 0.0
    %714 = vmatpush1.msra.mxu0 %v255
    %715 = vmatprep.subr.mxu0 0.0
    %716 = vmatpush1.msra.mxu0 %v256
    %717 = vmatprep.subr.mxu0 0.0
    %718 = vmatpush1.msra.mxu0 %v257
    %719 = vmatprep.subr.mxu0 0.0
    %720 = vmatpush1.msra.mxu0 %v258
    %721 = vmatprep.subr.mxu0 0.0
    %722 = vmatpush1.msra.mxu0 %v259
    %723 = vmatprep.subr.mxu0 0.0
    %724 = vmatpush1.msra.mxu0 %v260
    %725 = vmatprep.subr.mxu0 0.0
    %726 = vmatpush1.msra.mxu0 %v261
    %727 = vmatprep.subr.mxu0 0.0
    %728 = vmatpush1.msra.mxu0 %v262
    %729 = vmatprep.subr.mxu0 0.0
    %730 = vmatpush1.msra.mxu0 %v263
    %731 = vmatprep.subr.mxu0 0.0
    %732 = vmatpush1.msra.mxu0 %v264
    %733 = vmatprep.subr.mxu0 0.0
    %734 = vmatpush1.msra.mxu0 %v265
    %735 = vmatprep.subr.mxu0 0.0
    %736 = vmatpush1.msra.mxu0 %v266
    %737 = vmatprep.subr.mxu0 0.0
    %738 = vmatpush1.msra.mxu0 %v267
    %739 = vmatprep.subr.mxu0 0.0
    %740 = vmatpush1.msra.mxu0 %v268
    %741 = vmatprep.subr.mxu0 0.0
    %742 = vmatpush1.msra.mxu0 %v269
    %743 = vmatprep.subr.mxu0 0.0
    %744 = vmatpush1.msra.mxu0 %v270
    %745 = vmatprep.subr.mxu0 0.0
    %746 = vmatpush1.msra.mxu0 %v271
    %747 = vmatprep.subr.mxu0 0.0
    %748 = vmatpush1.msra.mxu0 %v272
    %749 = vmatprep.subr.mxu0 0.0
    %750 = vmatpush1.msra.mxu0 %v273
    %751 = vmatprep.mubr.f32.mxu0 %v610
    %752 = vmatmul.mubr.f32.gmra.mrb[0].mxu0 %v609
    %v753 = vpop.f32.mrb[0].mxu0
    %v754 = vadd.f32 %v684, %v753
    %v755 = vpop.f32.mrb[0].mxu0
    %756 = vdwg.mxu0
    %v757 = vadd.f32 %v754, %v283
    %v759 = vlaneseq
    %v760 = vshrl.u32 %v759, 7
    %v761 = vsub.s32 0, %v760
    %v762 = vrot.slane %v282, %v761
    %vm764 = vcmask 408576
    %v766 = vsel %vm764, %v80, 0
    %vm768 = vcmask 1041408
    %v770 = vsel %vm768, %v281, 0
    %772 = vmatprep.subr.mxu0 0.0
    %773 = vmatpush1.msra.mxu0 %v275
    %774 = vmatprep.subr.mxu0 0.0
    %775 = vmatpush1.msra.mxu0 %v276
    %776 = vmatprep.subr.mxu0 0.0
    %777 = vmatpush1.msra.mxu0 %v277
    %778 = vmatprep.subr.mxu0 0.0
    %779 = vmatpush1.msra.mxu0 %v278
    %780 = vmatprep.subr.mxu0 0.0
    %781 = vmatpush1.msra.mxu0 %v279
    %782 = vmatprep.subr.mxu0 0.0
    %783 = vmatpush1.msra.mxu0 %v280
    %784 = vmatprep.subr.mxu0 0.0
    %785 = vmatpush1.msra.mxu0 %v770
    %786 = vmatprep.subr.mxu0 0.0
    %787 = vmatpush1.msra.mxu0 0.0
    %788 = vmatprep.subr.mxu0 0.0
    %789 = vmatpush1.msra.mxu0 0.0
    %790 = vmatprep.subr.mxu0 0.0
    %791 = vmatpush1.msra.mxu0 0.0
    %792 = vmatprep.subr.mxu0 0.0
    %793 = vmatpush1.msra.mxu0 0.0
    %794 = vmatprep.subr.mxu0 0.0
    %795 = vmatpush1.msra.mxu0 0.0
    %796 = vmatprep.subr.mxu0 0.0
    %797 = vmatpush1.msra.mxu0 0.0
    %798 = vmatprep.subr.mxu0 0.0
    %799 = vmatpush1.msra.mxu0 0.0
    %800 = vmatprep.subr.mxu0 0.0
    %801 = vmatpush1.msra.mxu0 0.0
    %802 = vmatprep.subr.mxu0 0.0
    %803 = vmatpush1.msra.mxu0 0.0
    %804 = vmatprep.subr.mxu0 0.0
    %805 = vmatpush1.msra.mxu0 0.0
    %806 = vmatprep.subr.mxu0 0.0
    %807 = vmatpush1.msra.mxu0 0.0
    %808 = vmatprep.subr.mxu0 0.0
    %809 = vmatpush1.msra.mxu0 0.0
    %810 = vmatprep.subr.mxu0 0.0
    %811 = vmatpush1.msra.mxu0 0.0
    %812 = vmatprep.subr.mxu0 0.0
    %813 = vmatpush1.msra.mxu0 0.0
    %814 = vmatprep.subr.mxu0 0.0
    %815 = vmatpush1.msra.mxu0 0.0
    %816 = vmatprep.subr.mxu0 0.0
    %817 = vmatpush1.msra.mxu0 0.0
    %818 = vmatprep.subr.mxu0 0.0
    %819 = vmatpush1.msra.mxu0 0.0
    %820 = vmatprep.subr.mxu0 0.0
    %821 = vmatpush1.msra.mxu0 0.0
    %822 = vmatprep.subr.mxu0 0.0
    %823 = vmatpush1.msra.mxu0 0.0
    %824 = vmatprep.subr.mxu0 0.0
    %825 = vmatpush1.msra.mxu0 0.0
    %826 = vmatprep.subr.mxu0 0.0
    %827 = vmatpush1.msra.mxu0 0.0
    %828 = vmatprep.subr.mxu0 0.0
    %829 = vmatpush1.msra.mxu0 0.0
    %830 = vmatprep.subr.mxu0 0.0
    %831 = vmatpush1.msra.mxu0 0.0
    %832 = vmatprep.subr.mxu0 0.0
    %833 = vmatpush1.msra.mxu0 0.0
    %834 = vmatprep.subr.mxu0 0.0
    %835 = vmatpush1.msra.mxu0 0.0
    %836 = vmatprep.mubr.f32.mxu0 0.0
    %837 = vmatmul.mubr.f32.gmra.mrb[0].mxu0 %v766
    %v838 = vpop.f32.mrb[0].mxu0
    %v839 = vadd.f32 %v762, %v838
    %v840 = vpop.f32.mrb[0].mxu0
    %841 = vdwg.mxu0
    %v842 = vadd.f32 %v839, %v285
    %v844 = vrot.slane %v286, 4
    %vm846 = vcmask 1043456
    %v847 = vsel %vm846, %v842, %v844
    %vm848 = vcmask 261120
    %v849 = vsel %vm848, %v757, 0.0
    %850 = vadd.xlane.f32.xlu0 %v849
    %v851 = vpop.xlane.xlu0 %850
    %vm852 = vcmask 254976
    %v853 = vsel %vm852, %v284, 0.0
    %854 = vadd.xlane.f32.xlu0 %v853
    %v855 = vpop.xlane.xlu0 %854
    %v856 = vrcp.pop 32.0
    %v857 = vmul.f32 %v851, %v856
    %v858 = vmul.f32 %v855, %v856
    %v859 = vsub.f32 %v757, %v857
    %v860 = vsub.f32 %v284, %v858
    %v861 = vmul.f32 %v859, %v859
    %v862 = vmul.f32 %v860, %v860
    %v863 = vsel %vm848, %v861, 0.0
    %864 = vadd.xlane.f32.xlu0 %v863
    %v865 = vpop.xlane.xlu0 %864
    %v866 = vsel %vm852, %v862, 0.0
    %867 = vadd.xlane.f32.xlu0 %v866
    %v868 = vpop.xlane.xlu0 %867
    %v869 = vmul.f32 %v865, %v856
    %v870 = vmul.f32 %v868, %v856
    %v871 = vadd.f32 %v869, 1e-06
    %v872 = vadd.f32 %v870, 1e-06
    %v873 = vrsqrt.pop %v871
    %v874 = vrsqrt.pop %v872
    %v875 = vmul.f32 %v859, %v873
    %v876 = vmul.f32 %v860, %v874
    %v877 = vlaneseq
    %v878 = vshrl.u32 %v877, 7
    %v879 = vsub.s32 0, %v878
    %v880 = vrot.slane %v317, %v879
    %v881 = vmul.f32 %v875, %v880
    %v882 = vmul.f32 %v876, %v880
    %v883 = vlaneseq
    %v884 = vshrl.u32 %v883, 7
    %v885 = vsub.s32 0, %v884
    %v886 = vrot.slane %v318, %v885
    %v887 = vadd.f32 %v881, %v886
    %v888 = vadd.f32 %v882, %v886
    %v890 = vsel %vm848, %v887, 0
    %v893 = vsel %vm848, %v888, 0
    %895 = vmatprep.subr.mxu0 0.0
    %896 = vmatpush1.msra.mxu0 %v287
    %897 = vmatprep.subr.mxu0 0.0
    %898 = vmatpush1.msra.mxu0 %v288
    %899 = vmatprep.subr.mxu0 0.0
    %900 = vmatpush1.msra.mxu0 %v289
    %901 = vmatprep.subr.mxu0 0.0
    %902 = vmatpush1.msra.mxu0 %v290
    %903 = vmatprep.subr.mxu0 0.0
    %904 = vmatpush1.msra.mxu0 0.0
    %905 = vmatprep.subr.mxu0 0.0
    %906 = vmatpush1.msra.mxu0 0.0
    %907 = vmatprep.subr.mxu0 0.0
    %908 = vmatpush1.msra.mxu0 0.0
    %909 = vmatprep.subr.mxu0 0.0
    %910 = vmatpush1.msra.mxu0 0.0
    %911 = vmatprep.subr.mxu0 0.0
    %912 = vmatpush1.msra.mxu0 0.0
    %913 = vmatprep.subr.mxu0 0.0
    %914 = vmatpush1.msra.mxu0 0.0
    %915 = vmatprep.subr.mxu0 0.0
    %916 = vmatpush1.msra.mxu0 0.0
    %917 = vmatprep.subr.mxu0 0.0
    %918 = vmatpush1.msra.mxu0 0.0
    %919 = vmatprep.subr.mxu0 0.0
    %920 = vmatpush1.msra.mxu0 0.0
    %921 = vmatprep.subr.mxu0 0.0
    %922 = vmatpush1.msra.mxu0 0.0
    %923 = vmatprep.subr.mxu0 0.0
    %924 = vmatpush1.msra.mxu0 0.0
    %925 = vmatprep.subr.mxu0 0.0
    %926 = vmatpush1.msra.mxu0 0.0
    %927 = vmatprep.subr.mxu0 0.0
    %928 = vmatpush1.msra.mxu0 0.0
    %929 = vmatprep.subr.mxu0 0.0
    %930 = vmatpush1.msra.mxu0 0.0
    %931 = vmatprep.subr.mxu0 0.0
    %932 = vmatpush1.msra.mxu0 0.0
    %933 = vmatprep.subr.mxu0 0.0
    %934 = vmatpush1.msra.mxu0 0.0
    %935 = vmatprep.subr.mxu0 0.0
    %936 = vmatpush1.msra.mxu0 0.0
    %937 = vmatprep.subr.mxu0 0.0
    %938 = vmatpush1.msra.mxu0 0.0
    %939 = vmatprep.subr.mxu0 0.0
    %940 = vmatpush1.msra.mxu0 0.0
    %941 = vmatprep.subr.mxu0 0.0
    %942 = vmatpush1.msra.mxu0 0.0
    %943 = vmatprep.subr.mxu0 0.0
    %944 = vmatpush1.msra.mxu0 0.0
    %945 = vmatprep.subr.mxu0 0.0
    %946 = vmatpush1.msra.mxu0 0.0
    %947 = vmatprep.subr.mxu0 0.0
    %948 = vmatpush1.msra.mxu0 0.0
    %949 = vmatprep.subr.mxu0 0.0
    %950 = vmatpush1.msra.mxu0 0.0
    %951 = vmatprep.subr.mxu0 0.0
    %952 = vmatpush1.msra.mxu0 0.0
    %953 = vmatprep.subr.mxu0 0.0
    %954 = vmatpush1.msra.mxu0 0.0
    %955 = vmatprep.subr.mxu0 0.0
    %956 = vmatpush1.msra.mxu0 0.0
    %957 = vmatprep.subr.mxu0 0.0
    %958 = vmatpush1.msra.mxu0 0.0
    %959 = vmatprep.mubr.f32.mxu0 0.0
    %960 = vmatmul.mubr.f32.gmra.mrb[0].mxu0 %v890
    %v961 = vpop.f32.mrb[0].mxu0
    %v962 = vadd.f32 0.0, %v961
    %v963 = vpop.f32.mrb[0].mxu0
    %964 = vmatprep.mubr.f32.mxu0 0.0
    %965 = vmatmul.mubr.f32.gmra.mrb[0].mxu0 %v893
    %v966 = vpop.f32.mrb[0].mxu0
    %v967 = vadd.f32 0.0, %v966
    %v968 = vpop.f32.mrb[0].mxu0
    %969 = vdwg.mxu0
    %970 = vmatprep.subr.mxu0 0.0
    %971 = vmatpush1.msra.mxu0 %v291
    %972 = vmatprep.subr.mxu0 0.0
    %973 = vmatpush1.msra.mxu0 %v292
    %974 = vmatprep.subr.mxu0 0.0
    %975 = vmatpush1.msra.mxu0 %v293
    %976 = vmatprep.subr.mxu0 0.0
    %977 = vmatpush1.msra.mxu0 %v294
    %978 = vmatprep.subr.mxu0 0.0
    %979 = vmatpush1.msra.mxu0 0.0
    %980 = vmatprep.subr.mxu0 0.0
    %981 = vmatpush1.msra.mxu0 0.0
    %982 = vmatprep.subr.mxu0 0.0
    %983 = vmatpush1.msra.mxu0 0.0
    %984 = vmatprep.subr.mxu0 0.0
    %985 = vmatpush1.msra.mxu0 0.0
    %986 = vmatprep.subr.mxu0 0.0
    %987 = vmatpush1.msra.mxu0 0.0
    %988 = vmatprep.subr.mxu0 0.0
    %989 = vmatpush1.msra.mxu0 0.0
    %990 = vmatprep.subr.mxu0 0.0
    %991 = vmatpush1.msra.mxu0 0.0
    %992 = vmatprep.subr.mxu0 0.0
    %993 = vmatpush1.msra.mxu0 0.0
    %994 = vmatprep.subr.mxu0 0.0
    %995 = vmatpush1.msra.mxu0 0.0
    %996 = vmatprep.subr.mxu0 0.0
    %997 = vmatpush1.msra.mxu0 0.0
    %998 = vmatprep.subr.mxu0 0.0
    %999 = vmatpush1.msra.mxu0 0.0
    %1000 = vmatprep.subr.mxu0 0.0
    %1001 = vmatpush1.msra.mxu0 0.0
    %1002 = vmatprep.subr.mxu0 0.0
    %1003 = vmatpush1.msra.mxu0 0.0
    %1004 = vmatprep.subr.mxu0 0.0
    %1005 = vmatpush1.msra.mxu0 0.0
    %1006 = vmatprep.subr.mxu0 0.0
    %1007 = vmatpush1.msra.mxu0 0.0
    %1008 = vmatprep.subr.mxu0 0.0
    %1009 = vmatpush1.msra.mxu0 0.0
    %1010 = vmatprep.subr.mxu0 0.0
    %1011 = vmatpush1.msra.mxu0 0.0
    %1012 = vmatprep.subr.mxu0 0.0
    %1013 = vmatpush1.msra.mxu0 0.0
    %1014 = vmatprep.subr.mxu0 0.0
    %1015 = vmatpush1.msra.mxu0 0.0
    %1016 = vmatprep.subr.mxu0 0.0
    %1017 = vmatpush1.msra.mxu0 0.0
    %1018 = vmatprep.subr.mxu0 0.0
    %1019 = vmatpush1.msra.mxu0 0.0
    %1020 = vmatprep.subr.mxu0 0.0
    %1021 = vmatpush1.msra.mxu0 0.0
    %1022 = vmatprep.subr.mxu0 0.0
    %1023 = vmatpush1.msra.mxu0 0.0
    %1024 = vmatprep.subr.mxu0 0.0
    %1025 = vmatpush1.msra.mxu0 0.0
    %1026 = vmatprep.subr.mxu0 0.0
    %1027 = vmatpush1.msra.mxu0 0.0
    %1028 = vmatprep.subr.mxu0 0.0
    %1029 = vmatpush1.msra.mxu0 0.0
    %1030 = vmatprep.subr.mxu0 0.0
    %1031 = vmatpush1.msra.mxu0 0.0
    %1032 = vmatprep.subr.mxu0 0.0
    %1033 = vmatpush1.msra.mxu0 0.0
    %1034 = vmatprep.mubr.f32.mxu0 0.0
    %1035 = vmatmul.mubr.f32.gmra.mrb[0].mxu0 %v890
    %v1036 = vpop.f32.mrb[0].mxu0
    %v1037 = vadd.f32 0.0, %v1036
    %v1038 = vpop.f32.mrb[0].mxu0
    %1039 = vmatprep.mubr.f32.mxu0 0.0
    %1040 = vmatmul.mubr.f32.gmra.mrb[0].mxu0 %v893
    %v1041 = vpop.f32.mrb[0].mxu0
    %v1042 = vadd.f32 0.0, %v1041
    %v1043 = vpop.f32.mrb[0].mxu0
    %1044 = vdwg.mxu0
    %v1045 = vsub.f32 0.0, %v1037
    %v1046 = vsub.f32 0.0, %v1042
    %v1047 = vmul.f32 %v1045, 1.442695
    %v1048 = vpow.pop %v1047
    %v1049 = vmul.f32 %v1046, 1.442695
    %v1050 = vpow.pop %v1049
    %v1051 = vadd.f32 %v1048, 1.0
    %v1052 = vadd.f32 %v1050, 1.0
    %v1053 = vrcp.pop %v1051
    %v1054 = vmul.f32 1.0, %v1053
    %v1055 = vrcp.pop %v1052
    %v1056 = vmul.f32 1.0, %v1055
    %v1057 = vmul.f32 %v1037, %v1054
    %v1058 = vmul.f32 %v1042, %v1056
    %v1059 = vlaneseq
    %v1060 = vshrl.u32 %v1059, 7
    %v1061 = vsub.s32 3, %v1060
    %v1062 = vrot.slane %v305, %v1061
    %v1063 = vmul.f32 %v962, %v1062
    %v1064 = vlaneseq
    %v1065 = vshrl.u32 %v1064, 7
    %v1066 = vsub.s32 2, %v1065
    %v1067 = vrot.slane %v305, %v1066
    %v1068 = vmul.f32 %v962, %v1067
    %v1070 = vrot.slane %v1068, 6
    %v1072 = vadd.f32 %v1063, %v1070
    %v1073 = vlaneseq
    %v1074 = vshrl.u32 %v1073, 7
    %v1075 = vsub.s32 1, %v1074
    %v1076 = vrot.slane %v305, %v1075
    %v1077 = vmul.f32 %v962, %v1076
    %v1079 = vrot.slane %v1077, 4
    %v1081 = vadd.f32 %v1072, %v1079
    %v1082 = vlaneseq
    %v1083 = vshrl.u32 %v1082, 7
    %v1084 = vsub.s32 0, %v1083
    %v1085 = vrot.slane %v305, %v1084
    %v1086 = vmul.f32 %v962, %v1085
    %v1088 = vrot.slane %v1086, 2
    %v1090 = vadd.f32 %v1081, %v1088
    %v1091 = vmul.f32 %v967, %v1062
    %v1092 = vadd.f32 %v1091, %v1070
    %v1093 = vadd.f32 %v1092, %v1079
    %v1094 = vadd.f32 %v1093, %v1088
    %v1095 = vrot.slane %v1068, 2
    %v1097 = vadd.f32 %v1063, %v1095
    %v1098 = vadd.f32 %v1097, %v1079
    %v1099 = vrot.slane %v1086, 6
    %v1101 = vadd.f32 %v1098, %v1099
    %v1102 = vadd.f32 %v1091, %v1068
    %v1103 = vrot.slane %v1077, 2
    %v1105 = vadd.f32 %v1102, %v1103
    %v1106 = vrot.slane %v1086, 4
    %v1108 = vadd.f32 %v1105, %v1106
    %v1110 = vrot.slane %v1063, 4
    %v1113 = vrot.slane %v1098, 4
    %v1116 = vrot.slane %v1108, 6
    %v1118 = vsel %vm768, %v1063, %v1072
    %v1119 = vsel %vm846, %v1118, %v1081
    %vm1120 = vcmask 1045504
    %v1121 = vsel %vm1120, %v1119, %v1090
    %v1122 = vsel %vm768, %v1094, %v1110
    %v1123 = vsel %vm846, %v1122, %v1097
    %v1124 = vsel %vm1120, %v1123, %v1113
    %v1125 = vsel %vm768, %v1101, %v1116
    %v1126 = vlaneseq
    %v1127 = vshrl.u32 %v1126, 7
    %v1128 = vsub.s32 0, %v1127
    %v1129 = vrot.slane %v306, %v1128
    %v1130 = vadd.f32 %v1121, %v1129
    %v1131 = vadd.f32 %v1124, %v1129
    %v1132 = vadd.f32 %v1125, %v1129
    %v1133 = vsub.f32 0.0, %v1130
    %v1134 = vsub.f32 0.0, %v1131
    %v1135 = vsub.f32 0.0, %v1132
    %v1136 = vmul.f32 %v1133, 1.442695
    %v1137 = vpow.pop %v1136
    %v1138 = vmul.f32 %v1134, 1.442695
    %v1139 = vpow.pop %v1138
    %v1140 = vmul.f32 %v1135, 1.442695
    %v1141 = vpow.pop %v1140
    %v1142 = vadd.f32 %v1137, 1.0
    %v1143 = vadd.f32 %v1139, 1.0
    %v1144 = vadd.f32 %v1141, 1.0
    %v1145 = vrcp.pop %v1142
    %v1146 = vmul.f32 1.0, %v1145
    %v1147 = vrcp.pop %v1143
    %v1148 = vmul.f32 1.0, %v1147
    %v1149 = vrcp.pop %v1144
    %v1150 = vmul.f32 1.0, %v1149
    %v1151 = vmul.f32 %v1130, %v1146
    %v1152 = vmul.f32 %v1131, %v1148
    %v1153 = vmul.f32 %v1132, %v1150
    %v1154 = vlaneseq
    %v1155 = vshrl.u32 %v1154, 7
    %v1156 = vsub.s32 0, %v1155
    %v1157 = vrot.slane %v307, %v1156
    %vm1158 = vcmask 523264
    %v1160 = vsel %vm1158, %v1151, 0
    %v1163 = vsel %vm1158, %v1152, 0
    %v1166 = vsel %vm1158, %v1153, 0
    %1168 = vmatprep.subr.mxu0 0.0
    %1169 = vmatpush1.msra.mxu0 %v295
    %1170 = vmatprep.subr.mxu0 0.0
    %1171 = vmatpush1.msra.mxu0 %v296
    %1172 = vmatprep.subr.mxu0 0.0
    %1173 = vmatpush1.msra.mxu0 %v297
    %1174 = vmatprep.subr.mxu0 0.0
    %1175 = vmatpush1.msra.mxu0 %v298
    %1176 = vmatprep.subr.mxu0 0.0
    %1177 = vmatpush1.msra.mxu0 %v299
    %1178 = vmatprep.subr.mxu0 0.0
    %1179 = vmatpush1.msra.mxu0 %v300
    %1180 = vmatprep.subr.mxu0 0.0
    %1181 = vmatpush1.msra.mxu0 %v301
    %1182 = vmatprep.subr.mxu0 0.0
    %1183 = vmatpush1.msra.mxu0 %v302
    %1184 = vmatprep.subr.mxu0 0.0
    %1185 = vmatpush1.msra.mxu0 0.0
    %1186 = vmatprep.subr.mxu0 0.0
    %1187 = vmatpush1.msra.mxu0 0.0
    %1188 = vmatprep.subr.mxu0 0.0
    %1189 = vmatpush1.msra.mxu0 0.0
    %1190 = vmatprep.subr.mxu0 0.0
    %1191 = vmatpush1.msra.mxu0 0.0
    %1192 = vmatprep.subr.mxu0 0.0
    %1193 = vmatpush1.msra.mxu0 0.0
    %1194 = vmatprep.subr.mxu0 0.0
    %1195 = vmatpush1.msra.mxu0 0.0
    %1196 = vmatprep.subr.mxu0 0.0
    %1197 = vmatpush1.msra.mxu0 0.0
    %1198 = vmatprep.subr.mxu0 0.0
    %1199 = vmatpush1.msra.mxu0 0.0
    %1200 = vmatprep.subr.mxu0 0.0
    %1201 = vmatpush1.msra.mxu0 0.0
    %1202 = vmatprep.subr.mxu0 0.0
    %1203 = vmatpush1.msra.mxu0 0.0
    %1204 = vmatprep.subr.mxu0 0.0
    %1205 = vmatpush1.msra.mxu0 0.0
    %1206 = vmatprep.subr.mxu0 0.0
    %1207 = vmatpush1.msra.mxu0 0.0
    %1208 = vmatprep.subr.mxu0 0.0
    %1209 = vmatpush1.msra.mxu0 0.0
    %1210 = vmatprep.subr.mxu0 0.0
    %1211 = vmatpush1.msra.mxu0 0.0
    %1212 = vmatprep.subr.mxu0 0.0
    %1213 = vmatpush1.msra.mxu0 0.0
    %1214 = vmatprep.subr.mxu0 0.0
    %1215 = vmatpush1.msra.mxu0 0.0
    %1216 = vmatprep.subr.mxu0 0.0
    %1217 = vmatpush1.msra.mxu0 0.0
    %1218 = vmatprep.subr.mxu0 0.0
    %1219 = vmatpush1.msra.mxu0 0.0
    %1220 = vmatprep.subr.mxu0 0.0
    %1221 = vmatpush1.msra.mxu0 0.0
    %1222 = vmatprep.subr.mxu0 0.0
    %1223 = vmatpush1.msra.mxu0 0.0
    %1224 = vmatprep.subr.mxu0 0.0
    %1225 = vmatpush1.msra.mxu0 0.0
    %1226 = vmatprep.subr.mxu0 0.0
    %1227 = vmatpush1.msra.mxu0 0.0
    %1228 = vmatprep.subr.mxu0 0.0
    %1229 = vmatpush1.msra.mxu0 0.0
    %1230 = vmatprep.subr.mxu0 0.0
    %1231 = vmatpush1.msra.mxu0 0.0
    %1232 = vmatprep.mubr.f32.mxu0 0.0
    %1233 = vmatmul.mubr.f32.gmra.mrb[0].mxu0 %v1160
    %v1234 = vpop.f32.mrb[0].mxu0
    %v1235 = vadd.f32 %v1157, %v1234
    %v1236 = vpop.f32.mrb[0].mxu0
    %1237 = vmatprep.mubr.f32.mxu0 0.0
    %1238 = vmatmul.mubr.f32.gmra.mrb[0].mxu0 %v1163
    %v1239 = vpop.f32.mrb[0].mxu0
    %v1240 = vadd.f32 %v1157, %v1239
    %v1241 = vpop.f32.mrb[0].mxu0
    %1242 = vmatprep.mubr.f32.mxu0 0.0
    %1243 = vmatmul.mubr.f32.gmra.mrb[0].mxu0 %v1166
    %v1244 = vpop.f32.mrb[0].mxu0
    %v1245 = vadd.f32 %v1157, %v1244
    %v1246 = vpop.f32.mrb[0].mxu0
    %1247 = vdwg.mxu0
    %v1248 = vmax.f32 %v1235, 0.0
    %v1249 = vmax.f32 %v1240, 0.0
    %v1250 = vmax.f32 %v1245, 0.0
    %v1251 = vand.u32 2147483647, %v1235
    %v1252 = vand.u32 2147483647, %v1240
    %v1253 = vand.u32 2147483647, %v1245
    %v1254 = vsub.f32 0.0, %v1251
    %v1255 = vsub.f32 0.0, %v1252
    %v1256 = vsub.f32 0.0, %v1253
    %v1257 = vmul.f32 %v1254, 1.442695
    %v1258 = vpow.pop %v1257
    %v1259 = vmul.f32 %v1255, 1.442695
    %v1260 = vpow.pop %v1259
    %v1261 = vmul.f32 %v1256, 1.442695
    %v1262 = vpow.pop %v1261
    %v1263 = vadd.f32 %v1258, 1.0
    %v1264 = vlog2.pop %v1263
    %v1265 = vmul.f32 %v1264, 0.6931472
    %v1266 = vmul.f32 -0.5, %v1258
    %v1267 = vadd.f32 %v1266, 1.0
    %v1268 = vmul.f32 %v1267, %v1258
    %v1269 = vand.u32 2147483647, %v1258
    %vm1270 = vcmp.lt.f32.partialorder %v1269, 0.0004427343
    %v1271 = vsel %vm1270, %v1268, %v1265
    %v1272 = vadd.f32 %v1260, 1.0
    %v1273 = vlog2.pop %v1272
    %v1274 = vmul.f32 %v1273, 0.6931472
    %v1275 = vmul.f32 -0.5, %v1260
    %v1276 = vadd.f32 %v1275, 1.0
    %v1277 = vmul.f32 %v1276, %v1260
    %v1278 = vand.u32 2147483647, %v1260
    %vm1279 = vcmp.lt.f32.partialorder %v1278, 0.0004427343
    %v1280 = vsel %vm1279, %v1277, %v1274
    %v1281 = vadd.f32 %v1262, 1.0
    %v1282 = vlog2.pop %v1281
    %v1283 = vmul.f32 %v1282, 0.6931472
    %v1284 = vmul.f32 -0.5, %v1262
    %v1285 = vadd.f32 %v1284, 1.0
    %v1286 = vmul.f32 %v1285, %v1262
    %v1287 = vand.u32 2147483647, %v1262
    %vm1288 = vcmp.lt.f32.partialorder %v1287, 0.0004427343
    %v1289 = vsel %vm1288, %v1286, %v1283
    %v1290 = vadd.f32 %v1248, %v1271
    %v1291 = vadd.f32 %v1249, %v1280
    %v1292 = vadd.f32 %v1250, %v1289
    %v1294 = vsel %vm1158, %v319, 0
    %v1297 = vsel %vm1158, %v320, 0
    %v1300 = vsel %vm1158, %v321, 0
    %v1303 = vsel %vm1158, %v322, 0
    %1305 = vmatprep.subr.mxu0 0.0
    %1306 = vmatpush1.xpose.msra.mxu0 %v1160
    %1307 = vmatprep.subr.mxu0 0.0
    %1308 = vmatpush1.xpose.msra.mxu0 %v1163
    %1309 = vmatprep.subr.mxu0 0.0
    %1310 = vmatpush1.xpose.msra.mxu0 %v1166
    %1311 = vmatprep.subr.mxu0 0.0
    %1312 = vmatpush1.xpose.msra.mxu0 0.0
    %1313 = vmatprep.subr.mxu0 0.0
    %1314 = vmatpush1.xpose.msra.mxu0 0.0
    %1315 = vmatprep.subr.mxu0 0.0
    %1316 = vmatpush1.xpose.msra.mxu0 0.0
    %1317 = vmatprep.subr.mxu0 0.0
    %1318 = vmatpush1.xpose.msra.mxu0 0.0
    %1319 = vmatprep.subr.mxu0 0.0
    %1320 = vmatpush1.xpose.msra.mxu0 0.0
    %1321 = vmatprep.subr.mxu0 0.0
    %1322 = vmatpush1.xpose.msra.mxu0 0.0
    %1323 = vmatprep.subr.mxu0 0.0
    %1324 = vmatpush1.xpose.msra.mxu0 0.0
    %1325 = vmatprep.subr.mxu0 0.0
    %1326 = vmatpush1.xpose.msra.mxu0 0.0
    %1327 = vmatprep.subr.mxu0 0.0
    %1328 = vmatpush1.xpose.msra.mxu0 0.0
    %1329 = vmatprep.subr.mxu0 0.0
    %1330 = vmatpush1.xpose.msra.mxu0 0.0
    %1331 = vmatprep.subr.mxu0 0.0
    %1332 = vmatpush1.xpose.msra.mxu0 0.0
    %1333 = vmatprep.subr.mxu0 0.0
    %1334 = vmatpush1.xpose.msra.mxu0 0.0
    %1335 = vmatprep.subr.mxu0 0.0
    %1336 = vmatpush1.xpose.msra.mxu0 0.0
    %1337 = vmatprep.subr.mxu0 0.0
    %1338 = vmatpush1.xpose.msra.mxu0 0.0
    %1339 = vmatprep.subr.mxu0 0.0
    %1340 = vmatpush1.xpose.msra.mxu0 0.0
    %1341 = vmatprep.subr.mxu0 0.0
    %1342 = vmatpush1.xpose.msra.mxu0 0.0
    %1343 = vmatprep.subr.mxu0 0.0
    %1344 = vmatpush1.xpose.msra.mxu0 0.0
    %1345 = vmatprep.subr.mxu0 0.0
    %1346 = vmatpush1.xpose.msra.mxu0 0.0
    %1347 = vmatprep.subr.mxu0 0.0
    %1348 = vmatpush1.xpose.msra.mxu0 0.0
    %1349 = vmatprep.subr.mxu0 0.0
    %1350 = vmatpush1.xpose.msra.mxu0 0.0
    %1351 = vmatprep.subr.mxu0 0.0
    %1352 = vmatpush1.xpose.msra.mxu0 0.0
    %1353 = vmatprep.subr.mxu0 0.0
    %1354 = vmatpush1.xpose.msra.mxu0 0.0
    %1355 = vmatprep.subr.mxu0 0.0
    %1356 = vmatpush1.xpose.msra.mxu0 0.0
    %1357 = vmatprep.subr.mxu0 0.0
    %1358 = vmatpush1.xpose.msra.mxu0 0.0
    %1359 = vmatprep.subr.mxu0 0.0
    %1360 = vmatpush1.xpose.msra.mxu0 0.0
    %1361 = vmatprep.subr.mxu0 0.0
    %1362 = vmatpush1.xpose.msra.mxu0 0.0
    %1363 = vmatprep.subr.mxu0 0.0
    %1364 = vmatpush1.xpose.msra.mxu0 0.0
    %1365 = vmatprep.subr.mxu0 0.0
    %1366 = vmatpush1.xpose.msra.mxu0 0.0
    %1367 = vmatprep.subr.mxu0 0.0
    %1368 = vmatpush1.xpose.msra.mxu0 0.0
    %1369 = vmatprep.mubr.f32.mxu0 0.0
    %1370 = vmatmul.mubr.f32.gmra.mrb[0].mxu0 %v1294
    %v1371 = vpop.f32.mrb[0].mxu0
    %v1372 = vadd.f32 0.0, %v1371
    %v1373 = vpop.f32.mrb[0].mxu0
    %1374 = vmatprep.mubr.f32.mxu0 0.0
    %1375 = vmatmul.mubr.f32.gmra.mrb[0].mxu0 %v1297
    %v1376 = vpop.f32.mrb[0].mxu0
    %v1377 = vadd.f32 0.0, %v1376
    %v1378 = vpop.f32.mrb[0].mxu0
    %1379 = vmatprep.mubr.f32.mxu0 0.0
    %1380 = vmatmul.mubr.f32.gmra.mrb[0].mxu0 %v1300
    %v1381 = vpop.f32.mrb[0].mxu0
    %v1382 = vadd.f32 0.0, %v1381
    %v1383 = vpop.f32.mrb[0].mxu0
    %1384 = vmatprep.mubr.f32.mxu0 0.0
    %1385 = vmatmul.mubr.f32.gmra.mrb[0].mxu0 %v1303
    %v1386 = vpop.f32.mrb[0].mxu0
    %v1387 = vadd.f32 0.0, %v1386
    %v1388 = vpop.f32.mrb[0].mxu0
    %1389 = vdwg.mxu0
    %v1390 = vlaneseq
    %v1391 = vshrl.u32 %v1390, 7
    %v1392 = vsub.s32 0, %v1391
    %v1393 = vrot.slane %v1290, %v1392
    %v1394 = vmul.f32 %v1393, %v303
    %v1395 = vmul.f32 %v1393, %v304
    %v1396 = vmul.f32 %v1394, 1.442695
    %v1397 = vpow.pop %v1396
    %v1398 = vmul.f32 %v1395, 1.442695
    %v1399 = vpow.pop %v1398
    %v1400 = vmul.f32 %v1397, 0.0
    %v1401 = vmul.f32 %v1399, 0.0
    %v1402 = vmul.f32 %v1290, %v1151
    %1404 = vset.pattern.permute.xlu0 0
    %1405 = vperm.xlu0 %1404, %v1372
    %v1406 = vpop.permute.xlu0 %1405
    %1409 = vset.pattern.permute.xlu0 0
    %1410 = vperm.xlu0 %1409, %v1377
    %v1411 = vpop.permute.xlu0 %1410
    %v1413 = vlaneseq
    %v1414 = vshrl.u32 %v1413, 7
    %v1415 = vsub.s32 0, %v1414
    %v1416 = vrot.slane %v1402, %v1415
    %v1417 = vmul.f32 %v1406, %v1416
    %v1418 = vmul.f32 %v1411, %v1416
    %v1419 = vadd.f32 %v1400, %v1417
    %v1420 = vadd.f32 %v1401, %v1418
    %1422 = vset.pattern.permute.xlu0 0
    %1423 = vperm.xlu0 %1422, %v1382
    %v1424 = vpop.permute.xlu0 %1423
    %1427 = vset.pattern.permute.xlu0 0
    %1428 = vperm.xlu0 %1427, %v1387
    %v1429 = vpop.permute.xlu0 %1428
    %v1431 = vmul.f32 %v1419, %v1424
    %v1432 = vmul.f32 %v1420, %v1429
    %v1433 = vsel %vm1158, %v1431, 0.0
    %v1434 = vsel %vm1158, %v1432, 0.0
    %v1435 = vadd.f32 %v1433, %v1434
    %v1436 = vrot.slane %v1435, 4
    %v1437 = vadd.f32 %v1435, %v1436
    %v1438 = vrot.slane %v1437, 2
    %v1439 = vadd.f32 %v1437, %v1438
    %v1440 = vrot.slane %v1439, 1
    %v1441 = vadd.f32 %v1439, %v1440
    %v1442 = vmul.f32 %v308, %v1151
    %v1443 = vadd.f32 %v1441, %v1442
    %v1444 = vlaneseq
    %v1445 = vshrl.u32 %v1444, 7
    %v1446 = vsub.s32 2, %v1445
    %v1447 = vrot.slane %v1290, %v1446
    %v1448 = vmul.f32 %v1447, %v303
    %v1449 = vmul.f32 %v1447, %v304
    %v1450 = vmul.f32 %v1448, 1.442695
    %v1451 = vpow.pop %v1450
    %v1452 = vmul.f32 %v1449, 1.442695
    %v1453 = vpow.pop %v1452
    %v1454 = vmul.f32 %v1451, %v1419
    %v1455 = vmul.f32 %v1453, %v1420
    %1456 = vset.pattern.permute.xlu0 2
    %1457 = vperm.xlu0 %1456, %v1372
    %v1458 = vpop.permute.xlu0 %1457
    %1460 = vset.pattern.permute.xlu0 2
    %1461 = vperm.xlu0 %1460, %v1377
    %v1462 = vpop.permute.xlu0 %1461
    %v1464 = vlaneseq
    %v1465 = vshrl.u32 %v1464, 7
    %v1466 = vsub.s32 2, %v1465
    %v1467 = vrot.slane %v1402, %v1466
    %v1468 = vmul.f32 %v1458, %v1467
    %v1469 = vmul.f32 %v1462, %v1467
    %v1470 = vadd.f32 %v1454, %v1468
    %v1471 = vadd.f32 %v1455, %v1469
    %1472 = vset.pattern.permute.xlu0 2
    %1473 = vperm.xlu0 %1472, %v1382
    %v1474 = vpop.permute.xlu0 %1473
    %1476 = vset.pattern.permute.xlu0 2
    %1477 = vperm.xlu0 %1476, %v1387
    %v1478 = vpop.permute.xlu0 %1477
    %v1480 = vmul.f32 %v1470, %v1474
    %v1481 = vmul.f32 %v1471, %v1478
    %v1482 = vsel %vm1158, %v1480, 0.0
    %v1483 = vsel %vm1158, %v1481, 0.0
    %v1484 = vadd.f32 %v1482, %v1483
    %v1485 = vrot.slane %v1484, 4
    %v1486 = vadd.f32 %v1484, %v1485
    %v1487 = vrot.slane %v1486, 2
    %v1488 = vadd.f32 %v1486, %v1487
    %v1489 = vrot.slane %v1488, 1
    %v1490 = vadd.f32 %v1488, %v1489
    %v1491 = vrot.slane %v1151, 2
    %v1493 = vmul.f32 %v308, %v1491
    %v1494 = vadd.f32 %v1490, %v1493
    %v1495 = vlaneseq
    %v1496 = vshrl.u32 %v1495, 7
    %v1497 = vsub.s32 4, %v1496
    %v1498 = vrot.slane %v1290, %v1497
    %v1499 = vmul.f32 %v1498, %v303
    %v1500 = vmul.f32 %v1498, %v304
    %v1501 = vmul.f32 %v1499, 1.442695
    %v1502 = vpow.pop %v1501
    %v1503 = vmul.f32 %v1500, 1.442695
    %v1504 = vpow.pop %v1503
    %v1505 = vmul.f32 %v1502, %v1470
    %v1506 = vmul.f32 %v1504, %v1471
    %1507 = vset.pattern.permute.xlu0 4
    %1508 = vperm.xlu0 %1507, %v1372
    %v1509 = vpop.permute.xlu0 %1508
    %1511 = vset.pattern.permute.xlu0 4
    %1512 = vperm.xlu0 %1511, %v1377
    %v1513 = vpop.permute.xlu0 %1512
    %v1515 = vlaneseq
    %v1516 = vshrl.u32 %v1515, 7
    %v1517 = vsub.s32 4, %v1516
    %v1518 = vrot.slane %v1402, %v1517
    %v1519 = vmul.f32 %v1509, %v1518
    %v1520 = vmul.f32 %v1513, %v1518
    %v1521 = vadd.f32 %v1505, %v1519
    %v1522 = vadd.f32 %v1506, %v1520
    %1523 = vset.pattern.permute.xlu0 4
    %1524 = vperm.xlu0 %1523, %v1382
    %v1525 = vpop.permute.xlu0 %1524
    %1527 = vset.pattern.permute.xlu0 4
    %1528 = vperm.xlu0 %1527, %v1387
    %v1529 = vpop.permute.xlu0 %1528
    %v1531 = vmul.f32 %v1521, %v1525
    %v1532 = vmul.f32 %v1522, %v1529
    %v1533 = vsel %vm1158, %v1531, 0.0
    %v1534 = vsel %vm1158, %v1532, 0.0
    %v1535 = vadd.f32 %v1533, %v1534
    %v1536 = vrot.slane %v1535, 4
    %v1537 = vadd.f32 %v1535, %v1536
    %v1538 = vrot.slane %v1537, 2
    %v1539 = vadd.f32 %v1537, %v1538
    %v1540 = vrot.slane %v1539, 1
    %v1541 = vadd.f32 %v1539, %v1540
    %v1542 = vrot.slane %v1151, 4
    %v1544 = vmul.f32 %v308, %v1542
    %v1545 = vadd.f32 %v1541, %v1544
    %v1546 = vlaneseq
    %v1547 = vshrl.u32 %v1546, 7
    %v1548 = vsub.s32 6, %v1547
    %v1549 = vrot.slane %v1290, %v1548
    %v1550 = vmul.f32 %v1549, %v303
    %v1551 = vmul.f32 %v1549, %v304
    %v1552 = vmul.f32 %v1550, 1.442695
    %v1553 = vpow.pop %v1552
    %v1554 = vmul.f32 %v1551, 1.442695
    %v1555 = vpow.pop %v1554
    %v1556 = vmul.f32 %v1553, %v1521
    %v1557 = vmul.f32 %v1555, %v1522
    %1558 = vset.pattern.permute.xlu0 6
    %1559 = vperm.xlu0 %1558, %v1372
    %v1560 = vpop.permute.xlu0 %1559
    %1562 = vset.pattern.permute.xlu0 6
    %1563 = vperm.xlu0 %1562, %v1377
    %v1564 = vpop.permute.xlu0 %1563
    %v1566 = vlaneseq
    %v1567 = vshrl.u32 %v1566, 7
    %v1568 = vsub.s32 6, %v1567
    %v1569 = vrot.slane %v1402, %v1568
    %v1570 = vmul.f32 %v1560, %v1569
    %v1571 = vmul.f32 %v1564, %v1569
    %v1572 = vadd.f32 %v1556, %v1570
    %v1573 = vadd.f32 %v1557, %v1571
    %1574 = vset.pattern.permute.xlu0 6
    %1575 = vperm.xlu0 %1574, %v1382
    %v1576 = vpop.permute.xlu0 %1575
    %1578 = vset.pattern.permute.xlu0 6
    %1579 = vperm.xlu0 %1578, %v1387
    %v1580 = vpop.permute.xlu0 %1579
    %v1582 = vmul.f32 %v1572, %v1576
    %v1583 = vmul.f32 %v1573, %v1580
    %v1584 = vsel %vm1158, %v1582, 0.0
    %v1585 = vsel %vm1158, %v1583, 0.0
    %v1586 = vadd.f32 %v1584, %v1585
    %v1587 = vrot.slane %v1586, 4
    %v1588 = vadd.f32 %v1586, %v1587
    %v1589 = vrot.slane %v1588, 2
    %v1590 = vadd.f32 %v1588, %v1589
    %v1591 = vrot.slane %v1590, 1
    %v1592 = vadd.f32 %v1590, %v1591
    %v1593 = vrot.slane %v1151, 6
    %v1595 = vmul.f32 %v308, %v1593
    %v1596 = vadd.f32 %v1592, %v1595
    %v1597 = vlaneseq
    %v1598 = vshrl.u32 %v1597, 7
    %v1599 = vsub.s32 0, %v1598
    %v1600 = vrot.slane %v1291, %v1599
    %v1601 = vmul.f32 %v1600, %v303
    %v1602 = vmul.f32 %v1600, %v304
    %v1603 = vmul.f32 %v1601, 1.442695
    %v1604 = vpow.pop %v1603
    %v1605 = vmul.f32 %v1602, 1.442695
    %v1606 = vpow.pop %v1605
    %v1607 = vmul.f32 %v1604, %v1572
    %v1608 = vmul.f32 %v1606, %v1573
    %v1609 = vmul.f32 %v1291, %v1152
    %1610 = vset.pattern.permute.xlu0 8
    %1611 = vperm.xlu0 %1610, %v1372
    %v1612 = vpop.permute.xlu0 %1611
    %1614 = vset.pattern.permute.xlu0 8
    %1615 = vperm.xlu0 %1614, %v1377
    %v1616 = vpop.permute.xlu0 %1615
    %v1618 = vlaneseq
    %v1619 = vshrl.u32 %v1618, 7
    %v1620 = vsub.s32 0, %v1619
    %v1621 = vrot.slane %v1609, %v1620
    %v1622 = vmul.f32 %v1612, %v1621
    %v1623 = vmul.f32 %v1616, %v1621
    %v1624 = vadd.f32 %v1607, %v1622
    %v1625 = vadd.f32 %v1608, %v1623
    %1626 = vset.pattern.permute.xlu0 8
    %1627 = vperm.xlu0 %1626, %v1382
    %v1628 = vpop.permute.xlu0 %1627
    %1630 = vset.pattern.permute.xlu0 8
    %1631 = vperm.xlu0 %1630, %v1387
    %v1632 = vpop.permute.xlu0 %1631
    %v1634 = vmul.f32 %v1624, %v1628
    %v1635 = vmul.f32 %v1625, %v1632
    %v1636 = vsel %vm1158, %v1634, 0.0
    %v1637 = vsel %vm1158, %v1635, 0.0
    %v1638 = vadd.f32 %v1636, %v1637
    %v1639 = vrot.slane %v1638, 4
    %v1640 = vadd.f32 %v1638, %v1639
    %v1641 = vrot.slane %v1640, 2
    %v1642 = vadd.f32 %v1640, %v1641
    %v1643 = vrot.slane %v1642, 1
    %v1644 = vadd.f32 %v1642, %v1643
    %v1645 = vmul.f32 %v308, %v1152
    %v1646 = vadd.f32 %v1644, %v1645
    %v1647 = vlaneseq
    %v1648 = vshrl.u32 %v1647, 7
    %v1649 = vsub.s32 1, %v1648
    %v1650 = vrot.slane %v1290, %v1649
    %v1651 = vmul.f32 %v1650, %v303
    %v1652 = vmul.f32 %v1650, %v304
    %v1653 = vmul.f32 %v1651, 1.442695
    %v1654 = vpow.pop %v1653
    %v1655 = vmul.f32 %v1652, 1.442695
    %v1656 = vpow.pop %v1655
    %v1657 = vmul.f32 %v1654, 0.0
    %v1658 = vmul.f32 %v1656, 0.0
    %1659 = vset.pattern.permute.xlu0 1
    %1660 = vperm.xlu0 %1659, %v1372
    %v1661 = vpop.permute.xlu0 %1660
    %1663 = vset.pattern.permute.xlu0 1
    %1664 = vperm.xlu0 %1663, %v1377
    %v1665 = vpop.permute.xlu0 %1664
    %v1667 = vlaneseq
    %v1668 = vshrl.u32 %v1667, 7
    %v1669 = vsub.s32 1, %v1668
    %v1670 = vrot.slane %v1402, %v1669
    %v1671 = vmul.f32 %v1661, %v1670
    %v1672 = vmul.f32 %v1665, %v1670
    %v1673 = vadd.f32 %v1657, %v1671
    %v1674 = vadd.f32 %v1658, %v1672
    %1675 = vset.pattern.permute.xlu0 1
    %1676 = vperm.xlu0 %1675, %v1382
    %v1677 = vpop.permute.xlu0 %1676
    %1679 = vset.pattern.permute.xlu0 1
    %1680 = vperm.xlu0 %1679, %v1387
    %v1681 = vpop.permute.xlu0 %1680
    %v1683 = vmul.f32 %v1673, %v1677
    %v1684 = vmul.f32 %v1674, %v1681
    %v1685 = vsel %vm1158, %v1683, 0.0
    %v1686 = vsel %vm1158, %v1684, 0.0
    %v1687 = vadd.f32 %v1685, %v1686
    %v1688 = vrot.slane %v1687, 4
    %v1689 = vadd.f32 %v1687, %v1688
    %v1690 = vrot.slane %v1689, 2
    %v1691 = vadd.f32 %v1689, %v1690
    %v1692 = vrot.slane %v1691, 1
    %v1693 = vadd.f32 %v1691, %v1692
    %v1694 = vrot.slane %v1151, 1
    %v1696 = vmul.f32 %v308, %v1694
    %v1697 = vadd.f32 %v1693, %v1696
    %v1698 = vlaneseq
    %v1699 = vshrl.u32 %v1698, 7
    %v1700 = vsub.s32 3, %v1699
    %v1701 = vrot.slane %v1290, %v1700
    %v1702 = vmul.f32 %v1701, %v303
    %v1703 = vmul.f32 %v1701, %v304
    %v1704 = vmul.f32 %v1702, 1.442695
    %v1705 = vpow.pop %v1704
    %v1706 = vmul.f32 %v1703, 1.442695
    %v1707 = vpow.pop %v1706
    %v1708 = vmul.f32 %v1705, %v1673
    %v1709 = vmul.f32 %v1707, %v1674
    %1710 = vset.pattern.permute.xlu0 3
    %1711 = vperm.xlu0 %1710, %v1372
    %v1712 = vpop.permute.xlu0 %1711
    %1714 = vset.pattern.permute.xlu0 3
    %1715 = vperm.xlu0 %1714, %v1377
    %v1716 = vpop.permute.xlu0 %1715
    %v1718 = vlaneseq
    %v1719 = vshrl.u32 %v1718, 7
    %v1720 = vsub.s32 3, %v1719
    %v1721 = vrot.slane %v1402, %v1720
    %v1722 = vmul.f32 %v1712, %v1721
    %v1723 = vmul.f32 %v1716, %v1721
    %v1724 = vadd.f32 %v1708, %v1722
    %v1725 = vadd.f32 %v1709, %v1723
    %1726 = vset.pattern.permute.xlu0 3
    %1727 = vperm.xlu0 %1726, %v1382
    %v1728 = vpop.permute.xlu0 %1727
    %1730 = vset.pattern.permute.xlu0 3
    %1731 = vperm.xlu0 %1730, %v1387
    %v1732 = vpop.permute.xlu0 %1731
    %v1734 = vmul.f32 %v1724, %v1728
    %v1735 = vmul.f32 %v1725, %v1732
    %v1736 = vsel %vm1158, %v1734, 0.0
    %v1737 = vsel %vm1158, %v1735, 0.0
    %v1738 = vadd.f32 %v1736, %v1737
    %v1739 = vrot.slane %v1738, 4
    %v1740 = vadd.f32 %v1738, %v1739
    %v1741 = vrot.slane %v1740, 2
    %v1742 = vadd.f32 %v1740, %v1741
    %v1743 = vrot.slane %v1742, 1
    %v1744 = vadd.f32 %v1742, %v1743
    %v1745 = vrot.slane %v1151, 3
    %v1747 = vmul.f32 %v308, %v1745
    %v1748 = vadd.f32 %v1744, %v1747
    %v1749 = vlaneseq
    %v1750 = vshrl.u32 %v1749, 7
    %v1751 = vsub.s32 5, %v1750
    %v1752 = vrot.slane %v1290, %v1751
    %v1753 = vmul.f32 %v1752, %v303
    %v1754 = vmul.f32 %v1752, %v304
    %v1755 = vmul.f32 %v1753, 1.442695
    %v1756 = vpow.pop %v1755
    %v1757 = vmul.f32 %v1754, 1.442695
    %v1758 = vpow.pop %v1757
    %v1759 = vmul.f32 %v1756, %v1724
    %v1760 = vmul.f32 %v1758, %v1725
    %1761 = vset.pattern.permute.xlu0 5
    %1762 = vperm.xlu0 %1761, %v1372
    %v1763 = vpop.permute.xlu0 %1762
    %1765 = vset.pattern.permute.xlu0 5
    %1766 = vperm.xlu0 %1765, %v1377
    %v1767 = vpop.permute.xlu0 %1766
    %v1769 = vlaneseq
    %v1770 = vshrl.u32 %v1769, 7
    %v1771 = vsub.s32 5, %v1770
    %v1772 = vrot.slane %v1402, %v1771
    %v1773 = vmul.f32 %v1763, %v1772
    %v1774 = vmul.f32 %v1767, %v1772
    %v1775 = vadd.f32 %v1759, %v1773
    %v1776 = vadd.f32 %v1760, %v1774
    %1777 = vset.pattern.permute.xlu0 5
    %1778 = vperm.xlu0 %1777, %v1382
    %v1779 = vpop.permute.xlu0 %1778
    %1781 = vset.pattern.permute.xlu0 5
    %1782 = vperm.xlu0 %1781, %v1387
    %v1783 = vpop.permute.xlu0 %1782
    %v1785 = vmul.f32 %v1775, %v1779
    %v1786 = vmul.f32 %v1776, %v1783
    %v1787 = vsel %vm1158, %v1785, 0.0
    %v1788 = vsel %vm1158, %v1786, 0.0
    %v1789 = vadd.f32 %v1787, %v1788
    %v1790 = vrot.slane %v1789, 4
    %v1791 = vadd.f32 %v1789, %v1790
    %v1792 = vrot.slane %v1791, 2
    %v1793 = vadd.f32 %v1791, %v1792
    %v1794 = vrot.slane %v1793, 1
    %v1795 = vadd.f32 %v1793, %v1794
    %v1796 = vrot.slane %v1151, 5
    %v1798 = vmul.f32 %v308, %v1796
    %v1799 = vadd.f32 %v1795, %v1798
    %v1800 = vlaneseq
    %v1801 = vshrl.u32 %v1800, 7
    %v1802 = vsub.s32 7, %v1801
    %v1803 = vrot.slane %v1290, %v1802
    %v1804 = vmul.f32 %v1803, %v303
    %v1805 = vmul.f32 %v1803, %v304
    %v1806 = vmul.f32 %v1804, 1.442695
    %v1807 = vpow.pop %v1806
    %v1808 = vmul.f32 %v1805, 1.442695
    %v1809 = vpow.pop %v1808
    %v1810 = vmul.f32 %v1807, %v1775
    %v1811 = vmul.f32 %v1809, %v1776
    %1812 = vset.pattern.permute.xlu0 7
    %1813 = vperm.xlu0 %1812, %v1372
    %v1814 = vpop.permute.xlu0 %1813
    %1816 = vset.pattern.permute.xlu0 7
    %1817 = vperm.xlu0 %1816, %v1377
    %v1818 = vpop.permute.xlu0 %1817
    %v1820 = vlaneseq
    %v1821 = vshrl.u32 %v1820, 7
    %v1822 = vsub.s32 7, %v1821
    %v1823 = vrot.slane %v1402, %v1822
    %v1824 = vmul.f32 %v1814, %v1823
    %v1825 = vmul.f32 %v1818, %v1823
    %v1826 = vadd.f32 %v1810, %v1824
    %v1827 = vadd.f32 %v1811, %v1825
    %1828 = vset.pattern.permute.xlu0 7
    %1829 = vperm.xlu0 %1828, %v1382
    %v1830 = vpop.permute.xlu0 %1829
    %1832 = vset.pattern.permute.xlu0 7
    %1833 = vperm.xlu0 %1832, %v1387
    %v1834 = vpop.permute.xlu0 %1833
    %v1836 = vmul.f32 %v1826, %v1830
    %v1837 = vmul.f32 %v1827, %v1834
    %v1838 = vsel %vm1158, %v1836, 0.0
    %v1839 = vsel %vm1158, %v1837, 0.0
    %v1840 = vadd.f32 %v1838, %v1839
    %v1841 = vrot.slane %v1840, 4
    %v1842 = vadd.f32 %v1840, %v1841
    %v1843 = vrot.slane %v1842, 2
    %v1844 = vadd.f32 %v1842, %v1843
    %v1845 = vrot.slane %v1844, 1
    %v1846 = vadd.f32 %v1844, %v1845
    %v1847 = vrot.slane %v1151, 7
    %v1849 = vmul.f32 %v308, %v1847
    %v1850 = vadd.f32 %v1846, %v1849
    %v1851 = vlaneseq
    %v1852 = vshrl.u32 %v1851, 7
    %v1853 = vsub.s32 1, %v1852
    %v1854 = vrot.slane %v1291, %v1853
    %v1855 = vmul.f32 %v1854, %v303
    %v1856 = vmul.f32 %v1854, %v304
    %v1857 = vmul.f32 %v1855, 1.442695
    %v1858 = vpow.pop %v1857
    %v1859 = vmul.f32 %v1856, 1.442695
    %v1860 = vpow.pop %v1859
    %v1861 = vmul.f32 %v1858, %v1826
    %v1862 = vmul.f32 %v1860, %v1827
    %1863 = vset.pattern.permute.xlu0 9
    %1864 = vperm.xlu0 %1863, %v1372
    %v1865 = vpop.permute.xlu0 %1864
    %1867 = vset.pattern.permute.xlu0 9
    %1868 = vperm.xlu0 %1867, %v1377
    %v1869 = vpop.permute.xlu0 %1868
    %v1871 = vlaneseq
    %v1872 = vshrl.u32 %v1871, 7
    %v1873 = vsub.s32 1, %v1872
    %v1874 = vrot.slane %v1609, %v1873
    %v1875 = vmul.f32 %v1865, %v1874
    %v1876 = vmul.f32 %v1869, %v1874
    %v1877 = vadd.f32 %v1861, %v1875
    %v1878 = vadd.f32 %v1862, %v1876
    %1879 = vset.pattern.permute.xlu0 9
    %1880 = vperm.xlu0 %1879, %v1382
    %v1881 = vpop.permute.xlu0 %1880
    %1883 = vset.pattern.permute.xlu0 9
    %1884 = vperm.xlu0 %1883, %v1387
    %v1885 = vpop.permute.xlu0 %1884
    %v1887 = vmul.f32 %v1877, %v1881
    %v1888 = vmul.f32 %v1878, %v1885
    %v1889 = vsel %vm1158, %v1887, 0.0
    %v1890 = vsel %vm1158, %v1888, 0.0
    %v1891 = vadd.f32 %v1889, %v1890
    %v1892 = vrot.slane %v1891, 4
    %v1893 = vadd.f32 %v1891, %v1892
    %v1894 = vrot.slane %v1893, 2
    %v1895 = vadd.f32 %v1893, %v1894
    %v1896 = vrot.slane %v1895, 1
    %v1897 = vadd.f32 %v1895, %v1896
    %v1898 = vrot.slane %v1152, 1
    %v1900 = vmul.f32 %v308, %v1898
    %v1901 = vadd.f32 %v1897, %v1900
    %v1902 = vlaneseq
    %v1903 = vshrl.u32 %v1902, 7
    %v1904 = vsub.s32 2, %v1903
    %v1905 = vrot.slane %v1291, %v1904
    %v1906 = vmul.f32 %v1905, %v303
    %v1907 = vmul.f32 %v1905, %v304
    %v1908 = vmul.f32 %v1906, 1.442695
    %v1909 = vpow.pop %v1908
    %v1910 = vmul.f32 %v1907, 1.442695
    %v1911 = vpow.pop %v1910
    %v1912 = vmul.f32 %v1909, 0.0
    %v1913 = vmul.f32 %v1911, 0.0
    %1914 = vset.pattern.permute.xlu0 10
    %1915 = vperm.xlu0 %1914, %v1372
    %v1916 = vpop.permute.xlu0 %1915
    %1918 = vset.pattern.permute.xlu0 10
    %1919 = vperm.xlu0 %1918, %v1377
    %v1920 = vpop.permute.xlu0 %1919
    %v1922 = vlaneseq
    %v1923 = vshrl.u32 %v1922, 7
    %v1924 = vsub.s32 2, %v1923
    %v1925 = vrot.slane %v1609, %v1924
    %v1926 = vmul.f32 %v1916, %v1925
    %v1927 = vmul.f32 %v1920, %v1925
    %v1928 = vadd.f32 %v1912, %v1926
    %v1929 = vadd.f32 %v1913, %v1927
    %1930 = vset.pattern.permute.xlu0 10
    %1931 = vperm.xlu0 %1930, %v1382
    %v1932 = vpop.permute.xlu0 %1931
    %1934 = vset.pattern.permute.xlu0 10
    %1935 = vperm.xlu0 %1934, %v1387
    %v1936 = vpop.permute.xlu0 %1935
    %v1938 = vmul.f32 %v1928, %v1932
    %v1939 = vmul.f32 %v1929, %v1936
    %v1940 = vsel %vm1158, %v1938, 0.0
    %v1941 = vsel %vm1158, %v1939, 0.0
    %v1942 = vadd.f32 %v1940, %v1941
    %v1943 = vrot.slane %v1942, 4
    %v1944 = vadd.f32 %v1942, %v1943
    %v1945 = vrot.slane %v1944, 2
    %v1946 = vadd.f32 %v1944, %v1945
    %v1947 = vrot.slane %v1946, 1
    %v1948 = vadd.f32 %v1946, %v1947
    %v1949 = vrot.slane %v1152, 2
    %v1951 = vmul.f32 %v308, %v1949
    %v1952 = vadd.f32 %v1948, %v1951
    %v1953 = vadd.f32 %v1596, %v1952
    %v1954 = vlaneseq
    %v1955 = vshrl.u32 %v1954, 7
    %v1956 = vsub.s32 4, %v1955
    %v1957 = vrot.slane %v1291, %v1956
    %v1958 = vmul.f32 %v1957, %v303
    %v1959 = vmul.f32 %v1957, %v304
    %v1960 = vmul.f32 %v1958, 1.442695
    %v1961 = vpow.pop %v1960
    %v1962 = vmul.f32 %v1959, 1.442695
    %v1963 = vpow.pop %v1962
    %v1964 = vmul.f32 %v1961, %v1928
    %v1965 = vmul.f32 %v1963, %v1929
    %1966 = vset.pattern.permute.xlu0 12
    %1967 = vperm.xlu0 %1966, %v1372
    %v1968 = vpop.permute.xlu0 %1967
    %1970 = vset.pattern.permute.xlu0 12
    %1971 = vperm.xlu0 %1970, %v1377
    %v1972 = vpop.permute.xlu0 %1971
    %v1974 = vlaneseq
    %v1975 = vshrl.u32 %v1974, 7
    %v1976 = vsub.s32 4, %v1975
    %v1977 = vrot.slane %v1609, %v1976
    %v1978 = vmul.f32 %v1968, %v1977
    %v1979 = vmul.f32 %v1972, %v1977
    %v1980 = vadd.f32 %v1964, %v1978
    %v1981 = vadd.f32 %v1965, %v1979
    %1982 = vset.pattern.permute.xlu0 12
    %1983 = vperm.xlu0 %1982, %v1382
    %v1984 = vpop.permute.xlu0 %1983
    %1986 = vset.pattern.permute.xlu0 12
    %1987 = vperm.xlu0 %1986, %v1387
    %v1988 = vpop.permute.xlu0 %1987
    %v1990 = vmul.f32 %v1980, %v1984
    %v1991 = vmul.f32 %v1981, %v1988
    %v1992 = vsel %vm1158, %v1990, 0.0
    %v1993 = vsel %vm1158, %v1991, 0.0
    %v1994 = vadd.f32 %v1992, %v1993
    %v1995 = vrot.slane %v1994, 4
    %v1996 = vadd.f32 %v1994, %v1995
    %v1997 = vrot.slane %v1996, 2
    %v1998 = vadd.f32 %v1996, %v1997
    %v1999 = vrot.slane %v1998, 1
    %v2000 = vadd.f32 %v1998, %v1999
    %v2001 = vrot.slane %v1152, 4
    %v2003 = vmul.f32 %v308, %v2001
    %v2004 = vadd.f32 %v2000, %v2003
    %v2005 = vadd.f32 %v1545, %v2004
    %v2006 = vlaneseq
    %v2007 = vshrl.u32 %v2006, 7
    %v2008 = vsub.s32 6, %v2007
    %v2009 = vrot.slane %v1291, %v2008
    %v2010 = vmul.f32 %v2009, %v303
    %v2011 = vmul.f32 %v2009, %v304
    %v2012 = vmul.f32 %v2010, 1.442695
    %v2013 = vpow.pop %v2012
    %v2014 = vmul.f32 %v2011, 1.442695
    %v2015 = vpow.pop %v2014
    %v2016 = vmul.f32 %v2013, %v1980
    %v2017 = vmul.f32 %v2015, %v1981
    %2018 = vset.pattern.permute.xlu0 14
    %2019 = vperm.xlu0 %2018, %v1372
    %v2020 = vpop.permute.xlu0 %2019
    %2022 = vset.pattern.permute.xlu0 14
    %2023 = vperm.xlu0 %2022, %v1377
    %v2024 = vpop.permute.xlu0 %2023
    %v2026 = vlaneseq
    %v2027 = vshrl.u32 %v2026, 7
    %v2028 = vsub.s32 6, %v2027
    %v2029 = vrot.slane %v1609, %v2028
    %v2030 = vmul.f32 %v2020, %v2029
    %v2031 = vmul.f32 %v2024, %v2029
    %v2032 = vadd.f32 %v2016, %v2030
    %v2033 = vadd.f32 %v2017, %v2031
    %2034 = vset.pattern.permute.xlu0 14
    %2035 = vperm.xlu0 %2034, %v1382
    %v2036 = vpop.permute.xlu0 %2035
    %2038 = vset.pattern.permute.xlu0 14
    %2039 = vperm.xlu0 %2038, %v1387
    %v2040 = vpop.permute.xlu0 %2039
    %v2042 = vmul.f32 %v2032, %v2036
    %v2043 = vmul.f32 %v2033, %v2040
    %v2044 = vsel %vm1158, %v2042, 0.0
    %v2045 = vsel %vm1158, %v2043, 0.0
    %v2046 = vadd.f32 %v2044, %v2045
    %v2047 = vrot.slane %v2046, 4
    %v2048 = vadd.f32 %v2046, %v2047
    %v2049 = vrot.slane %v2048, 2
    %v2050 = vadd.f32 %v2048, %v2049
    %v2051 = vrot.slane %v2050, 1
    %v2052 = vadd.f32 %v2050, %v2051
    %v2053 = vrot.slane %v1152, 6
    %v2055 = vmul.f32 %v308, %v2053
    %v2056 = vadd.f32 %v2052, %v2055
    %v2057 = vadd.f32 %v1494, %v2056
    %v2058 = vlaneseq
    %v2059 = vshrl.u32 %v2058, 7
    %v2060 = vsub.s32 0, %v2059
    %v2061 = vrot.slane %v1292, %v2060
    %v2062 = vmul.f32 %v2061, %v303
    %v2063 = vmul.f32 %v2061, %v304
    %v2064 = vmul.f32 %v2062, 1.442695
    %v2065 = vpow.pop %v2064
    %v2066 = vmul.f32 %v2063, 1.442695
    %v2067 = vpow.pop %v2066
    %v2068 = vmul.f32 %v2065, %v2032
    %v2069 = vmul.f32 %v2067, %v2033
    %v2070 = vmul.f32 %v1292, %v1153
    %2071 = vset.pattern.permute.xlu0 16
    %2072 = vperm.xlu0 %2071, %v1372
    %v2073 = vpop.permute.xlu0 %2072
    %2075 = vset.pattern.permute.xlu0 16
    %2076 = vperm.xlu0 %2075, %v1377
    %v2077 = vpop.permute.xlu0 %2076
    %v2079 = vlaneseq
    %v2080 = vshrl.u32 %v2079, 7
    %v2081 = vsub.s32 0, %v2080
    %v2082 = vrot.slane %v2070, %v2081
    %v2083 = vmul.f32 %v2073, %v2082
    %v2084 = vmul.f32 %v2077, %v2082
    %v2085 = vadd.f32 %v2068, %v2083
    %v2086 = vadd.f32 %v2069, %v2084
    %2087 = vset.pattern.permute.xlu0 16
    %2088 = vperm.xlu0 %2087, %v1382
    %v2089 = vpop.permute.xlu0 %2088
    %2091 = vset.pattern.permute.xlu0 16
    %2092 = vperm.xlu0 %2091, %v1387
    %v2093 = vpop.permute.xlu0 %2092
    %v2095 = vmul.f32 %v2085, %v2089
    %v2096 = vmul.f32 %v2086, %v2093
    %v2097 = vsel %vm1158, %v2095, 0.0
    %v2098 = vsel %vm1158, %v2096, 0.0
    %v2099 = vadd.f32 %v2097, %v2098
    %v2100 = vrot.slane %v2099, 4
    %v2101 = vadd.f32 %v2099, %v2100
    %v2102 = vrot.slane %v2101, 2
    %v2103 = vadd.f32 %v2101, %v2102
    %v2104 = vrot.slane %v2103, 1
    %v2105 = vadd.f32 %v2103, %v2104
    %v2106 = vmul.f32 %v308, %v1153
    %v2107 = vadd.f32 %v2105, %v2106
    %v2108 = vadd.f32 %v1443, %v2107
    %v2109 = vlaneseq
    %v2110 = vshrl.u32 %v2109, 7
    %v2111 = vsub.s32 2, %v2110
    %v2112 = vrot.slane %v1292, %v2111
    %v2113 = vmul.f32 %v2112, %v303
    %v2114 = vmul.f32 %v2112, %v304
    %v2115 = vmul.f32 %v2113, 1.442695
    %v2116 = vpow.pop %v2115
    %v2117 = vmul.f32 %v2114, 1.442695
    %v2118 = vpow.pop %v2117
    %v2119 = vmul.f32 %v2116, %v2085
    %v2120 = vmul.f32 %v2118, %v2086
    %2121 = vset.pattern.permute.xlu0 18
    %2122 = vperm.xlu0 %2121, %v1372
    %v2123 = vpop.permute.xlu0 %2122
    %2125 = vset.pattern.permute.xlu0 18
    %2126 = vperm.xlu0 %2125, %v1377
    %v2127 = vpop.permute.xlu0 %2126
    %v2129 = vlaneseq
    %v2130 = vshrl.u32 %v2129, 7
    %v2131 = vsub.s32 2, %v2130
    %v2132 = vrot.slane %v2070, %v2131
    %v2133 = vmul.f32 %v2123, %v2132
    %v2134 = vmul.f32 %v2127, %v2132
    %v2135 = vadd.f32 %v2119, %v2133
    %v2136 = vadd.f32 %v2120, %v2134
    %2137 = vset.pattern.permute.xlu0 18
    %2138 = vperm.xlu0 %2137, %v1382
    %v2139 = vpop.permute.xlu0 %2138
    %2141 = vset.pattern.permute.xlu0 18
    %2142 = vperm.xlu0 %2141, %v1387
    %v2143 = vpop.permute.xlu0 %2142
    %v2145 = vmul.f32 %v2135, %v2139
    %v2146 = vmul.f32 %v2136, %v2143
    %v2147 = vsel %vm1158, %v2145, 0.0
    %v2148 = vsel %vm1158, %v2146, 0.0
    %v2149 = vadd.f32 %v2147, %v2148
    %v2150 = vrot.slane %v2149, 4
    %v2151 = vadd.f32 %v2149, %v2150
    %v2152 = vrot.slane %v2151, 2
    %v2153 = vadd.f32 %v2151, %v2152
    %v2154 = vrot.slane %v2153, 1
    %v2155 = vadd.f32 %v2153, %v2154
    %v2156 = vrot.slane %v1153, 2
    %v2158 = vmul.f32 %v308, %v2156
    %v2159 = vadd.f32 %v2155, %v2158
    %v2160 = vadd.f32 %v1646, %v2159
    %v2161 = vlaneseq
    %v2162 = vshrl.u32 %v2161, 7
    %v2163 = vsub.s32 3, %v2162
    %v2164 = vrot.slane %v1291, %v2163
    %v2165 = vmul.f32 %v2164, %v303
    %v2166 = vmul.f32 %v2164, %v304
    %v2167 = vmul.f32 %v2165, 1.442695
    %v2168 = vpow.pop %v2167
    %v2169 = vmul.f32 %v2166, 1.442695
    %v2170 = vpow.pop %v2169
    %v2171 = vmul.f32 %v2168, 0.0
    %v2172 = vmul.f32 %v2170, 0.0
    %2173 = vset.pattern.permute.xlu0 11
    %2174 = vperm.xlu0 %2173, %v1372
    %v2175 = vpop.permute.xlu0 %2174
    %2177 = vset.pattern.permute.xlu0 11
    %2178 = vperm.xlu0 %2177, %v1377
    %v2179 = vpop.permute.xlu0 %2178
    %v2181 = vlaneseq
    %v2182 = vshrl.u32 %v2181, 7
    %v2183 = vsub.s32 3, %v2182
    %v2184 = vrot.slane %v1609, %v2183
    %v2185 = vmul.f32 %v2175, %v2184
    %v2186 = vmul.f32 %v2179, %v2184
    %v2187 = vadd.f32 %v2171, %v2185
    %v2188 = vadd.f32 %v2172, %v2186
    %2189 = vset.pattern.permute.xlu0 11
    %2190 = vperm.xlu0 %2189, %v1382
    %v2191 = vpop.permute.xlu0 %2190
    %2193 = vset.pattern.permute.xlu0 11
    %2194 = vperm.xlu0 %2193, %v1387
    %v2195 = vpop.permute.xlu0 %2194
    %v2197 = vmul.f32 %v2187, %v2191
    %v2198 = vmul.f32 %v2188, %v2195
    %v2199 = vsel %vm1158, %v2197, 0.0
    %v2200 = vsel %vm1158, %v2198, 0.0
    %v2201 = vadd.f32 %v2199, %v2200
    %v2202 = vrot.slane %v2201, 4
    %v2203 = vadd.f32 %v2201, %v2202
    %v2204 = vrot.slane %v2203, 2
    %v2205 = vadd.f32 %v2203, %v2204
    %v2206 = vrot.slane %v2205, 1
    %v2207 = vadd.f32 %v2205, %v2206
    %v2208 = vrot.slane %v1152, 3
    %v2210 = vmul.f32 %v308, %v2208
    %v2211 = vadd.f32 %v2207, %v2210
    %v2212 = vadd.f32 %v1850, %v2211
    %v2213 = vlaneseq
    %v2214 = vshrl.u32 %v2213, 7
    %v2215 = vsub.s32 5, %v2214
    %v2216 = vrot.slane %v1291, %v2215
    %v2217 = vmul.f32 %v2216, %v303
    %v2218 = vmul.f32 %v2216, %v304
    %v2219 = vmul.f32 %v2217, 1.442695
    %v2220 = vpow.pop %v2219
    %v2221 = vmul.f32 %v2218, 1.442695
    %v2222 = vpow.pop %v2221
    %v2223 = vmul.f32 %v2220, %v2187
    %v2224 = vmul.f32 %v2222, %v2188
    %2225 = vset.pattern.permute.xlu0 13
    %2226 = vperm.xlu0 %2225, %v1372
    %v2227 = vpop.permute.xlu0 %2226
    %2229 = vset.pattern.permute.xlu0 13
    %2230 = vperm.xlu0 %2229, %v1377
    %v2231 = vpop.permute.xlu0 %2230
    %v2233 = vlaneseq
    %v2234 = vshrl.u32 %v2233, 7
    %v2235 = vsub.s32 5, %v2234
    %v2236 = vrot.slane %v1609, %v2235
    %v2237 = vmul.f32 %v2227, %v2236
    %v2238 = vmul.f32 %v2231, %v2236
    %v2239 = vadd.f32 %v2223, %v2237
    %v2240 = vadd.f32 %v2224, %v2238
    %2241 = vset.pattern.permute.xlu0 13
    %2242 = vperm.xlu0 %2241, %v1382
    %v2243 = vpop.permute.xlu0 %2242
    %2245 = vset.pattern.permute.xlu0 13
    %2246 = vperm.xlu0 %2245, %v1387
    %v2247 = vpop.permute.xlu0 %2246
    %v2249 = vmul.f32 %v2239, %v2243
    %v2250 = vmul.f32 %v2240, %v2247
    %v2251 = vsel %vm1158, %v2249, 0.0
    %v2252 = vsel %vm1158, %v2250, 0.0
    %v2253 = vadd.f32 %v2251, %v2252
    %v2254 = vrot.slane %v2253, 4
    %v2255 = vadd.f32 %v2253, %v2254
    %v2256 = vrot.slane %v2255, 2
    %v2257 = vadd.f32 %v2255, %v2256
    %v2258 = vrot.slane %v2257, 1
    %v2259 = vadd.f32 %v2257, %v2258
    %v2260 = vrot.slane %v1152, 5
    %v2262 = vmul.f32 %v308, %v2260
    %v2263 = vadd.f32 %v2259, %v2262
    %v2264 = vadd.f32 %v1799, %v2263
    %v2265 = vlaneseq
    %v2266 = vshrl.u32 %v2265, 7
    %v2267 = vsub.s32 7, %v2266
    %v2268 = vrot.slane %v1291, %v2267
    %v2269 = vmul.f32 %v2268, %v303
    %v2270 = vmul.f32 %v2268, %v304
    %v2271 = vmul.f32 %v2269, 1.442695
    %v2272 = vpow.pop %v2271
    %v2273 = vmul.f32 %v2270, 1.442695
    %v2274 = vpow.pop %v2273
    %v2275 = vmul.f32 %v2272, %v2239
    %v2276 = vmul.f32 %v2274, %v2240
    %2277 = vset.pattern.permute.xlu0 15
    %2278 = vperm.xlu0 %2277, %v1372
    %v2279 = vpop.permute.xlu0 %2278
    %2281 = vset.pattern.permute.xlu0 15
    %2282 = vperm.xlu0 %2281, %v1377
    %v2283 = vpop.permute.xlu0 %2282
    %v2285 = vlaneseq
    %v2286 = vshrl.u32 %v2285, 7
    %v2287 = vsub.s32 7, %v2286
    %v2288 = vrot.slane %v1609, %v2287
    %v2289 = vmul.f32 %v2279, %v2288
    %v2290 = vmul.f32 %v2283, %v2288
    %v2291 = vadd.f32 %v2275, %v2289
    %v2292 = vadd.f32 %v2276, %v2290
    %2293 = vset.pattern.permute.xlu0 15
    %2294 = vperm.xlu0 %2293, %v1382
    %v2295 = vpop.permute.xlu0 %2294
    %2297 = vset.pattern.permute.xlu0 15
    %2298 = vperm.xlu0 %2297, %v1387
    %v2299 = vpop.permute.xlu0 %2298
    %v2301 = vmul.f32 %v2291, %v2295
    %v2302 = vmul.f32 %v2292, %v2299
    %v2303 = vsel %vm1158, %v2301, 0.0
    %v2304 = vsel %vm1158, %v2302, 0.0
    %v2305 = vadd.f32 %v2303, %v2304
    %v2306 = vrot.slane %v2305, 4
    %v2307 = vadd.f32 %v2305, %v2306
    %v2308 = vrot.slane %v2307, 2
    %v2309 = vadd.f32 %v2307, %v2308
    %v2310 = vrot.slane %v2309, 1
    %v2311 = vadd.f32 %v2309, %v2310
    %v2312 = vrot.slane %v1152, 7
    %v2314 = vmul.f32 %v308, %v2312
    %v2315 = vadd.f32 %v2311, %v2314
    %v2316 = vadd.f32 %v1748, %v2315
    %v2317 = vlaneseq
    %v2318 = vshrl.u32 %v2317, 7
    %v2319 = vsub.s32 1, %v2318
    %v2320 = vrot.slane %v1292, %v2319
    %v2321 = vmul.f32 %v2320, %v303
    %v2322 = vmul.f32 %v2320, %v304
    %v2323 = vmul.f32 %v2321, 1.442695
    %v2324 = vpow.pop %v2323
    %v2325 = vmul.f32 %v2322, 1.442695
    %v2326 = vpow.pop %v2325
    %v2327 = vmul.f32 %v2324, %v2291
    %v2328 = vmul.f32 %v2326, %v2292
    %2329 = vset.pattern.permute.xlu0 17
    %2330 = vperm.xlu0 %2329, %v1372
    %v2331 = vpop.permute.xlu0 %2330
    %2333 = vset.pattern.permute.xlu0 17
    %2334 = vperm.xlu0 %2333, %v1377
    %v2335 = vpop.permute.xlu0 %2334
    %v2337 = vlaneseq
    %v2338 = vshrl.u32 %v2337, 7
    %v2339 = vsub.s32 1, %v2338
    %v2340 = vrot.slane %v2070, %v2339
    %v2341 = vmul.f32 %v2331, %v2340
    %v2342 = vmul.f32 %v2335, %v2340
    %v2343 = vadd.f32 %v2327, %v2341
    %v2344 = vadd.f32 %v2328, %v2342
    %2345 = vset.pattern.permute.xlu0 17
    %2346 = vperm.xlu0 %2345, %v1382
    %v2347 = vpop.permute.xlu0 %2346
    %2349 = vset.pattern.permute.xlu0 17
    %2350 = vperm.xlu0 %2349, %v1387
    %v2351 = vpop.permute.xlu0 %2350
    %v2353 = vmul.f32 %v2343, %v2347
    %v2354 = vmul.f32 %v2344, %v2351
    %v2355 = vsel %vm1158, %v2353, 0.0
    %v2356 = vsel %vm1158, %v2354, 0.0
    %v2357 = vadd.f32 %v2355, %v2356
    %v2358 = vrot.slane %v2357, 4
    %v2359 = vadd.f32 %v2357, %v2358
    %v2360 = vrot.slane %v2359, 2
    %v2361 = vadd.f32 %v2359, %v2360
    %v2362 = vrot.slane %v2361, 1
    %v2363 = vadd.f32 %v2361, %v2362
    %v2364 = vrot.slane %v1153, 1
    %v2366 = vmul.f32 %v308, %v2364
    %v2367 = vadd.f32 %v2363, %v2366
    %v2368 = vadd.f32 %v1697, %v2367
    %v2369 = vlaneseq
    %v2370 = vshrl.u32 %v2369, 7
    %v2371 = vsub.s32 3, %v2370
    %v2372 = vrot.slane %v1292, %v2371
    %v2373 = vmul.f32 %v2372, %v303
    %v2374 = vmul.f32 %v2372, %v304
    %v2375 = vmul.f32 %v2373, 1.442695
    %v2376 = vpow.pop %v2375
    %v2377 = vmul.f32 %v2374, 1.442695
    %v2378 = vpow.pop %v2377
    %v2379 = vmul.f32 %v2376, %v2343
    %v2380 = vmul.f32 %v2378, %v2344
    %2381 = vset.pattern.permute.xlu0 19
    %2382 = vperm.xlu0 %2381, %v1372
    %v2383 = vpop.permute.xlu0 %2382
    %2385 = vset.pattern.permute.xlu0 19
    %2386 = vperm.xlu0 %2385, %v1377
    %v2387 = vpop.permute.xlu0 %2386
    %v2389 = vlaneseq
    %v2390 = vshrl.u32 %v2389, 7
    %v2391 = vsub.s32 3, %v2390
    %v2392 = vrot.slane %v2070, %v2391
    %v2393 = vmul.f32 %v2383, %v2392
    %v2394 = vmul.f32 %v2387, %v2392
    %v2395 = vadd.f32 %v2379, %v2393
    %v2396 = vadd.f32 %v2380, %v2394
    %2397 = vset.pattern.permute.xlu0 19
    %2398 = vperm.xlu0 %2397, %v1382
    %v2399 = vpop.permute.xlu0 %2398
    %2401 = vset.pattern.permute.xlu0 19
    %2402 = vperm.xlu0 %2401, %v1387
    %v2403 = vpop.permute.xlu0 %2402
    %v2405 = vmul.f32 %v2395, %v2399
    %v2406 = vmul.f32 %v2396, %v2403
    %v2407 = vsel %vm1158, %v2405, 0.0
    %v2408 = vsel %vm1158, %v2406, 0.0
    %v2409 = vadd.f32 %v2407, %v2408
    %v2410 = vrot.slane %v2409, 4
    %v2411 = vadd.f32 %v2409, %v2410
    %v2412 = vrot.slane %v2411, 2
    %v2413 = vadd.f32 %v2411, %v2412
    %v2414 = vrot.slane %v2413, 1
    %v2415 = vadd.f32 %v2413, %v2414
    %v2416 = vrot.slane %v1153, 3
    %v2418 = vmul.f32 %v308, %v2416
    %v2419 = vadd.f32 %v2415, %v2418
    %v2420 = vadd.f32 %v1901, %v2419
    %v2422 = vrot.slane %v2368, 7
    %v2425 = vrot.slane %v2057, 6
    %v2428 = vrot.slane %v2316, 5
    %v2431 = vrot.slane %v2005, 4
    %v2434 = vrot.slane %v2264, 3
    %v2437 = vrot.slane %v1953, 2
    %v2440 = vrot.slane %v2212, 1
    %v2443 = vrot.slane %v2420, 7
    %vm2445 = vcmask 1040384
    %v2446 = vsel %vm2445, %v2108, %v2422
    %v2447 = vsel %vm768, %v2446, %v2425
    %vm2448 = vcmask 1042432
    %v2449 = vsel %vm2448, %v2447, %v2428
    %v2450 = vsel %vm846, %v2449, %v2431
    %vm2451 = vcmask 1044480
    %v2452 = vsel %vm2451, %v2450, %v2434
    %v2453 = vsel %vm1120, %v2452, %v2437
    %vm2454 = vcmask 1046528
    %v2455 = vsel %vm2454, %v2453, %v2440
    %v2456 = vsel %vm2445, %v2160, %v2443
    %v2457 = vmul.f32 %v2455, 0.5
    %v2458 = vmul.f32 %v2456, 0.5
    %v2459 = vmul.f32 %v2457, %v1057
    %v2460 = vmul.f32 %v2458, %v1058
    %v2462 = vsel %vm1158, %v2459, 0
    %v2465 = vsel %vm1158, %v2460, 0
    %2467 = vmatprep.subr.mxu0 0.0
    %2468 = vmatpush1.msra.mxu0 %v309
    %2469 = vmatprep.subr.mxu0 0.0
    %2470 = vmatpush1.msra.mxu0 %v310
    %2471 = vmatprep.subr.mxu0 0.0
    %2472 = vmatpush1.msra.mxu0 %v311
    %2473 = vmatprep.subr.mxu0 0.0
    %2474 = vmatpush1.msra.mxu0 %v312
    %2475 = vmatprep.subr.mxu0 0.0
    %2476 = vmatpush1.msra.mxu0 %v313
    %2477 = vmatprep.subr.mxu0 0.0
    %2478 = vmatpush1.msra.mxu0 %v314
    %2479 = vmatprep.subr.mxu0 0.0
    %2480 = vmatpush1.msra.mxu0 %v315
    %2481 = vmatprep.subr.mxu0 0.0
    %2482 = vmatpush1.msra.mxu0 %v316
    %2483 = vmatprep.subr.mxu0 0.0
    %2484 = vmatpush1.msra.mxu0 0.0
    %2485 = vmatprep.subr.mxu0 0.0
    %2486 = vmatpush1.msra.mxu0 0.0
    %2487 = vmatprep.subr.mxu0 0.0
    %2488 = vmatpush1.msra.mxu0 0.0
    %2489 = vmatprep.subr.mxu0 0.0
    %2490 = vmatpush1.msra.mxu0 0.0
    %2491 = vmatprep.subr.mxu0 0.0
    %2492 = vmatpush1.msra.mxu0 0.0
    %2493 = vmatprep.subr.mxu0 0.0
    %2494 = vmatpush1.msra.mxu0 0.0
    %2495 = vmatprep.subr.mxu0 0.0
    %2496 = vmatpush1.msra.mxu0 0.0
    %2497 = vmatprep.subr.mxu0 0.0
    %2498 = vmatpush1.msra.mxu0 0.0
    %2499 = vmatprep.subr.mxu0 0.0
    %2500 = vmatpush1.msra.mxu0 0.0
    %2501 = vmatprep.subr.mxu0 0.0
    %2502 = vmatpush1.msra.mxu0 0.0
    %2503 = vmatprep.subr.mxu0 0.0
    %2504 = vmatpush1.msra.mxu0 0.0
    %2505 = vmatprep.subr.mxu0 0.0
    %2506 = vmatpush1.msra.mxu0 0.0
    %2507 = vmatprep.subr.mxu0 0.0
    %2508 = vmatpush1.msra.mxu0 0.0
    %2509 = vmatprep.subr.mxu0 0.0
    %2510 = vmatpush1.msra.mxu0 0.0
    %2511 = vmatprep.subr.mxu0 0.0
    %2512 = vmatpush1.msra.mxu0 0.0
    %2513 = vmatprep.subr.mxu0 0.0
    %2514 = vmatpush1.msra.mxu0 0.0
    %2515 = vmatprep.subr.mxu0 0.0
    %2516 = vmatpush1.msra.mxu0 0.0
    %2517 = vmatprep.subr.mxu0 0.0
    %2518 = vmatpush1.msra.mxu0 0.0
    %2519 = vmatprep.subr.mxu0 0.0
    %2520 = vmatpush1.msra.mxu0 0.0
    %2521 = vmatprep.subr.mxu0 0.0
    %2522 = vmatpush1.msra.mxu0 0.0
    %2523 = vmatprep.subr.mxu0 0.0
    %2524 = vmatpush1.msra.mxu0 0.0
    %2525 = vmatprep.subr.mxu0 0.0
    %2526 = vmatpush1.msra.mxu0 0.0
    %2527 = vmatprep.subr.mxu0 0.0
    %2528 = vmatpush1.msra.mxu0 0.0
    %2529 = vmatprep.subr.mxu0 0.0
    %2530 = vmatpush1.msra.mxu0 0.0
    %2531 = vmatprep.mubr.f32.mxu0 0.0
    %2532 = vmatmul.mubr.f32.gmra.mrb[0].mxu0 %v2462
    %v2533 = vpop.f32.mrb[0].mxu0
    %v2534 = vadd.f32 %v757, %v2533
    %v2535 = vpop.f32.mrb[0].mxu0
    %2536 = vmatprep.mubr.f32.mxu0 0.0
    %2537 = vmatmul.mubr.f32.gmra.mrb[0].mxu0 %v2465
    %v2538 = vpop.f32.mrb[0].mxu0
    %v2539 = vadd.f32 %v284, %v2538
    %v2540 = vpop.f32.mrb[0].mxu0
    %2541 = vdwg.mxu0
    %vm2542 = vcmask 259072
    %v2543 = vsel %vm2542, %v847, 0.0
    %2544 = vadd.xlane.f32.xlu0 %v2543
    %v2545 = vpop.xlane.xlu0 %2544
    %v2546 = vmul.f32 %v2545, %v856
    %v2547 = vsub.f32 %v847, %v2546
    %v2548 = vmul.f32 %v2547, %v2547
    %v2549 = vsel %vm2542, %v2548, 0.0
    %2550 = vadd.xlane.f32.xlu0 %v2549
    %v2551 = vpop.xlane.xlu0 %2550
    %v2552 = vmul.f32 %v2551, %v856
    %v2553 = vadd.f32 %v2552, 1e-06
    %v2554 = vrsqrt.pop %v2553
    %v2555 = vmul.f32 %v2547, %v2554
    %v2556 = vlaneseq
    %v2557 = vshrl.u32 %v2556, 7
    %v2558 = vsub.s32 0, %v2557
    %v2559 = vrot.slane %v353, %v2558
    %v2560 = vmul.f32 %v2555, %v2559
    %v2561 = vlaneseq
    %v2562 = vshrl.u32 %v2561, 7
    %v2563 = vsub.s32 0, %v2562
    %v2564 = vrot.slane %v354, %v2563
    %v2565 = vadd.f32 %v2560, %v2564
    %v2567 = vsel %vm848, %v2565, 0
    %2569 = vmatprep.subr.mxu0 0.0
    %2570 = vmatpush1.msra.mxu0 %v323
    %2571 = vmatprep.subr.mxu0 0.0
    %2572 = vmatpush1.msra.mxu0 %v324
    %2573 = vmatprep.subr.mxu0 0.0
    %2574 = vmatpush1.msra.mxu0 %v325
    %2575 = vmatprep.subr.mxu0 0.0
    %2576 = vmatpush1.msra.mxu0 %v326
    %2577 = vmatprep.subr.mxu0 0.0
    %2578 = vmatpush1.msra.mxu0 0.0
    %2579 = vmatprep.subr.mxu0 0.0
    %2580 = vmatpush1.msra.mxu0 0.0
    %2581 = vmatprep.subr.mxu0 0.0
    %2582 = vmatpush1.msra.mxu0 0.0
    %2583 = vmatprep.subr.mxu0 0.0
    %2584 = vmatpush1.msra.mxu0 0.0
    %2585 = vmatprep.subr.mxu0 0.0
    %2586 = vmatpush1.msra.mxu0 0.0
    %2587 = vmatprep.subr.mxu0 0.0
    %2588 = vmatpush1.msra.mxu0 0.0
    %2589 = vmatprep.subr.mxu0 0.0
    %2590 = vmatpush1.msra.mxu0 0.0
    %2591 = vmatprep.subr.mxu0 0.0
    %2592 = vmatpush1.msra.mxu0 0.0
    %2593 = vmatprep.subr.mxu0 0.0
    %2594 = vmatpush1.msra.mxu0 0.0
    %2595 = vmatprep.subr.mxu0 0.0
    %2596 = vmatpush1.msra.mxu0 0.0
    %2597 = vmatprep.subr.mxu0 0.0
    %2598 = vmatpush1.msra.mxu0 0.0
    %2599 = vmatprep.subr.mxu0 0.0
    %2600 = vmatpush1.msra.mxu0 0.0
    %2601 = vmatprep.subr.mxu0 0.0
    %2602 = vmatpush1.msra.mxu0 0.0
    %2603 = vmatprep.subr.mxu0 0.0
    %2604 = vmatpush1.msra.mxu0 0.0
    %2605 = vmatprep.subr.mxu0 0.0
    %2606 = vmatpush1.msra.mxu0 0.0
    %2607 = vmatprep.subr.mxu0 0.0
    %2608 = vmatpush1.msra.mxu0 0.0
    %2609 = vmatprep.subr.mxu0 0.0
    %2610 = vmatpush1.msra.mxu0 0.0
    %2611 = vmatprep.subr.mxu0 0.0
    %2612 = vmatpush1.msra.mxu0 0.0
    %2613 = vmatprep.subr.mxu0 0.0
    %2614 = vmatpush1.msra.mxu0 0.0
    %2615 = vmatprep.subr.mxu0 0.0
    %2616 = vmatpush1.msra.mxu0 0.0
    %2617 = vmatprep.subr.mxu0 0.0
    %2618 = vmatpush1.msra.mxu0 0.0
    %2619 = vmatprep.subr.mxu0 0.0
    %2620 = vmatpush1.msra.mxu0 0.0
    %2621 = vmatprep.subr.mxu0 0.0
    %2622 = vmatpush1.msra.mxu0 0.0
    %2623 = vmatprep.subr.mxu0 0.0
    %2624 = vmatpush1.msra.mxu0 0.0
    %2625 = vmatprep.subr.mxu0 0.0
    %2626 = vmatpush1.msra.mxu0 0.0
    %2627 = vmatprep.subr.mxu0 0.0
    %2628 = vmatpush1.msra.mxu0 0.0
    %2629 = vmatprep.subr.mxu0 0.0
    %2630 = vmatpush1.msra.mxu0 0.0
    %2631 = vmatprep.subr.mxu0 0.0
    %2632 = vmatpush1.msra.mxu0 0.0
    %2633 = vmatprep.mubr.f32.mxu0 0.0
    %2634 = vmatmul.mubr.f32.gmra.mrb[0].mxu0 %v2567
    %v2635 = vpop.f32.mrb[0].mxu0
    %v2636 = vadd.f32 0.0, %v2635
    %v2637 = vpop.f32.mrb[0].mxu0
    %2638 = vdwg.mxu0
    %2639 = vmatprep.subr.mxu0 0.0
    %2640 = vmatpush1.msra.mxu0 %v327
    %2641 = vmatprep.subr.mxu0 0.0
    %2642 = vmatpush1.msra.mxu0 %v328
    %2643 = vmatprep.subr.mxu0 0.0
    %2644 = vmatpush1.msra.mxu0 %v329
    %2645 = vmatprep.subr.mxu0 0.0
    %2646 = vmatpush1.msra.mxu0 %v330
    %2647 = vmatprep.subr.mxu0 0.0
    %2648 = vmatpush1.msra.mxu0 0.0
    %2649 = vmatprep.subr.mxu0 0.0
    %2650 = vmatpush1.msra.mxu0 0.0
    %2651 = vmatprep.subr.mxu0 0.0
    %2652 = vmatpush1.msra.mxu0 0.0
    %2653 = vmatprep.subr.mxu0 0.0
    %2654 = vmatpush1.msra.mxu0 0.0
    %2655 = vmatprep.subr.mxu0 0.0
    %2656 = vmatpush1.msra.mxu0 0.0
    %2657 = vmatprep.subr.mxu0 0.0
    %2658 = vmatpush1.msra.mxu0 0.0
    %2659 = vmatprep.subr.mxu0 0.0
    %2660 = vmatpush1.msra.mxu0 0.0
    %2661 = vmatprep.subr.mxu0 0.0
    %2662 = vmatpush1.msra.mxu0 0.0
    %2663 = vmatprep.subr.mxu0 0.0
    %2664 = vmatpush1.msra.mxu0 0.0
    %2665 = vmatprep.subr.mxu0 0.0
    %2666 = vmatpush1.msra.mxu0 0.0
    %2667 = vmatprep.subr.mxu0 0.0
    %2668 = vmatpush1.msra.mxu0 0.0
    %2669 = vmatprep.subr.mxu0 0.0
    %2670 = vmatpush1.msra.mxu0 0.0
    %2671 = vmatprep.subr.mxu0 0.0
    %2672 = vmatpush1.msra.mxu0 0.0
    %2673 = vmatprep.subr.mxu0 0.0
    %2674 = vmatpush1.msra.mxu0 0.0
    %2675 = vmatprep.subr.mxu0 0.0
    %2676 = vmatpush1.msra.mxu0 0.0
    %2677 = vmatprep.subr.mxu0 0.0
    %2678 = vmatpush1.msra.mxu0 0.0
    %2679 = vmatprep.subr.mxu0 0.0
    %2680 = vmatpush1.msra.mxu0 0.0
    %2681 = vmatprep.subr.mxu0 0.0
    %2682 = vmatpush1.msra.mxu0 0.0
    %2683 = vmatprep.subr.mxu0 0.0
    %2684 = vmatpush1.msra.mxu0 0.0
    %2685 = vmatprep.subr.mxu0 0.0
    %2686 = vmatpush1.msra.mxu0 0.0
    %2687 = vmatprep.subr.mxu0 0.0
    %2688 = vmatpush1.msra.mxu0 0.0
    %2689 = vmatprep.subr.mxu0 0.0
    %2690 = vmatpush1.msra.mxu0 0.0
    %2691 = vmatprep.subr.mxu0 0.0
    %2692 = vmatpush1.msra.mxu0 0.0
    %2693 = vmatprep.subr.mxu0 0.0
    %2694 = vmatpush1.msra.mxu0 0.0
    %2695 = vmatprep.subr.mxu0 0.0
    %2696 = vmatpush1.msra.mxu0 0.0
    %2697 = vmatprep.subr.mxu0 0.0
    %2698 = vmatpush1.msra.mxu0 0.0
    %2699 = vmatprep.subr.mxu0 0.0
    %2700 = vmatpush1.msra.mxu0 0.0
    %2701 = vmatprep.subr.mxu0 0.0
    %2702 = vmatpush1.msra.mxu0 0.0
    %2703 = vmatprep.mubr.f32.mxu0 0.0
    %2704 = vmatmul.mubr.f32.gmra.mrb[0].mxu0 %v2567
    %v2705 = vpop.f32.mrb[0].mxu0
    %v2706 = vadd.f32 0.0, %v2705
    %v2707 = vpop.f32.mrb[0].mxu0
    %2708 = vdwg.mxu0
    %v2709 = vsub.f32 0.0, %v2706
    %v2710 = vmul.f32 %v2709, 1.442695
    %v2711 = vpow.pop %v2710
    %v2712 = vadd.f32 %v2711, 1.0
    %v2713 = vrcp.pop %v2712
    %v2714 = vmul.f32 1.0, %v2713
    %v2715 = vmul.f32 %v2706, %v2714
    %v2716 = vlaneseq
    %v2717 = vshrl.u32 %v2716, 7
    %v2718 = vsub.s32 3, %v2717
    %v2719 = vrot.slane %v341, %v2718
    %v2720 = vmul.f32 %v2636, %v2719
    %v2721 = vlaneseq
    %v2722 = vshrl.u32 %v2721, 7
    %v2723 = vsub.s32 2, %v2722
    %v2724 = vrot.slane %v341, %v2723
    %v2725 = vmul.f32 %v2636, %v2724
    %v2727 = vrot.slane %v2725, 6
    %v2729 = vadd.f32 %v2720, %v2727
    %v2730 = vlaneseq
    %v2731 = vshrl.u32 %v2730, 7
    %v2732 = vsub.s32 1, %v2731
    %v2733 = vrot.slane %v341, %v2732
    %v2734 = vmul.f32 %v2636, %v2733
    %v2736 = vrot.slane %v2734, 4
    %v2738 = vadd.f32 %v2729, %v2736
    %v2739 = vrot.slane %v2725, 2
    %v2741 = vadd.f32 %v2720, %v2739
    %v2742 = vrot.slane %v2725, 4
    %v2744 = vadd.f32 %v2720, %v2742
    %v2745 = vrot.slane %v2734, 6
    %v2747 = vadd.f32 %v2744, %v2745
    %v2749 = vrot.slane %v2720, 4
    %v2752 = vrot.slane %v2747, 2
    %v2754 = vsel %vm768, %v2720, %v2729
    %v2755 = vsel %vm846, %v2754, %v2738
    %v2756 = vsel %vm1120, %v2755, %v2749
    %v2757 = vsel %vm768, %v2741, %v2752
    %v2758 = vlaneseq
    %v2759 = vshrl.u32 %v2758, 7
    %v2760 = vsub.s32 0, %v2759
    %v2761 = vrot.slane %v342, %v2760
    %v2762 = vadd.f32 %v2756, %v2761
    %v2763 = vadd.f32 %v2757, %v2761
    %v2764 = vsub.f32 0.0, %v2762
    %v2765 = vsub.f32 0.0, %v2763
    %v2766 = vmul.f32 %v2764, 1.442695
    %v2767 = vpow.pop %v2766
    %v2768 = vmul.f32 %v2765, 1.442695
    %v2769 = vpow.pop %v2768
    %v2770 = vadd.f32 %v2767, 1.0
    %v2771 = vadd.f32 %v2769, 1.0
    %v2772 = vrcp.pop %v2770
    %v2773 = vmul.f32 1.0, %v2772
    %v2774 = vrcp.pop %v2771
    %v2775 = vmul.f32 1.0, %v2774
    %v2776 = vmul.f32 %v2762, %v2773
    %v2777 = vmul.f32 %v2763, %v2775
    %v2778 = vlaneseq
    %v2779 = vshrl.u32 %v2778, 7
    %v2780 = vsub.s32 0, %v2779
    %v2781 = vrot.slane %v343, %v2780
    %v2783 = vsel %vm1158, %v2776, 0
    %v2786 = vsel %vm1158, %v2777, 0
    %2788 = vmatprep.subr.mxu0 0.0
    %2789 = vmatpush1.msra.mxu0 %v331
    %2790 = vmatprep.subr.mxu0 0.0
    %2791 = vmatpush1.msra.mxu0 %v332
    %2792 = vmatprep.subr.mxu0 0.0
    %2793 = vmatpush1.msra.mxu0 %v333
    %2794 = vmatprep.subr.mxu0 0.0
    %2795 = vmatpush1.msra.mxu0 %v334
    %2796 = vmatprep.subr.mxu0 0.0
    %2797 = vmatpush1.msra.mxu0 %v335
    %2798 = vmatprep.subr.mxu0 0.0
    %2799 = vmatpush1.msra.mxu0 %v336
    %2800 = vmatprep.subr.mxu0 0.0
    %2801 = vmatpush1.msra.mxu0 %v337
    %2802 = vmatprep.subr.mxu0 0.0
    %2803 = vmatpush1.msra.mxu0 %v338
    %2804 = vmatprep.subr.mxu0 0.0
    %2805 = vmatpush1.msra.mxu0 0.0
    %2806 = vmatprep.subr.mxu0 0.0
    %2807 = vmatpush1.msra.mxu0 0.0
    %2808 = vmatprep.subr.mxu0 0.0
    %2809 = vmatpush1.msra.mxu0 0.0
    %2810 = vmatprep.subr.mxu0 0.0
    %2811 = vmatpush1.msra.mxu0 0.0
    %2812 = vmatprep.subr.mxu0 0.0
    %2813 = vmatpush1.msra.mxu0 0.0
    %2814 = vmatprep.subr.mxu0 0.0
    %2815 = vmatpush1.msra.mxu0 0.0
    %2816 = vmatprep.subr.mxu0 0.0
    %2817 = vmatpush1.msra.mxu0 0.0
    %2818 = vmatprep.subr.mxu0 0.0
    %2819 = vmatpush1.msra.mxu0 0.0
    %2820 = vmatprep.subr.mxu0 0.0
    %2821 = vmatpush1.msra.mxu0 0.0
    %2822 = vmatprep.subr.mxu0 0.0
    %2823 = vmatpush1.msra.mxu0 0.0
    %2824 = vmatprep.subr.mxu0 0.0
    %2825 = vmatpush1.msra.mxu0 0.0
    %2826 = vmatprep.subr.mxu0 0.0
    %2827 = vmatpush1.msra.mxu0 0.0
    %2828 = vmatprep.subr.mxu0 0.0
    %2829 = vmatpush1.msra.mxu0 0.0
    %2830 = vmatprep.subr.mxu0 0.0
    %2831 = vmatpush1.msra.mxu0 0.0
    %2832 = vmatprep.subr.mxu0 0.0
    %2833 = vmatpush1.msra.mxu0 0.0
    %2834 = vmatprep.subr.mxu0 0.0
    %2835 = vmatpush1.msra.mxu0 0.0
    %2836 = vmatprep.subr.mxu0 0.0
    %2837 = vmatpush1.msra.mxu0 0.0
    %2838 = vmatprep.subr.mxu0 0.0
    %2839 = vmatpush1.msra.mxu0 0.0
    %2840 = vmatprep.subr.mxu0 0.0
    %2841 = vmatpush1.msra.mxu0 0.0
    %2842 = vmatprep.subr.mxu0 0.0
    %2843 = vmatpush1.msra.mxu0 0.0
    %2844 = vmatprep.subr.mxu0 0.0
    %2845 = vmatpush1.msra.mxu0 0.0
    %2846 = vmatprep.subr.mxu0 0.0
    %2847 = vmatpush1.msra.mxu0 0.0
    %2848 = vmatprep.subr.mxu0 0.0
    %2849 = vmatpush1.msra.mxu0 0.0
    %2850 = vmatprep.subr.mxu0 0.0
    %2851 = vmatpush1.msra.mxu0 0.0
    %2852 = vmatprep.mubr.f32.mxu0 0.0
    %2853 = vmatmul.mubr.f32.gmra.mrb[0].mxu0 %v2783
    %v2854 = vpop.f32.mrb[0].mxu0
    %v2855 = vadd.f32 %v2781, %v2854
    %v2856 = vpop.f32.mrb[0].mxu0
    %2857 = vmatprep.mubr.f32.mxu0 0.0
    %2858 = vmatmul.mubr.f32.gmra.mrb[0].mxu0 %v2786
    %v2859 = vpop.f32.mrb[0].mxu0
    %v2860 = vadd.f32 %v2781, %v2859
    %v2861 = vpop.f32.mrb[0].mxu0
    %2862 = vdwg.mxu0
    %v2863 = vmax.f32 %v2855, 0.0
    %v2864 = vmax.f32 %v2860, 0.0
    %v2865 = vand.u32 2147483647, %v2855
    %v2866 = vand.u32 2147483647, %v2860
    %v2867 = vsub.f32 0.0, %v2865
    %v2868 = vsub.f32 0.0, %v2866
    %v2869 = vmul.f32 %v2867, 1.442695
    %v2870 = vpow.pop %v2869
    %v2871 = vmul.f32 %v2868, 1.442695
    %v2872 = vpow.pop %v2871
    %v2873 = vadd.f32 %v2870, 1.0
    %v2874 = vlog2.pop %v2873
    %v2875 = vmul.f32 %v2874, 0.6931472
    %v2876 = vmul.f32 -0.5, %v2870
    %v2877 = vadd.f32 %v2876, 1.0
    %v2878 = vmul.f32 %v2877, %v2870
    %v2879 = vand.u32 2147483647, %v2870
    %vm2880 = vcmp.lt.f32.partialorder %v2879, 0.0004427343
    %v2881 = vsel %vm2880, %v2878, %v2875
    %v2882 = vadd.f32 %v2872, 1.0
    %v2883 = vlog2.pop %v2882
    %v2884 = vmul.f32 %v2883, 0.6931472
    %v2885 = vmul.f32 -0.5, %v2872
    %v2886 = vadd.f32 %v2885, 1.0
    %v2887 = vmul.f32 %v2886, %v2872
    %v2888 = vand.u32 2147483647, %v2872
    %vm2889 = vcmp.lt.f32.partialorder %v2888, 0.0004427343
    %v2890 = vsel %vm2889, %v2887, %v2884
    %v2891 = vadd.f32 %v2863, %v2881
    %v2892 = vadd.f32 %v2864, %v2890
    %v2894 = vsel %vm1158, %v355, 0
    %v2897 = vsel %vm1158, %v356, 0
    %v2900 = vsel %vm1158, %v357, 0
    %v2903 = vsel %vm1158, %v358, 0
    %2905 = vmatprep.subr.mxu0 0.0
    %2906 = vmatpush1.xpose.msra.mxu0 %v2783
    %2907 = vmatprep.subr.mxu0 0.0
    %2908 = vmatpush1.xpose.msra.mxu0 %v2786
    %2909 = vmatprep.subr.mxu0 0.0
    %2910 = vmatpush1.xpose.msra.mxu0 0.0
    %2911 = vmatprep.subr.mxu0 0.0
    %2912 = vmatpush1.xpose.msra.mxu0 0.0
    %2913 = vmatprep.subr.mxu0 0.0
    %2914 = vmatpush1.xpose.msra.mxu0 0.0
    %2915 = vmatprep.subr.mxu0 0.0
    %2916 = vmatpush1.xpose.msra.mxu0 0.0
    %2917 = vmatprep.subr.mxu0 0.0
    %2918 = vmatpush1.xpose.msra.mxu0 0.0
    %2919 = vmatprep.subr.mxu0 0.0
    %2920 = vmatpush1.xpose.msra.mxu0 0.0
    %2921 = vmatprep.subr.mxu0 0.0
    %2922 = vmatpush1.xpose.msra.mxu0 0.0
    %2923 = vmatprep.subr.mxu0 0.0
    %2924 = vmatpush1.xpose.msra.mxu0 0.0
    %2925 = vmatprep.subr.mxu0 0.0
    %2926 = vmatpush1.xpose.msra.mxu0 0.0
    %2927 = vmatprep.subr.mxu0 0.0
    %2928 = vmatpush1.xpose.msra.mxu0 0.0
    %2929 = vmatprep.subr.mxu0 0.0
    %2930 = vmatpush1.xpose.msra.mxu0 0.0
    %2931 = vmatprep.subr.mxu0 0.0
    %2932 = vmatpush1.xpose.msra.mxu0 0.0
    %2933 = vmatprep.subr.mxu0 0.0
    %2934 = vmatpush1.xpose.msra.mxu0 0.0
    %2935 = vmatprep.subr.mxu0 0.0
    %2936 = vmatpush1.xpose.msra.mxu0 0.0
    %2937 = vmatprep.subr.mxu0 0.0
    %2938 = vmatpush1.xpose.msra.mxu0 0.0
    %2939 = vmatprep.subr.mxu0 0.0
    %2940 = vmatpush1.xpose.msra.mxu0 0.0
    %2941 = vmatprep.subr.mxu0 0.0
    %2942 = vmatpush1.xpose.msra.mxu0 0.0
    %2943 = vmatprep.subr.mxu0 0.0
    %2944 = vmatpush1.xpose.msra.mxu0 0.0
    %2945 = vmatprep.subr.mxu0 0.0
    %2946 = vmatpush1.xpose.msra.mxu0 0.0
    %2947 = vmatprep.subr.mxu0 0.0
    %2948 = vmatpush1.xpose.msra.mxu0 0.0
    %2949 = vmatprep.subr.mxu0 0.0
    %2950 = vmatpush1.xpose.msra.mxu0 0.0
    %2951 = vmatprep.subr.mxu0 0.0
    %2952 = vmatpush1.xpose.msra.mxu0 0.0
    %2953 = vmatprep.subr.mxu0 0.0
    %2954 = vmatpush1.xpose.msra.mxu0 0.0
    %2955 = vmatprep.subr.mxu0 0.0
    %2956 = vmatpush1.xpose.msra.mxu0 0.0
    %2957 = vmatprep.subr.mxu0 0.0
    %2958 = vmatpush1.xpose.msra.mxu0 0.0
    %2959 = vmatprep.subr.mxu0 0.0
    %2960 = vmatpush1.xpose.msra.mxu0 0.0
    %2961 = vmatprep.subr.mxu0 0.0
    %2962 = vmatpush1.xpose.msra.mxu0 0.0
    %2963 = vmatprep.subr.mxu0 0.0
    %2964 = vmatpush1.xpose.msra.mxu0 0.0
    %2965 = vmatprep.subr.mxu0 0.0
    %2966 = vmatpush1.xpose.msra.mxu0 0.0
    %2967 = vmatprep.subr.mxu0 0.0
    %2968 = vmatpush1.xpose.msra.mxu0 0.0
    %2969 = vmatprep.mubr.f32.mxu0 0.0
    %2970 = vmatmul.mubr.f32.gmra.mrb[0].mxu0 %v2894
    %v2971 = vpop.f32.mrb[0].mxu0
    %v2972 = vadd.f32 0.0, %v2971
    %v2973 = vpop.f32.mrb[0].mxu0
    %2974 = vmatprep.mubr.f32.mxu0 0.0
    %2975 = vmatmul.mubr.f32.gmra.mrb[0].mxu0 %v2897
    %v2976 = vpop.f32.mrb[0].mxu0
    %v2977 = vadd.f32 0.0, %v2976
    %v2978 = vpop.f32.mrb[0].mxu0
    %2979 = vmatprep.mubr.f32.mxu0 0.0
    %2980 = vmatmul.mubr.f32.gmra.mrb[0].mxu0 %v2900
    %v2981 = vpop.f32.mrb[0].mxu0
    %v2982 = vadd.f32 0.0, %v2981
    %v2983 = vpop.f32.mrb[0].mxu0
    %2984 = vmatprep.mubr.f32.mxu0 0.0
    %2985 = vmatmul.mubr.f32.gmra.mrb[0].mxu0 %v2903
    %v2986 = vpop.f32.mrb[0].mxu0
    %v2987 = vadd.f32 0.0, %v2986
    %v2988 = vpop.f32.mrb[0].mxu0
    %2989 = vdwg.mxu0
    %v2990 = vlaneseq
    %v2991 = vshrl.u32 %v2990, 7
    %v2992 = vsub.s32 0, %v2991
    %v2993 = vrot.slane %v2891, %v2992
    %v2994 = vmul.f32 %v2993, %v339
    %v2995 = vmul.f32 %v2993, %v340
    %v2996 = vmul.f32 %v2994, 1.442695
    %v2997 = vpow.pop %v2996
    %v2998 = vmul.f32 %v2995, 1.442695
    %v2999 = vpow.pop %v2998
    %v3000 = vmul.f32 %v2997, 0.0
    %v3001 = vmul.f32 %v2999, 0.0
    %v3002 = vmul.f32 %v2891, %v2776
    %3004 = vset.pattern.permute.xlu0 0
    %3005 = vperm.xlu0 %3004, %v2972
    %v3006 = vpop.permute.xlu0 %3005
    %3009 = vset.pattern.permute.xlu0 0
    %3010 = vperm.xlu0 %3009, %v2977
    %v3011 = vpop.permute.xlu0 %3010
    %v3013 = vlaneseq
    %v3014 = vshrl.u32 %v3013, 7
    %v3015 = vsub.s32 0, %v3014
    %v3016 = vrot.slane %v3002, %v3015
    %v3017 = vmul.f32 %v3006, %v3016
    %v3018 = vmul.f32 %v3011, %v3016
    %v3019 = vadd.f32 %v3000, %v3017
    %v3020 = vadd.f32 %v3001, %v3018
    %3022 = vset.pattern.permute.xlu0 0
    %3023 = vperm.xlu0 %3022, %v2982
    %v3024 = vpop.permute.xlu0 %3023
    %3027 = vset.pattern.permute.xlu0 0
    %3028 = vperm.xlu0 %3027, %v2987
    %v3029 = vpop.permute.xlu0 %3028
    %v3031 = vmul.f32 %v3019, %v3024
    %v3032 = vmul.f32 %v3020, %v3029
    %v3033 = vsel %vm1158, %v3031, 0.0
    %v3034 = vsel %vm1158, %v3032, 0.0
    %v3035 = vadd.f32 %v3033, %v3034
    %v3036 = vrot.slane %v3035, 4
    %v3037 = vadd.f32 %v3035, %v3036
    %v3038 = vrot.slane %v3037, 2
    %v3039 = vadd.f32 %v3037, %v3038
    %v3040 = vrot.slane %v3039, 1
    %v3041 = vadd.f32 %v3039, %v3040
    %v3042 = vmul.f32 %v344, %v2776
    %v3043 = vadd.f32 %v3041, %v3042
    %v3044 = vlaneseq
    %v3045 = vshrl.u32 %v3044, 7
    %v3046 = vsub.s32 2, %v3045
    %v3047 = vrot.slane %v2891, %v3046
    %v3048 = vmul.f32 %v3047, %v339
    %v3049 = vmul.f32 %v3047, %v340
    %v3050 = vmul.f32 %v3048, 1.442695
    %v3051 = vpow.pop %v3050
    %v3052 = vmul.f32 %v3049, 1.442695
    %v3053 = vpow.pop %v3052
    %v3054 = vmul.f32 %v3051, %v3019
    %v3055 = vmul.f32 %v3053, %v3020
    %3056 = vset.pattern.permute.xlu0 2
    %3057 = vperm.xlu0 %3056, %v2972
    %v3058 = vpop.permute.xlu0 %3057
    %3060 = vset.pattern.permute.xlu0 2
    %3061 = vperm.xlu0 %3060, %v2977
    %v3062 = vpop.permute.xlu0 %3061
    %v3064 = vlaneseq
    %v3065 = vshrl.u32 %v3064, 7
    %v3066 = vsub.s32 2, %v3065
    %v3067 = vrot.slane %v3002, %v3066
    %v3068 = vmul.f32 %v3058, %v3067
    %v3069 = vmul.f32 %v3062, %v3067
    %v3070 = vadd.f32 %v3054, %v3068
    %v3071 = vadd.f32 %v3055, %v3069
    %3072 = vset.pattern.permute.xlu0 2
    %3073 = vperm.xlu0 %3072, %v2982
    %v3074 = vpop.permute.xlu0 %3073
    %3076 = vset.pattern.permute.xlu0 2
    %3077 = vperm.xlu0 %3076, %v2987
    %v3078 = vpop.permute.xlu0 %3077
    %v3080 = vmul.f32 %v3070, %v3074
    %v3081 = vmul.f32 %v3071, %v3078
    %v3082 = vsel %vm1158, %v3080, 0.0
    %v3083 = vsel %vm1158, %v3081, 0.0
    %v3084 = vadd.f32 %v3082, %v3083
    %v3085 = vrot.slane %v3084, 4
    %v3086 = vadd.f32 %v3084, %v3085
    %v3087 = vrot.slane %v3086, 2
    %v3088 = vadd.f32 %v3086, %v3087
    %v3089 = vrot.slane %v3088, 1
    %v3090 = vadd.f32 %v3088, %v3089
    %v3091 = vrot.slane %v2776, 2
    %v3093 = vmul.f32 %v344, %v3091
    %v3094 = vadd.f32 %v3090, %v3093
    %v3095 = vlaneseq
    %v3096 = vshrl.u32 %v3095, 7
    %v3097 = vsub.s32 4, %v3096
    %v3098 = vrot.slane %v2891, %v3097
    %v3099 = vmul.f32 %v3098, %v339
    %v3100 = vmul.f32 %v3098, %v340
    %v3101 = vmul.f32 %v3099, 1.442695
    %v3102 = vpow.pop %v3101
    %v3103 = vmul.f32 %v3100, 1.442695
    %v3104 = vpow.pop %v3103
    %v3105 = vmul.f32 %v3102, %v3070
    %v3106 = vmul.f32 %v3104, %v3071
    %3107 = vset.pattern.permute.xlu0 4
    %3108 = vperm.xlu0 %3107, %v2972
    %v3109 = vpop.permute.xlu0 %3108
    %3111 = vset.pattern.permute.xlu0 4
    %3112 = vperm.xlu0 %3111, %v2977
    %v3113 = vpop.permute.xlu0 %3112
    %v3115 = vlaneseq
    %v3116 = vshrl.u32 %v3115, 7
    %v3117 = vsub.s32 4, %v3116
    %v3118 = vrot.slane %v3002, %v3117
    %v3119 = vmul.f32 %v3109, %v3118
    %v3120 = vmul.f32 %v3113, %v3118
    %v3121 = vadd.f32 %v3105, %v3119
    %v3122 = vadd.f32 %v3106, %v3120
    %3123 = vset.pattern.permute.xlu0 4
    %3124 = vperm.xlu0 %3123, %v2982
    %v3125 = vpop.permute.xlu0 %3124
    %3127 = vset.pattern.permute.xlu0 4
    %3128 = vperm.xlu0 %3127, %v2987
    %v3129 = vpop.permute.xlu0 %3128
    %v3131 = vmul.f32 %v3121, %v3125
    %v3132 = vmul.f32 %v3122, %v3129
    %v3133 = vsel %vm1158, %v3131, 0.0
    %v3134 = vsel %vm1158, %v3132, 0.0
    %v3135 = vadd.f32 %v3133, %v3134
    %v3136 = vrot.slane %v3135, 4
    %v3137 = vadd.f32 %v3135, %v3136
    %v3138 = vrot.slane %v3137, 2
    %v3139 = vadd.f32 %v3137, %v3138
    %v3140 = vrot.slane %v3139, 1
    %v3141 = vadd.f32 %v3139, %v3140
    %v3142 = vrot.slane %v2776, 4
    %v3144 = vmul.f32 %v344, %v3142
    %v3145 = vadd.f32 %v3141, %v3144
    %v3146 = vlaneseq
    %v3147 = vshrl.u32 %v3146, 7
    %v3148 = vsub.s32 1, %v3147
    %v3149 = vrot.slane %v2891, %v3148
    %v3150 = vmul.f32 %v3149, %v339
    %v3151 = vmul.f32 %v3149, %v340
    %v3152 = vmul.f32 %v3150, 1.442695
    %v3153 = vpow.pop %v3152
    %v3154 = vmul.f32 %v3151, 1.442695
    %v3155 = vpow.pop %v3154
    %v3156 = vmul.f32 %v3153, 0.0
    %v3157 = vmul.f32 %v3155, 0.0
    %3158 = vset.pattern.permute.xlu0 1
    %3159 = vperm.xlu0 %3158, %v2972
    %v3160 = vpop.permute.xlu0 %3159
    %3162 = vset.pattern.permute.xlu0 1
    %3163 = vperm.xlu0 %3162, %v2977
    %v3164 = vpop.permute.xlu0 %3163
    %v3166 = vlaneseq
    %v3167 = vshrl.u32 %v3166, 7
    %v3168 = vsub.s32 1, %v3167
    %v3169 = vrot.slane %v3002, %v3168
    %v3170 = vmul.f32 %v3160, %v3169
    %v3171 = vmul.f32 %v3164, %v3169
    %v3172 = vadd.f32 %v3156, %v3170
    %v3173 = vadd.f32 %v3157, %v3171
    %3174 = vset.pattern.permute.xlu0 1
    %3175 = vperm.xlu0 %3174, %v2982
    %v3176 = vpop.permute.xlu0 %3175
    %3178 = vset.pattern.permute.xlu0 1
    %3179 = vperm.xlu0 %3178, %v2987
    %v3180 = vpop.permute.xlu0 %3179
    %v3182 = vmul.f32 %v3172, %v3176
    %v3183 = vmul.f32 %v3173, %v3180
    %v3184 = vsel %vm1158, %v3182, 0.0
    %v3185 = vsel %vm1158, %v3183, 0.0
    %v3186 = vadd.f32 %v3184, %v3185
    %v3187 = vrot.slane %v3186, 4
    %v3188 = vadd.f32 %v3186, %v3187
    %v3189 = vrot.slane %v3188, 2
    %v3190 = vadd.f32 %v3188, %v3189
    %v3191 = vrot.slane %v3190, 1
    %v3192 = vadd.f32 %v3190, %v3191
    %v3193 = vrot.slane %v2776, 1
    %v3195 = vmul.f32 %v344, %v3193
    %v3196 = vadd.f32 %v3192, %v3195
    %v3197 = vlaneseq
    %v3198 = vshrl.u32 %v3197, 7
    %v3199 = vsub.s32 3, %v3198
    %v3200 = vrot.slane %v2891, %v3199
    %v3201 = vmul.f32 %v3200, %v339
    %v3202 = vmul.f32 %v3200, %v340
    %v3203 = vmul.f32 %v3201, 1.442695
    %v3204 = vpow.pop %v3203
    %v3205 = vmul.f32 %v3202, 1.442695
    %v3206 = vpow.pop %v3205
    %v3207 = vmul.f32 %v3204, %v3172
    %v3208 = vmul.f32 %v3206, %v3173
    %3209 = vset.pattern.permute.xlu0 3
    %3210 = vperm.xlu0 %3209, %v2972
    %v3211 = vpop.permute.xlu0 %3210
    %3213 = vset.pattern.permute.xlu0 3
    %3214 = vperm.xlu0 %3213, %v2977
    %v3215 = vpop.permute.xlu0 %3214
    %v3217 = vlaneseq
    %v3218 = vshrl.u32 %v3217, 7
    %v3219 = vsub.s32 3, %v3218
    %v3220 = vrot.slane %v3002, %v3219
    %v3221 = vmul.f32 %v3211, %v3220
    %v3222 = vmul.f32 %v3215, %v3220
    %v3223 = vadd.f32 %v3207, %v3221
    %v3224 = vadd.f32 %v3208, %v3222
    %3225 = vset.pattern.permute.xlu0 3
    %3226 = vperm.xlu0 %3225, %v2982
    %v3227 = vpop.permute.xlu0 %3226
    %3229 = vset.pattern.permute.xlu0 3
    %3230 = vperm.xlu0 %3229, %v2987
    %v3231 = vpop.permute.xlu0 %3230
    %v3233 = vmul.f32 %v3223, %v3227
    %v3234 = vmul.f32 %v3224, %v3231
    %v3235 = vsel %vm1158, %v3233, 0.0
    %v3236 = vsel %vm1158, %v3234, 0.0
    %v3237 = vadd.f32 %v3235, %v3236
    %v3238 = vrot.slane %v3237, 4
    %v3239 = vadd.f32 %v3237, %v3238
    %v3240 = vrot.slane %v3239, 2
    %v3241 = vadd.f32 %v3239, %v3240
    %v3242 = vrot.slane %v3241, 1
    %v3243 = vadd.f32 %v3241, %v3242
    %v3244 = vrot.slane %v2776, 3
    %v3246 = vmul.f32 %v344, %v3244
    %v3247 = vadd.f32 %v3243, %v3246
    %v3248 = vlaneseq
    %v3249 = vshrl.u32 %v3248, 7
    %v3250 = vsub.s32 5, %v3249
    %v3251 = vrot.slane %v2891, %v3250
    %v3252 = vmul.f32 %v3251, %v339
    %v3253 = vmul.f32 %v3251, %v340
    %v3254 = vmul.f32 %v3252, 1.442695
    %v3255 = vpow.pop %v3254
    %v3256 = vmul.f32 %v3253, 1.442695
    %v3257 = vpow.pop %v3256
    %v3258 = vmul.f32 %v3255, %v3223
    %v3259 = vmul.f32 %v3257, %v3224
    %3260 = vset.pattern.permute.xlu0 5
    %3261 = vperm.xlu0 %3260, %v2972
    %v3262 = vpop.permute.xlu0 %3261
    %3264 = vset.pattern.permute.xlu0 5
    %3265 = vperm.xlu0 %3264, %v2977
    %v3266 = vpop.permute.xlu0 %3265
    %v3268 = vlaneseq
    %v3269 = vshrl.u32 %v3268, 7
    %v3270 = vsub.s32 5, %v3269
    %v3271 = vrot.slane %v3002, %v3270
    %v3272 = vmul.f32 %v3262, %v3271
    %v3273 = vmul.f32 %v3266, %v3271
    %v3274 = vadd.f32 %v3258, %v3272
    %v3275 = vadd.f32 %v3259, %v3273
    %3276 = vset.pattern.permute.xlu0 5
    %3277 = vperm.xlu0 %3276, %v2982
    %v3278 = vpop.permute.xlu0 %3277
    %3280 = vset.pattern.permute.xlu0 5
    %3281 = vperm.xlu0 %3280, %v2987
    %v3282 = vpop.permute.xlu0 %3281
    %v3284 = vmul.f32 %v3274, %v3278
    %v3285 = vmul.f32 %v3275, %v3282
    %v3286 = vsel %vm1158, %v3284, 0.0
    %v3287 = vsel %vm1158, %v3285, 0.0
    %v3288 = vadd.f32 %v3286, %v3287
    %v3289 = vrot.slane %v3288, 4
    %v3290 = vadd.f32 %v3288, %v3289
    %v3291 = vrot.slane %v3290, 2
    %v3292 = vadd.f32 %v3290, %v3291
    %v3293 = vrot.slane %v3292, 1
    %v3294 = vadd.f32 %v3292, %v3293
    %v3295 = vrot.slane %v2776, 5
    %v3297 = vmul.f32 %v344, %v3295
    %v3298 = vadd.f32 %v3294, %v3297
    %v3299 = vlaneseq
    %v3300 = vshrl.u32 %v3299, 7
    %v3301 = vsub.s32 6, %v3300
    %v3302 = vrot.slane %v2891, %v3301
    %v3303 = vmul.f32 %v3302, %v339
    %v3304 = vmul.f32 %v3302, %v340
    %v3305 = vmul.f32 %v3303, 1.442695
    %v3306 = vpow.pop %v3305
    %v3307 = vmul.f32 %v3304, 1.442695
    %v3308 = vpow.pop %v3307
    %v3309 = vmul.f32 %v3306, 0.0
    %v3310 = vmul.f32 %v3308, 0.0
    %3311 = vset.pattern.permute.xlu0 6
    %3312 = vperm.xlu0 %3311, %v2972
    %v3313 = vpop.permute.xlu0 %3312
    %3315 = vset.pattern.permute.xlu0 6
    %3316 = vperm.xlu0 %3315, %v2977
    %v3317 = vpop.permute.xlu0 %3316
    %v3319 = vlaneseq
    %v3320 = vshrl.u32 %v3319, 7
    %v3321 = vsub.s32 6, %v3320
    %v3322 = vrot.slane %v3002, %v3321
    %v3323 = vmul.f32 %v3313, %v3322
    %v3324 = vmul.f32 %v3317, %v3322
    %v3325 = vadd.f32 %v3309, %v3323
    %v3326 = vadd.f32 %v3310, %v3324
    %3327 = vset.pattern.permute.xlu0 6
    %3328 = vperm.xlu0 %3327, %v2982
    %v3329 = vpop.permute.xlu0 %3328
    %3331 = vset.pattern.permute.xlu0 6
    %3332 = vperm.xlu0 %3331, %v2987
    %v3333 = vpop.permute.xlu0 %3332
    %v3335 = vmul.f32 %v3325, %v3329
    %v3336 = vmul.f32 %v3326, %v3333
    %v3337 = vsel %vm1158, %v3335, 0.0
    %v3338 = vsel %vm1158, %v3336, 0.0
    %v3339 = vadd.f32 %v3337, %v3338
    %v3340 = vrot.slane %v3339, 4
    %v3341 = vadd.f32 %v3339, %v3340
    %v3342 = vrot.slane %v3341, 2
    %v3343 = vadd.f32 %v3341, %v3342
    %v3344 = vrot.slane %v3343, 1
    %v3345 = vadd.f32 %v3343, %v3344
    %v3346 = vrot.slane %v2776, 6
    %v3348 = vmul.f32 %v344, %v3346
    %v3349 = vadd.f32 %v3345, %v3348
    %v3350 = vadd.f32 %v3094, %v3349
    %v3351 = vlaneseq
    %v3352 = vshrl.u32 %v3351, 7
    %v3353 = vsub.s32 0, %v3352
    %v3354 = vrot.slane %v2892, %v3353
    %v3355 = vmul.f32 %v3354, %v339
    %v3356 = vmul.f32 %v3354, %v340
    %v3357 = vmul.f32 %v3355, 1.442695
    %v3358 = vpow.pop %v3357
    %v3359 = vmul.f32 %v3356, 1.442695
    %v3360 = vpow.pop %v3359
    %v3361 = vmul.f32 %v3358, %v3325
    %v3362 = vmul.f32 %v3360, %v3326
    %v3363 = vmul.f32 %v2892, %v2777
    %3364 = vset.pattern.permute.xlu0 8
    %3365 = vperm.xlu0 %3364, %v2972
    %v3366 = vpop.permute.xlu0 %3365
    %3368 = vset.pattern.permute.xlu0 8
    %3369 = vperm.xlu0 %3368, %v2977
    %v3370 = vpop.permute.xlu0 %3369
    %v3372 = vlaneseq
    %v3373 = vshrl.u32 %v3372, 7
    %v3374 = vsub.s32 0, %v3373
    %v3375 = vrot.slane %v3363, %v3374
    %v3376 = vmul.f32 %v3366, %v3375
    %v3377 = vmul.f32 %v3370, %v3375
    %v3378 = vadd.f32 %v3361, %v3376
    %v3379 = vadd.f32 %v3362, %v3377
    %3380 = vset.pattern.permute.xlu0 8
    %3381 = vperm.xlu0 %3380, %v2982
    %v3382 = vpop.permute.xlu0 %3381
    %3384 = vset.pattern.permute.xlu0 8
    %3385 = vperm.xlu0 %3384, %v2987
    %v3386 = vpop.permute.xlu0 %3385
    %v3388 = vmul.f32 %v3378, %v3382
    %v3389 = vmul.f32 %v3379, %v3386
    %v3390 = vsel %vm1158, %v3388, 0.0
    %v3391 = vsel %vm1158, %v3389, 0.0
    %v3392 = vadd.f32 %v3390, %v3391
    %v3393 = vrot.slane %v3392, 4
    %v3394 = vadd.f32 %v3392, %v3393
    %v3395 = vrot.slane %v3394, 2
    %v3396 = vadd.f32 %v3394, %v3395
    %v3397 = vrot.slane %v3396, 1
    %v3398 = vadd.f32 %v3396, %v3397
    %v3399 = vmul.f32 %v344, %v2777
    %v3400 = vadd.f32 %v3398, %v3399
    %v3401 = vadd.f32 %v3043, %v3400
    %v3402 = vlaneseq
    %v3403 = vshrl.u32 %v3402, 7
    %v3404 = vsub.s32 2, %v3403
    %v3405 = vrot.slane %v2892, %v3404
    %v3406 = vmul.f32 %v3405, %v339
    %v3407 = vmul.f32 %v3405, %v340
    %v3408 = vmul.f32 %v3406, 1.442695
    %v3409 = vpow.pop %v3408
    %v3410 = vmul.f32 %v3407, 1.442695
    %v3411 = vpow.pop %v3410
    %v3412 = vmul.f32 %v3409, %v3378
    %v3413 = vmul.f32 %v3411, %v3379
    %3414 = vset.pattern.permute.xlu0 10
    %3415 = vperm.xlu0 %3414, %v2972
    %v3416 = vpop.permute.xlu0 %3415
    %3418 = vset.pattern.permute.xlu0 10
    %3419 = vperm.xlu0 %3418, %v2977
    %v3420 = vpop.permute.xlu0 %3419
    %v3422 = vlaneseq
    %v3423 = vshrl.u32 %v3422, 7
    %v3424 = vsub.s32 2, %v3423
    %v3425 = vrot.slane %v3363, %v3424
    %v3426 = vmul.f32 %v3416, %v3425
    %v3427 = vmul.f32 %v3420, %v3425
    %v3428 = vadd.f32 %v3412, %v3426
    %v3429 = vadd.f32 %v3413, %v3427
    %3430 = vset.pattern.permute.xlu0 10
    %3431 = vperm.xlu0 %3430, %v2982
    %v3432 = vpop.permute.xlu0 %3431
    %3434 = vset.pattern.permute.xlu0 10
    %3435 = vperm.xlu0 %3434, %v2987
    %v3436 = vpop.permute.xlu0 %3435
    %v3438 = vmul.f32 %v3428, %v3432
    %v3439 = vmul.f32 %v3429, %v3436
    %v3440 = vsel %vm1158, %v3438, 0.0
    %v3441 = vsel %vm1158, %v3439, 0.0
    %v3442 = vadd.f32 %v3440, %v3441
    %v3443 = vrot.slane %v3442, 4
    %v3444 = vadd.f32 %v3442, %v3443
    %v3445 = vrot.slane %v3444, 2
    %v3446 = vadd.f32 %v3444, %v3445
    %v3447 = vrot.slane %v3446, 1
    %v3448 = vadd.f32 %v3446, %v3447
    %v3449 = vrot.slane %v2777, 2
    %v3451 = vmul.f32 %v344, %v3449
    %v3452 = vadd.f32 %v3448, %v3451
    %v3453 = vadd.f32 %v3145, %v3452
    %v3454 = vlaneseq
    %v3455 = vshrl.u32 %v3454, 7
    %v3456 = vsub.s32 7, %v3455
    %v3457 = vrot.slane %v2891, %v3456
    %v3458 = vmul.f32 %v3457, %v339
    %v3459 = vmul.f32 %v3457, %v340
    %v3460 = vmul.f32 %v3458, 1.442695
    %v3461 = vpow.pop %v3460
    %v3462 = vmul.f32 %v3459, 1.442695
    %v3463 = vpow.pop %v3462
    %v3464 = vmul.f32 %v3461, 0.0
    %v3465 = vmul.f32 %v3463, 0.0
    %3466 = vset.pattern.permute.xlu0 7
    %3467 = vperm.xlu0 %3466, %v2972
    %v3468 = vpop.permute.xlu0 %3467
    %3470 = vset.pattern.permute.xlu0 7
    %3471 = vperm.xlu0 %3470, %v2977
    %v3472 = vpop.permute.xlu0 %3471
    %v3474 = vlaneseq
    %v3475 = vshrl.u32 %v3474, 7
    %v3476 = vsub.s32 7, %v3475
    %v3477 = vrot.slane %v3002, %v3476
    %v3478 = vmul.f32 %v3468, %v3477
    %v3479 = vmul.f32 %v3472, %v3477
    %v3480 = vadd.f32 %v3464, %v3478
    %v3481 = vadd.f32 %v3465, %v3479
    %3482 = vset.pattern.permute.xlu0 7
    %3483 = vperm.xlu0 %3482, %v2982
    %v3484 = vpop.permute.xlu0 %3483
    %3486 = vset.pattern.permute.xlu0 7
    %3487 = vperm.xlu0 %3486, %v2987
    %v3488 = vpop.permute.xlu0 %3487
    %v3490 = vmul.f32 %v3480, %v3484
    %v3491 = vmul.f32 %v3481, %v3488
    %v3492 = vsel %vm1158, %v3490, 0.0
    %v3493 = vsel %vm1158, %v3491, 0.0
    %v3494 = vadd.f32 %v3492, %v3493
    %v3495 = vrot.slane %v3494, 4
    %v3496 = vadd.f32 %v3494, %v3495
    %v3497 = vrot.slane %v3496, 2
    %v3498 = vadd.f32 %v3496, %v3497
    %v3499 = vrot.slane %v3498, 1
    %v3500 = vadd.f32 %v3498, %v3499
    %v3501 = vrot.slane %v2776, 7
    %v3503 = vmul.f32 %v344, %v3501
    %v3504 = vadd.f32 %v3500, %v3503
    %v3505 = vadd.f32 %v3247, %v3504
    %v3506 = vlaneseq
    %v3507 = vshrl.u32 %v3506, 7
    %v3508 = vsub.s32 1, %v3507
    %v3509 = vrot.slane %v2892, %v3508
    %v3510 = vmul.f32 %v3509, %v339
    %v3511 = vmul.f32 %v3509, %v340
    %v3512 = vmul.f32 %v3510, 1.442695
    %v3513 = vpow.pop %v3512
    %v3514 = vmul.f32 %v3511, 1.442695
    %v3515 = vpow.pop %v3514
    %v3516 = vmul.f32 %v3513, %v3480
    %v3517 = vmul.f32 %v3515, %v3481
    %3518 = vset.pattern.permute.xlu0 9
    %3519 = vperm.xlu0 %3518, %v2972
    %v3520 = vpop.permute.xlu0 %3519
    %3522 = vset.pattern.permute.xlu0 9
    %3523 = vperm.xlu0 %3522, %v2977
    %v3524 = vpop.permute.xlu0 %3523
    %v3526 = vlaneseq
    %v3527 = vshrl.u32 %v3526, 7
    %v3528 = vsub.s32 1, %v3527
    %v3529 = vrot.slane %v3363, %v3528
    %v3530 = vmul.f32 %v3520, %v3529
    %v3531 = vmul.f32 %v3524, %v3529
    %v3532 = vadd.f32 %v3516, %v3530
    %v3533 = vadd.f32 %v3517, %v3531
    %3534 = vset.pattern.permute.xlu0 9
    %3535 = vperm.xlu0 %3534, %v2982
    %v3536 = vpop.permute.xlu0 %3535
    %3538 = vset.pattern.permute.xlu0 9
    %3539 = vperm.xlu0 %3538, %v2987
    %v3540 = vpop.permute.xlu0 %3539
    %v3542 = vmul.f32 %v3532, %v3536
    %v3543 = vmul.f32 %v3533, %v3540
    %v3544 = vsel %vm1158, %v3542, 0.0
    %v3545 = vsel %vm1158, %v3543, 0.0
    %v3546 = vadd.f32 %v3544, %v3545
    %v3547 = vrot.slane %v3546, 4
    %v3548 = vadd.f32 %v3546, %v3547
    %v3549 = vrot.slane %v3548, 2
    %v3550 = vadd.f32 %v3548, %v3549
    %v3551 = vrot.slane %v3550, 1
    %v3552 = vadd.f32 %v3550, %v3551
    %v3553 = vrot.slane %v2777, 1
    %v3555 = vmul.f32 %v344, %v3553
    %v3556 = vadd.f32 %v3552, %v3555
    %v3557 = vadd.f32 %v3196, %v3556
    %v3558 = vlaneseq
    %v3559 = vshrl.u32 %v3558, 7
    %v3560 = vsub.s32 3, %v3559
    %v3561 = vrot.slane %v2892, %v3560
    %v3562 = vmul.f32 %v3561, %v339
    %v3563 = vmul.f32 %v3561, %v340
    %v3564 = vmul.f32 %v3562, 1.442695
    %v3565 = vpow.pop %v3564
    %v3566 = vmul.f32 %v3563, 1.442695
    %v3567 = vpow.pop %v3566
    %v3568 = vmul.f32 %v3565, %v3532
    %v3569 = vmul.f32 %v3567, %v3533
    %3570 = vset.pattern.permute.xlu0 11
    %3571 = vperm.xlu0 %3570, %v2972
    %v3572 = vpop.permute.xlu0 %3571
    %3574 = vset.pattern.permute.xlu0 11
    %3575 = vperm.xlu0 %3574, %v2977
    %v3576 = vpop.permute.xlu0 %3575
    %v3578 = vlaneseq
    %v3579 = vshrl.u32 %v3578, 7
    %v3580 = vsub.s32 3, %v3579
    %v3581 = vrot.slane %v3363, %v3580
    %v3582 = vmul.f32 %v3572, %v3581
    %v3583 = vmul.f32 %v3576, %v3581
    %v3584 = vadd.f32 %v3568, %v3582
    %v3585 = vadd.f32 %v3569, %v3583
    %3586 = vset.pattern.permute.xlu0 11
    %3587 = vperm.xlu0 %3586, %v2982
    %v3588 = vpop.permute.xlu0 %3587
    %3590 = vset.pattern.permute.xlu0 11
    %3591 = vperm.xlu0 %3590, %v2987
    %v3592 = vpop.permute.xlu0 %3591
    %v3594 = vmul.f32 %v3584, %v3588
    %v3595 = vmul.f32 %v3585, %v3592
    %v3596 = vsel %vm1158, %v3594, 0.0
    %v3597 = vsel %vm1158, %v3595, 0.0
    %v3598 = vadd.f32 %v3596, %v3597
    %v3599 = vrot.slane %v3598, 4
    %v3600 = vadd.f32 %v3598, %v3599
    %v3601 = vrot.slane %v3600, 2
    %v3602 = vadd.f32 %v3600, %v3601
    %v3603 = vrot.slane %v3602, 1
    %v3604 = vadd.f32 %v3602, %v3603
    %v3605 = vrot.slane %v2777, 3
    %v3607 = vmul.f32 %v344, %v3605
    %v3608 = vadd.f32 %v3604, %v3607
    %v3609 = vadd.f32 %v3298, %v3608
    %v3611 = vrot.slane %v3557, 7
    %v3614 = vrot.slane %v3350, 6
    %v3617 = vrot.slane %v3505, 5
    %v3620 = vrot.slane %v3453, 4
    %v3623 = vrot.slane %v3609, 3
    %v3625 = vsel %vm2445, %v3401, %v3611
    %v3626 = vsel %vm768, %v3625, %v3614
    %v3627 = vsel %vm2448, %v3626, %v3617
    %v3628 = vsel %vm846, %v3627, %v3620
    %v3629 = vsel %vm2451, %v3628, %v3623
    %v3630 = vmul.f32 %v3629, 0.5
    %v3631 = vmul.f32 %v3630, %v2715
    %v3633 = vsel %vm1158, %v3631, 0
    %3635 = vmatprep.subr.mxu0 0.0
    %3636 = vmatpush1.msra.mxu0 %v345
    %3637 = vmatprep.subr.mxu0 0.0
    %3638 = vmatpush1.msra.mxu0 %v346
    %3639 = vmatprep.subr.mxu0 0.0
    %3640 = vmatpush1.msra.mxu0 %v347
    %3641 = vmatprep.subr.mxu0 0.0
    %3642 = vmatpush1.msra.mxu0 %v348
    %3643 = vmatprep.subr.mxu0 0.0
    %3644 = vmatpush1.msra.mxu0 %v349
    %3645 = vmatprep.subr.mxu0 0.0
    %3646 = vmatpush1.msra.mxu0 %v350
    %3647 = vmatprep.subr.mxu0 0.0
    %3648 = vmatpush1.msra.mxu0 %v351
    %3649 = vmatprep.subr.mxu0 0.0
    %3650 = vmatpush1.msra.mxu0 %v352
    %3651 = vmatprep.subr.mxu0 0.0
    %3652 = vmatpush1.msra.mxu0 0.0
    %3653 = vmatprep.subr.mxu0 0.0
    %3654 = vmatpush1.msra.mxu0 0.0
    %3655 = vmatprep.subr.mxu0 0.0
    %3656 = vmatpush1.msra.mxu0 0.0
    %3657 = vmatprep.subr.mxu0 0.0
    %3658 = vmatpush1.msra.mxu0 0.0
    %3659 = vmatprep.subr.mxu0 0.0
    %3660 = vmatpush1.msra.mxu0 0.0
    %3661 = vmatprep.subr.mxu0 0.0
    %3662 = vmatpush1.msra.mxu0 0.0
    %3663 = vmatprep.subr.mxu0 0.0
    %3664 = vmatpush1.msra.mxu0 0.0
    %3665 = vmatprep.subr.mxu0 0.0
    %3666 = vmatpush1.msra.mxu0 0.0
    %3667 = vmatprep.subr.mxu0 0.0
    %3668 = vmatpush1.msra.mxu0 0.0
    %3669 = vmatprep.subr.mxu0 0.0
    %3670 = vmatpush1.msra.mxu0 0.0
    %3671 = vmatprep.subr.mxu0 0.0
    %3672 = vmatpush1.msra.mxu0 0.0
    %3673 = vmatprep.subr.mxu0 0.0
    %3674 = vmatpush1.msra.mxu0 0.0
    %3675 = vmatprep.subr.mxu0 0.0
    %3676 = vmatpush1.msra.mxu0 0.0
    %3677 = vmatprep.subr.mxu0 0.0
    %3678 = vmatpush1.msra.mxu0 0.0
    %3679 = vmatprep.subr.mxu0 0.0
    %3680 = vmatpush1.msra.mxu0 0.0
    %3681 = vmatprep.subr.mxu0 0.0
    %3682 = vmatpush1.msra.mxu0 0.0
    %3683 = vmatprep.subr.mxu0 0.0
    %3684 = vmatpush1.msra.mxu0 0.0
    %3685 = vmatprep.subr.mxu0 0.0
    %3686 = vmatpush1.msra.mxu0 0.0
    %3687 = vmatprep.subr.mxu0 0.0
    %3688 = vmatpush1.msra.mxu0 0.0
    %3689 = vmatprep.subr.mxu0 0.0
    %3690 = vmatpush1.msra.mxu0 0.0
    %3691 = vmatprep.subr.mxu0 0.0
    %3692 = vmatpush1.msra.mxu0 0.0
    %3693 = vmatprep.subr.mxu0 0.0
    %3694 = vmatpush1.msra.mxu0 0.0
    %3695 = vmatprep.subr.mxu0 0.0
    %3696 = vmatpush1.msra.mxu0 0.0
    %3697 = vmatprep.subr.mxu0 0.0
    %3698 = vmatpush1.msra.mxu0 0.0
    %3699 = vmatprep.mubr.f32.mxu0 0.0
    %3700 = vmatmul.mubr.f32.gmra.mrb[0].mxu0 %v3633
    %v3701 = vpop.f32.mrb[0].mxu0
    %v3702 = vadd.f32 %v847, %v3701
    %v3703 = vpop.f32.mrb[0].mxu0
    %3704 = vdwg.mxu0
    %v3706 = vrot.slane %v3702, 2
    %v3708 = vadd.f32 %v3702, %v3706
    %v3709 = vrot.slane %v3702, 4
    %v3711 = vadd.f32 %v3708, %v3709
    %v3712 = vmul.f32 %v3711, 0.33333334
    %v3714 = vrot.slane %v3712, 4
    %v3716 = vadd.f32 %v2534, %v3714
    %v3717 = vmul.f32 %v3716, 0.5
    %v3719 = vrot.slane %v3717, 4
    %v3720 = vsel %vm848, %v3719, 0
    %3722 = vmatprep.subr.mxu0 0.0
    %3723 = vmatpush1.msra.mxu0 %v359
    %3724 = vmatprep.subr.mxu0 0.0
    %3725 = vmatpush1.msra.mxu0 %v360
    %3726 = vmatprep.subr.mxu0 0.0
    %3727 = vmatpush1.msra.mxu0 %v361
    %3728 = vmatprep.subr.mxu0 0.0
    %3729 = vmatpush1.msra.mxu0 %v362
    %3730 = vmatprep.subr.mxu0 0.0
    %3731 = vmatpush1.msra.mxu0 0.0
    %3732 = vmatprep.subr.mxu0 0.0
    %3733 = vmatpush1.msra.mxu0 0.0
    %3734 = vmatprep.subr.mxu0 0.0
    %3735 = vmatpush1.msra.mxu0 0.0
    %3736 = vmatprep.subr.mxu0 0.0
    %3737 = vmatpush1.msra.mxu0 0.0
    %3738 = vmatprep.subr.mxu0 0.0
    %3739 = vmatpush1.msra.mxu0 0.0
    %3740 = vmatprep.subr.mxu0 0.0
    %3741 = vmatpush1.msra.mxu0 0.0
    %3742 = vmatprep.subr.mxu0 0.0
    %3743 = vmatpush1.msra.mxu0 0.0
    %3744 = vmatprep.subr.mxu0 0.0
    %3745 = vmatpush1.msra.mxu0 0.0
    %3746 = vmatprep.subr.mxu0 0.0
    %3747 = vmatpush1.msra.mxu0 0.0
    %3748 = vmatprep.subr.mxu0 0.0
    %3749 = vmatpush1.msra.mxu0 0.0
    %3750 = vmatprep.subr.mxu0 0.0
    %3751 = vmatpush1.msra.mxu0 0.0
    %3752 = vmatprep.subr.mxu0 0.0
    %3753 = vmatpush1.msra.mxu0 0.0
    %3754 = vmatprep.subr.mxu0 0.0
    %3755 = vmatpush1.msra.mxu0 0.0
    %3756 = vmatprep.subr.mxu0 0.0
    %3757 = vmatpush1.msra.mxu0 0.0
    %3758 = vmatprep.subr.mxu0 0.0
    %3759 = vmatpush1.msra.mxu0 0.0
    %3760 = vmatprep.subr.mxu0 0.0
    %3761 = vmatpush1.msra.mxu0 0.0
    %3762 = vmatprep.subr.mxu0 0.0
    %3763 = vmatpush1.msra.mxu0 0.0
    %3764 = vmatprep.subr.mxu0 0.0
    %3765 = vmatpush1.msra.mxu0 0.0
    %3766 = vmatprep.subr.mxu0 0.0
    %3767 = vmatpush1.msra.mxu0 0.0
    %3768 = vmatprep.subr.mxu0 0.0
    %3769 = vmatpush1.msra.mxu0 0.0
    %3770 = vmatprep.subr.mxu0 0.0
    %3771 = vmatpush1.msra.mxu0 0.0
    %3772 = vmatprep.subr.mxu0 0.0
    %3773 = vmatpush1.msra.mxu0 0.0
    %3774 = vmatprep.subr.mxu0 0.0
    %3775 = vmatpush1.msra.mxu0 0.0
    %3776 = vmatprep.subr.mxu0 0.0
    %3777 = vmatpush1.msra.mxu0 0.0
    %3778 = vmatprep.subr.mxu0 0.0
    %3779 = vmatpush1.msra.mxu0 0.0
    %3780 = vmatprep.subr.mxu0 0.0
    %3781 = vmatpush1.msra.mxu0 0.0
    %3782 = vmatprep.subr.mxu0 0.0
    %3783 = vmatpush1.msra.mxu0 0.0
    %3784 = vmatprep.subr.mxu0 0.0
    %3785 = vmatpush1.msra.mxu0 0.0
    %3786 = vmatprep.mubr.f32.mxu0 0.0
    %3787 = vmatmul.mubr.f32.gmra.mrb[0].mxu0 %v3720
    %v3788 = vpop.f32.mrb[0].mxu0
    %v3789 = vadd.f32 0.0, %v3788
    %v3790 = vpop.f32.mrb[0].mxu0
    %3791 = vdwg.mxu0
    %v3792 = vsub.f32 0.0, %v3789
    %v3793 = vmul.f32 %v3792, 1.442695
    %v3794 = vpow.pop %v3793
    %v3795 = vadd.f32 %v3794, 1.0
    %v3796 = vrcp.pop %v3795
    %v3797 = vmul.f32 1.0, %v3796
    %v3799 = vrot.slane %v3797, 6
    %v3801 = vrot.slane %v3797, 4
    %v3803 = vrot.slane %v3797, 2
    %v3805 = vsel %vm768, %v3797, %v3799
    %v3806 = vsel %vm846, %v3805, %v3801
    %v3807 = vsel %vm1120, %v3806, %v3803
    %v3808 = vmul.f32 %v2534, %v3807
    %v3809 = vmul.f32 %v2539, %v3797
    %v3810 = vmul.f32 %v3702, %v3806
    %v3811 = vsel %vm848, %v3808, 0.0
    %3812 = vadd.xlane.f32.xlu0 %v3811
    %v3813 = vpop.xlane.xlu0 %3812
    %v3814 = vsel %vm852, %v3809, 0.0
    %3815 = vadd.xlane.f32.xlu0 %v3814
    %v3816 = vpop.xlane.xlu0 %3815
    %v3817 = vmul.f32 %v3813, %v856
    %v3818 = vmul.f32 %v3816, %v856
    %v3819 = vsub.f32 %v3808, %v3817
    %v3820 = vsub.f32 %v3809, %v3818
    %v3821 = vmul.f32 %v3819, %v3819
    %v3822 = vmul.f32 %v3820, %v3820
    %v3823 = vsel %vm848, %v3821, 0.0
    %3824 = vadd.xlane.f32.xlu0 %v3823
    %v3825 = vpop.xlane.xlu0 %3824
    %v3826 = vsel %vm852, %v3822, 0.0
    %3827 = vadd.xlane.f32.xlu0 %v3826
    %v3828 = vpop.xlane.xlu0 %3827
    %v3829 = vmul.f32 %v3825, %v856
    %v3830 = vmul.f32 %v3828, %v856
    %v3831 = vadd.f32 %v3829, 1e-06
    %v3832 = vadd.f32 %v3830, 1e-06
    %v3833 = vrsqrt.pop %v3831
    %v3834 = vrsqrt.pop %v3832
    %v3835 = vmul.f32 %v3819, %v3833
    %v3836 = vmul.f32 %v3820, %v3834
    %v3837 = vlaneseq
    %v3838 = vshrl.u32 %v3837, 7
    %v3839 = vsub.s32 0, %v3838
    %v3840 = vrot.slane %v393, %v3839
    %v3841 = vmul.f32 %v3835, %v3840
    %v3842 = vmul.f32 %v3836, %v3840
    %v3843 = vlaneseq
    %v3844 = vshrl.u32 %v3843, 7
    %v3845 = vsub.s32 0, %v3844
    %v3846 = vrot.slane %v394, %v3845
    %v3847 = vadd.f32 %v3841, %v3846
    %v3848 = vadd.f32 %v3842, %v3846
    %v3850 = vsel %vm848, %v3847, 0
    %v3853 = vsel %vm848, %v3848, 0
    %3855 = vmatprep.subr.mxu0 0.0
    %3856 = vmatpush1.msra.mxu0 %v363
    %3857 = vmatprep.subr.mxu0 0.0
    %3858 = vmatpush1.msra.mxu0 %v364
    %3859 = vmatprep.subr.mxu0 0.0
    %3860 = vmatpush1.msra.mxu0 %v365
    %3861 = vmatprep.subr.mxu0 0.0
    %3862 = vmatpush1.msra.mxu0 %v366
    %3863 = vmatprep.subr.mxu0 0.0
    %3864 = vmatpush1.msra.mxu0 0.0
    %3865 = vmatprep.subr.mxu0 0.0
    %3866 = vmatpush1.msra.mxu0 0.0
    %3867 = vmatprep.subr.mxu0 0.0
    %3868 = vmatpush1.msra.mxu0 0.0
    %3869 = vmatprep.subr.mxu0 0.0
    %3870 = vmatpush1.msra.mxu0 0.0
    %3871 = vmatprep.subr.mxu0 0.0
    %3872 = vmatpush1.msra.mxu0 0.0
    %3873 = vmatprep.subr.mxu0 0.0
    %3874 = vmatpush1.msra.mxu0 0.0
    %3875 = vmatprep.subr.mxu0 0.0
    %3876 = vmatpush1.msra.mxu0 0.0
    %3877 = vmatprep.subr.mxu0 0.0
    %3878 = vmatpush1.msra.mxu0 0.0
    %3879 = vmatprep.subr.mxu0 0.0
    %3880 = vmatpush1.msra.mxu0 0.0
    %3881 = vmatprep.subr.mxu0 0.0
    %3882 = vmatpush1.msra.mxu0 0.0
    %3883 = vmatprep.subr.mxu0 0.0
    %3884 = vmatpush1.msra.mxu0 0.0
    %3885 = vmatprep.subr.mxu0 0.0
    %3886 = vmatpush1.msra.mxu0 0.0
    %3887 = vmatprep.subr.mxu0 0.0
    %3888 = vmatpush1.msra.mxu0 0.0
    %3889 = vmatprep.subr.mxu0 0.0
    %3890 = vmatpush1.msra.mxu0 0.0
    %3891 = vmatprep.subr.mxu0 0.0
    %3892 = vmatpush1.msra.mxu0 0.0
    %3893 = vmatprep.subr.mxu0 0.0
    %3894 = vmatpush1.msra.mxu0 0.0
    %3895 = vmatprep.subr.mxu0 0.0
    %3896 = vmatpush1.msra.mxu0 0.0
    %3897 = vmatprep.subr.mxu0 0.0
    %3898 = vmatpush1.msra.mxu0 0.0
    %3899 = vmatprep.subr.mxu0 0.0
    %3900 = vmatpush1.msra.mxu0 0.0
    %3901 = vmatprep.subr.mxu0 0.0
    %3902 = vmatpush1.msra.mxu0 0.0
    %3903 = vmatprep.subr.mxu0 0.0
    %3904 = vmatpush1.msra.mxu0 0.0
    %3905 = vmatprep.subr.mxu0 0.0
    %3906 = vmatpush1.msra.mxu0 0.0
    %3907 = vmatprep.subr.mxu0 0.0
    %3908 = vmatpush1.msra.mxu0 0.0
    %3909 = vmatprep.subr.mxu0 0.0
    %3910 = vmatpush1.msra.mxu0 0.0
    %3911 = vmatprep.subr.mxu0 0.0
    %3912 = vmatpush1.msra.mxu0 0.0
    %3913 = vmatprep.subr.mxu0 0.0
    %3914 = vmatpush1.msra.mxu0 0.0
    %3915 = vmatprep.subr.mxu0 0.0
    %3916 = vmatpush1.msra.mxu0 0.0
    %3917 = vmatprep.subr.mxu0 0.0
    %3918 = vmatpush1.msra.mxu0 0.0
    %3919 = vmatprep.mubr.f32.mxu0 0.0
    %3920 = vmatmul.mubr.f32.gmra.mrb[0].mxu0 %v3850
    %v3921 = vpop.f32.mrb[0].mxu0
    %v3922 = vadd.f32 0.0, %v3921
    %v3923 = vpop.f32.mrb[0].mxu0
    %3924 = vmatprep.mubr.f32.mxu0 0.0
    %3925 = vmatmul.mubr.f32.gmra.mrb[0].mxu0 %v3853
    %v3926 = vpop.f32.mrb[0].mxu0
    %v3927 = vadd.f32 0.0, %v3926
    %v3928 = vpop.f32.mrb[0].mxu0
    %3929 = vdwg.mxu0
    %3930 = vmatprep.subr.mxu0 0.0
    %3931 = vmatpush1.msra.mxu0 %v367
    %3932 = vmatprep.subr.mxu0 0.0
    %3933 = vmatpush1.msra.mxu0 %v368
    %3934 = vmatprep.subr.mxu0 0.0
    %3935 = vmatpush1.msra.mxu0 %v369
    %3936 = vmatprep.subr.mxu0 0.0
    %3937 = vmatpush1.msra.mxu0 %v370
    %3938 = vmatprep.subr.mxu0 0.0
    %3939 = vmatpush1.msra.mxu0 0.0
    %3940 = vmatprep.subr.mxu0 0.0
    %3941 = vmatpush1.msra.mxu0 0.0
    %3942 = vmatprep.subr.mxu0 0.0
    %3943 = vmatpush1.msra.mxu0 0.0
    %3944 = vmatprep.subr.mxu0 0.0
    %3945 = vmatpush1.msra.mxu0 0.0
    %3946 = vmatprep.subr.mxu0 0.0
    %3947 = vmatpush1.msra.mxu0 0.0
    %3948 = vmatprep.subr.mxu0 0.0
    %3949 = vmatpush1.msra.mxu0 0.0
    %3950 = vmatprep.subr.mxu0 0.0
    %3951 = vmatpush1.msra.mxu0 0.0
    %3952 = vmatprep.subr.mxu0 0.0
    %3953 = vmatpush1.msra.mxu0 0.0
    %3954 = vmatprep.subr.mxu0 0.0
    %3955 = vmatpush1.msra.mxu0 0.0
    %3956 = vmatprep.subr.mxu0 0.0
    %3957 = vmatpush1.msra.mxu0 0.0
    %3958 = vmatprep.subr.mxu0 0.0
    %3959 = vmatpush1.msra.mxu0 0.0
    %3960 = vmatprep.subr.mxu0 0.0
    %3961 = vmatpush1.msra.mxu0 0.0
    %3962 = vmatprep.subr.mxu0 0.0
    %3963 = vmatpush1.msra.mxu0 0.0
    %3964 = vmatprep.subr.mxu0 0.0
    %3965 = vmatpush1.msra.mxu0 0.0
    %3966 = vmatprep.subr.mxu0 0.0
    %3967 = vmatpush1.msra.mxu0 0.0
    %3968 = vmatprep.subr.mxu0 0.0
    %3969 = vmatpush1.msra.mxu0 0.0
    %3970 = vmatprep.subr.mxu0 0.0
    %3971 = vmatpush1.msra.mxu0 0.0
    %3972 = vmatprep.subr.mxu0 0.0
    %3973 = vmatpush1.msra.mxu0 0.0
    %3974 = vmatprep.subr.mxu0 0.0
    %3975 = vmatpush1.msra.mxu0 0.0
    %3976 = vmatprep.subr.mxu0 0.0
    %3977 = vmatpush1.msra.mxu0 0.0
    %3978 = vmatprep.subr.mxu0 0.0
    %3979 = vmatpush1.msra.mxu0 0.0
    %3980 = vmatprep.subr.mxu0 0.0
    %3981 = vmatpush1.msra.mxu0 0.0
    %3982 = vmatprep.subr.mxu0 0.0
    %3983 = vmatpush1.msra.mxu0 0.0
    %3984 = vmatprep.subr.mxu0 0.0
    %3985 = vmatpush1.msra.mxu0 0.0
    %3986 = vmatprep.subr.mxu0 0.0
    %3987 = vmatpush1.msra.mxu0 0.0
    %3988 = vmatprep.subr.mxu0 0.0
    %3989 = vmatpush1.msra.mxu0 0.0
    %3990 = vmatprep.subr.mxu0 0.0
    %3991 = vmatpush1.msra.mxu0 0.0
    %3992 = vmatprep.subr.mxu0 0.0
    %3993 = vmatpush1.msra.mxu0 0.0
    %3994 = vmatprep.mubr.f32.mxu0 0.0
    %3995 = vmatmul.mubr.f32.gmra.mrb[0].mxu0 %v3850
    %v3996 = vpop.f32.mrb[0].mxu0
    %v3997 = vadd.f32 0.0, %v3996
    %v3998 = vpop.f32.mrb[0].mxu0
    %3999 = vmatprep.mubr.f32.mxu0 0.0
    %4000 = vmatmul.mubr.f32.gmra.mrb[0].mxu0 %v3853
    %v4001 = vpop.f32.mrb[0].mxu0
    %v4002 = vadd.f32 0.0, %v4001
    %v4003 = vpop.f32.mrb[0].mxu0
    %4004 = vdwg.mxu0
    %v4005 = vsub.f32 0.0, %v3997
    %v4006 = vsub.f32 0.0, %v4002
    %v4007 = vmul.f32 %v4005, 1.442695
    %v4008 = vpow.pop %v4007
    %v4009 = vmul.f32 %v4006, 1.442695
    %v4010 = vpow.pop %v4009
    %v4011 = vadd.f32 %v4008, 1.0
    %v4012 = vadd.f32 %v4010, 1.0
    %v4013 = vrcp.pop %v4011
    %v4014 = vmul.f32 1.0, %v4013
    %v4015 = vrcp.pop %v4012
    %v4016 = vmul.f32 1.0, %v4015
    %v4017 = vmul.f32 %v3997, %v4014
    %v4018 = vmul.f32 %v4002, %v4016
    %v4019 = vlaneseq
    %v4020 = vshrl.u32 %v4019, 7
    %v4021 = vsub.s32 3, %v4020
    %v4022 = vrot.slane %v381, %v4021
    %v4023 = vmul.f32 %v3922, %v4022
    %v4024 = vlaneseq
    %v4025 = vshrl.u32 %v4024, 7
    %v4026 = vsub.s32 2, %v4025
    %v4027 = vrot.slane %v381, %v4026
    %v4028 = vmul.f32 %v3922, %v4027
    %v4030 = vrot.slane %v4028, 6
    %v4032 = vadd.f32 %v4023, %v4030
    %v4033 = vlaneseq
    %v4034 = vshrl.u32 %v4033, 7
    %v4035 = vsub.s32 1, %v4034
    %v4036 = vrot.slane %v381, %v4035
    %v4037 = vmul.f32 %v3922, %v4036
    %v4039 = vrot.slane %v4037, 4
    %v4041 = vadd.f32 %v4032, %v4039
    %v4042 = vlaneseq
    %v4043 = vshrl.u32 %v4042, 7
    %v4044 = vsub.s32 0, %v4043
    %v4045 = vrot.slane %v381, %v4044
    %v4046 = vmul.f32 %v3922, %v4045
    %v4048 = vrot.slane %v4046, 2
    %v4050 = vadd.f32 %v4041, %v4048
    %v4051 = vmul.f32 %v3927, %v4022
    %v4052 = vadd.f32 %v4051, %v4030
    %v4053 = vadd.f32 %v4052, %v4039
    %v4054 = vadd.f32 %v4053, %v4048
    %v4055 = vrot.slane %v4028, 2
    %v4057 = vadd.f32 %v4023, %v4055
    %v4058 = vadd.f32 %v4057, %v4039
    %v4059 = vrot.slane %v4046, 6
    %v4061 = vadd.f32 %v4058, %v4059
    %v4062 = vadd.f32 %v4051, %v4028
    %v4063 = vrot.slane %v4037, 2
    %v4065 = vadd.f32 %v4062, %v4063
    %v4066 = vrot.slane %v4046, 4
    %v4068 = vadd.f32 %v4065, %v4066
    %v4070 = vrot.slane %v4023, 4
    %v4073 = vrot.slane %v4058, 4
    %v4076 = vrot.slane %v4068, 6
    %v4078 = vsel %vm768, %v4023, %v4032
    %v4079 = vsel %vm846, %v4078, %v4041
    %v4080 = vsel %vm1120, %v4079, %v4050
    %v4081 = vsel %vm768, %v4054, %v4070
    %v4082 = vsel %vm846, %v4081, %v4057
    %v4083 = vsel %vm1120, %v4082, %v4073
    %v4084 = vsel %vm768, %v4061, %v4076
    %v4085 = vlaneseq
    %v4086 = vshrl.u32 %v4085, 7
    %v4087 = vsub.s32 0, %v4086
    %v4088 = vrot.slane %v382, %v4087
    %v4089 = vadd.f32 %v4080, %v4088
    %v4090 = vadd.f32 %v4083, %v4088
    %v4091 = vadd.f32 %v4084, %v4088
    %v4092 = vsub.f32 0.0, %v4089
    %v4093 = vsub.f32 0.0, %v4090
    %v4094 = vsub.f32 0.0, %v4091
    %v4095 = vmul.f32 %v4092, 1.442695
    %v4096 = vpow.pop %v4095
    %v4097 = vmul.f32 %v4093, 1.442695
    %v4098 = vpow.pop %v4097
    %v4099 = vmul.f32 %v4094, 1.442695
    %v4100 = vpow.pop %v4099
    %v4101 = vadd.f32 %v4096, 1.0
    %v4102 = vadd.f32 %v4098, 1.0
    %v4103 = vadd.f32 %v4100, 1.0
    %v4104 = vrcp.pop %v4101
    %v4105 = vmul.f32 1.0, %v4104
    %v4106 = vrcp.pop %v4102
    %v4107 = vmul.f32 1.0, %v4106
    %v4108 = vrcp.pop %v4103
    %v4109 = vmul.f32 1.0, %v4108
    %v4110 = vmul.f32 %v4089, %v4105
    %v4111 = vmul.f32 %v4090, %v4107
    %v4112 = vmul.f32 %v4091, %v4109
    %v4113 = vlaneseq
    %v4114 = vshrl.u32 %v4113, 7
    %v4115 = vsub.s32 0, %v4114
    %v4116 = vrot.slane %v383, %v4115
    %v4118 = vsel %vm1158, %v4110, 0
    %v4121 = vsel %vm1158, %v4111, 0
    %v4124 = vsel %vm1158, %v4112, 0
    %4126 = vmatprep.subr.mxu0 0.0
    %4127 = vmatpush1.msra.mxu0 %v371
    %4128 = vmatprep.subr.mxu0 0.0
    %4129 = vmatpush1.msra.mxu0 %v372
    %4130 = vmatprep.subr.mxu0 0.0
    %4131 = vmatpush1.msra.mxu0 %v373
    %4132 = vmatprep.subr.mxu0 0.0
    %4133 = vmatpush1.msra.mxu0 %v374
    %4134 = vmatprep.subr.mxu0 0.0
    %4135 = vmatpush1.msra.mxu0 %v375
    %4136 = vmatprep.subr.mxu0 0.0
    %4137 = vmatpush1.msra.mxu0 %v376
    %4138 = vmatprep.subr.mxu0 0.0
    %4139 = vmatpush1.msra.mxu0 %v377
    %4140 = vmatprep.subr.mxu0 0.0
    %4141 = vmatpush1.msra.mxu0 %v378
    %4142 = vmatprep.subr.mxu0 0.0
    %4143 = vmatpush1.msra.mxu0 0.0
    %4144 = vmatprep.subr.mxu0 0.0
    %4145 = vmatpush1.msra.mxu0 0.0
    %4146 = vmatprep.subr.mxu0 0.0
    %4147 = vmatpush1.msra.mxu0 0.0
    %4148 = vmatprep.subr.mxu0 0.0
    %4149 = vmatpush1.msra.mxu0 0.0
    %4150 = vmatprep.subr.mxu0 0.0
    %4151 = vmatpush1.msra.mxu0 0.0
    %4152 = vmatprep.subr.mxu0 0.0
    %4153 = vmatpush1.msra.mxu0 0.0
    %4154 = vmatprep.subr.mxu0 0.0
    %4155 = vmatpush1.msra.mxu0 0.0
    %4156 = vmatprep.subr.mxu0 0.0
    %4157 = vmatpush1.msra.mxu0 0.0
    %4158 = vmatprep.subr.mxu0 0.0
    %4159 = vmatpush1.msra.mxu0 0.0
    %4160 = vmatprep.subr.mxu0 0.0
    %4161 = vmatpush1.msra.mxu0 0.0
    %4162 = vmatprep.subr.mxu0 0.0
    %4163 = vmatpush1.msra.mxu0 0.0
    %4164 = vmatprep.subr.mxu0 0.0
    %4165 = vmatpush1.msra.mxu0 0.0
    %4166 = vmatprep.subr.mxu0 0.0
    %4167 = vmatpush1.msra.mxu0 0.0
    %4168 = vmatprep.subr.mxu0 0.0
    %4169 = vmatpush1.msra.mxu0 0.0
    %4170 = vmatprep.subr.mxu0 0.0
    %4171 = vmatpush1.msra.mxu0 0.0
    %4172 = vmatprep.subr.mxu0 0.0
    %4173 = vmatpush1.msra.mxu0 0.0
    %4174 = vmatprep.subr.mxu0 0.0
    %4175 = vmatpush1.msra.mxu0 0.0
    %4176 = vmatprep.subr.mxu0 0.0
    %4177 = vmatpush1.msra.mxu0 0.0
    %4178 = vmatprep.subr.mxu0 0.0
    %4179 = vmatpush1.msra.mxu0 0.0
    %4180 = vmatprep.subr.mxu0 0.0
    %4181 = vmatpush1.msra.mxu0 0.0
    %4182 = vmatprep.subr.mxu0 0.0
    %4183 = vmatpush1.msra.mxu0 0.0
    %4184 = vmatprep.subr.mxu0 0.0
    %4185 = vmatpush1.msra.mxu0 0.0
    %4186 = vmatprep.subr.mxu0 0.0
    %4187 = vmatpush1.msra.mxu0 0.0
    %4188 = vmatprep.subr.mxu0 0.0
    %4189 = vmatpush1.msra.mxu0 0.0
    %4190 = vmatprep.mubr.f32.mxu0 0.0
    %4191 = vmatmul.mubr.f32.gmra.mrb[0].mxu0 %v4118
    %v4192 = vpop.f32.mrb[0].mxu0
    %v4193 = vadd.f32 %v4116, %v4192
    %v4194 = vpop.f32.mrb[0].mxu0
    %4195 = vmatprep.mubr.f32.mxu0 0.0
    %4196 = vmatmul.mubr.f32.gmra.mrb[0].mxu0 %v4121
    %v4197 = vpop.f32.mrb[0].mxu0
    %v4198 = vadd.f32 %v4116, %v4197
    %v4199 = vpop.f32.mrb[0].mxu0
    %4200 = vmatprep.mubr.f32.mxu0 0.0
    %4201 = vmatmul.mubr.f32.gmra.mrb[0].mxu0 %v4124
    %v4202 = vpop.f32.mrb[0].mxu0
    %v4203 = vadd.f32 %v4116, %v4202
    %v4204 = vpop.f32.mrb[0].mxu0
    %4205 = vdwg.mxu0
    %v4206 = vmax.f32 %v4193, 0.0
    %v4207 = vmax.f32 %v4198, 0.0
    %v4208 = vmax.f32 %v4203, 0.0
    %v4209 = vand.u32 2147483647, %v4193
    %v4210 = vand.u32 2147483647, %v4198
    %v4211 = vand.u32 2147483647, %v4203
    %v4212 = vsub.f32 0.0, %v4209
    %v4213 = vsub.f32 0.0, %v4210
    %v4214 = vsub.f32 0.0, %v4211
    %v4215 = vmul.f32 %v4212, 1.442695
    %v4216 = vpow.pop %v4215
    %v4217 = vmul.f32 %v4213, 1.442695
    %v4218 = vpow.pop %v4217
    %v4219 = vmul.f32 %v4214, 1.442695
    %v4220 = vpow.pop %v4219
    %v4221 = vadd.f32 %v4216, 1.0
    %v4222 = vlog2.pop %v4221
    %v4223 = vmul.f32 %v4222, 0.6931472
    %v4224 = vmul.f32 -0.5, %v4216
    %v4225 = vadd.f32 %v4224, 1.0
    %v4226 = vmul.f32 %v4225, %v4216
    %v4227 = vand.u32 2147483647, %v4216
    %vm4228 = vcmp.lt.f32.partialorder %v4227, 0.0004427343
    %v4229 = vsel %vm4228, %v4226, %v4223
    %v4230 = vadd.f32 %v4218, 1.0
    %v4231 = vlog2.pop %v4230
    %v4232 = vmul.f32 %v4231, 0.6931472
    %v4233 = vmul.f32 -0.5, %v4218
    %v4234 = vadd.f32 %v4233, 1.0
    %v4235 = vmul.f32 %v4234, %v4218
    %v4236 = vand.u32 2147483647, %v4218
    %vm4237 = vcmp.lt.f32.partialorder %v4236, 0.0004427343
    %v4238 = vsel %vm4237, %v4235, %v4232
    %v4239 = vadd.f32 %v4220, 1.0
    %v4240 = vlog2.pop %v4239
    %v4241 = vmul.f32 %v4240, 0.6931472
    %v4242 = vmul.f32 -0.5, %v4220
    %v4243 = vadd.f32 %v4242, 1.0
    %v4244 = vmul.f32 %v4243, %v4220
    %v4245 = vand.u32 2147483647, %v4220
    %vm4246 = vcmp.lt.f32.partialorder %v4245, 0.0004427343
    %v4247 = vsel %vm4246, %v4244, %v4241
    %v4248 = vadd.f32 %v4206, %v4229
    %v4249 = vadd.f32 %v4207, %v4238
    %v4250 = vadd.f32 %v4208, %v4247
    %v4252 = vsel %vm1158, %v395, 0
    %v4255 = vsel %vm1158, %v396, 0
    %v4258 = vsel %vm1158, %v397, 0
    %v4261 = vsel %vm1158, %v398, 0
    %4263 = vmatprep.subr.mxu0 0.0
    %4264 = vmatpush1.xpose.msra.mxu0 %v4118
    %4265 = vmatprep.subr.mxu0 0.0
    %4266 = vmatpush1.xpose.msra.mxu0 %v4121
    %4267 = vmatprep.subr.mxu0 0.0
    %4268 = vmatpush1.xpose.msra.mxu0 %v4124
    %4269 = vmatprep.subr.mxu0 0.0
    %4270 = vmatpush1.xpose.msra.mxu0 0.0
    %4271 = vmatprep.subr.mxu0 0.0
    %4272 = vmatpush1.xpose.msra.mxu0 0.0
    %4273 = vmatprep.subr.mxu0 0.0
    %4274 = vmatpush1.xpose.msra.mxu0 0.0
    %4275 = vmatprep.subr.mxu0 0.0
    %4276 = vmatpush1.xpose.msra.mxu0 0.0
    %4277 = vmatprep.subr.mxu0 0.0
    %4278 = vmatpush1.xpose.msra.mxu0 0.0
    %4279 = vmatprep.subr.mxu0 0.0
    %4280 = vmatpush1.xpose.msra.mxu0 0.0
    %4281 = vmatprep.subr.mxu0 0.0
    %4282 = vmatpush1.xpose.msra.mxu0 0.0
    %4283 = vmatprep.subr.mxu0 0.0
    %4284 = vmatpush1.xpose.msra.mxu0 0.0
    %4285 = vmatprep.subr.mxu0 0.0
    %4286 = vmatpush1.xpose.msra.mxu0 0.0
    %4287 = vmatprep.subr.mxu0 0.0
    %4288 = vmatpush1.xpose.msra.mxu0 0.0
    %4289 = vmatprep.subr.mxu0 0.0
    %4290 = vmatpush1.xpose.msra.mxu0 0.0
    %4291 = vmatprep.subr.mxu0 0.0
    %4292 = vmatpush1.xpose.msra.mxu0 0.0
    %4293 = vmatprep.subr.mxu0 0.0
    %4294 = vmatpush1.xpose.msra.mxu0 0.0
    %4295 = vmatprep.subr.mxu0 0.0
    %4296 = vmatpush1.xpose.msra.mxu0 0.0
    %4297 = vmatprep.subr.mxu0 0.0
    %4298 = vmatpush1.xpose.msra.mxu0 0.0
    %4299 = vmatprep.subr.mxu0 0.0
    %4300 = vmatpush1.xpose.msra.mxu0 0.0
    %4301 = vmatprep.subr.mxu0 0.0
    %4302 = vmatpush1.xpose.msra.mxu0 0.0
    %4303 = vmatprep.subr.mxu0 0.0
    %4304 = vmatpush1.xpose.msra.mxu0 0.0
    %4305 = vmatprep.subr.mxu0 0.0
    %4306 = vmatpush1.xpose.msra.mxu0 0.0
    %4307 = vmatprep.subr.mxu0 0.0
    %4308 = vmatpush1.xpose.msra.mxu0 0.0
    %4309 = vmatprep.subr.mxu0 0.0
    %4310 = vmatpush1.xpose.msra.mxu0 0.0
    %4311 = vmatprep.subr.mxu0 0.0
    %4312 = vmatpush1.xpose.msra.mxu0 0.0
    %4313 = vmatprep.subr.mxu0 0.0
    %4314 = vmatpush1.xpose.msra.mxu0 0.0
    %4315 = vmatprep.subr.mxu0 0.0
    %4316 = vmatpush1.xpose.msra.mxu0 0.0
    %4317 = vmatprep.subr.mxu0 0.0
    %4318 = vmatpush1.xpose.msra.mxu0 0.0
    %4319 = vmatprep.subr.mxu0 0.0
    %4320 = vmatpush1.xpose.msra.mxu0 0.0
    %4321 = vmatprep.subr.mxu0 0.0
    %4322 = vmatpush1.xpose.msra.mxu0 0.0
    %4323 = vmatprep.subr.mxu0 0.0
    %4324 = vmatpush1.xpose.msra.mxu0 0.0
    %4325 = vmatprep.subr.mxu0 0.0
    %4326 = vmatpush1.xpose.msra.mxu0 0.0
    %4327 = vmatprep.mubr.f32.mxu0 0.0
    %4328 = vmatmul.mubr.f32.gmra.mrb[0].mxu0 %v4252
    %v4329 = vpop.f32.mrb[0].mxu0
    %v4330 = vadd.f32 0.0, %v4329
    %v4331 = vpop.f32.mrb[0].mxu0
    %4332 = vmatprep.mubr.f32.mxu0 0.0
    %4333 = vmatmul.mubr.f32.gmra.mrb[0].mxu0 %v4255
    %v4334 = vpop.f32.mrb[0].mxu0
    %v4335 = vadd.f32 0.0, %v4334
    %v4336 = vpop.f32.mrb[0].mxu0
    %4337 = vmatprep.mubr.f32.mxu0 0.0
    %4338 = vmatmul.mubr.f32.gmra.mrb[0].mxu0 %v4258
    %v4339 = vpop.f32.mrb[0].mxu0
    %v4340 = vadd.f32 0.0, %v4339
    %v4341 = vpop.f32.mrb[0].mxu0
    %4342 = vmatprep.mubr.f32.mxu0 0.0
    %4343 = vmatmul.mubr.f32.gmra.mrb[0].mxu0 %v4261
    %v4344 = vpop.f32.mrb[0].mxu0
    %v4345 = vadd.f32 0.0, %v4344
    %v4346 = vpop.f32.mrb[0].mxu0
    %4347 = vdwg.mxu0
    %v4348 = vlaneseq
    %v4349 = vshrl.u32 %v4348, 7
    %v4350 = vsub.s32 0, %v4349
    %v4351 = vrot.slane %v4248, %v4350
    %v4352 = vmul.f32 %v4351, %v379
    %v4353 = vmul.f32 %v4351, %v380
    %v4354 = vmul.f32 %v4352, 1.442695
    %v4355 = vpow.pop %v4354
    %v4356 = vmul.f32 %v4353, 1.442695
    %v4357 = vpow.pop %v4356
    %v4358 = vmul.f32 %v4355, 0.0
    %v4359 = vmul.f32 %v4357, 0.0
    %v4360 = vmul.f32 %v4248, %v4110
    %4362 = vset.pattern.permute.xlu0 0
    %4363 = vperm.xlu0 %4362, %v4330
    %v4364 = vpop.permute.xlu0 %4363
    %4367 = vset.pattern.permute.xlu0 0
    %4368 = vperm.xlu0 %4367, %v4335
    %v4369 = vpop.permute.xlu0 %4368
    %v4371 = vlaneseq
    %v4372 = vshrl.u32 %v4371, 7
    %v4373 = vsub.s32 0, %v4372
    %v4374 = vrot.slane %v4360, %v4373
    %v4375 = vmul.f32 %v4364, %v4374
    %v4376 = vmul.f32 %v4369, %v4374
    %v4377 = vadd.f32 %v4358, %v4375
    %v4378 = vadd.f32 %v4359, %v4376
    %4380 = vset.pattern.permute.xlu0 0
    %4381 = vperm.xlu0 %4380, %v4340
    %v4382 = vpop.permute.xlu0 %4381
    %4385 = vset.pattern.permute.xlu0 0
    %4386 = vperm.xlu0 %4385, %v4345
    %v4387 = vpop.permute.xlu0 %4386
    %v4389 = vmul.f32 %v4377, %v4382
    %v4390 = vmul.f32 %v4378, %v4387
    %v4391 = vsel %vm1158, %v4389, 0.0
    %v4392 = vsel %vm1158, %v4390, 0.0
    %v4393 = vadd.f32 %v4391, %v4392
    %v4394 = vrot.slane %v4393, 4
    %v4395 = vadd.f32 %v4393, %v4394
    %v4396 = vrot.slane %v4395, 2
    %v4397 = vadd.f32 %v4395, %v4396
    %v4398 = vrot.slane %v4397, 1
    %v4399 = vadd.f32 %v4397, %v4398
    %v4400 = vmul.f32 %v384, %v4110
    %v4401 = vadd.f32 %v4399, %v4400
    %v4402 = vlaneseq
    %v4403 = vshrl.u32 %v4402, 7
    %v4404 = vsub.s32 2, %v4403
    %v4405 = vrot.slane %v4248, %v4404
    %v4406 = vmul.f32 %v4405, %v379
    %v4407 = vmul.f32 %v4405, %v380
    %v4408 = vmul.f32 %v4406, 1.442695
    %v4409 = vpow.pop %v4408
    %v4410 = vmul.f32 %v4407, 1.442695
    %v4411 = vpow.pop %v4410
    %v4412 = vmul.f32 %v4409, %v4377
    %v4413 = vmul.f32 %v4411, %v4378
    %4414 = vset.pattern.permute.xlu0 2
    %4415 = vperm.xlu0 %4414, %v4330
    %v4416 = vpop.permute.xlu0 %4415
    %4418 = vset.pattern.permute.xlu0 2
    %4419 = vperm.xlu0 %4418, %v4335
    %v4420 = vpop.permute.xlu0 %4419
    %v4422 = vlaneseq
    %v4423 = vshrl.u32 %v4422, 7
    %v4424 = vsub.s32 2, %v4423
    %v4425 = vrot.slane %v4360, %v4424
    %v4426 = vmul.f32 %v4416, %v4425
    %v4427 = vmul.f32 %v4420, %v4425
    %v4428 = vadd.f32 %v4412, %v4426
    %v4429 = vadd.f32 %v4413, %v4427
    %4430 = vset.pattern.permute.xlu0 2
    %4431 = vperm.xlu0 %4430, %v4340
    %v4432 = vpop.permute.xlu0 %4431
    %4434 = vset.pattern.permute.xlu0 2
    %4435 = vperm.xlu0 %4434, %v4345
    %v4436 = vpop.permute.xlu0 %4435
    %v4438 = vmul.f32 %v4428, %v4432
    %v4439 = vmul.f32 %v4429, %v4436
    %v4440 = vsel %vm1158, %v4438, 0.0
    %v4441 = vsel %vm1158, %v4439, 0.0
    %v4442 = vadd.f32 %v4440, %v4441
    %v4443 = vrot.slane %v4442, 4
    %v4444 = vadd.f32 %v4442, %v4443
    %v4445 = vrot.slane %v4444, 2
    %v4446 = vadd.f32 %v4444, %v4445
    %v4447 = vrot.slane %v4446, 1
    %v4448 = vadd.f32 %v4446, %v4447
    %v4449 = vrot.slane %v4110, 2
    %v4451 = vmul.f32 %v384, %v4449
    %v4452 = vadd.f32 %v4448, %v4451
    %v4453 = vlaneseq
    %v4454 = vshrl.u32 %v4453, 7
    %v4455 = vsub.s32 4, %v4454
    %v4456 = vrot.slane %v4248, %v4455
    %v4457 = vmul.f32 %v4456, %v379
    %v4458 = vmul.f32 %v4456, %v380
    %v4459 = vmul.f32 %v4457, 1.442695
    %v4460 = vpow.pop %v4459
    %v4461 = vmul.f32 %v4458, 1.442695
    %v4462 = vpow.pop %v4461
    %v4463 = vmul.f32 %v4460, %v4428
    %v4464 = vmul.f32 %v4462, %v4429
    %4465 = vset.pattern.permute.xlu0 4
    %4466 = vperm.xlu0 %4465, %v4330
    %v4467 = vpop.permute.xlu0 %4466
    %4469 = vset.pattern.permute.xlu0 4
    %4470 = vperm.xlu0 %4469, %v4335
    %v4471 = vpop.permute.xlu0 %4470
    %v4473 = vlaneseq
    %v4474 = vshrl.u32 %v4473, 7
    %v4475 = vsub.s32 4, %v4474
    %v4476 = vrot.slane %v4360, %v4475
    %v4477 = vmul.f32 %v4467, %v4476
    %v4478 = vmul.f32 %v4471, %v4476
    %v4479 = vadd.f32 %v4463, %v4477
    %v4480 = vadd.f32 %v4464, %v4478
    %4481 = vset.pattern.permute.xlu0 4
    %4482 = vperm.xlu0 %4481, %v4340
    %v4483 = vpop.permute.xlu0 %4482
    %4485 = vset.pattern.permute.xlu0 4
    %4486 = vperm.xlu0 %4485, %v4345
    %v4487 = vpop.permute.xlu0 %4486
    %v4489 = vmul.f32 %v4479, %v4483
    %v4490 = vmul.f32 %v4480, %v4487
    %v4491 = vsel %vm1158, %v4489, 0.0
    %v4492 = vsel %vm1158, %v4490, 0.0
    %v4493 = vadd.f32 %v4491, %v4492
    %v4494 = vrot.slane %v4493, 4
    %v4495 = vadd.f32 %v4493, %v4494
    %v4496 = vrot.slane %v4495, 2
    %v4497 = vadd.f32 %v4495, %v4496
    %v4498 = vrot.slane %v4497, 1
    %v4499 = vadd.f32 %v4497, %v4498
    %v4500 = vrot.slane %v4110, 4
    %v4502 = vmul.f32 %v384, %v4500
    %v4503 = vadd.f32 %v4499, %v4502
    %v4504 = vlaneseq
    %v4505 = vshrl.u32 %v4504, 7
    %v4506 = vsub.s32 6, %v4505
    %v4507 = vrot.slane %v4248, %v4506
    %v4508 = vmul.f32 %v4507, %v379
    %v4509 = vmul.f32 %v4507, %v380
    %v4510 = vmul.f32 %v4508, 1.442695
    %v4511 = vpow.pop %v4510
    %v4512 = vmul.f32 %v4509, 1.442695
    %v4513 = vpow.pop %v4512
    %v4514 = vmul.f32 %v4511, %v4479
    %v4515 = vmul.f32 %v4513, %v4480
    %4516 = vset.pattern.permute.xlu0 6
    %4517 = vperm.xlu0 %4516, %v4330
    %v4518 = vpop.permute.xlu0 %4517
    %4520 = vset.pattern.permute.xlu0 6
    %4521 = vperm.xlu0 %4520, %v4335
    %v4522 = vpop.permute.xlu0 %4521
    %v4524 = vlaneseq
    %v4525 = vshrl.u32 %v4524, 7
    %v4526 = vsub.s32 6, %v4525
    %v4527 = vrot.slane %v4360, %v4526
    %v4528 = vmul.f32 %v4518, %v4527
    %v4529 = vmul.f32 %v4522, %v4527
    %v4530 = vadd.f32 %v4514, %v4528
    %v4531 = vadd.f32 %v4515, %v4529
    %4532 = vset.pattern.permute.xlu0 6
    %4533 = vperm.xlu0 %4532, %v4340
    %v4534 = vpop.permute.xlu0 %4533
    %4536 = vset.pattern.permute.xlu0 6
    %4537 = vperm.xlu0 %4536, %v4345
    %v4538 = vpop.permute.xlu0 %4537
    %v4540 = vmul.f32 %v4530, %v4534
    %v4541 = vmul.f32 %v4531, %v4538
    %v4542 = vsel %vm1158, %v4540, 0.0
    %v4543 = vsel %vm1158, %v4541, 0.0
    %v4544 = vadd.f32 %v4542, %v4543
    %v4545 = vrot.slane %v4544, 4
    %v4546 = vadd.f32 %v4544, %v4545
    %v4547 = vrot.slane %v4546, 2
    %v4548 = vadd.f32 %v4546, %v4547
    %v4549 = vrot.slane %v4548, 1
    %v4550 = vadd.f32 %v4548, %v4549
    %v4551 = vrot.slane %v4110, 6
    %v4553 = vmul.f32 %v384, %v4551
    %v4554 = vadd.f32 %v4550, %v4553
    %v4555 = vlaneseq
    %v4556 = vshrl.u32 %v4555, 7
    %v4557 = vsub.s32 0, %v4556
    %v4558 = vrot.slane %v4249, %v4557
    %v4559 = vmul.f32 %v4558, %v379
    %v4560 = vmul.f32 %v4558, %v380
    %v4561 = vmul.f32 %v4559, 1.442695
    %v4562 = vpow.pop %v4561
    %v4563 = vmul.f32 %v4560, 1.442695
    %v4564 = vpow.pop %v4563
    %v4565 = vmul.f32 %v4562, %v4530
    %v4566 = vmul.f32 %v4564, %v4531
    %v4567 = vmul.f32 %v4249, %v4111
    %4568 = vset.pattern.permute.xlu0 8
    %4569 = vperm.xlu0 %4568, %v4330
    %v4570 = vpop.permute.xlu0 %4569
    %4572 = vset.pattern.permute.xlu0 8
    %4573 = vperm.xlu0 %4572, %v4335
    %v4574 = vpop.permute.xlu0 %4573
    %v4576 = vlaneseq
    %v4577 = vshrl.u32 %v4576, 7
    %v4578 = vsub.s32 0, %v4577
    %v4579 = vrot.slane %v4567, %v4578
    %v4580 = vmul.f32 %v4570, %v4579
    %v4581 = vmul.f32 %v4574, %v4579
    %v4582 = vadd.f32 %v4565, %v4580
    %v4583 = vadd.f32 %v4566, %v4581
    %4584 = vset.pattern.permute.xlu0 8
    %4585 = vperm.xlu0 %4584, %v4340
    %v4586 = vpop.permute.xlu0 %4585
    %4588 = vset.pattern.permute.xlu0 8
    %4589 = vperm.xlu0 %4588, %v4345
    %v4590 = vpop.permute.xlu0 %4589
    %v4592 = vmul.f32 %v4582, %v4586
    %v4593 = vmul.f32 %v4583, %v4590
    %v4594 = vsel %vm1158, %v4592, 0.0
    %v4595 = vsel %vm1158, %v4593, 0.0
    %v4596 = vadd.f32 %v4594, %v4595
    %v4597 = vrot.slane %v4596, 4
    %v4598 = vadd.f32 %v4596, %v4597
    %v4599 = vrot.slane %v4598, 2
    %v4600 = vadd.f32 %v4598, %v4599
    %v4601 = vrot.slane %v4600, 1
    %v4602 = vadd.f32 %v4600, %v4601
    %v4603 = vmul.f32 %v384, %v4111
    %v4604 = vadd.f32 %v4602, %v4603
    %v4605 = vlaneseq
    %v4606 = vshrl.u32 %v4605, 7
    %v4607 = vsub.s32 1, %v4606
    %v4608 = vrot.slane %v4248, %v4607
    %v4609 = vmul.f32 %v4608, %v379
    %v4610 = vmul.f32 %v4608, %v380
    %v4611 = vmul.f32 %v4609, 1.442695
    %v4612 = vpow.pop %v4611
    %v4613 = vmul.f32 %v4610, 1.442695
    %v4614 = vpow.pop %v4613
    %v4615 = vmul.f32 %v4612, 0.0
    %v4616 = vmul.f32 %v4614, 0.0
    %4617 = vset.pattern.permute.xlu0 1
    %4618 = vperm.xlu0 %4617, %v4330
    %v4619 = vpop.permute.xlu0 %4618
    %4621 = vset.pattern.permute.xlu0 1
    %4622 = vperm.xlu0 %4621, %v4335
    %v4623 = vpop.permute.xlu0 %4622
    %v4625 = vlaneseq
    %v4626 = vshrl.u32 %v4625, 7
    %v4627 = vsub.s32 1, %v4626
    %v4628 = vrot.slane %v4360, %v4627
    %v4629 = vmul.f32 %v4619, %v4628
    %v4630 = vmul.f32 %v4623, %v4628
    %v4631 = vadd.f32 %v4615, %v4629
    %v4632 = vadd.f32 %v4616, %v4630
    %4633 = vset.pattern.permute.xlu0 1
    %4634 = vperm.xlu0 %4633, %v4340
    %v4635 = vpop.permute.xlu0 %4634
    %4637 = vset.pattern.permute.xlu0 1
    %4638 = vperm.xlu0 %4637, %v4345
    %v4639 = vpop.permute.xlu0 %4638
    %v4641 = vmul.f32 %v4631, %v4635
    %v4642 = vmul.f32 %v4632, %v4639
    %v4643 = vsel %vm1158, %v4641, 0.0
    %v4644 = vsel %vm1158, %v4642, 0.0
    %v4645 = vadd.f32 %v4643, %v4644
    %v4646 = vrot.slane %v4645, 4
    %v4647 = vadd.f32 %v4645, %v4646
    %v4648 = vrot.slane %v4647, 2
    %v4649 = vadd.f32 %v4647, %v4648
    %v4650 = vrot.slane %v4649, 1
    %v4651 = vadd.f32 %v4649, %v4650
    %v4652 = vrot.slane %v4110, 1
    %v4654 = vmul.f32 %v384, %v4652
    %v4655 = vadd.f32 %v4651, %v4654
    %v4656 = vlaneseq
    %v4657 = vshrl.u32 %v4656, 7
    %v4658 = vsub.s32 3, %v4657
    %v4659 = vrot.slane %v4248, %v4658
    %v4660 = vmul.f32 %v4659, %v379
    %v4661 = vmul.f32 %v4659, %v380
    %v4662 = vmul.f32 %v4660, 1.442695
    %v4663 = vpow.pop %v4662
    %v4664 = vmul.f32 %v4661, 1.442695
    %v4665 = vpow.pop %v4664
    %v4666 = vmul.f32 %v4663, %v4631
    %v4667 = vmul.f32 %v4665, %v4632
    %4668 = vset.pattern.permute.xlu0 3
    %4669 = vperm.xlu0 %4668, %v4330
    %v4670 = vpop.permute.xlu0 %4669
    %4672 = vset.pattern.permute.xlu0 3
    %4673 = vperm.xlu0 %4672, %v4335
    %v4674 = vpop.permute.xlu0 %4673
    %v4676 = vlaneseq
    %v4677 = vshrl.u32 %v4676, 7
    %v4678 = vsub.s32 3, %v4677
    %v4679 = vrot.slane %v4360, %v4678
    %v4680 = vmul.f32 %v4670, %v4679
    %v4681 = vmul.f32 %v4674, %v4679
    %v4682 = vadd.f32 %v4666, %v4680
    %v4683 = vadd.f32 %v4667, %v4681
    %4684 = vset.pattern.permute.xlu0 3
    %4685 = vperm.xlu0 %4684, %v4340
    %v4686 = vpop.permute.xlu0 %4685
    %4688 = vset.pattern.permute.xlu0 3
    %4689 = vperm.xlu0 %4688, %v4345
    %v4690 = vpop.permute.xlu0 %4689
    %v4692 = vmul.f32 %v4682, %v4686
    %v4693 = vmul.f32 %v4683, %v4690
    %v4694 = vsel %vm1158, %v4692, 0.0
    %v4695 = vsel %vm1158, %v4693, 0.0
    %v4696 = vadd.f32 %v4694, %v4695
    %v4697 = vrot.slane %v4696, 4
    %v4698 = vadd.f32 %v4696, %v4697
    %v4699 = vrot.slane %v4698, 2
    %v4700 = vadd.f32 %v4698, %v4699
    %v4701 = vrot.slane %v4700, 1
    %v4702 = vadd.f32 %v4700, %v4701
    %v4703 = vrot.slane %v4110, 3
    %v4705 = vmul.f32 %v384, %v4703
    %v4706 = vadd.f32 %v4702, %v4705
    %v4707 = vlaneseq
    %v4708 = vshrl.u32 %v4707, 7
    %v4709 = vsub.s32 5, %v4708
    %v4710 = vrot.slane %v4248, %v4709
    %v4711 = vmul.f32 %v4710, %v379
    %v4712 = vmul.f32 %v4710, %v380
    %v4713 = vmul.f32 %v4711, 1.442695
    %v4714 = vpow.pop %v4713
    %v4715 = vmul.f32 %v4712, 1.442695
    %v4716 = vpow.pop %v4715
    %v4717 = vmul.f32 %v4714, %v4682
    %v4718 = vmul.f32 %v4716, %v4683
    %4719 = vset.pattern.permute.xlu0 5
    %4720 = vperm.xlu0 %4719, %v4330
    %v4721 = vpop.permute.xlu0 %4720
    %4723 = vset.pattern.permute.xlu0 5
    %4724 = vperm.xlu0 %4723, %v4335
    %v4725 = vpop.permute.xlu0 %4724
    %v4727 = vlaneseq
    %v4728 = vshrl.u32 %v4727, 7
    %v4729 = vsub.s32 5, %v4728
    %v4730 = vrot.slane %v4360, %v4729
    %v4731 = vmul.f32 %v4721, %v4730
    %v4732 = vmul.f32 %v4725, %v4730
    %v4733 = vadd.f32 %v4717, %v4731
    %v4734 = vadd.f32 %v4718, %v4732
    %4735 = vset.pattern.permute.xlu0 5
    %4736 = vperm.xlu0 %4735, %v4340
    %v4737 = vpop.permute.xlu0 %4736
    %4739 = vset.pattern.permute.xlu0 5
    %4740 = vperm.xlu0 %4739, %v4345
    %v4741 = vpop.permute.xlu0 %4740
    %v4743 = vmul.f32 %v4733, %v4737
    %v4744 = vmul.f32 %v4734, %v4741
    %v4745 = vsel %vm1158, %v4743, 0.0
    %v4746 = vsel %vm1158, %v4744, 0.0
    %v4747 = vadd.f32 %v4745, %v4746
    %v4748 = vrot.slane %v4747, 4
    %v4749 = vadd.f32 %v4747, %v4748
    %v4750 = vrot.slane %v4749, 2
    %v4751 = vadd.f32 %v4749, %v4750
    %v4752 = vrot.slane %v4751, 1
    %v4753 = vadd.f32 %v4751, %v4752
    %v4754 = vrot.slane %v4110, 5
    %v4756 = vmul.f32 %v384, %v4754
    %v4757 = vadd.f32 %v4753, %v4756
    %v4758 = vlaneseq
    %v4759 = vshrl.u32 %v4758, 7
    %v4760 = vsub.s32 7, %v4759
    %v4761 = vrot.slane %v4248, %v4760
    %v4762 = vmul.f32 %v4761, %v379
    %v4763 = vmul.f32 %v4761, %v380
    %v4764 = vmul.f32 %v4762, 1.442695
    %v4765 = vpow.pop %v4764
    %v4766 = vmul.f32 %v4763, 1.442695
    %v4767 = vpow.pop %v4766
    %v4768 = vmul.f32 %v4765, %v4733
    %v4769 = vmul.f32 %v4767, %v4734
    %4770 = vset.pattern.permute.xlu0 7
    %4771 = vperm.xlu0 %4770, %v4330
    %v4772 = vpop.permute.xlu0 %4771
    %4774 = vset.pattern.permute.xlu0 7
    %4775 = vperm.xlu0 %4774, %v4335
    %v4776 = vpop.permute.xlu0 %4775
    %v4778 = vlaneseq
    %v4779 = vshrl.u32 %v4778, 7
    %v4780 = vsub.s32 7, %v4779
    %v4781 = vrot.slane %v4360, %v4780
    %v4782 = vmul.f32 %v4772, %v4781
    %v4783 = vmul.f32 %v4776, %v4781
    %v4784 = vadd.f32 %v4768, %v4782
    %v4785 = vadd.f32 %v4769, %v4783
    %4786 = vset.pattern.permute.xlu0 7
    %4787 = vperm.xlu0 %4786, %v4340
    %v4788 = vpop.permute.xlu0 %4787
    %4790 = vset.pattern.permute.xlu0 7
    %4791 = vperm.xlu0 %4790, %v4345
    %v4792 = vpop.permute.xlu0 %4791
    %v4794 = vmul.f32 %v4784, %v4788
    %v4795 = vmul.f32 %v4785, %v4792
    %v4796 = vsel %vm1158, %v4794, 0.0
    %v4797 = vsel %vm1158, %v4795, 0.0
    %v4798 = vadd.f32 %v4796, %v4797
    %v4799 = vrot.slane %v4798, 4
    %v4800 = vadd.f32 %v4798, %v4799
    %v4801 = vrot.slane %v4800, 2
    %v4802 = vadd.f32 %v4800, %v4801
    %v4803 = vrot.slane %v4802, 1
    %v4804 = vadd.f32 %v4802, %v4803
    %v4805 = vrot.slane %v4110, 7
    %v4807 = vmul.f32 %v384, %v4805
    %v4808 = vadd.f32 %v4804, %v4807
    %v4809 = vlaneseq
    %v4810 = vshrl.u32 %v4809, 7
    %v4811 = vsub.s32 1, %v4810
    %v4812 = vrot.slane %v4249, %v4811
    %v4813 = vmul.f32 %v4812, %v379
    %v4814 = vmul.f32 %v4812, %v380
    %v4815 = vmul.f32 %v4813, 1.442695
    %v4816 = vpow.pop %v4815
    %v4817 = vmul.f32 %v4814, 1.442695
    %v4818 = vpow.pop %v4817
    %v4819 = vmul.f32 %v4816, %v4784
    %v4820 = vmul.f32 %v4818, %v4785
    %4821 = vset.pattern.permute.xlu0 9
    %4822 = vperm.xlu0 %4821, %v4330
    %v4823 = vpop.permute.xlu0 %4822
    %4825 = vset.pattern.permute.xlu0 9
    %4826 = vperm.xlu0 %4825, %v4335
    %v4827 = vpop.permute.xlu0 %4826
    %v4829 = vlaneseq
    %v4830 = vshrl.u32 %v4829, 7
    %v4831 = vsub.s32 1, %v4830
    %v4832 = vrot.slane %v4567, %v4831
    %v4833 = vmul.f32 %v4823, %v4832
    %v4834 = vmul.f32 %v4827, %v4832
    %v4835 = vadd.f32 %v4819, %v4833
    %v4836 = vadd.f32 %v4820, %v4834
    %4837 = vset.pattern.permute.xlu0 9
    %4838 = vperm.xlu0 %4837, %v4340
    %v4839 = vpop.permute.xlu0 %4838
    %4841 = vset.pattern.permute.xlu0 9
    %4842 = vperm.xlu0 %4841, %v4345
    %v4843 = vpop.permute.xlu0 %4842
    %v4845 = vmul.f32 %v4835, %v4839
    %v4846 = vmul.f32 %v4836, %v4843
    %v4847 = vsel %vm1158, %v4845, 0.0
    %v4848 = vsel %vm1158, %v4846, 0.0
    %v4849 = vadd.f32 %v4847, %v4848
    %v4850 = vrot.slane %v4849, 4
    %v4851 = vadd.f32 %v4849, %v4850
    %v4852 = vrot.slane %v4851, 2
    %v4853 = vadd.f32 %v4851, %v4852
    %v4854 = vrot.slane %v4853, 1
    %v4855 = vadd.f32 %v4853, %v4854
    %v4856 = vrot.slane %v4111, 1
    %v4858 = vmul.f32 %v384, %v4856
    %v4859 = vadd.f32 %v4855, %v4858
    %v4860 = vlaneseq
    %v4861 = vshrl.u32 %v4860, 7
    %v4862 = vsub.s32 2, %v4861
    %v4863 = vrot.slane %v4249, %v4862
    %v4864 = vmul.f32 %v4863, %v379
    %v4865 = vmul.f32 %v4863, %v380
    %v4866 = vmul.f32 %v4864, 1.442695
    %v4867 = vpow.pop %v4866
    %v4868 = vmul.f32 %v4865, 1.442695
    %v4869 = vpow.pop %v4868
    %v4870 = vmul.f32 %v4867, 0.0
    %v4871 = vmul.f32 %v4869, 0.0
    %4872 = vset.pattern.permute.xlu0 10
    %4873 = vperm.xlu0 %4872, %v4330
    %v4874 = vpop.permute.xlu0 %4873
    %4876 = vset.pattern.permute.xlu0 10
    %4877 = vperm.xlu0 %4876, %v4335
    %v4878 = vpop.permute.xlu0 %4877
    %v4880 = vlaneseq
    %v4881 = vshrl.u32 %v4880, 7
    %v4882 = vsub.s32 2, %v4881
    %v4883 = vrot.slane %v4567, %v4882
    %v4884 = vmul.f32 %v4874, %v4883
    %v4885 = vmul.f32 %v4878, %v4883
    %v4886 = vadd.f32 %v4870, %v4884
    %v4887 = vadd.f32 %v4871, %v4885
    %4888 = vset.pattern.permute.xlu0 10
    %4889 = vperm.xlu0 %4888, %v4340
    %v4890 = vpop.permute.xlu0 %4889
    %4892 = vset.pattern.permute.xlu0 10
    %4893 = vperm.xlu0 %4892, %v4345
    %v4894 = vpop.permute.xlu0 %4893
    %v4896 = vmul.f32 %v4886, %v4890
    %v4897 = vmul.f32 %v4887, %v4894
    %v4898 = vsel %vm1158, %v4896, 0.0
    %v4899 = vsel %vm1158, %v4897, 0.0
    %v4900 = vadd.f32 %v4898, %v4899
    %v4901 = vrot.slane %v4900, 4
    %v4902 = vadd.f32 %v4900, %v4901
    %v4903 = vrot.slane %v4902, 2
    %v4904 = vadd.f32 %v4902, %v4903
    %v4905 = vrot.slane %v4904, 1
    %v4906 = vadd.f32 %v4904, %v4905
    %v4907 = vrot.slane %v4111, 2
    %v4909 = vmul.f32 %v384, %v4907
    %v4910 = vadd.f32 %v4906, %v4909
    %v4911 = vadd.f32 %v4554, %v4910
    %v4912 = vlaneseq
    %v4913 = vshrl.u32 %v4912, 7
    %v4914 = vsub.s32 4, %v4913
    %v4915 = vrot.slane %v4249, %v4914
    %v4916 = vmul.f32 %v4915, %v379
    %v4917 = vmul.f32 %v4915, %v380
    %v4918 = vmul.f32 %v4916, 1.442695
    %v4919 = vpow.pop %v4918
    %v4920 = vmul.f32 %v4917, 1.442695
    %v4921 = vpow.pop %v4920
    %v4922 = vmul.f32 %v4919, %v4886
    %v4923 = vmul.f32 %v4921, %v4887
    %4924 = vset.pattern.permute.xlu0 12
    %4925 = vperm.xlu0 %4924, %v4330
    %v4926 = vpop.permute.xlu0 %4925
    %4928 = vset.pattern.permute.xlu0 12
    %4929 = vperm.xlu0 %4928, %v4335
    %v4930 = vpop.permute.xlu0 %4929
    %v4932 = vlaneseq
    %v4933 = vshrl.u32 %v4932, 7
    %v4934 = vsub.s32 4, %v4933
    %v4935 = vrot.slane %v4567, %v4934
    %v4936 = vmul.f32 %v4926, %v4935
    %v4937 = vmul.f32 %v4930, %v4935
    %v4938 = vadd.f32 %v4922, %v4936
    %v4939 = vadd.f32 %v4923, %v4937
    %4940 = vset.pattern.permute.xlu0 12
    %4941 = vperm.xlu0 %4940, %v4340
    %v4942 = vpop.permute.xlu0 %4941
    %4944 = vset.pattern.permute.xlu0 12
    %4945 = vperm.xlu0 %4944, %v4345
    %v4946 = vpop.permute.xlu0 %4945
    %v4948 = vmul.f32 %v4938, %v4942
    %v4949 = vmul.f32 %v4939, %v4946
    %v4950 = vsel %vm1158, %v4948, 0.0
    %v4951 = vsel %vm1158, %v4949, 0.0
    %v4952 = vadd.f32 %v4950, %v4951
    %v4953 = vrot.slane %v4952, 4
    %v4954 = vadd.f32 %v4952, %v4953
    %v4955 = vrot.slane %v4954, 2
    %v4956 = vadd.f32 %v4954, %v4955
    %v4957 = vrot.slane %v4956, 1
    %v4958 = vadd.f32 %v4956, %v4957
    %v4959 = vrot.slane %v4111, 4
    %v4961 = vmul.f32 %v384, %v4959
    %v4962 = vadd.f32 %v4958, %v4961
    %v4963 = vadd.f32 %v4503, %v4962
    %v4964 = vlaneseq
    %v4965 = vshrl.u32 %v4964, 7
    %v4966 = vsub.s32 6, %v4965
    %v4967 = vrot.slane %v4249, %v4966
    %v4968 = vmul.f32 %v4967, %v379
    %v4969 = vmul.f32 %v4967, %v380
    %v4970 = vmul.f32 %v4968, 1.442695
    %v4971 = vpow.pop %v4970
    %v4972 = vmul.f32 %v4969, 1.442695
    %v4973 = vpow.pop %v4972
    %v4974 = vmul.f32 %v4971, %v4938
    %v4975 = vmul.f32 %v4973, %v4939
    %4976 = vset.pattern.permute.xlu0 14
    %4977 = vperm.xlu0 %4976, %v4330
    %v4978 = vpop.permute.xlu0 %4977
    %4980 = vset.pattern.permute.xlu0 14
    %4981 = vperm.xlu0 %4980, %v4335
    %v4982 = vpop.permute.xlu0 %4981
    %v4984 = vlaneseq
    %v4985 = vshrl.u32 %v4984, 7
    %v4986 = vsub.s32 6, %v4985
    %v4987 = vrot.slane %v4567, %v4986
    %v4988 = vmul.f32 %v4978, %v4987
    %v4989 = vmul.f32 %v4982, %v4987
    %v4990 = vadd.f32 %v4974, %v4988
    %v4991 = vadd.f32 %v4975, %v4989
    %4992 = vset.pattern.permute.xlu0 14
    %4993 = vperm.xlu0 %4992, %v4340
    %v4994 = vpop.permute.xlu0 %4993
    %4996 = vset.pattern.permute.xlu0 14
    %4997 = vperm.xlu0 %4996, %v4345
    %v4998 = vpop.permute.xlu0 %4997
    %v5000 = vmul.f32 %v4990, %v4994
    %v5001 = vmul.f32 %v4991, %v4998
    %v5002 = vsel %vm1158, %v5000, 0.0
    %v5003 = vsel %vm1158, %v5001, 0.0
    %v5004 = vadd.f32 %v5002, %v5003
    %v5005 = vrot.slane %v5004, 4
    %v5006 = vadd.f32 %v5004, %v5005
    %v5007 = vrot.slane %v5006, 2
    %v5008 = vadd.f32 %v5006, %v5007
    %v5009 = vrot.slane %v5008, 1
    %v5010 = vadd.f32 %v5008, %v5009
    %v5011 = vrot.slane %v4111, 6
    %v5013 = vmul.f32 %v384, %v5011
    %v5014 = vadd.f32 %v5010, %v5013
    %v5015 = vadd.f32 %v4452, %v5014
    %v5016 = vlaneseq
    %v5017 = vshrl.u32 %v5016, 7
    %v5018 = vsub.s32 0, %v5017
    %v5019 = vrot.slane %v4250, %v5018
    %v5020 = vmul.f32 %v5019, %v379
    %v5021 = vmul.f32 %v5019, %v380
    %v5022 = vmul.f32 %v5020, 1.442695
    %v5023 = vpow.pop %v5022
    %v5024 = vmul.f32 %v5021, 1.442695
    %v5025 = vpow.pop %v5024
    %v5026 = vmul.f32 %v5023, %v4990
    %v5027 = vmul.f32 %v5025, %v4991
    %v5028 = vmul.f32 %v4250, %v4112
    %5029 = vset.pattern.permute.xlu0 16
    %5030 = vperm.xlu0 %5029, %v4330
    %v5031 = vpop.permute.xlu0 %5030
    %5033 = vset.pattern.permute.xlu0 16
    %5034 = vperm.xlu0 %5033, %v4335
    %v5035 = vpop.permute.xlu0 %5034
    %v5037 = vlaneseq
    %v5038 = vshrl.u32 %v5037, 7
    %v5039 = vsub.s32 0, %v5038
    %v5040 = vrot.slane %v5028, %v5039
    %v5041 = vmul.f32 %v5031, %v5040
    %v5042 = vmul.f32 %v5035, %v5040
    %v5043 = vadd.f32 %v5026, %v5041
    %v5044 = vadd.f32 %v5027, %v5042
    %5045 = vset.pattern.permute.xlu0 16
    %5046 = vperm.xlu0 %5045, %v4340
    %v5047 = vpop.permute.xlu0 %5046
    %5049 = vset.pattern.permute.xlu0 16
    %5050 = vperm.xlu0 %5049, %v4345
    %v5051 = vpop.permute.xlu0 %5050
    %v5053 = vmul.f32 %v5043, %v5047
    %v5054 = vmul.f32 %v5044, %v5051
    %v5055 = vsel %vm1158, %v5053, 0.0
    %v5056 = vsel %vm1158, %v5054, 0.0
    %v5057 = vadd.f32 %v5055, %v5056
    %v5058 = vrot.slane %v5057, 4
    %v5059 = vadd.f32 %v5057, %v5058
    %v5060 = vrot.slane %v5059, 2
    %v5061 = vadd.f32 %v5059, %v5060
    %v5062 = vrot.slane %v5061, 1
    %v5063 = vadd.f32 %v5061, %v5062
    %v5064 = vmul.f32 %v384, %v4112
    %v5065 = vadd.f32 %v5063, %v5064
    %v5066 = vadd.f32 %v4401, %v5065
    %v5067 = vlaneseq
    %v5068 = vshrl.u32 %v5067, 7
    %v5069 = vsub.s32 2, %v5068
    %v5070 = vrot.slane %v4250, %v5069
    %v5071 = vmul.f32 %v5070, %v379
    %v5072 = vmul.f32 %v5070, %v380
    %v5073 = vmul.f32 %v5071, 1.442695
    %v5074 = vpow.pop %v5073
    %v5075 = vmul.f32 %v5072, 1.442695
    %v5076 = vpow.pop %v5075
    %v5077 = vmul.f32 %v5074, %v5043
    %v5078 = vmul.f32 %v5076, %v5044
    %5079 = vset.pattern.permute.xlu0 18
    %5080 = vperm.xlu0 %5079, %v4330
    %v5081 = vpop.permute.xlu0 %5080
    %5083 = vset.pattern.permute.xlu0 18
    %5084 = vperm.xlu0 %5083, %v4335
    %v5085 = vpop.permute.xlu0 %5084
    %v5087 = vlaneseq
    %v5088 = vshrl.u32 %v5087, 7
    %v5089 = vsub.s32 2, %v5088
    %v5090 = vrot.slane %v5028, %v5089
    %v5091 = vmul.f32 %v5081, %v5090
    %v5092 = vmul.f32 %v5085, %v5090
    %v5093 = vadd.f32 %v5077, %v5091
    %v5094 = vadd.f32 %v5078, %v5092
    %5095 = vset.pattern.permute.xlu0 18
    %5096 = vperm.xlu0 %5095, %v4340
    %v5097 = vpop.permute.xlu0 %5096
    %5099 = vset.pattern.permute.xlu0 18
    %5100 = vperm.xlu0 %5099, %v4345
    %v5101 = vpop.permute.xlu0 %5100
    %v5103 = vmul.f32 %v5093, %v5097
    %v5104 = vmul.f32 %v5094, %v5101
    %v5105 = vsel %vm1158, %v5103, 0.0
    %v5106 = vsel %vm1158, %v5104, 0.0
    %v5107 = vadd.f32 %v5105, %v5106
    %v5108 = vrot.slane %v5107, 4
    %v5109 = vadd.f32 %v5107, %v5108
    %v5110 = vrot.slane %v5109, 2
    %v5111 = vadd.f32 %v5109, %v5110
    %v5112 = vrot.slane %v5111, 1
    %v5113 = vadd.f32 %v5111, %v5112
    %v5114 = vrot.slane %v4112, 2
    %v5116 = vmul.f32 %v384, %v5114
    %v5117 = vadd.f32 %v5113, %v5116
    %v5118 = vadd.f32 %v4604, %v5117
    %v5119 = vlaneseq
    %v5120 = vshrl.u32 %v5119, 7
    %v5121 = vsub.s32 3, %v5120
    %v5122 = vrot.slane %v4249, %v5121
    %v5123 = vmul.f32 %v5122, %v379
    %v5124 = vmul.f32 %v5122, %v380
    %v5125 = vmul.f32 %v5123, 1.442695
    %v5126 = vpow.pop %v5125
    %v5127 = vmul.f32 %v5124, 1.442695
    %v5128 = vpow.pop %v5127
    %v5129 = vmul.f32 %v5126, 0.0
    %v5130 = vmul.f32 %v5128, 0.0
    %5131 = vset.pattern.permute.xlu0 11
    %5132 = vperm.xlu0 %5131, %v4330
    %v5133 = vpop.permute.xlu0 %5132
    %5135 = vset.pattern.permute.xlu0 11
    %5136 = vperm.xlu0 %5135, %v4335
    %v5137 = vpop.permute.xlu0 %5136
    %v5139 = vlaneseq
    %v5140 = vshrl.u32 %v5139, 7
    %v5141 = vsub.s32 3, %v5140
    %v5142 = vrot.slane %v4567, %v5141
    %v5143 = vmul.f32 %v5133, %v5142
    %v5144 = vmul.f32 %v5137, %v5142
    %v5145 = vadd.f32 %v5129, %v5143
    %v5146 = vadd.f32 %v5130, %v5144
    %5147 = vset.pattern.permute.xlu0 11
    %5148 = vperm.xlu0 %5147, %v4340
    %v5149 = vpop.permute.xlu0 %5148
    %5151 = vset.pattern.permute.xlu0 11
    %5152 = vperm.xlu0 %5151, %v4345
    %v5153 = vpop.permute.xlu0 %5152
    %v5155 = vmul.f32 %v5145, %v5149
    %v5156 = vmul.f32 %v5146, %v5153
    %v5157 = vsel %vm1158, %v5155, 0.0
    %v5158 = vsel %vm1158, %v5156, 0.0
    %v5159 = vadd.f32 %v5157, %v5158
    %v5160 = vrot.slane %v5159, 4
    %v5161 = vadd.f32 %v5159, %v5160
    %v5162 = vrot.slane %v5161, 2
    %v5163 = vadd.f32 %v5161, %v5162
    %v5164 = vrot.slane %v5163, 1
    %v5165 = vadd.f32 %v5163, %v5164
    %v5166 = vrot.slane %v4111, 3
    %v5168 = vmul.f32 %v384, %v5166
    %v5169 = vadd.f32 %v5165, %v5168
    %v5170 = vadd.f32 %v4808, %v5169
    %v5171 = vlaneseq
    %v5172 = vshrl.u32 %v5171, 7
    %v5173 = vsub.s32 5, %v5172
    %v5174 = vrot.slane %v4249, %v5173
    %v5175 = vmul.f32 %v5174, %v379
    %v5176 = vmul.f32 %v5174, %v380
    %v5177 = vmul.f32 %v5175, 1.442695
    %v5178 = vpow.pop %v5177
    %v5179 = vmul.f32 %v5176, 1.442695
    %v5180 = vpow.pop %v5179
    %v5181 = vmul.f32 %v5178, %v5145
    %v5182 = vmul.f32 %v5180, %v5146
    %5183 = vset.pattern.permute.xlu0 13
    %5184 = vperm.xlu0 %5183, %v4330
    %v5185 = vpop.permute.xlu0 %5184
    %5187 = vset.pattern.permute.xlu0 13
    %5188 = vperm.xlu0 %5187, %v4335
    %v5189 = vpop.permute.xlu0 %5188
    %v5191 = vlaneseq
    %v5192 = vshrl.u32 %v5191, 7
    %v5193 = vsub.s32 5, %v5192
    %v5194 = vrot.slane %v4567, %v5193
    %v5195 = vmul.f32 %v5185, %v5194
    %v5196 = vmul.f32 %v5189, %v5194
    %v5197 = vadd.f32 %v5181, %v5195
    %v5198 = vadd.f32 %v5182, %v5196
    %5199 = vset.pattern.permute.xlu0 13
    %5200 = vperm.xlu0 %5199, %v4340
    %v5201 = vpop.permute.xlu0 %5200
    %5203 = vset.pattern.permute.xlu0 13
    %5204 = vperm.xlu0 %5203, %v4345
    %v5205 = vpop.permute.xlu0 %5204
    %v5207 = vmul.f32 %v5197, %v5201
    %v5208 = vmul.f32 %v5198, %v5205
    %v5209 = vsel %vm1158, %v5207, 0.0
    %v5210 = vsel %vm1158, %v5208, 0.0
    %v5211 = vadd.f32 %v5209, %v5210
    %v5212 = vrot.slane %v5211, 4
    %v5213 = vadd.f32 %v5211, %v5212
    %v5214 = vrot.slane %v5213, 2
    %v5215 = vadd.f32 %v5213, %v5214
    %v5216 = vrot.slane %v5215, 1
    %v5217 = vadd.f32 %v5215, %v5216
    %v5218 = vrot.slane %v4111, 5
    %v5220 = vmul.f32 %v384, %v5218
    %v5221 = vadd.f32 %v5217, %v5220
    %v5222 = vadd.f32 %v4757, %v5221
    %v5223 = vlaneseq
    %v5224 = vshrl.u32 %v5223, 7
    %v5225 = vsub.s32 7, %v5224
    %v5226 = vrot.slane %v4249, %v5225
    %v5227 = vmul.f32 %v5226, %v379
    %v5228 = vmul.f32 %v5226, %v380
    %v5229 = vmul.f32 %v5227, 1.442695
    %v5230 = vpow.pop %v5229
    %v5231 = vmul.f32 %v5228, 1.442695
    %v5232 = vpow.pop %v5231
    %v5233 = vmul.f32 %v5230, %v5197
    %v5234 = vmul.f32 %v5232, %v5198
    %5235 = vset.pattern.permute.xlu0 15
    %5236 = vperm.xlu0 %5235, %v4330
    %v5237 = vpop.permute.xlu0 %5236
    %5239 = vset.pattern.permute.xlu0 15
    %5240 = vperm.xlu0 %5239, %v4335
    %v5241 = vpop.permute.xlu0 %5240
    %v5243 = vlaneseq
    %v5244 = vshrl.u32 %v5243, 7
    %v5245 = vsub.s32 7, %v5244
    %v5246 = vrot.slane %v4567, %v5245
    %v5247 = vmul.f32 %v5237, %v5246
    %v5248 = vmul.f32 %v5241, %v5246
    %v5249 = vadd.f32 %v5233, %v5247
    %v5250 = vadd.f32 %v5234, %v5248
    %5251 = vset.pattern.permute.xlu0 15
    %5252 = vperm.xlu0 %5251, %v4340
    %v5253 = vpop.permute.xlu0 %5252
    %5255 = vset.pattern.permute.xlu0 15
    %5256 = vperm.xlu0 %5255, %v4345
    %v5257 = vpop.permute.xlu0 %5256
    %v5259 = vmul.f32 %v5249, %v5253
    %v5260 = vmul.f32 %v5250, %v5257
    %v5261 = vsel %vm1158, %v5259, 0.0
    %v5262 = vsel %vm1158, %v5260, 0.0
    %v5263 = vadd.f32 %v5261, %v5262
    %v5264 = vrot.slane %v5263, 4
    %v5265 = vadd.f32 %v5263, %v5264
    %v5266 = vrot.slane %v5265, 2
    %v5267 = vadd.f32 %v5265, %v5266
    %v5268 = vrot.slane %v5267, 1
    %v5269 = vadd.f32 %v5267, %v5268
    %v5270 = vrot.slane %v4111, 7
    %v5272 = vmul.f32 %v384, %v5270
    %v5273 = vadd.f32 %v5269, %v5272
    %v5274 = vadd.f32 %v4706, %v5273
    %v5275 = vlaneseq
    %v5276 = vshrl.u32 %v5275, 7
    %v5277 = vsub.s32 1, %v5276
    %v5278 = vrot.slane %v4250, %v5277
    %v5279 = vmul.f32 %v5278, %v379
    %v5280 = vmul.f32 %v5278, %v380
    %v5281 = vmul.f32 %v5279, 1.442695
    %v5282 = vpow.pop %v5281
    %v5283 = vmul.f32 %v5280, 1.442695
    %v5284 = vpow.pop %v5283
    %v5285 = vmul.f32 %v5282, %v5249
    %v5286 = vmul.f32 %v5284, %v5250
    %5287 = vset.pattern.permute.xlu0 17
    %5288 = vperm.xlu0 %5287, %v4330
    %v5289 = vpop.permute.xlu0 %5288
    %5291 = vset.pattern.permute.xlu0 17
    %5292 = vperm.xlu0 %5291, %v4335
    %v5293 = vpop.permute.xlu0 %5292
    %v5295 = vlaneseq
    %v5296 = vshrl.u32 %v5295, 7
    %v5297 = vsub.s32 1, %v5296
    %v5298 = vrot.slane %v5028, %v5297
    %v5299 = vmul.f32 %v5289, %v5298
    %v5300 = vmul.f32 %v5293, %v5298
    %v5301 = vadd.f32 %v5285, %v5299
    %v5302 = vadd.f32 %v5286, %v5300
    %5303 = vset.pattern.permute.xlu0 17
    %5304 = vperm.xlu0 %5303, %v4340
    %v5305 = vpop.permute.xlu0 %5304
    %5307 = vset.pattern.permute.xlu0 17
    %5308 = vperm.xlu0 %5307, %v4345
    %v5309 = vpop.permute.xlu0 %5308
    %v5311 = vmul.f32 %v5301, %v5305
    %v5312 = vmul.f32 %v5302, %v5309
    %v5313 = vsel %vm1158, %v5311, 0.0
    %v5314 = vsel %vm1158, %v5312, 0.0
    %v5315 = vadd.f32 %v5313, %v5314
    %v5316 = vrot.slane %v5315, 4
    %v5317 = vadd.f32 %v5315, %v5316
    %v5318 = vrot.slane %v5317, 2
    %v5319 = vadd.f32 %v5317, %v5318
    %v5320 = vrot.slane %v5319, 1
    %v5321 = vadd.f32 %v5319, %v5320
    %v5322 = vrot.slane %v4112, 1
    %v5324 = vmul.f32 %v384, %v5322
    %v5325 = vadd.f32 %v5321, %v5324
    %v5326 = vadd.f32 %v4655, %v5325
    %v5327 = vlaneseq
    %v5328 = vshrl.u32 %v5327, 7
    %v5329 = vsub.s32 3, %v5328
    %v5330 = vrot.slane %v4250, %v5329
    %v5331 = vmul.f32 %v5330, %v379
    %v5332 = vmul.f32 %v5330, %v380
    %v5333 = vmul.f32 %v5331, 1.442695
    %v5334 = vpow.pop %v5333
    %v5335 = vmul.f32 %v5332, 1.442695
    %v5336 = vpow.pop %v5335
    %v5337 = vmul.f32 %v5334, %v5301
    %v5338 = vmul.f32 %v5336, %v5302
    %5339 = vset.pattern.permute.xlu0 19
    %5340 = vperm.xlu0 %5339, %v4330
    %v5341 = vpop.permute.xlu0 %5340
    %5343 = vset.pattern.permute.xlu0 19
    %5344 = vperm.xlu0 %5343, %v4335
    %v5345 = vpop.permute.xlu0 %5344
    %v5347 = vlaneseq
    %v5348 = vshrl.u32 %v5347, 7
    %v5349 = vsub.s32 3, %v5348
    %v5350 = vrot.slane %v5028, %v5349
    %v5351 = vmul.f32 %v5341, %v5350
    %v5352 = vmul.f32 %v5345, %v5350
    %v5353 = vadd.f32 %v5337, %v5351
    %v5354 = vadd.f32 %v5338, %v5352
    %5355 = vset.pattern.permute.xlu0 19
    %5356 = vperm.xlu0 %5355, %v4340
    %v5357 = vpop.permute.xlu0 %5356
    %5359 = vset.pattern.permute.xlu0 19
    %5360 = vperm.xlu0 %5359, %v4345
    %v5361 = vpop.permute.xlu0 %5360
    %v5363 = vmul.f32 %v5353, %v5357
    %v5364 = vmul.f32 %v5354, %v5361
    %v5365 = vsel %vm1158, %v5363, 0.0
    %v5366 = vsel %vm1158, %v5364, 0.0
    %v5367 = vadd.f32 %v5365, %v5366
    %v5368 = vrot.slane %v5367, 4
    %v5369 = vadd.f32 %v5367, %v5368
    %v5370 = vrot.slane %v5369, 2
    %v5371 = vadd.f32 %v5369, %v5370
    %v5372 = vrot.slane %v5371, 1
    %v5373 = vadd.f32 %v5371, %v5372
    %v5374 = vrot.slane %v4112, 3
    %v5376 = vmul.f32 %v384, %v5374
    %v5377 = vadd.f32 %v5373, %v5376
    %v5378 = vadd.f32 %v4859, %v5377
    %v5380 = vrot.slane %v5326, 7
    %v5383 = vrot.slane %v5015, 6
    %v5386 = vrot.slane %v5274, 5
    %v5389 = vrot.slane %v4963, 4
    %v5392 = vrot.slane %v5222, 3
    %v5395 = vrot.slane %v4911, 2
    %v5398 = vrot.slane %v5170, 1
    %v5401 = vrot.slane %v5378, 7
    %v5403 = vsel %vm2445, %v5066, %v5380
    %v5404 = vsel %vm768, %v5403, %v5383
    %v5405 = vsel %vm2448, %v5404, %v5386
    %v5406 = vsel %vm846, %v5405, %v5389
    %v5407 = vsel %vm2451, %v5406, %v5392
    %v5408 = vsel %vm1120, %v5407, %v5395
    %v5409 = vsel %vm2454, %v5408, %v5398
    %v5410 = vsel %vm2445, %v5118, %v5401
    %v5411 = vmul.f32 %v5409, 0.5
    %v5412 = vmul.f32 %v5410, 0.5
    %v5413 = vmul.f32 %v5411, %v4017
    %v5414 = vmul.f32 %v5412, %v4018
    %v5416 = vsel %vm1158, %v5413, 0
    %v5419 = vsel %vm1158, %v5414, 0
    %5421 = vmatprep.subr.mxu0 0.0
    %5422 = vmatpush1.msra.mxu0 %v385
    %5423 = vmatprep.subr.mxu0 0.0
    %5424 = vmatpush1.msra.mxu0 %v386
    %5425 = vmatprep.subr.mxu0 0.0
    %5426 = vmatpush1.msra.mxu0 %v387
    %5427 = vmatprep.subr.mxu0 0.0
    %5428 = vmatpush1.msra.mxu0 %v388
    %5429 = vmatprep.subr.mxu0 0.0
    %5430 = vmatpush1.msra.mxu0 %v389
    %5431 = vmatprep.subr.mxu0 0.0
    %5432 = vmatpush1.msra.mxu0 %v390
    %5433 = vmatprep.subr.mxu0 0.0
    %5434 = vmatpush1.msra.mxu0 %v391
    %5435 = vmatprep.subr.mxu0 0.0
    %5436 = vmatpush1.msra.mxu0 %v392
    %5437 = vmatprep.subr.mxu0 0.0
    %5438 = vmatpush1.msra.mxu0 0.0
    %5439 = vmatprep.subr.mxu0 0.0
    %5440 = vmatpush1.msra.mxu0 0.0
    %5441 = vmatprep.subr.mxu0 0.0
    %5442 = vmatpush1.msra.mxu0 0.0
    %5443 = vmatprep.subr.mxu0 0.0
    %5444 = vmatpush1.msra.mxu0 0.0
    %5445 = vmatprep.subr.mxu0 0.0
    %5446 = vmatpush1.msra.mxu0 0.0
    %5447 = vmatprep.subr.mxu0 0.0
    %5448 = vmatpush1.msra.mxu0 0.0
    %5449 = vmatprep.subr.mxu0 0.0
    %5450 = vmatpush1.msra.mxu0 0.0
    %5451 = vmatprep.subr.mxu0 0.0
    %5452 = vmatpush1.msra.mxu0 0.0
    %5453 = vmatprep.subr.mxu0 0.0
    %5454 = vmatpush1.msra.mxu0 0.0
    %5455 = vmatprep.subr.mxu0 0.0
    %5456 = vmatpush1.msra.mxu0 0.0
    %5457 = vmatprep.subr.mxu0 0.0
    %5458 = vmatpush1.msra.mxu0 0.0
    %5459 = vmatprep.subr.mxu0 0.0
    %5460 = vmatpush1.msra.mxu0 0.0
    %5461 = vmatprep.subr.mxu0 0.0
    %5462 = vmatpush1.msra.mxu0 0.0
    %5463 = vmatprep.subr.mxu0 0.0
    %5464 = vmatpush1.msra.mxu0 0.0
    %5465 = vmatprep.subr.mxu0 0.0
    %5466 = vmatpush1.msra.mxu0 0.0
    %5467 = vmatprep.subr.mxu0 0.0
    %5468 = vmatpush1.msra.mxu0 0.0
    %5469 = vmatprep.subr.mxu0 0.0
    %5470 = vmatpush1.msra.mxu0 0.0
    %5471 = vmatprep.subr.mxu0 0.0
    %5472 = vmatpush1.msra.mxu0 0.0
    %5473 = vmatprep.subr.mxu0 0.0
    %5474 = vmatpush1.msra.mxu0 0.0
    %5475 = vmatprep.subr.mxu0 0.0
    %5476 = vmatpush1.msra.mxu0 0.0
    %5477 = vmatprep.subr.mxu0 0.0
    %5478 = vmatpush1.msra.mxu0 0.0
    %5479 = vmatprep.subr.mxu0 0.0
    %5480 = vmatpush1.msra.mxu0 0.0
    %5481 = vmatprep.subr.mxu0 0.0
    %5482 = vmatpush1.msra.mxu0 0.0
    %5483 = vmatprep.subr.mxu0 0.0
    %5484 = vmatpush1.msra.mxu0 0.0
    %5485 = vmatprep.mubr.f32.mxu0 0.0
    %5486 = vmatmul.mubr.f32.gmra.mrb[0].mxu0 %v5416
    %v5487 = vpop.f32.mrb[0].mxu0
    %v5488 = vadd.f32 %v3808, %v5487
    %v5489 = vpop.f32.mrb[0].mxu0
    %5490 = vmatprep.mubr.f32.mxu0 0.0
    %5491 = vmatmul.mubr.f32.gmra.mrb[0].mxu0 %v5419
    %v5492 = vpop.f32.mrb[0].mxu0
    %v5493 = vadd.f32 %v3809, %v5492
    %v5494 = vpop.f32.mrb[0].mxu0
    %5495 = vdwg.mxu0
    %v5496 = vsel %vm2542, %v3810, 0.0
    %5497 = vadd.xlane.f32.xlu0 %v5496
    %v5498 = vpop.xlane.xlu0 %5497
    %v5499 = vmul.f32 %v5498, %v856
    %v5500 = vsub.f32 %v3810, %v5499
    %v5501 = vmul.f32 %v5500, %v5500
    %v5502 = vsel %vm2542, %v5501, 0.0
    %5503 = vadd.xlane.f32.xlu0 %v5502
    %v5504 = vpop.xlane.xlu0 %5503
    %v5505 = vmul.f32 %v5504, %v856
    %v5506 = vadd.f32 %v5505, 1e-06
    %v5507 = vrsqrt.pop %v5506
    %v5508 = vmul.f32 %v5500, %v5507
    %v5509 = vlaneseq
    %v5510 = vshrl.u32 %v5509, 7
    %v5511 = vsub.s32 0, %v5510
    %v5512 = vrot.slane %v429, %v5511
    %v5513 = vmul.f32 %v5508, %v5512
    %v5514 = vlaneseq
    %v5515 = vshrl.u32 %v5514, 7
    %v5516 = vsub.s32 0, %v5515
    %v5517 = vrot.slane %v430, %v5516
    %v5518 = vadd.f32 %v5513, %v5517
    %v5520 = vsel %vm848, %v5518, 0
    %5522 = vmatprep.subr.mxu0 0.0
    %5523 = vmatpush1.msra.mxu0 %v399
    %5524 = vmatprep.subr.mxu0 0.0
    %5525 = vmatpush1.msra.mxu0 %v400
    %5526 = vmatprep.subr.mxu0 0.0
    %5527 = vmatpush1.msra.mxu0 %v401
    %5528 = vmatprep.subr.mxu0 0.0
    %5529 = vmatpush1.msra.mxu0 %v402
    %5530 = vmatprep.subr.mxu0 0.0
    %5531 = vmatpush1.msra.mxu0 0.0
    %5532 = vmatprep.subr.mxu0 0.0
    %5533 = vmatpush1.msra.mxu0 0.0
    %5534 = vmatprep.subr.mxu0 0.0
    %5535 = vmatpush1.msra.mxu0 0.0
    %5536 = vmatprep.subr.mxu0 0.0
    %5537 = vmatpush1.msra.mxu0 0.0
    %5538 = vmatprep.subr.mxu0 0.0
    %5539 = vmatpush1.msra.mxu0 0.0
    %5540 = vmatprep.subr.mxu0 0.0
    %5541 = vmatpush1.msra.mxu0 0.0
    %5542 = vmatprep.subr.mxu0 0.0
    %5543 = vmatpush1.msra.mxu0 0.0
    %5544 = vmatprep.subr.mxu0 0.0
    %5545 = vmatpush1.msra.mxu0 0.0
    %5546 = vmatprep.subr.mxu0 0.0
    %5547 = vmatpush1.msra.mxu0 0.0
    %5548 = vmatprep.subr.mxu0 0.0
    %5549 = vmatpush1.msra.mxu0 0.0
    %5550 = vmatprep.subr.mxu0 0.0
    %5551 = vmatpush1.msra.mxu0 0.0
    %5552 = vmatprep.subr.mxu0 0.0
    %5553 = vmatpush1.msra.mxu0 0.0
    %5554 = vmatprep.subr.mxu0 0.0
    %5555 = vmatpush1.msra.mxu0 0.0
    %5556 = vmatprep.subr.mxu0 0.0
    %5557 = vmatpush1.msra.mxu0 0.0
    %5558 = vmatprep.subr.mxu0 0.0
    %5559 = vmatpush1.msra.mxu0 0.0
    %5560 = vmatprep.subr.mxu0 0.0
    %5561 = vmatpush1.msra.mxu0 0.0
    %5562 = vmatprep.subr.mxu0 0.0
    %5563 = vmatpush1.msra.mxu0 0.0
    %5564 = vmatprep.subr.mxu0 0.0
    %5565 = vmatpush1.msra.mxu0 0.0
    %5566 = vmatprep.subr.mxu0 0.0
    %5567 = vmatpush1.msra.mxu0 0.0
    %5568 = vmatprep.subr.mxu0 0.0
    %5569 = vmatpush1.msra.mxu0 0.0
    %5570 = vmatprep.subr.mxu0 0.0
    %5571 = vmatpush1.msra.mxu0 0.0
    %5572 = vmatprep.subr.mxu0 0.0
    %5573 = vmatpush1.msra.mxu0 0.0
    %5574 = vmatprep.subr.mxu0 0.0
    %5575 = vmatpush1.msra.mxu0 0.0
    %5576 = vmatprep.subr.mxu0 0.0
    %5577 = vmatpush1.msra.mxu0 0.0
    %5578 = vmatprep.subr.mxu0 0.0
    %5579 = vmatpush1.msra.mxu0 0.0
    %5580 = vmatprep.subr.mxu0 0.0
    %5581 = vmatpush1.msra.mxu0 0.0
    %5582 = vmatprep.subr.mxu0 0.0
    %5583 = vmatpush1.msra.mxu0 0.0
    %5584 = vmatprep.subr.mxu0 0.0
    %5585 = vmatpush1.msra.mxu0 0.0
    %5586 = vmatprep.mubr.f32.mxu0 0.0
    %5587 = vmatmul.mubr.f32.gmra.mrb[0].mxu0 %v5520
    %v5588 = vpop.f32.mrb[0].mxu0
    %v5589 = vadd.f32 0.0, %v5588
    %v5590 = vpop.f32.mrb[0].mxu0
    %5591 = vdwg.mxu0
    %5592 = vmatprep.subr.mxu0 0.0
    %5593 = vmatpush1.msra.mxu0 %v403
    %5594 = vmatprep.subr.mxu0 0.0
    %5595 = vmatpush1.msra.mxu0 %v404
    %5596 = vmatprep.subr.mxu0 0.0
    %5597 = vmatpush1.msra.mxu0 %v405
    %5598 = vmatprep.subr.mxu0 0.0
    %5599 = vmatpush1.msra.mxu0 %v406
    %5600 = vmatprep.subr.mxu0 0.0
    %5601 = vmatpush1.msra.mxu0 0.0
    %5602 = vmatprep.subr.mxu0 0.0
    %5603 = vmatpush1.msra.mxu0 0.0
    %5604 = vmatprep.subr.mxu0 0.0
    %5605 = vmatpush1.msra.mxu0 0.0
    %5606 = vmatprep.subr.mxu0 0.0
    %5607 = vmatpush1.msra.mxu0 0.0
    %5608 = vmatprep.subr.mxu0 0.0
    %5609 = vmatpush1.msra.mxu0 0.0
    %5610 = vmatprep.subr.mxu0 0.0
    %5611 = vmatpush1.msra.mxu0 0.0
    %5612 = vmatprep.subr.mxu0 0.0
    %5613 = vmatpush1.msra.mxu0 0.0
    %5614 = vmatprep.subr.mxu0 0.0
    %5615 = vmatpush1.msra.mxu0 0.0
    %5616 = vmatprep.subr.mxu0 0.0
    %5617 = vmatpush1.msra.mxu0 0.0
    %5618 = vmatprep.subr.mxu0 0.0
    %5619 = vmatpush1.msra.mxu0 0.0
    %5620 = vmatprep.subr.mxu0 0.0
    %5621 = vmatpush1.msra.mxu0 0.0
    %5622 = vmatprep.subr.mxu0 0.0
    %5623 = vmatpush1.msra.mxu0 0.0
    %5624 = vmatprep.subr.mxu0 0.0
    %5625 = vmatpush1.msra.mxu0 0.0
    %5626 = vmatprep.subr.mxu0 0.0
    %5627 = vmatpush1.msra.mxu0 0.0
    %5628 = vmatprep.subr.mxu0 0.0
    %5629 = vmatpush1.msra.mxu0 0.0
    %5630 = vmatprep.subr.mxu0 0.0
    %5631 = vmatpush1.msra.mxu0 0.0
    %5632 = vmatprep.subr.mxu0 0.0
    %5633 = vmatpush1.msra.mxu0 0.0
    %5634 = vmatprep.subr.mxu0 0.0
    %5635 = vmatpush1.msra.mxu0 0.0
    %5636 = vmatprep.subr.mxu0 0.0
    %5637 = vmatpush1.msra.mxu0 0.0
    %5638 = vmatprep.subr.mxu0 0.0
    %5639 = vmatpush1.msra.mxu0 0.0
    %5640 = vmatprep.subr.mxu0 0.0
    %5641 = vmatpush1.msra.mxu0 0.0
    %5642 = vmatprep.subr.mxu0 0.0
    %5643 = vmatpush1.msra.mxu0 0.0
    %5644 = vmatprep.subr.mxu0 0.0
    %5645 = vmatpush1.msra.mxu0 0.0
    %5646 = vmatprep.subr.mxu0 0.0
    %5647 = vmatpush1.msra.mxu0 0.0
    %5648 = vmatprep.subr.mxu0 0.0
    %5649 = vmatpush1.msra.mxu0 0.0
    %5650 = vmatprep.subr.mxu0 0.0
    %5651 = vmatpush1.msra.mxu0 0.0
    %5652 = vmatprep.subr.mxu0 0.0
    %5653 = vmatpush1.msra.mxu0 0.0
    %5654 = vmatprep.subr.mxu0 0.0
    %5655 = vmatpush1.msra.mxu0 0.0
    %5656 = vmatprep.mubr.f32.mxu0 0.0
    %5657 = vmatmul.mubr.f32.gmra.mrb[0].mxu0 %v5520
    %v5658 = vpop.f32.mrb[0].mxu0
    %v5659 = vadd.f32 0.0, %v5658
    %v5660 = vpop.f32.mrb[0].mxu0
    %5661 = vdwg.mxu0
    %v5662 = vsub.f32 0.0, %v5659
    %v5663 = vmul.f32 %v5662, 1.442695
    %v5664 = vpow.pop %v5663
    %v5665 = vadd.f32 %v5664, 1.0
    %v5666 = vrcp.pop %v5665
    %v5667 = vmul.f32 1.0, %v5666
    %v5668 = vmul.f32 %v5659, %v5667
    %v5669 = vlaneseq
    %v5670 = vshrl.u32 %v5669, 7
    %v5671 = vsub.s32 3, %v5670
    %v5672 = vrot.slane %v417, %v5671
    %v5673 = vmul.f32 %v5589, %v5672
    %v5674 = vlaneseq
    %v5675 = vshrl.u32 %v5674, 7
    %v5676 = vsub.s32 2, %v5675
    %v5677 = vrot.slane %v417, %v5676
    %v5678 = vmul.f32 %v5589, %v5677
    %v5680 = vrot.slane %v5678, 6
    %v5682 = vadd.f32 %v5673, %v5680
    %v5683 = vlaneseq
    %v5684 = vshrl.u32 %v5683, 7
    %v5685 = vsub.s32 1, %v5684
    %v5686 = vrot.slane %v417, %v5685
    %v5687 = vmul.f32 %v5589, %v5686
    %v5689 = vrot.slane %v5687, 4
    %v5691 = vadd.f32 %v5682, %v5689
    %v5692 = vrot.slane %v5678, 2
    %v5694 = vadd.f32 %v5673, %v5692
    %v5695 = vrot.slane %v5678, 4
    %v5697 = vadd.f32 %v5673, %v5695
    %v5698 = vrot.slane %v5687, 6
    %v5700 = vadd.f32 %v5697, %v5698
    %v5702 = vrot.slane %v5673, 4
    %v5705 = vrot.slane %v5700, 2
    %v5707 = vsel %vm768, %v5673, %v5682
    %v5708 = vsel %vm846, %v5707, %v5691
    %v5709 = vsel %vm1120, %v5708, %v5702
    %v5710 = vsel %vm768, %v5694, %v5705
    %v5711 = vlaneseq
    %v5712 = vshrl.u32 %v5711, 7
    %v5713 = vsub.s32 0, %v5712
    %v5714 = vrot.slane %v418, %v5713
    %v5715 = vadd.f32 %v5709, %v5714
    %v5716 = vadd.f32 %v5710, %v5714
    %v5717 = vsub.f32 0.0, %v5715
    %v5718 = vsub.f32 0.0, %v5716
    %v5719 = vmul.f32 %v5717, 1.442695
    %v5720 = vpow.pop %v5719
    %v5721 = vmul.f32 %v5718, 1.442695
    %v5722 = vpow.pop %v5721
    %v5723 = vadd.f32 %v5720, 1.0
    %v5724 = vadd.f32 %v5722, 1.0
    %v5725 = vrcp.pop %v5723
    %v5726 = vmul.f32 1.0, %v5725
    %v5727 = vrcp.pop %v5724
    %v5728 = vmul.f32 1.0, %v5727
    %v5729 = vmul.f32 %v5715, %v5726
    %v5730 = vmul.f32 %v5716, %v5728
    %v5731 = vlaneseq
    %v5732 = vshrl.u32 %v5731, 7
    %v5733 = vsub.s32 0, %v5732
    %v5734 = vrot.slane %v419, %v5733
    %v5736 = vsel %vm1158, %v5729, 0
    %v5739 = vsel %vm1158, %v5730, 0
    %5741 = vmatprep.subr.mxu0 0.0
    %5742 = vmatpush1.msra.mxu0 %v407
    %5743 = vmatprep.subr.mxu0 0.0
    %5744 = vmatpush1.msra.mxu0 %v408
    %5745 = vmatprep.subr.mxu0 0.0
    %5746 = vmatpush1.msra.mxu0 %v409
    %5747 = vmatprep.subr.mxu0 0.0
    %5748 = vmatpush1.msra.mxu0 %v410
    %5749 = vmatprep.subr.mxu0 0.0
    %5750 = vmatpush1.msra.mxu0 %v411
    %5751 = vmatprep.subr.mxu0 0.0
    %5752 = vmatpush1.msra.mxu0 %v412
    %5753 = vmatprep.subr.mxu0 0.0
    %5754 = vmatpush1.msra.mxu0 %v413
    %5755 = vmatprep.subr.mxu0 0.0
    %5756 = vmatpush1.msra.mxu0 %v414
    %5757 = vmatprep.subr.mxu0 0.0
    %5758 = vmatpush1.msra.mxu0 0.0
    %5759 = vmatprep.subr.mxu0 0.0
    %5760 = vmatpush1.msra.mxu0 0.0
    %5761 = vmatprep.subr.mxu0 0.0
    %5762 = vmatpush1.msra.mxu0 0.0
    %5763 = vmatprep.subr.mxu0 0.0
    %5764 = vmatpush1.msra.mxu0 0.0
    %5765 = vmatprep.subr.mxu0 0.0
    %5766 = vmatpush1.msra.mxu0 0.0
    %5767 = vmatprep.subr.mxu0 0.0
    %5768 = vmatpush1.msra.mxu0 0.0
    %5769 = vmatprep.subr.mxu0 0.0
    %5770 = vmatpush1.msra.mxu0 0.0
    %5771 = vmatprep.subr.mxu0 0.0
    %5772 = vmatpush1.msra.mxu0 0.0
    %5773 = vmatprep.subr.mxu0 0.0
    %5774 = vmatpush1.msra.mxu0 0.0
    %5775 = vmatprep.subr.mxu0 0.0
    %5776 = vmatpush1.msra.mxu0 0.0
    %5777 = vmatprep.subr.mxu0 0.0
    %5778 = vmatpush1.msra.mxu0 0.0
    %5779 = vmatprep.subr.mxu0 0.0
    %5780 = vmatpush1.msra.mxu0 0.0
    %5781 = vmatprep.subr.mxu0 0.0
    %5782 = vmatpush1.msra.mxu0 0.0
    %5783 = vmatprep.subr.mxu0 0.0
    %5784 = vmatpush1.msra.mxu0 0.0
    %5785 = vmatprep.subr.mxu0 0.0
    %5786 = vmatpush1.msra.mxu0 0.0
    %5787 = vmatprep.subr.mxu0 0.0
    %5788 = vmatpush1.msra.mxu0 0.0
    %5789 = vmatprep.subr.mxu0 0.0
    %5790 = vmatpush1.msra.mxu0 0.0
    %5791 = vmatprep.subr.mxu0 0.0
    %5792 = vmatpush1.msra.mxu0 0.0
    %5793 = vmatprep.subr.mxu0 0.0
    %5794 = vmatpush1.msra.mxu0 0.0
    %5795 = vmatprep.subr.mxu0 0.0
    %5796 = vmatpush1.msra.mxu0 0.0
    %5797 = vmatprep.subr.mxu0 0.0
    %5798 = vmatpush1.msra.mxu0 0.0
    %5799 = vmatprep.subr.mxu0 0.0
    %5800 = vmatpush1.msra.mxu0 0.0
    %5801 = vmatprep.subr.mxu0 0.0
    %5802 = vmatpush1.msra.mxu0 0.0
    %5803 = vmatprep.subr.mxu0 0.0
    %5804 = vmatpush1.msra.mxu0 0.0
    %5805 = vmatprep.mubr.f32.mxu0 0.0
    %5806 = vmatmul.mubr.f32.gmra.mrb[0].mxu0 %v5736
    %v5807 = vpop.f32.mrb[0].mxu0
    %v5808 = vadd.f32 %v5734, %v5807
    %v5809 = vpop.f32.mrb[0].mxu0
    %5810 = vmatprep.mubr.f32.mxu0 0.0
    %5811 = vmatmul.mubr.f32.gmra.mrb[0].mxu0 %v5739
    %v5812 = vpop.f32.mrb[0].mxu0
    %v5813 = vadd.f32 %v5734, %v5812
    %v5814 = vpop.f32.mrb[0].mxu0
    %5815 = vdwg.mxu0
    %v5816 = vmax.f32 %v5808, 0.0
    %v5817 = vmax.f32 %v5813, 0.0
    %v5818 = vand.u32 2147483647, %v5808
    %v5819 = vand.u32 2147483647, %v5813
    %v5820 = vsub.f32 0.0, %v5818
    %v5821 = vsub.f32 0.0, %v5819
    %v5822 = vmul.f32 %v5820, 1.442695
    %v5823 = vpow.pop %v5822
    %v5824 = vmul.f32 %v5821, 1.442695
    %v5825 = vpow.pop %v5824
    %v5826 = vadd.f32 %v5823, 1.0
    %v5827 = vlog2.pop %v5826
    %v5828 = vmul.f32 %v5827, 0.6931472
    %v5829 = vmul.f32 -0.5, %v5823
    %v5830 = vadd.f32 %v5829, 1.0
    %v5831 = vmul.f32 %v5830, %v5823
    %v5832 = vand.u32 2147483647, %v5823
    %vm5833 = vcmp.lt.f32.partialorder %v5832, 0.0004427343
    %v5834 = vsel %vm5833, %v5831, %v5828
    %v5835 = vadd.f32 %v5825, 1.0
    %v5836 = vlog2.pop %v5835
    %v5837 = vmul.f32 %v5836, 0.6931472
    %v5838 = vmul.f32 -0.5, %v5825
    %v5839 = vadd.f32 %v5838, 1.0
    %v5840 = vmul.f32 %v5839, %v5825
    %v5841 = vand.u32 2147483647, %v5825
    %vm5842 = vcmp.lt.f32.partialorder %v5841, 0.0004427343
    %v5843 = vsel %vm5842, %v5840, %v5837
    %v5844 = vadd.f32 %v5816, %v5834
    %v5845 = vadd.f32 %v5817, %v5843
    %v5847 = vsel %vm1158, %v431, 0
    %v5850 = vsel %vm1158, %v432, 0
    %v5853 = vsel %vm1158, %v433, 0
    %v5856 = vsel %vm1158, %v434, 0
    %5858 = vmatprep.subr.mxu0 0.0
    %5859 = vmatpush1.xpose.msra.mxu0 %v5736
    %5860 = vmatprep.subr.mxu0 0.0
    %5861 = vmatpush1.xpose.msra.mxu0 %v5739
    %5862 = vmatprep.subr.mxu0 0.0
    %5863 = vmatpush1.xpose.msra.mxu0 0.0
    %5864 = vmatprep.subr.mxu0 0.0
    %5865 = vmatpush1.xpose.msra.mxu0 0.0
    %5866 = vmatprep.subr.mxu0 0.0
    %5867 = vmatpush1.xpose.msra.mxu0 0.0
    %5868 = vmatprep.subr.mxu0 0.0
    %5869 = vmatpush1.xpose.msra.mxu0 0.0
    %5870 = vmatprep.subr.mxu0 0.0
    %5871 = vmatpush1.xpose.msra.mxu0 0.0
    %5872 = vmatprep.subr.mxu0 0.0
    %5873 = vmatpush1.xpose.msra.mxu0 0.0
    %5874 = vmatprep.subr.mxu0 0.0
    %5875 = vmatpush1.xpose.msra.mxu0 0.0
    %5876 = vmatprep.subr.mxu0 0.0
    %5877 = vmatpush1.xpose.msra.mxu0 0.0
    %5878 = vmatprep.subr.mxu0 0.0
    %5879 = vmatpush1.xpose.msra.mxu0 0.0
    %5880 = vmatprep.subr.mxu0 0.0
    %5881 = vmatpush1.xpose.msra.mxu0 0.0
    %5882 = vmatprep.subr.mxu0 0.0
    %5883 = vmatpush1.xpose.msra.mxu0 0.0
    %5884 = vmatprep.subr.mxu0 0.0
    %5885 = vmatpush1.xpose.msra.mxu0 0.0
    %5886 = vmatprep.subr.mxu0 0.0
    %5887 = vmatpush1.xpose.msra.mxu0 0.0
    %5888 = vmatprep.subr.mxu0 0.0
    %5889 = vmatpush1.xpose.msra.mxu0 0.0
    %5890 = vmatprep.subr.mxu0 0.0
    %5891 = vmatpush1.xpose.msra.mxu0 0.0
    %5892 = vmatprep.subr.mxu0 0.0
    %5893 = vmatpush1.xpose.msra.mxu0 0.0
    %5894 = vmatprep.subr.mxu0 0.0
    %5895 = vmatpush1.xpose.msra.mxu0 0.0
    %5896 = vmatprep.subr.mxu0 0.0
    %5897 = vmatpush1.xpose.msra.mxu0 0.0
    %5898 = vmatprep.subr.mxu0 0.0
    %5899 = vmatpush1.xpose.msra.mxu0 0.0
    %5900 = vmatprep.subr.mxu0 0.0
    %5901 = vmatpush1.xpose.msra.mxu0 0.0
    %5902 = vmatprep.subr.mxu0 0.0
    %5903 = vmatpush1.xpose.msra.mxu0 0.0
    %5904 = vmatprep.subr.mxu0 0.0
    %5905 = vmatpush1.xpose.msra.mxu0 0.0
    %5906 = vmatprep.subr.mxu0 0.0
    %5907 = vmatpush1.xpose.msra.mxu0 0.0
    %5908 = vmatprep.subr.mxu0 0.0
    %5909 = vmatpush1.xpose.msra.mxu0 0.0
    %5910 = vmatprep.subr.mxu0 0.0
    %5911 = vmatpush1.xpose.msra.mxu0 0.0
    %5912 = vmatprep.subr.mxu0 0.0
    %5913 = vmatpush1.xpose.msra.mxu0 0.0
    %5914 = vmatprep.subr.mxu0 0.0
    %5915 = vmatpush1.xpose.msra.mxu0 0.0
    %5916 = vmatprep.subr.mxu0 0.0
    %5917 = vmatpush1.xpose.msra.mxu0 0.0
    %5918 = vmatprep.subr.mxu0 0.0
    %5919 = vmatpush1.xpose.msra.mxu0 0.0
    %5920 = vmatprep.subr.mxu0 0.0
    %5921 = vmatpush1.xpose.msra.mxu0 0.0
    %5922 = vmatprep.mubr.f32.mxu0 0.0
    %5923 = vmatmul.mubr.f32.gmra.mrb[0].mxu0 %v5847
    %v5924 = vpop.f32.mrb[0].mxu0
    %v5925 = vadd.f32 0.0, %v5924
    %v5926 = vpop.f32.mrb[0].mxu0
    %5927 = vmatprep.mubr.f32.mxu0 0.0
    %5928 = vmatmul.mubr.f32.gmra.mrb[0].mxu0 %v5850
    %v5929 = vpop.f32.mrb[0].mxu0
    %v5930 = vadd.f32 0.0, %v5929
    %v5931 = vpop.f32.mrb[0].mxu0
    %5932 = vmatprep.mubr.f32.mxu0 0.0
    %5933 = vmatmul.mubr.f32.gmra.mrb[0].mxu0 %v5853
    %v5934 = vpop.f32.mrb[0].mxu0
    %v5935 = vadd.f32 0.0, %v5934
    %v5936 = vpop.f32.mrb[0].mxu0
    %5937 = vmatprep.mubr.f32.mxu0 0.0
    %5938 = vmatmul.mubr.f32.gmra.mrb[0].mxu0 %v5856
    %v5939 = vpop.f32.mrb[0].mxu0
    %v5940 = vadd.f32 0.0, %v5939
    %v5941 = vpop.f32.mrb[0].mxu0
    %5942 = vdwg.mxu0
    %v5943 = vlaneseq
    %v5944 = vshrl.u32 %v5943, 7
    %v5945 = vsub.s32 0, %v5944
    %v5946 = vrot.slane %v5844, %v5945
    %v5947 = vmul.f32 %v5946, %v415
    %v5948 = vmul.f32 %v5946, %v416
    %v5949 = vmul.f32 %v5947, 1.442695
    %v5950 = vpow.pop %v5949
    %v5951 = vmul.f32 %v5948, 1.442695
    %v5952 = vpow.pop %v5951
    %v5953 = vmul.f32 %v5950, 0.0
    %v5954 = vmul.f32 %v5952, 0.0
    %v5955 = vmul.f32 %v5844, %v5729
    %5957 = vset.pattern.permute.xlu0 0
    %5958 = vperm.xlu0 %5957, %v5925
    %v5959 = vpop.permute.xlu0 %5958
    %5962 = vset.pattern.permute.xlu0 0
    %5963 = vperm.xlu0 %5962, %v5930
    %v5964 = vpop.permute.xlu0 %5963
    %v5966 = vlaneseq
    %v5967 = vshrl.u32 %v5966, 7
    %v5968 = vsub.s32 0, %v5967
    %v5969 = vrot.slane %v5955, %v5968
    %v5970 = vmul.f32 %v5959, %v5969
    %v5971 = vmul.f32 %v5964, %v5969
    %v5972 = vadd.f32 %v5953, %v5970
    %v5973 = vadd.f32 %v5954, %v5971
    %5975 = vset.pattern.permute.xlu0 0
    %5976 = vperm.xlu0 %5975, %v5935
    %v5977 = vpop.permute.xlu0 %5976
    %5980 = vset.pattern.permute.xlu0 0
    %5981 = vperm.xlu0 %5980, %v5940
    %v5982 = vpop.permute.xlu0 %5981
    %v5984 = vmul.f32 %v5972, %v5977
    %v5985 = vmul.f32 %v5973, %v5982
    %v5986 = vsel %vm1158, %v5984, 0.0
    %v5987 = vsel %vm1158, %v5985, 0.0
    %v5988 = vadd.f32 %v5986, %v5987
    %v5989 = vrot.slane %v5988, 4
    %v5990 = vadd.f32 %v5988, %v5989
    %v5991 = vrot.slane %v5990, 2
    %v5992 = vadd.f32 %v5990, %v5991
    %v5993 = vrot.slane %v5992, 1
    %v5994 = vadd.f32 %v5992, %v5993
    %v5995 = vmul.f32 %v420, %v5729
    %v5996 = vadd.f32 %v5994, %v5995
    %v5997 = vlaneseq
    %v5998 = vshrl.u32 %v5997, 7
    %v5999 = vsub.s32 2, %v5998
    %v6000 = vrot.slane %v5844, %v5999
    %v6001 = vmul.f32 %v6000, %v415
    %v6002 = vmul.f32 %v6000, %v416
    %v6003 = vmul.f32 %v6001, 1.442695
    %v6004 = vpow.pop %v6003
    %v6005 = vmul.f32 %v6002, 1.442695
    %v6006 = vpow.pop %v6005
    %v6007 = vmul.f32 %v6004, %v5972
    %v6008 = vmul.f32 %v6006, %v5973
    %6009 = vset.pattern.permute.xlu0 2
    %6010 = vperm.xlu0 %6009, %v5925
    %v6011 = vpop.permute.xlu0 %6010
    %6013 = vset.pattern.permute.xlu0 2
    %6014 = vperm.xlu0 %6013, %v5930
    %v6015 = vpop.permute.xlu0 %6014
    %v6017 = vlaneseq
    %v6018 = vshrl.u32 %v6017, 7
    %v6019 = vsub.s32 2, %v6018
    %v6020 = vrot.slane %v5955, %v6019
    %v6021 = vmul.f32 %v6011, %v6020
    %v6022 = vmul.f32 %v6015, %v6020
    %v6023 = vadd.f32 %v6007, %v6021
    %v6024 = vadd.f32 %v6008, %v6022
    %6025 = vset.pattern.permute.xlu0 2
    %6026 = vperm.xlu0 %6025, %v5935
    %v6027 = vpop.permute.xlu0 %6026
    %6029 = vset.pattern.permute.xlu0 2
    %6030 = vperm.xlu0 %6029, %v5940
    %v6031 = vpop.permute.xlu0 %6030
    %v6033 = vmul.f32 %v6023, %v6027
    %v6034 = vmul.f32 %v6024, %v6031
    %v6035 = vsel %vm1158, %v6033, 0.0
    %v6036 = vsel %vm1158, %v6034, 0.0
    %v6037 = vadd.f32 %v6035, %v6036
    %v6038 = vrot.slane %v6037, 4
    %v6039 = vadd.f32 %v6037, %v6038
    %v6040 = vrot.slane %v6039, 2
    %v6041 = vadd.f32 %v6039, %v6040
    %v6042 = vrot.slane %v6041, 1
    %v6043 = vadd.f32 %v6041, %v6042
    %v6044 = vrot.slane %v5729, 2
    %v6046 = vmul.f32 %v420, %v6044
    %v6047 = vadd.f32 %v6043, %v6046
    %v6048 = vlaneseq
    %v6049 = vshrl.u32 %v6048, 7
    %v6050 = vsub.s32 4, %v6049
    %v6051 = vrot.slane %v5844, %v6050
    %v6052 = vmul.f32 %v6051, %v415
    %v6053 = vmul.f32 %v6051, %v416
    %v6054 = vmul.f32 %v6052, 1.442695
    %v6055 = vpow.pop %v6054
    %v6056 = vmul.f32 %v6053, 1.442695
    %v6057 = vpow.pop %v6056
    %v6058 = vmul.f32 %v6055, %v6023
    %v6059 = vmul.f32 %v6057, %v6024
    %6060 = vset.pattern.permute.xlu0 4
    %6061 = vperm.xlu0 %6060, %v5925
    %v6062 = vpop.permute.xlu0 %6061
    %6064 = vset.pattern.permute.xlu0 4
    %6065 = vperm.xlu0 %6064, %v5930
    %v6066 = vpop.permute.xlu0 %6065
    %v6068 = vlaneseq
    %v6069 = vshrl.u32 %v6068, 7
    %v6070 = vsub.s32 4, %v6069
    %v6071 = vrot.slane %v5955, %v6070
    %v6072 = vmul.f32 %v6062, %v6071
    %v6073 = vmul.f32 %v6066, %v6071
    %v6074 = vadd.f32 %v6058, %v6072
    %v6075 = vadd.f32 %v6059, %v6073
    %6076 = vset.pattern.permute.xlu0 4
    %6077 = vperm.xlu0 %6076, %v5935
    %v6078 = vpop.permute.xlu0 %6077
    %6080 = vset.pattern.permute.xlu0 4
    %6081 = vperm.xlu0 %6080, %v5940
    %v6082 = vpop.permute.xlu0 %6081
    %v6084 = vmul.f32 %v6074, %v6078
    %v6085 = vmul.f32 %v6075, %v6082
    %v6086 = vsel %vm1158, %v6084, 0.0
    %v6087 = vsel %vm1158, %v6085, 0.0
    %v6088 = vadd.f32 %v6086, %v6087
    %v6089 = vrot.slane %v6088, 4
    %v6090 = vadd.f32 %v6088, %v6089
    %v6091 = vrot.slane %v6090, 2
    %v6092 = vadd.f32 %v6090, %v6091
    %v6093 = vrot.slane %v6092, 1
    %v6094 = vadd.f32 %v6092, %v6093
    %v6095 = vrot.slane %v5729, 4
    %v6097 = vmul.f32 %v420, %v6095
    %v6098 = vadd.f32 %v6094, %v6097
    %v6099 = vlaneseq
    %v6100 = vshrl.u32 %v6099, 7
    %v6101 = vsub.s32 1, %v6100
    %v6102 = vrot.slane %v5844, %v6101
    %v6103 = vmul.f32 %v6102, %v415
    %v6104 = vmul.f32 %v6102, %v416
    %v6105 = vmul.f32 %v6103, 1.442695
    %v6106 = vpow.pop %v6105
    %v6107 = vmul.f32 %v6104, 1.442695
    %v6108 = vpow.pop %v6107
    %v6109 = vmul.f32 %v6106, 0.0
    %v6110 = vmul.f32 %v6108, 0.0
    %6111 = vset.pattern.permute.xlu0 1
    %6112 = vperm.xlu0 %6111, %v5925
    %v6113 = vpop.permute.xlu0 %6112
    %6115 = vset.pattern.permute.xlu0 1
    %6116 = vperm.xlu0 %6115, %v5930
    %v6117 = vpop.permute.xlu0 %6116
    %v6119 = vlaneseq
    %v6120 = vshrl.u32 %v6119, 7
    %v6121 = vsub.s32 1, %v6120
    %v6122 = vrot.slane %v5955, %v6121
    %v6123 = vmul.f32 %v6113, %v6122
    %v6124 = vmul.f32 %v6117, %v6122
    %v6125 = vadd.f32 %v6109, %v6123
    %v6126 = vadd.f32 %v6110, %v6124
    %6127 = vset.pattern.permute.xlu0 1
    %6128 = vperm.xlu0 %6127, %v5935
    %v6129 = vpop.permute.xlu0 %6128
    %6131 = vset.pattern.permute.xlu0 1
    %6132 = vperm.xlu0 %6131, %v5940
    %v6133 = vpop.permute.xlu0 %6132
    %v6135 = vmul.f32 %v6125, %v6129
    %v6136 = vmul.f32 %v6126, %v6133
    %v6137 = vsel %vm1158, %v6135, 0.0
    %v6138 = vsel %vm1158, %v6136, 0.0
    %v6139 = vadd.f32 %v6137, %v6138
    %v6140 = vrot.slane %v6139, 4
    %v6141 = vadd.f32 %v6139, %v6140
    %v6142 = vrot.slane %v6141, 2
    %v6143 = vadd.f32 %v6141, %v6142
    %v6144 = vrot.slane %v6143, 1
    %v6145 = vadd.f32 %v6143, %v6144
    %v6146 = vrot.slane %v5729, 1
    %v6148 = vmul.f32 %v420, %v6146
    %v6149 = vadd.f32 %v6145, %v6148
    %v6150 = vlaneseq
    %v6151 = vshrl.u32 %v6150, 7
    %v6152 = vsub.s32 3, %v6151
    %v6153 = vrot.slane %v5844, %v6152
    %v6154 = vmul.f32 %v6153, %v415
    %v6155 = vmul.f32 %v6153, %v416
    %v6156 = vmul.f32 %v6154, 1.442695
    %v6157 = vpow.pop %v6156
    %v6158 = vmul.f32 %v6155, 1.442695
    %v6159 = vpow.pop %v6158
    %v6160 = vmul.f32 %v6157, %v6125
    %v6161 = vmul.f32 %v6159, %v6126
    %6162 = vset.pattern.permute.xlu0 3
    %6163 = vperm.xlu0 %6162, %v5925
    %v6164 = vpop.permute.xlu0 %6163
    %6166 = vset.pattern.permute.xlu0 3
    %6167 = vperm.xlu0 %6166, %v5930
    %v6168 = vpop.permute.xlu0 %6167
    %v6170 = vlaneseq
    %v6171 = vshrl.u32 %v6170, 7
    %v6172 = vsub.s32 3, %v6171
    %v6173 = vrot.slane %v5955, %v6172
    %v6174 = vmul.f32 %v6164, %v6173
    %v6175 = vmul.f32 %v6168, %v6173
    %v6176 = vadd.f32 %v6160, %v6174
    %v6177 = vadd.f32 %v6161, %v6175
    %6178 = vset.pattern.permute.xlu0 3
    %6179 = vperm.xlu0 %6178, %v5935
    %v6180 = vpop.permute.xlu0 %6179
    %6182 = vset.pattern.permute.xlu0 3
    %6183 = vperm.xlu0 %6182, %v5940
    %v6184 = vpop.permute.xlu0 %6183
    %v6186 = vmul.f32 %v6176, %v6180
    %v6187 = vmul.f32 %v6177, %v6184
    %v6188 = vsel %vm1158, %v6186, 0.0
    %v6189 = vsel %vm1158, %v6187, 0.0
    %v6190 = vadd.f32 %v6188, %v6189
    %v6191 = vrot.slane %v6190, 4
    %v6192 = vadd.f32 %v6190, %v6191
    %v6193 = vrot.slane %v6192, 2
    %v6194 = vadd.f32 %v6192, %v6193
    %v6195 = vrot.slane %v6194, 1
    %v6196 = vadd.f32 %v6194, %v6195
    %v6197 = vrot.slane %v5729, 3
    %v6199 = vmul.f32 %v420, %v6197
    %v6200 = vadd.f32 %v6196, %v6199
    %v6201 = vlaneseq
    %v6202 = vshrl.u32 %v6201, 7
    %v6203 = vsub.s32 5, %v6202
    %v6204 = vrot.slane %v5844, %v6203
    %v6205 = vmul.f32 %v6204, %v415
    %v6206 = vmul.f32 %v6204, %v416
    %v6207 = vmul.f32 %v6205, 1.442695
    %v6208 = vpow.pop %v6207
    %v6209 = vmul.f32 %v6206, 1.442695
    %v6210 = vpow.pop %v6209
    %v6211 = vmul.f32 %v6208, %v6176
    %v6212 = vmul.f32 %v6210, %v6177
    %6213 = vset.pattern.permute.xlu0 5
    %6214 = vperm.xlu0 %6213, %v5925
    %v6215 = vpop.permute.xlu0 %6214
    %6217 = vset.pattern.permute.xlu0 5
    %6218 = vperm.xlu0 %6217, %v5930
    %v6219 = vpop.permute.xlu0 %6218
    %v6221 = vlaneseq
    %v6222 = vshrl.u32 %v6221, 7
    %v6223 = vsub.s32 5, %v6222
    %v6224 = vrot.slane %v5955, %v6223
    %v6225 = vmul.f32 %v6215, %v6224
    %v6226 = vmul.f32 %v6219, %v6224
    %v6227 = vadd.f32 %v6211, %v6225
    %v6228 = vadd.f32 %v6212, %v6226
    %6229 = vset.pattern.permute.xlu0 5
    %6230 = vperm.xlu0 %6229, %v5935
    %v6231 = vpop.permute.xlu0 %6230
    %6233 = vset.pattern.permute.xlu0 5
    %6234 = vperm.xlu0 %6233, %v5940
    %v6235 = vpop.permute.xlu0 %6234
    %v6237 = vmul.f32 %v6227, %v6231
    %v6238 = vmul.f32 %v6228, %v6235
    %v6239 = vsel %vm1158, %v6237, 0.0
    %v6240 = vsel %vm1158, %v6238, 0.0
    %v6241 = vadd.f32 %v6239, %v6240
    %v6242 = vrot.slane %v6241, 4
    %v6243 = vadd.f32 %v6241, %v6242
    %v6244 = vrot.slane %v6243, 2
    %v6245 = vadd.f32 %v6243, %v6244
    %v6246 = vrot.slane %v6245, 1
    %v6247 = vadd.f32 %v6245, %v6246
    %v6248 = vrot.slane %v5729, 5
    %v6250 = vmul.f32 %v420, %v6248
    %v6251 = vadd.f32 %v6247, %v6250
    %v6252 = vlaneseq
    %v6253 = vshrl.u32 %v6252, 7
    %v6254 = vsub.s32 6, %v6253
    %v6255 = vrot.slane %v5844, %v6254
    %v6256 = vmul.f32 %v6255, %v415
    %v6257 = vmul.f32 %v6255, %v416
    %v6258 = vmul.f32 %v6256, 1.442695
    %v6259 = vpow.pop %v6258
    %v6260 = vmul.f32 %v6257, 1.442695
    %v6261 = vpow.pop %v6260
    %v6262 = vmul.f32 %v6259, 0.0
    %v6263 = vmul.f32 %v6261, 0.0
    %6264 = vset.pattern.permute.xlu0 6
    %6265 = vperm.xlu0 %6264, %v5925
    %v6266 = vpop.permute.xlu0 %6265
    %6268 = vset.pattern.permute.xlu0 6
    %6269 = vperm.xlu0 %6268, %v5930
    %v6270 = vpop.permute.xlu0 %6269
    %v6272 = vlaneseq
    %v6273 = vshrl.u32 %v6272, 7
    %v6274 = vsub.s32 6, %v6273
    %v6275 = vrot.slane %v5955, %v6274
    %v6276 = vmul.f32 %v6266, %v6275
    %v6277 = vmul.f32 %v6270, %v6275
    %v6278 = vadd.f32 %v6262, %v6276
    %v6279 = vadd.f32 %v6263, %v6277
    %6280 = vset.pattern.permute.xlu0 6
    %6281 = vperm.xlu0 %6280, %v5935
    %v6282 = vpop.permute.xlu0 %6281
    %6284 = vset.pattern.permute.xlu0 6
    %6285 = vperm.xlu0 %6284, %v5940
    %v6286 = vpop.permute.xlu0 %6285
    %v6288 = vmul.f32 %v6278, %v6282
    %v6289 = vmul.f32 %v6279, %v6286
    %v6290 = vsel %vm1158, %v6288, 0.0
    %v6291 = vsel %vm1158, %v6289, 0.0
    %v6292 = vadd.f32 %v6290, %v6291
    %v6293 = vrot.slane %v6292, 4
    %v6294 = vadd.f32 %v6292, %v6293
    %v6295 = vrot.slane %v6294, 2
    %v6296 = vadd.f32 %v6294, %v6295
    %v6297 = vrot.slane %v6296, 1
    %v6298 = vadd.f32 %v6296, %v6297
    %v6299 = vrot.slane %v5729, 6
    %v6301 = vmul.f32 %v420, %v6299
    %v6302 = vadd.f32 %v6298, %v6301
    %v6303 = vadd.f32 %v6047, %v6302
    %v6304 = vlaneseq
    %v6305 = vshrl.u32 %v6304, 7
    %v6306 = vsub.s32 0, %v6305
    %v6307 = vrot.slane %v5845, %v6306
    %v6308 = vmul.f32 %v6307, %v415
    %v6309 = vmul.f32 %v6307, %v416
    %v6310 = vmul.f32 %v6308, 1.442695
    %v6311 = vpow.pop %v6310
    %v6312 = vmul.f32 %v6309, 1.442695
    %v6313 = vpow.pop %v6312
    %v6314 = vmul.f32 %v6311, %v6278
    %v6315 = vmul.f32 %v6313, %v6279
    %v6316 = vmul.f32 %v5845, %v5730
    %6317 = vset.pattern.permute.xlu0 8
    %6318 = vperm.xlu0 %6317, %v5925
    %v6319 = vpop.permute.xlu0 %6318
    %6321 = vset.pattern.permute.xlu0 8
    %6322 = vperm.xlu0 %6321, %v5930
    %v6323 = vpop.permute.xlu0 %6322
    %v6325 = vlaneseq
    %v6326 = vshrl.u32 %v6325, 7
    %v6327 = vsub.s32 0, %v6326
    %v6328 = vrot.slane %v6316, %v6327
    %v6329 = vmul.f32 %v6319, %v6328
    %v6330 = vmul.f32 %v6323, %v6328
    %v6331 = vadd.f32 %v6314, %v6329
    %v6332 = vadd.f32 %v6315, %v6330
    %6333 = vset.pattern.permute.xlu0 8
    %6334 = vperm.xlu0 %6333, %v5935
    %v6335 = vpop.permute.xlu0 %6334
    %6337 = vset.pattern.permute.xlu0 8
    %6338 = vperm.xlu0 %6337, %v5940
    %v6339 = vpop.permute.xlu0 %6338
    %v6341 = vmul.f32 %v6331, %v6335
    %v6342 = vmul.f32 %v6332, %v6339
    %v6343 = vsel %vm1158, %v6341, 0.0
    %v6344 = vsel %vm1158, %v6342, 0.0
    %v6345 = vadd.f32 %v6343, %v6344
    %v6346 = vrot.slane %v6345, 4
    %v6347 = vadd.f32 %v6345, %v6346
    %v6348 = vrot.slane %v6347, 2
    %v6349 = vadd.f32 %v6347, %v6348
    %v6350 = vrot.slane %v6349, 1
    %v6351 = vadd.f32 %v6349, %v6350
    %v6352 = vmul.f32 %v420, %v5730
    %v6353 = vadd.f32 %v6351, %v6352
    %v6354 = vadd.f32 %v5996, %v6353
    %v6355 = vlaneseq
    %v6356 = vshrl.u32 %v6355, 7
    %v6357 = vsub.s32 2, %v6356
    %v6358 = vrot.slane %v5845, %v6357
    %v6359 = vmul.f32 %v6358, %v415
    %v6360 = vmul.f32 %v6358, %v416
    %v6361 = vmul.f32 %v6359, 1.442695
    %v6362 = vpow.pop %v6361
    %v6363 = vmul.f32 %v6360, 1.442695
    %v6364 = vpow.pop %v6363
    %v6365 = vmul.f32 %v6362, %v6331
    %v6366 = vmul.f32 %v6364, %v6332
    %6367 = vset.pattern.permute.xlu0 10
    %6368 = vperm.xlu0 %6367, %v5925
    %v6369 = vpop.permute.xlu0 %6368
    %6371 = vset.pattern.permute.xlu0 10
    %6372 = vperm.xlu0 %6371, %v5930
    %v6373 = vpop.permute.xlu0 %6372
    %v6375 = vlaneseq
    %v6376 = vshrl.u32 %v6375, 7
    %v6377 = vsub.s32 2, %v6376
    %v6378 = vrot.slane %v6316, %v6377
    %v6379 = vmul.f32 %v6369, %v6378
    %v6380 = vmul.f32 %v6373, %v6378
    %v6381 = vadd.f32 %v6365, %v6379
    %v6382 = vadd.f32 %v6366, %v6380
    %6383 = vset.pattern.permute.xlu0 10
    %6384 = vperm.xlu0 %6383, %v5935
    %v6385 = vpop.permute.xlu0 %6384
    %6387 = vset.pattern.permute.xlu0 10
    %6388 = vperm.xlu0 %6387, %v5940
    %v6389 = vpop.permute.xlu0 %6388
    %v6391 = vmul.f32 %v6381, %v6385
    %v6392 = vmul.f32 %v6382, %v6389
    %v6393 = vsel %vm1158, %v6391, 0.0
    %v6394 = vsel %vm1158, %v6392, 0.0
    %v6395 = vadd.f32 %v6393, %v6394
    %v6396 = vrot.slane %v6395, 4
    %v6397 = vadd.f32 %v6395, %v6396
    %v6398 = vrot.slane %v6397, 2
    %v6399 = vadd.f32 %v6397, %v6398
    %v6400 = vrot.slane %v6399, 1
    %v6401 = vadd.f32 %v6399, %v6400
    %v6402 = vrot.slane %v5730, 2
    %v6404 = vmul.f32 %v420, %v6402
    %v6405 = vadd.f32 %v6401, %v6404
    %v6406 = vadd.f32 %v6098, %v6405
    %v6407 = vlaneseq
    %v6408 = vshrl.u32 %v6407, 7
    %v6409 = vsub.s32 7, %v6408
    %v6410 = vrot.slane %v5844, %v6409
    %v6411 = vmul.f32 %v6410, %v415
    %v6412 = vmul.f32 %v6410, %v416
    %v6413 = vmul.f32 %v6411, 1.442695
    %v6414 = vpow.pop %v6413
    %v6415 = vmul.f32 %v6412, 1.442695
    %v6416 = vpow.pop %v6415
    %v6417 = vmul.f32 %v6414, 0.0
    %v6418 = vmul.f32 %v6416, 0.0
    %6419 = vset.pattern.permute.xlu0 7
    %6420 = vperm.xlu0 %6419, %v5925
    %v6421 = vpop.permute.xlu0 %6420
    %6423 = vset.pattern.permute.xlu0 7
    %6424 = vperm.xlu0 %6423, %v5930
    %v6425 = vpop.permute.xlu0 %6424
    %v6427 = vlaneseq
    %v6428 = vshrl.u32 %v6427, 7
    %v6429 = vsub.s32 7, %v6428
    %v6430 = vrot.slane %v5955, %v6429
    %v6431 = vmul.f32 %v6421, %v6430
    %v6432 = vmul.f32 %v6425, %v6430
    %v6433 = vadd.f32 %v6417, %v6431
    %v6434 = vadd.f32 %v6418, %v6432
    %6435 = vset.pattern.permute.xlu0 7
    %6436 = vperm.xlu0 %6435, %v5935
    %v6437 = vpop.permute.xlu0 %6436
    %6439 = vset.pattern.permute.xlu0 7
    %6440 = vperm.xlu0 %6439, %v5940
    %v6441 = vpop.permute.xlu0 %6440
    %v6443 = vmul.f32 %v6433, %v6437
    %v6444 = vmul.f32 %v6434, %v6441
    %v6445 = vsel %vm1158, %v6443, 0.0
    %v6446 = vsel %vm1158, %v6444, 0.0
    %v6447 = vadd.f32 %v6445, %v6446
    %v6448 = vrot.slane %v6447, 4
    %v6449 = vadd.f32 %v6447, %v6448
    %v6450 = vrot.slane %v6449, 2
    %v6451 = vadd.f32 %v6449, %v6450
    %v6452 = vrot.slane %v6451, 1
    %v6453 = vadd.f32 %v6451, %v6452
    %v6454 = vrot.slane %v5729, 7
    %v6456 = vmul.f32 %v420, %v6454
    %v6457 = vadd.f32 %v6453, %v6456
    %v6458 = vadd.f32 %v6200, %v6457
    %v6459 = vlaneseq
    %v6460 = vshrl.u32 %v6459, 7
    %v6461 = vsub.s32 1, %v6460
    %v6462 = vrot.slane %v5845, %v6461
    %v6463 = vmul.f32 %v6462, %v415
    %v6464 = vmul.f32 %v6462, %v416
    %v6465 = vmul.f32 %v6463, 1.442695
    %v6466 = vpow.pop %v6465
    %v6467 = vmul.f32 %v6464, 1.442695
    %v6468 = vpow.pop %v6467
    %v6469 = vmul.f32 %v6466, %v6433
    %v6470 = vmul.f32 %v6468, %v6434
    %6471 = vset.pattern.permute.xlu0 9
    %6472 = vperm.xlu0 %6471, %v5925
    %v6473 = vpop.permute.xlu0 %6472
    %6475 = vset.pattern.permute.xlu0 9
    %6476 = vperm.xlu0 %6475, %v5930
    %v6477 = vpop.permute.xlu0 %6476
    %v6479 = vlaneseq
    %v6480 = vshrl.u32 %v6479, 7
    %v6481 = vsub.s32 1, %v6480
    %v6482 = vrot.slane %v6316, %v6481
    %v6483 = vmul.f32 %v6473, %v6482
    %v6484 = vmul.f32 %v6477, %v6482
    %v6485 = vadd.f32 %v6469, %v6483
    %v6486 = vadd.f32 %v6470, %v6484
    %6487 = vset.pattern.permute.xlu0 9
    %6488 = vperm.xlu0 %6487, %v5935
    %v6489 = vpop.permute.xlu0 %6488
    %6491 = vset.pattern.permute.xlu0 9
    %6492 = vperm.xlu0 %6491, %v5940
    %v6493 = vpop.permute.xlu0 %6492
    %v6495 = vmul.f32 %v6485, %v6489
    %v6496 = vmul.f32 %v6486, %v6493
    %v6497 = vsel %vm1158, %v6495, 0.0
    %v6498 = vsel %vm1158, %v6496, 0.0
    %v6499 = vadd.f32 %v6497, %v6498
    %v6500 = vrot.slane %v6499, 4
    %v6501 = vadd.f32 %v6499, %v6500
    %v6502 = vrot.slane %v6501, 2
    %v6503 = vadd.f32 %v6501, %v6502
    %v6504 = vrot.slane %v6503, 1
    %v6505 = vadd.f32 %v6503, %v6504
    %v6506 = vrot.slane %v5730, 1
    %v6508 = vmul.f32 %v420, %v6506
    %v6509 = vadd.f32 %v6505, %v6508
    %v6510 = vadd.f32 %v6149, %v6509
    %v6511 = vlaneseq
    %v6512 = vshrl.u32 %v6511, 7
    %v6513 = vsub.s32 3, %v6512
    %v6514 = vrot.slane %v5845, %v6513
    %v6515 = vmul.f32 %v6514, %v415
    %v6516 = vmul.f32 %v6514, %v416
    %v6517 = vmul.f32 %v6515, 1.442695
    %v6518 = vpow.pop %v6517
    %v6519 = vmul.f32 %v6516, 1.442695
    %v6520 = vpow.pop %v6519
    %v6521 = vmul.f32 %v6518, %v6485
    %v6522 = vmul.f32 %v6520, %v6486
    %6523 = vset.pattern.permute.xlu0 11
    %6524 = vperm.xlu0 %6523, %v5925
    %v6525 = vpop.permute.xlu0 %6524
    %6527 = vset.pattern.permute.xlu0 11
    %6528 = vperm.xlu0 %6527, %v5930
    %v6529 = vpop.permute.xlu0 %6528
    %v6531 = vlaneseq
    %v6532 = vshrl.u32 %v6531, 7
    %v6533 = vsub.s32 3, %v6532
    %v6534 = vrot.slane %v6316, %v6533
    %v6535 = vmul.f32 %v6525, %v6534
    %v6536 = vmul.f32 %v6529, %v6534
    %v6537 = vadd.f32 %v6521, %v6535
    %v6538 = vadd.f32 %v6522, %v6536
    %6539 = vset.pattern.permute.xlu0 11
    %6540 = vperm.xlu0 %6539, %v5935
    %v6541 = vpop.permute.xlu0 %6540
    %6543 = vset.pattern.permute.xlu0 11
    %6544 = vperm.xlu0 %6543, %v5940
    %v6545 = vpop.permute.xlu0 %6544
    %v6547 = vmul.f32 %v6537, %v6541
    %v6548 = vmul.f32 %v6538, %v6545
    %v6549 = vsel %vm1158, %v6547, 0.0
    %v6550 = vsel %vm1158, %v6548, 0.0
    %v6551 = vadd.f32 %v6549, %v6550
    %v6552 = vrot.slane %v6551, 4
    %v6553 = vadd.f32 %v6551, %v6552
    %v6554 = vrot.slane %v6553, 2
    %v6555 = vadd.f32 %v6553, %v6554
    %v6556 = vrot.slane %v6555, 1
    %v6557 = vadd.f32 %v6555, %v6556
    %v6558 = vrot.slane %v5730, 3
    %v6560 = vmul.f32 %v420, %v6558
    %v6561 = vadd.f32 %v6557, %v6560
    %v6562 = vadd.f32 %v6251, %v6561
    %v6564 = vrot.slane %v6510, 7
    %v6567 = vrot.slane %v6303, 6
    %v6570 = vrot.slane %v6458, 5
    %v6573 = vrot.slane %v6406, 4
    %v6576 = vrot.slane %v6562, 3
    %v6578 = vsel %vm2445, %v6354, %v6564
    %v6579 = vsel %vm768, %v6578, %v6567
    %v6580 = vsel %vm2448, %v6579, %v6570
    %v6581 = vsel %vm846, %v6580, %v6573
    %v6582 = vsel %vm2451, %v6581, %v6576
    %v6583 = vmul.f32 %v6582, 0.5
    %v6584 = vmul.f32 %v6583, %v5668
    %v6586 = vsel %vm1158, %v6584, 0
    %6588 = vmatprep.subr.mxu0 0.0
    %6589 = vmatpush1.msra.mxu0 %v421
    %6590 = vmatprep.subr.mxu0 0.0
    %6591 = vmatpush1.msra.mxu0 %v422
    %6592 = vmatprep.subr.mxu0 0.0
    %6593 = vmatpush1.msra.mxu0 %v423
    %6594 = vmatprep.subr.mxu0 0.0
    %6595 = vmatpush1.msra.mxu0 %v424
    %6596 = vmatprep.subr.mxu0 0.0
    %6597 = vmatpush1.msra.mxu0 %v425
    %6598 = vmatprep.subr.mxu0 0.0
    %6599 = vmatpush1.msra.mxu0 %v426
    %6600 = vmatprep.subr.mxu0 0.0
    %6601 = vmatpush1.msra.mxu0 %v427
    %6602 = vmatprep.subr.mxu0 0.0
    %6603 = vmatpush1.msra.mxu0 %v428
    %6604 = vmatprep.subr.mxu0 0.0
    %6605 = vmatpush1.msra.mxu0 0.0
    %6606 = vmatprep.subr.mxu0 0.0
    %6607 = vmatpush1.msra.mxu0 0.0
    %6608 = vmatprep.subr.mxu0 0.0
    %6609 = vmatpush1.msra.mxu0 0.0
    %6610 = vmatprep.subr.mxu0 0.0
    %6611 = vmatpush1.msra.mxu0 0.0
    %6612 = vmatprep.subr.mxu0 0.0
    %6613 = vmatpush1.msra.mxu0 0.0
    %6614 = vmatprep.subr.mxu0 0.0
    %6615 = vmatpush1.msra.mxu0 0.0
    %6616 = vmatprep.subr.mxu0 0.0
    %6617 = vmatpush1.msra.mxu0 0.0
    %6618 = vmatprep.subr.mxu0 0.0
    %6619 = vmatpush1.msra.mxu0 0.0
    %6620 = vmatprep.subr.mxu0 0.0
    %6621 = vmatpush1.msra.mxu0 0.0
    %6622 = vmatprep.subr.mxu0 0.0
    %6623 = vmatpush1.msra.mxu0 0.0
    %6624 = vmatprep.subr.mxu0 0.0
    %6625 = vmatpush1.msra.mxu0 0.0
    %6626 = vmatprep.subr.mxu0 0.0
    %6627 = vmatpush1.msra.mxu0 0.0
    %6628 = vmatprep.subr.mxu0 0.0
    %6629 = vmatpush1.msra.mxu0 0.0
    %6630 = vmatprep.subr.mxu0 0.0
    %6631 = vmatpush1.msra.mxu0 0.0
    %6632 = vmatprep.subr.mxu0 0.0
    %6633 = vmatpush1.msra.mxu0 0.0
    %6634 = vmatprep.subr.mxu0 0.0
    %6635 = vmatpush1.msra.mxu0 0.0
    %6636 = vmatprep.subr.mxu0 0.0
    %6637 = vmatpush1.msra.mxu0 0.0
    %6638 = vmatprep.subr.mxu0 0.0
    %6639 = vmatpush1.msra.mxu0 0.0
    %6640 = vmatprep.subr.mxu0 0.0
    %6641 = vmatpush1.msra.mxu0 0.0
    %6642 = vmatprep.subr.mxu0 0.0
    %6643 = vmatpush1.msra.mxu0 0.0
    %6644 = vmatprep.subr.mxu0 0.0
    %6645 = vmatpush1.msra.mxu0 0.0
    %6646 = vmatprep.subr.mxu0 0.0
    %6647 = vmatpush1.msra.mxu0 0.0
    %6648 = vmatprep.subr.mxu0 0.0
    %6649 = vmatpush1.msra.mxu0 0.0
    %6650 = vmatprep.subr.mxu0 0.0
    %6651 = vmatpush1.msra.mxu0 0.0
    %6652 = vmatprep.mubr.f32.mxu0 0.0
    %6653 = vmatmul.mubr.f32.gmra.mrb[0].mxu0 %v6586
    %v6654 = vpop.f32.mrb[0].mxu0
    %v6655 = vadd.f32 %v3810, %v6654
    %v6656 = vpop.f32.mrb[0].mxu0
    %6657 = vdwg.mxu0
    %v6659 = vrot.slane %v6655, 2
    %v6661 = vadd.f32 %v6655, %v6659
    %v6662 = vrot.slane %v6655, 4
    %v6664 = vadd.f32 %v6661, %v6662
    %v6665 = vmul.f32 %v6664, 0.33333334
    %v6667 = vrot.slane %v6665, 4
    %v6669 = vadd.f32 %v5488, %v6667
    %v6670 = vmul.f32 %v6669, 0.5
    %v6672 = vrot.slane %v6670, 4
    %v6673 = vsel %vm848, %v6672, 0
    %6675 = vmatprep.subr.mxu0 0.0
    %6676 = vmatpush1.msra.mxu0 %v435
    %6677 = vmatprep.subr.mxu0 0.0
    %6678 = vmatpush1.msra.mxu0 %v436
    %6679 = vmatprep.subr.mxu0 0.0
    %6680 = vmatpush1.msra.mxu0 %v437
    %6681 = vmatprep.subr.mxu0 0.0
    %6682 = vmatpush1.msra.mxu0 %v438
    %6683 = vmatprep.subr.mxu0 0.0
    %6684 = vmatpush1.msra.mxu0 0.0
    %6685 = vmatprep.subr.mxu0 0.0
    %6686 = vmatpush1.msra.mxu0 0.0
    %6687 = vmatprep.subr.mxu0 0.0
    %6688 = vmatpush1.msra.mxu0 0.0
    %6689 = vmatprep.subr.mxu0 0.0
    %6690 = vmatpush1.msra.mxu0 0.0
    %6691 = vmatprep.subr.mxu0 0.0
    %6692 = vmatpush1.msra.mxu0 0.0
    %6693 = vmatprep.subr.mxu0 0.0
    %6694 = vmatpush1.msra.mxu0 0.0
    %6695 = vmatprep.subr.mxu0 0.0
    %6696 = vmatpush1.msra.mxu0 0.0
    %6697 = vmatprep.subr.mxu0 0.0
    %6698 = vmatpush1.msra.mxu0 0.0
    %6699 = vmatprep.subr.mxu0 0.0
    %6700 = vmatpush1.msra.mxu0 0.0
    %6701 = vmatprep.subr.mxu0 0.0
    %6702 = vmatpush1.msra.mxu0 0.0
    %6703 = vmatprep.subr.mxu0 0.0
    %6704 = vmatpush1.msra.mxu0 0.0
    %6705 = vmatprep.subr.mxu0 0.0
    %6706 = vmatpush1.msra.mxu0 0.0
    %6707 = vmatprep.subr.mxu0 0.0
    %6708 = vmatpush1.msra.mxu0 0.0
    %6709 = vmatprep.subr.mxu0 0.0
    %6710 = vmatpush1.msra.mxu0 0.0
    %6711 = vmatprep.subr.mxu0 0.0
    %6712 = vmatpush1.msra.mxu0 0.0
    %6713 = vmatprep.subr.mxu0 0.0
    %6714 = vmatpush1.msra.mxu0 0.0
    %6715 = vmatprep.subr.mxu0 0.0
    %6716 = vmatpush1.msra.mxu0 0.0
    %6717 = vmatprep.subr.mxu0 0.0
    %6718 = vmatpush1.msra.mxu0 0.0
    %6719 = vmatprep.subr.mxu0 0.0
    %6720 = vmatpush1.msra.mxu0 0.0
    %6721 = vmatprep.subr.mxu0 0.0
    %6722 = vmatpush1.msra.mxu0 0.0
    %6723 = vmatprep.subr.mxu0 0.0
    %6724 = vmatpush1.msra.mxu0 0.0
    %6725 = vmatprep.subr.mxu0 0.0
    %6726 = vmatpush1.msra.mxu0 0.0
    %6727 = vmatprep.subr.mxu0 0.0
    %6728 = vmatpush1.msra.mxu0 0.0
    %6729 = vmatprep.subr.mxu0 0.0
    %6730 = vmatpush1.msra.mxu0 0.0
    %6731 = vmatprep.subr.mxu0 0.0
    %6732 = vmatpush1.msra.mxu0 0.0
    %6733 = vmatprep.subr.mxu0 0.0
    %6734 = vmatpush1.msra.mxu0 0.0
    %6735 = vmatprep.subr.mxu0 0.0
    %6736 = vmatpush1.msra.mxu0 0.0
    %6737 = vmatprep.subr.mxu0 0.0
    %6738 = vmatpush1.msra.mxu0 0.0
    %6739 = vmatprep.mubr.f32.mxu0 0.0
    %6740 = vmatmul.mubr.f32.gmra.mrb[0].mxu0 %v6673
    %v6741 = vpop.f32.mrb[0].mxu0
    %v6742 = vadd.f32 0.0, %v6741
    %v6743 = vpop.f32.mrb[0].mxu0
    %6744 = vdwg.mxu0
    %v6745 = vsub.f32 0.0, %v6742
    %v6746 = vmul.f32 %v6745, 1.442695
    %v6747 = vpow.pop %v6746
    %v6748 = vadd.f32 %v6747, 1.0
    %v6749 = vrcp.pop %v6748
    %v6750 = vmul.f32 1.0, %v6749
    %v6751 = vmul.f32 %v5493, %v6750
    %v6753 = vrot.slane %v6750, 6
    %v6755 = vrot.slane %v6750, 4
    %v6757 = vsel %vm768, %v6750, %v6753
    %v6758 = vsel %vm846, %v6757, %v6755
    %v6759 = vmul.f32 %v6655, %v6758
    %v6761 = vrot.slane %v6759, 4
    %v6763 = vadd.f32 %v6751, %v6761
    %v6764 = vmul.f32 %v6763, 0.5
    %v6766 = vlaneseq
    %v6767 = vshrl.u32 %v6766, 7
    %v6768 = vsub.s32 0, %v6767
    %v6769 = vrot.slane %v443, %v6768
    %v6772 = vsel %vm848, %v6764, 0
    %6774 = vmatprep.subr.mxu0 0.0
    %6775 = vmatpush1.msra.mxu0 %v439
    %6776 = vmatprep.subr.mxu0 0.0
    %6777 = vmatpush1.msra.mxu0 %v440
    %6778 = vmatprep.subr.mxu0 0.0
    %6779 = vmatpush1.msra.mxu0 %v441
    %6780 = vmatprep.subr.mxu0 0.0
    %6781 = vmatpush1.msra.mxu0 %v442
    %6782 = vmatprep.subr.mxu0 0.0
    %6783 = vmatpush1.msra.mxu0 0.0
    %6784 = vmatprep.subr.mxu0 0.0
    %6785 = vmatpush1.msra.mxu0 0.0
    %6786 = vmatprep.subr.mxu0 0.0
    %6787 = vmatpush1.msra.mxu0 0.0
    %6788 = vmatprep.subr.mxu0 0.0
    %6789 = vmatpush1.msra.mxu0 0.0
    %6790 = vmatprep.subr.mxu0 0.0
    %6791 = vmatpush1.msra.mxu0 0.0
    %6792 = vmatprep.subr.mxu0 0.0
    %6793 = vmatpush1.msra.mxu0 0.0
    %6794 = vmatprep.subr.mxu0 0.0
    %6795 = vmatpush1.msra.mxu0 0.0
    %6796 = vmatprep.subr.mxu0 0.0
    %6797 = vmatpush1.msra.mxu0 0.0
    %6798 = vmatprep.subr.mxu0 0.0
    %6799 = vmatpush1.msra.mxu0 0.0
    %6800 = vmatprep.subr.mxu0 0.0
    %6801 = vmatpush1.msra.mxu0 0.0
    %6802 = vmatprep.subr.mxu0 0.0
    %6803 = vmatpush1.msra.mxu0 0.0
    %6804 = vmatprep.subr.mxu0 0.0
    %6805 = vmatpush1.msra.mxu0 0.0
    %6806 = vmatprep.subr.mxu0 0.0
    %6807 = vmatpush1.msra.mxu0 0.0
    %6808 = vmatprep.subr.mxu0 0.0
    %6809 = vmatpush1.msra.mxu0 0.0
    %6810 = vmatprep.subr.mxu0 0.0
    %6811 = vmatpush1.msra.mxu0 0.0
    %6812 = vmatprep.subr.mxu0 0.0
    %6813 = vmatpush1.msra.mxu0 0.0
    %6814 = vmatprep.subr.mxu0 0.0
    %6815 = vmatpush1.msra.mxu0 0.0
    %6816 = vmatprep.subr.mxu0 0.0
    %6817 = vmatpush1.msra.mxu0 0.0
    %6818 = vmatprep.subr.mxu0 0.0
    %6819 = vmatpush1.msra.mxu0 0.0
    %6820 = vmatprep.subr.mxu0 0.0
    %6821 = vmatpush1.msra.mxu0 0.0
    %6822 = vmatprep.subr.mxu0 0.0
    %6823 = vmatpush1.msra.mxu0 0.0
    %6824 = vmatprep.subr.mxu0 0.0
    %6825 = vmatpush1.msra.mxu0 0.0
    %6826 = vmatprep.subr.mxu0 0.0
    %6827 = vmatpush1.msra.mxu0 0.0
    %6828 = vmatprep.subr.mxu0 0.0
    %6829 = vmatpush1.msra.mxu0 0.0
    %6830 = vmatprep.subr.mxu0 0.0
    %6831 = vmatpush1.msra.mxu0 0.0
    %6832 = vmatprep.subr.mxu0 0.0
    %6833 = vmatpush1.msra.mxu0 0.0
    %6834 = vmatprep.subr.mxu0 0.0
    %6835 = vmatpush1.msra.mxu0 0.0
    %6836 = vmatprep.subr.mxu0 0.0
    %6837 = vmatpush1.msra.mxu0 0.0
    %6838 = vmatprep.mubr.f32.mxu0 0.0
    %6839 = vmatmul.mubr.f32.gmra.mrb[0].mxu0 %v6772
    %v6840 = vpop.f32.mrb[0].mxu0
    %v6841 = vadd.f32 %v6769, %v6840
    %v6842 = vpop.f32.mrb[0].mxu0
    %6843 = vdwg.mxu0
    %vm6844 = vcmask 74752
    %6845 = vst.msk [vmem:[#allocation2] sm:$0x3] %vm6844, %v6841
    // Predicated region
    $region98: #{model_forward.1} parent=1 // pred_check
      _
    $region99: #{model_forward.1} parent=1 // pred_check_branch
      %6847 = sbr.rel (0) target = $region101
    $region100: #{model_forward.1} parent=1 // pred_region
      %s6849 = ssub.s32 32, 32
      %6850 = vsyncadd [#allocation3], %s6849
      %s6852 = sshll.u32 [#allocation2], 4
      %s6853 = int_to_ptr.vmem [resolvable:$true] %s6852
      %6855 = dma.vmem_to_hbm [thread:$0]  %s6853, 32, %s24, [#allocation3]
    $region101: #{model_forward.1} parent=1 // pred_fallthru
      _
    // Predicated region
    $region102: #{model_forward.1} parent=1 // pred_check
      _
    $region103: #{model_forward.1} parent=1 // pred_check_branch
      %6857 = sbr.rel (0) target = $region105
    $region104: #{model_forward.1} parent=1 // pred_region
      %6858 = dma.done [#allocation3], 32
    $region105: #{model_forward.1} parent=1 // pred_fallthru
      _
    %6859 = vsyncpa [#allocation3], 1

</llo_original>
